<compile_context>
chip_gen: v7x
topology: tpu7x:2x2x1
jax: 0.10.0
libtpu: 0.0.40
codegen_flags: <defaults>
</compile_context>

<pallas_src>
import math
from functools import partial

import jax
import jax.numpy as jnp
import numpy as np
from jax.experimental import pallas as pl
from jax.experimental.pallas import tpu as pltpu

LN_EPS = 1e-5  # PyTorch nn.LayerNorm default


# ----------------------------------------------------------------------------
# hardware probing (safe fallbacks) + tiling heuristics
# ----------------------------------------------------------------------------
_HW_CACHE = None


def _tpu_hw():
    """Return (tensorcores_per_chip, vmem_capacity_bytes) with safe fallbacks."""
    global _HW_CACHE
    if _HW_CACHE is not None:
        return _HW_CACHE
    cores, vmem = 1, 64 * 1024 * 1024           # conservative (v7x-sized) default
    try:
        info = pltpu.get_tpu_info()
        vmem = int(getattr(info, "vmem_capacity_bytes", vmem))
    except Exception:
        pass
    try:
        dev = jax.devices()[0]
        kind = str(getattr(dev, "device_kind", "")).lower()
        cores = 2 if "v7" in kind else max(1, int(getattr(dev, "num_cores", 1)))
    except Exception:
        pass
    _HW_CACHE = (cores, vmem)
    return _HW_CACHE


def _pick_group_block(G, S, *, per_row_bytes, target_rows=1024):
    """Whole sequences (groups) per grid step.

    Largest block that (a) divides G, (b) satisfies the (8,128) sublane rule,
    (c) fits a 30% VMEM activation budget, (d) stays <= target_rows.
    Only on multi-TensorCore chips (v7x) do we force >= n_tc grid steps, and
    only if the tile stays >= 256 rows (single-TC chips keep the biggest tile).
    """
    n_tc, vmem_cap = _tpu_hw()
    budget_rows = max(8, int(vmem_cap * 0.3) // max(per_row_bytes, 1))
    target = max(8, min(target_rows, budget_rows))
    divisors = [d for d in range(1, G + 1) if G % d == 0]
    legal = [d for d in divisors if (d * S) % 8 == 0 or d == G]
    best = max((d for d in legal if d * S <= target), default=min(legal))
    if n_tc > 1 and G // best < n_tc:            # keep both v7x TensorCores busy
        alt = [d for d in legal if G // d >= n_tc and d * S >= 256]
        if alt:
            best = max(alt)
    return best


def _pick_row_block(M, *, per_row_bytes, target_rows=1024):
    n_tc, vmem_cap = _tpu_hw()
    budget_rows = max(8, int(vmem_cap * 0.3) // max(per_row_bytes, 1))
    target = max(8, min(target_rows, budget_rows))
    divisors = [d for d in range(1, M + 1) if M % d == 0]
    legal = [d for d in divisors if d % 8 == 0 or d == M]
    best = max((d for d in legal if d <= target), default=min(legal))
    if n_tc > 1 and M // best < n_tc:
        alt = [d for d in legal if M // d >= n_tc and d >= 256]
        if alt:
            best = max(alt)
    return best


# ----------------------------------------------------------------------------
# helpers
# ----------------------------------------------------------------------------
def _layer_norm(s, gamma, beta, eps):
    mu = jnp.mean(s, axis=-1, keepdims=True)
    d = s - mu
    var = jnp.mean(d * d, axis=-1, keepdims=True)
    return d * jax.lax.rsqrt(var + eps) * gamma + beta


# ----------------------------------------------------------------------------
# Kernel 1: multi-head attention + residual add + LayerNorm.
#   x block = (Gb*S, D) rows: Gb whole sequences of length S, group-major order.
# ----------------------------------------------------------------------------
def _attn_ln_kernel(x_ref, wqkv_ref, bqkv_ref, wo_ref, bo_ref,
                    gamma_ref, beta_ref, o_ref,
                    *, n_heads, dk, S, Gb, eps):
    hdk = n_heads * dk
    rows = Gb * S
    x = x_ref[...]                                              # (rows, D)
    x32 = x.astype(jnp.float32)

    # Fused QKV projection for the whole block: bf16 operands (MXU native),
    # f32 accumulation.
    qkv = jnp.dot(x.astype(jnp.bfloat16), wqkv_ref[...],
                  preferred_element_type=jnp.float32) + bqkv_ref[:, :]   # (rows, 3*hdk)

    scale = 1.0 / math.sqrt(dk)
    head_outs = []
    for h in range(n_heads):                    # short static loop over heads only
        c = h * dk
        # Leading-dim reshapes only (no lane->sublane relayout); the attention
        # dots for this head are batched over the Gb sequences in the block.
        q = qkv[:, c:c + dk].reshape(Gb, S, dk)
        k = qkv[:, hdk + c:hdk + c + dk].reshape(Gb, S, dk)
        v = qkv[:, 2 * hdk + c:2 * hdk + c + dk].reshape(Gb, S, dk)
        s = jnp.einsum("gqd,gkd->gqk",
                       q.astype(jnp.bfloat16), k.astype(jnp.bfloat16),
                       preferred_element_type=jnp.float32) * scale        # (Gb, S, S)
        s = s - jnp.max(s, axis=-1, keepdims=True)
        p = jnp.exp(s)
        p = p * pl.reciprocal(jnp.sum(p, axis=-1, keepdims=True), approx=True)
        o = jnp.einsum("gqk,gkd->gqd",
                       p.astype(jnp.bfloat16), v.astype(jnp.bfloat16),
                       preferred_element_type=jnp.float32)                # (Gb, S, dk)
        head_outs.append(o.reshape(rows, dk))

    # Lane-dense head concat (one concatenate) instead of masked dk-wide scratch
    # stores; feeds a single output projection over all groups/heads.
    heads = jnp.concatenate(head_outs, axis=-1)                           # (rows, hdk)
    a = jnp.dot(heads.astype(jnp.bfloat16), wo_ref[...],
                preferred_element_type=jnp.float32) + bo_ref[:, :]        # (rows, D)

    y = _layer_norm(x32 + a, gamma_ref[:, :], beta_ref[:, :], eps)
    o_ref[...] = y.astype(o_ref.dtype)


def attn_add_layer_norm(x2d, wqkv, bqkv, wo, bo, gamma, beta, *, n_heads, dk, seq_len):
    M, D = x2d.shape
    S = seq_len
    G = M // S
    hdk = n_heads * dk
    # rough per-row activation footprint (x/out double-buffered + qkv + heads + scores)
    per_row = 4 * (4 * D + 4 * hdk + 2 * n_heads * S)
    Gb = _pick_group_block(G, S, per_row_bytes=per_row)
    rows = Gb * S
    _, vmem_cap = _tpu_hw()
    cost = pl.CostEstimate(
        flops=int(2 * M * D * 3 * hdk + 4 * M * S * dk * n_heads
                  + 2 * M * hdk * D + 10 * M * D),
        transcendentals=int(M * S * n_heads + M),
        bytes_accessed=int(8 * M * D + 2 * D * 3 * hdk + 2 * hdk * D
                           + 4 * (3 * hdk + 3 * D)),
    )
    return pl.pallas_call(
        partial(_attn_ln_kernel, n_heads=n_heads, dk=dk, S=S, Gb=Gb, eps=LN_EPS),
        out_shape=jax.ShapeDtypeStruct((M, D), x2d.dtype),
        grid=(G // Gb,),
        in_specs=[
            pl.BlockSpec((rows, D), lambda i: (i, 0)),
            # grid-invariant weights: constant index_map -> fetched once, resident.
            # TODO(synk): pipeline_mode=pl.Buffered(1) would also drop the second
            # buffer copy; left out for lowering-compat safety.
            pl.BlockSpec((D, 3 * hdk), lambda i: (0, 0)),
            pl.BlockSpec((1, 3 * hdk), lambda i: (0, 0)),
            pl.BlockSpec((hdk, D), lambda i: (0, 0)),
            pl.BlockSpec((1, D), lambda i: (0, 0)),
            pl.BlockSpec((1, D), lambda i: (0, 0)),
            pl.BlockSpec((1, D), lambda i: (0, 0)),
        ],
        out_specs=pl.BlockSpec((rows, D), lambda i: (i, 0)),
        compiler_params=pltpu.CompilerParams(
            dimension_semantics=("parallel",),
            vmem_limit_bytes=int(vmem_cap * 0.75)),
        cost_estimate=cost,
    )(x2d, wqkv, bqkv, wo, bo, gamma, beta)


# ----------------------------------------------------------------------------
# Kernel 2: feed-forward  fc1(ELU(fc2(x)))  + residual + LayerNorm.
# ----------------------------------------------------------------------------
def _ffn_ln_kernel(x_ref, w2_ref, b2_ref, w1_ref, b1_ref, gamma_ref, beta_ref,
                   o_ref, *, eps):
    x = x_ref[...]
    x32 = x.astype(jnp.float32)
    h = jnp.dot(x.astype(jnp.bfloat16), w2_ref[...],
                preferred_element_type=jnp.float32) + b2_ref[:, :]
    # ELU(alpha=1) in f32.  (exp(h)-1 rather than expm1: difference is ~1e-7
    # absolute here and expm1 has no guaranteed Mosaic lowering.)
    h = jnp.where(h > 0, h, jnp.exp(h) - 1.0)
    a = jnp.dot(h.astype(jnp.bfloat16), w1_ref[...],
                preferred_element_type=jnp.float32) + b1_ref[:, :]
    y = _layer_norm(x32 + a, gamma_ref[:, :], beta_ref[:, :], eps)
    o_ref[...] = y.astype(o_ref.dtype)


def ffn_add_layer_norm(x, w2, b2, w1, b1, gamma, beta):
    M, D = x.shape
    dff = w2.shape[1]
    per_row = 4 * (6 * D + 2 * dff)
    tm = _pick_row_block(M, per_row_bytes=per_row)
    _, vmem_cap = _tpu_hw()
    cost = pl.CostEstimate(
        flops=int(4 * M * D * dff + 10 * M * D),
        transcendentals=int(M * dff),
        bytes_accessed=int(8 * M * D + 4 * D * dff + 4 * (dff + 3 * D)),
    )
    # TODO(synk): for very large dff, tile the contraction over dff chunks with an
    # f32 VMEM accumulator instead of holding full w2/w1 and the (tm, dff) h.
    return pl.pallas_call(
        partial(_ffn_ln_kernel, eps=LN_EPS),
        out_shape=jax.ShapeDtypeStruct((M, D), x.dtype),
        grid=(M // tm,),
        in_specs=[
            pl.BlockSpec((tm, D), lambda i: (i, 0)),
            pl.BlockSpec((D, dff), lambda i: (0, 0)),
            pl.BlockSpec((1, dff), lambda i: (0, 0)),
            pl.BlockSpec((dff, D), lambda i: (0, 0)),
            pl.BlockSpec((1, D), lambda i: (0, 0)),
            pl.BlockSpec((1, D), lambda i: (0, 0)),
            pl.BlockSpec((1, D), lambda i: (0, 0)),
        ],
        out_specs=pl.BlockSpec((tm, D), lambda i: (i, 0)),
        compiler_params=pltpu.CompilerParams(
            dimension_semantics=("parallel",),
            vmem_limit_bytes=int(vmem_cap * 0.75)),
        cost_estimate=cost,
    )(x, w2, b2, w1, b1, gamma, beta)


# ----------------------------------------------------------------------------
# EncoderLayer forward (glue: layout transposes + weight fusion/casting only).
# ----------------------------------------------------------------------------
def encoder_layer_forward(x, params, *, n_heads, dk):
    B, T, n, D = x.shape

    def fuse(p):  # wq|wk|wv fused once in the wrapper; weights cast to bf16 once.
        wqkv = jnp.concatenate([p["wq"], p["wk"], p["wv"]], axis=1).astype(jnp.bfloat16)
        bqkv = jnp.concatenate([p["bq"], p["bk"], p["bv"]], axis=1)
        return wqkv, bqkv, p["wo"].astype(jnp.bfloat16), p["bo"]

    wqkv1, bqkv1, wo1, bo1 = fuse(params["attn1"])
    wqkv2, bqkv2, wo2, bo2 = fuse(params["attn2"])

    # --- temporal attention (over T, per (b, n)) + residual + LayerNorm,
    #     computed entirely in the permuted (B, n, T, D) row layout (LN is per-row).
    # TODO(synk): these two XLA transposes could be folded into kernel-2's
    # BlockSpec index_map (read (1, n, Tb, D) blocks directly); kept in XLA for
    # lowering-compat safety.
    xp = jnp.transpose(x, (0, 2, 1, 3)).reshape(B * n * T, D)
    x1p = attn_add_layer_norm(xp, wqkv1, bqkv1, wo1, bo1,
                              params["ln1_g"], params["ln1_b"],
                              n_heads=n_heads, dk=dk, seq_len=T)
    x1 = jnp.transpose(x1p.reshape(B, n, T, D), (0, 2, 1, 3)).reshape(B * T * n, D)

    # --- spatial attention (over n, per (b, t)) + residual + LayerNorm ---
    x2 = attn_add_layer_norm(x1, wqkv2, bqkv2, wo2, bo2,
                             params["ln2_g"], params["ln2_b"],
                             n_heads=n_heads, dk=dk, seq_len=n)

    # --- feed-forward: fc1(ELU(fc2(x))) + residual + LayerNorm ---
    x3 = ffn_add_layer_norm(x2,
                            params["w2"].astype(jnp.bfloat16), params["b2"],
                            params["w1"].astype(jnp.bfloat16), params["b1"],
                            params["ln3_g"], params["ln3_b"])
    return x3.reshape(B, T, n, D)
    # TODO(synk): nn.Dropout(p=0.1) exists in the module but is never applied in
    # forward(), so it is intentionally omitted here.


# ----------------------------------------------------------------------------
# Deterministic parameter init (weights stored in x @ W orientation, f32 master).
# ----------------------------------------------------------------------------
def init_params(key, d_model, dk, n_heads, dff):
    hdk = n_heads * dk
    ks = iter(jax.random.split(key, 32))

    def w(shape, scale=0.1):
        return scale * jax.random.normal(next(ks), shape, jnp.float32)

    def attn_p():
        return dict(
            wq=w((d_model, hdk)), bq=w((1, hdk)),
            wk=w((d_model, hdk)), bk=w((1, hdk)),
            wv=w((d_model, hdk)), bv=w((1, hdk)),
            wo=w((hdk, d_model)), bo=w((1, d_model)),
        )

    return dict(
        attn1=attn_p(),
        attn2=attn_p(),
        # fc2: Linear(d_model, dff); fc1: Linear(dff, d_model)
        w2=w((d_model, dff)), b2=w((1, dff)),
        w1=w((dff, d_model)), b1=w((1, d_model)),
        ln1_g=1.0 + w((1, d_model)), ln1_b=w((1, d_model)),
        ln2_g=1.0 + w((1, d_model)), ln2_b=w((1, d_model)),
        ln3_g=1.0 + w((1, d_model)), ln3_b=w((1, d_model)),
    )


# ----------------------------------------------------------------------------
# Pure-JAX f32 reference for validation.
# ----------------------------------------------------------------------------
def _ref_mha(x_seq, p, n_heads, dk):
    G, S, D = x_seq.shape
    q = (x_seq @ p["wq"] + p["bq"][0]).reshape(G, S, n_heads, dk)
    k = (x_seq @ p["wk"] + p["bk"][0]).reshape(G, S, n_heads, dk)
    v = (x_seq @ p["wv"] + p["bv"][0]).reshape(G, S, n_heads, dk)
    s = jnp.einsum("gqhd,gkhd->ghqk", q, k) / math.sqrt(dk)
    a = jax.nn.softmax(s, axis=-1)
    o = jnp.einsum("ghqk,gkhd->gqhd", a, v).reshape(G, S, n_heads * dk)
    return o @ p["wo"] + p["bo"][0]


def _ref_ln(x, g, b):
    mu = jnp.mean(x, axis=-1, keepdims=True)
    var = jnp.mean((x - mu) ** 2, axis=-1, keepdims=True)
    return (x - mu) / jnp.sqrt(var + LN_EPS) * g[0] + b[0]


def reference_forward(x, params, *, n_heads, dk):
    B, T, n, D = x.shape
    a = jnp.transpose(x, (0, 2, 1, 3)).reshape(B * n, T, D)
    a = _ref_mha(a, params["attn1"], n_heads, dk)
    a = jnp.transpose(a.reshape(B, n, T, D), (0, 2, 1, 3))
    x = _ref_ln(x + a, params["ln1_g"], params["ln1_b"])
    a = _ref_mha(x.reshape(B * T, n, D), params["attn2"], n_heads, dk)
    x = _ref_ln(x + a.reshape(B, T, n, D), params["ln2_g"], params["ln2_b"])
    h = x @ params["w2"] + params["b2"][0]
    h = jnp.where(h > 0, h, jnp.expm1(h))
    a = h @ params["w1"] + params["b1"][0]
    return _ref_ln(x + a, params["ln3_g"], params["ln3_b"])


if __name__ == "__main__":
    B, T, n = 2, 8, 4
    d_model, dk, n_heads, dff = 32, 8, 4, 64

    key = jax.random.PRNGKey(0)
    kx, kp = jax.random.split(key)
    x = jax.random.normal(kx, (B, T, n, d_model), jnp.float32)
    params = init_params(kp, d_model, dk, n_heads, dff)

    fwd = jax.jit(partial(encoder_layer_forward, n_heads=n_heads, dk=dk))
    out = jax.block_until_ready(fwd(x, params))

    ref = reference_forward(x, params, n_heads=n_heads, dk=dk)
    # Tolerance loosened vs. f32 because matmul operands are bf16 (f32 accum);
    # softmax/LN stay f32.
    np.testing.assert_allclose(np.asarray(out), np.asarray(ref), rtol=4e-2, atol=4e-2)
    assert out.shape == (B, T, n, d_model)
    print("KERNEL_OK")
</pallas_src>

<mosaic_0001>
module attributes {stable_mosaic.version = 11 : i64} {
  func.func @_attn_ln_kernel(%arg0: i32, %arg1: memref<64x32xf32, #tpu.memory_space<vmem>>, %arg2: memref<32x96xbf16, #tpu.memory_space<vmem>>, %arg3: memref<1x96xf32, #tpu.memory_space<vmem>>, %arg4: memref<32x32xbf16, #tpu.memory_space<vmem>>, %arg5: memref<1x32xf32, #tpu.memory_space<vmem>>, %arg6: memref<1x32xf32, #tpu.memory_space<vmem>>, %arg7: memref<1x32xf32, #tpu.memory_space<vmem>>, %arg8: memref<64x32xf32, #tpu.memory_space<vmem>>) attributes {dimension_semantics = [#tpu.dimension_semantics<parallel>], iteration_bounds = array<i64: 1>, scalar_prefetch = 0 : i64, scratch_operands = 0 : i64, tpu.core_type = #tpu.core_type<tc>, window_params = [{transform_indices = @transform_0, window_bounds = array<i64: 64, 32>}, {pipeline_mode = #tpu.pipeline_mode<synchronous>, transform_indices = @transform_1, window_bounds = array<i64: 32, 96>}, {pipeline_mode = #tpu.pipeline_mode<synchronous>, transform_indices = @transform_2, window_bounds = array<i64: 1, 96>}, {pipeline_mode = #tpu.pipeline_mode<synchronous>, transform_indices = @transform_3, window_bounds = array<i64: 32, 32>}, {pipeline_mode = #tpu.pipeline_mode<synchronous>, transform_indices = @transform_4, window_bounds = array<i64: 1, 32>}, {pipeline_mode = #tpu.pipeline_mode<synchronous>, transform_indices = @transform_5, window_bounds = array<i64: 1, 32>}, {pipeline_mode = #tpu.pipeline_mode<synchronous>, transform_indices = @transform_6, window_bounds = array<i64: 1, 32>}, {transform_indices = @transform_7, window_bounds = array<i64: 64, 32>}]} {
    %c0 = arith.constant 0 : index
    %c0_0 = arith.constant 0 : index
    %0 = vector.load %arg1[%c0, %c0_0] : memref<64x32xf32, #tpu.memory_space<vmem>>, vector<64x32xf32>
    %1 = arith.truncf %0 : vector<64x32xf32> to vector<64x32xbf16>
    %c0_1 = arith.constant 0 : index
    %c0_2 = arith.constant 0 : index
    %2 = vector.load %arg2[%c0_1, %c0_2] : memref<32x96xbf16, #tpu.memory_space<vmem>>, vector<32x96xbf16>
    %cst = arith.constant dense<0.000000e+00> : vector<64x96xf32>
    %3 = tpu.matmul %1, %2, %cst {dimension_numbers = #tpu.dot_dimension_numbers<[1], [0], [0], [1], [0, 0, 1, 1], [], []>} : vector<64x32xbf16>, vector<32x96xbf16>, vector<64x96xf32> -> vector<64x96xf32>
    %c0_3 = arith.constant 0 : index
    %c0_4 = arith.constant 0 : index
    %4 = vector.load %arg3[%c0_3, %c0_4] : memref<1x96xf32, #tpu.memory_space<vmem>>, vector<1x96xf32>
    %5 = vector.broadcast %4 : vector<1x96xf32> to vector<64x96xf32>
    %6 = arith.addf %3, %5 : vector<64x96xf32>
    %7 = vector.extract_strided_slice %6 {offsets = [0, 0], sizes = [64, 8], strides = [1, 1]} : vector<64x96xf32> to vector<64x8xf32>
    %8 = vector.shape_cast %7 : vector<64x8xf32> to vector<8x8x8xf32>
    %9 = vector.extract_strided_slice %6 {offsets = [0, 32], sizes = [64, 8], strides = [1, 1]} : vector<64x96xf32> to vector<64x8xf32>
    %10 = vector.shape_cast %9 : vector<64x8xf32> to vector<8x8x8xf32>
    %11 = vector.extract_strided_slice %6 {offsets = [0, 64], sizes = [64, 8], strides = [1, 1]} : vector<64x96xf32> to vector<64x8xf32>
    %12 = vector.shape_cast %11 : vector<64x8xf32> to vector<8x8x8xf32>
    %13 = arith.truncf %8 : vector<8x8x8xf32> to vector<8x8x8xbf16>
    %14 = arith.truncf %10 : vector<8x8x8xf32> to vector<8x8x8xbf16>
    "tpu.trace_start"() <{level = 10 : i32, message = "gqd,gkd->gqk"}> : () -> ()
    %cst_5 = arith.constant dense<0.000000e+00> : vector<8x8x8xf32>
    %15 = tpu.matmul %13, %14, %cst_5 {dimension_numbers = #tpu.dot_dimension_numbers<[2], [2], [1], [1], [0, 0, 0, 1, 1, 1], [0], [0]>} : vector<8x8x8xbf16>, vector<8x8x8xbf16>, vector<8x8x8xf32> -> vector<8x8x8xf32>
    "tpu.trace_stop"() : () -> ()
    %cst_6 = arith.constant 0.353553385 : f32
    %16 = vector.broadcast %cst_6 : f32 to vector<8x8x8xf32>
    %17 = arith.mulf %15, %16 : vector<8x8x8xf32>
    %cst_7 = arith.constant dense<0xFF800000> : vector<8x8xf32>
    %18 = vector.multi_reduction <maximumf>, %17, %cst_7 [2] : vector<8x8x8xf32> to vector<8x8xf32>
    %19 = vector.shape_cast %18 : vector<8x8xf32> to vector<8x8x1xf32>
    %20 = vector.broadcast %19 : vector<8x8x1xf32> to vector<8x8x8xf32>
    %21 = arith.subf %17, %20 : vector<8x8x8xf32>
    %22 = math.exp %21 : vector<8x8x8xf32>
    %cst_8 = arith.constant dense<0.000000e+00> : vector<8x8xf32>
    %23 = vector.multi_reduction <add>, %22, %cst_8 [2] : vector<8x8x8xf32> to vector<8x8xf32>
    %24 = vector.shape_cast %23 : vector<8x8xf32> to vector<8x8x1xf32>
    %25 = tpu.reciprocal %24 {approx = true} : vector<8x8x1xf32> -> vector<8x8x1xf32>
    %26 = vector.broadcast %25 : vector<8x8x1xf32> to vector<8x8x8xf32>
    %27 = arith.mulf %22, %26 : vector<8x8x8xf32>
    %28 = arith.truncf %27 : vector<8x8x8xf32> to vector<8x8x8xbf16>
    %29 = arith.truncf %12 : vector<8x8x8xf32> to vector<8x8x8xbf16>
    "tpu.trace_start"() <{level = 10 : i32, message = "gqk,gkd->gqd"}> : () -> ()
    %cst_9 = arith.constant dense<0.000000e+00> : vector<8x8x8xf32>
    %30 = tpu.matmul %28, %29, %cst_9 {dimension_numbers = #tpu.dot_dimension_numbers<[2], [1], [1], [2], [0, 0, 0, 1, 1, 2], [0], [0]>} : vector<8x8x8xbf16>, vector<8x8x8xbf16>, vector<8x8x8xf32> -> vector<8x8x8xf32>
    "tpu.trace_stop"() : () -> ()
    %31 = vector.shape_cast %30 : vector<8x8x8xf32> to vector<64x8xf32>
    %32 = vector.extract_strided_slice %6 {offsets = [0, 8], sizes = [64, 8], strides = [1, 1]} : vector<64x96xf32> to vector<64x8xf32>
    %33 = vector.shape_cast %32 : vector<64x8xf32> to vector<8x8x8xf32>
    %34 = vector.extract_strided_slice %6 {offsets = [0, 40], sizes = [64, 8], strides = [1, 1]} : vector<64x96xf32> to vector<64x8xf32>
    %35 = vector.shape_cast %34 : vector<64x8xf32> to vector<8x8x8xf32>
    %36 = vector.extract_strided_slice %6 {offsets = [0, 72], sizes = [64, 8], strides = [1, 1]} : vector<64x96xf32> to vector<64x8xf32>
    %37 = vector.shape_cast %36 : vector<64x8xf32> to vector<8x8x8xf32>
    %38 = arith.truncf %33 : vector<8x8x8xf32> to vector<8x8x8xbf16>
    %39 = arith.truncf %35 : vector<8x8x8xf32> to vector<8x8x8xbf16>
    "tpu.trace_start"() <{level = 10 : i32, message = "gqd,gkd->gqk"}> : () -> ()
    %cst_10 = arith.constant dense<0.000000e+00> : vector<8x8x8xf32>
    %40 = tpu.matmul %38, %39, %cst_10 {dimension_numbers = #tpu.dot_dimension_numbers<[2], [2], [1], [1], [0, 0, 0, 1, 1, 1], [0], [0]>} : vector<8x8x8xbf16>, vector<8x8x8xbf16>, vector<8x8x8xf32> -> vector<8x8x8xf32>
    "tpu.trace_stop"() : () -> ()
    %cst_11 = arith.constant 0.353553385 : f32
    %41 = vector.broadcast %cst_11 : f32 to vector<8x8x8xf32>
    %42 = arith.mulf %40, %41 : vector<8x8x8xf32>
    %cst_12 = arith.constant dense<0xFF800000> : vector<8x8xf32>
    %43 = vector.multi_reduction <maximumf>, %42, %cst_12 [2] : vector<8x8x8xf32> to vector<8x8xf32>
    %44 = vector.shape_cast %43 : vector<8x8xf32> to vector<8x8x1xf32>
    %45 = vector.broadcast %44 : vector<8x8x1xf32> to vector<8x8x8xf32>
    %46 = arith.subf %42, %45 : vector<8x8x8xf32>
    %47 = math.exp %46 : vector<8x8x8xf32>
    %cst_13 = arith.constant dense<0.000000e+00> : vector<8x8xf32>
    %48 = vector.multi_reduction <add>, %47, %cst_13 [2] : vector<8x8x8xf32> to vector<8x8xf32>
    %49 = vector.shape_cast %48 : vector<8x8xf32> to vector<8x8x1xf32>
    %50 = tpu.reciprocal %49 {approx = true} : vector<8x8x1xf32> -> vector<8x8x1xf32>
    %51 = vector.broadcast %50 : vector<8x8x1xf32> to vector<8x8x8xf32>
    %52 = arith.mulf %47, %51 : vector<8x8x8xf32>
    %53 = arith.truncf %52 : vector<8x8x8xf32> to vector<8x8x8xbf16>
    %54 = arith.truncf %37 : vector<8x8x8xf32> to vector<8x8x8xbf16>
    "tpu.trace_start"() <{level = 10 : i32, message = "gqk,gkd->gqd"}> : () -> ()
    %cst_14 = arith.constant dense<0.000000e+00> : vector<8x8x8xf32>
    %55 = tpu.matmul %53, %54, %cst_14 {dimension_numbers = #tpu.dot_dimension_numbers<[2], [1], [1], [2], [0, 0, 0, 1, 1, 2], [0], [0]>} : vector<8x8x8xbf16>, vector<8x8x8xbf16>, vector<8x8x8xf32> -> vector<8x8x8xf32>
    "tpu.trace_stop"() : () -> ()
    %56 = vector.shape_cast %55 : vector<8x8x8xf32> to vector<64x8xf32>
    %57 = vector.extract_strided_slice %6 {offsets = [0, 16], sizes = [64, 8], strides = [1, 1]} : vector<64x96xf32> to vector<64x8xf32>
    %58 = vector.shape_cast %57 : vector<64x8xf32> to vector<8x8x8xf32>
    %59 = vector.extract_strided_slice %6 {offsets = [0, 48], sizes = [64, 8], strides = [1, 1]} : vector<64x96xf32> to vector<64x8xf32>
    %60 = vector.shape_cast %59 : vector<64x8xf32> to vector<8x8x8xf32>
    %61 = vector.extract_strided_slice %6 {offsets = [0, 80], sizes = [64, 8], strides = [1, 1]} : vector<64x96xf32> to vector<64x8xf32>
    %62 = vector.shape_cast %61 : vector<64x8xf32> to vector<8x8x8xf32>
    %63 = arith.truncf %58 : vector<8x8x8xf32> to vector<8x8x8xbf16>
    %64 = arith.truncf %60 : vector<8x8x8xf32> to vector<8x8x8xbf16>
    "tpu.trace_start"() <{level = 10 : i32, message = "gqd,gkd->gqk"}> : () -> ()
    %cst_15 = arith.constant dense<0.000000e+00> : vector<8x8x8xf32>
    %65 = tpu.matmul %63, %64, %cst_15 {dimension_numbers = #tpu.dot_dimension_numbers<[2], [2], [1], [1], [0, 0, 0, 1, 1, 1], [0], [0]>} : vector<8x8x8xbf16>, vector<8x8x8xbf16>, vector<8x8x8xf32> -> vector<8x8x8xf32>
    "tpu.trace_stop"() : () -> ()
    %cst_16 = arith.constant 0.353553385 : f32
    %66 = vector.broadcast %cst_16 : f32 to vector<8x8x8xf32>
    %67 = arith.mulf %65, %66 : vector<8x8x8xf32>
    %cst_17 = arith.constant dense<0xFF800000> : vector<8x8xf32>
    %68 = vector.multi_reduction <maximumf>, %67, %cst_17 [2] : vector<8x8x8xf32> to vector<8x8xf32>
    %69 = vector.shape_cast %68 : vector<8x8xf32> to vector<8x8x1xf32>
    %70 = vector.broadcast %69 : vector<8x8x1xf32> to vector<8x8x8xf32>
    %71 = arith.subf %67, %70 : vector<8x8x8xf32>
    %72 = math.exp %71 : vector<8x8x8xf32>
    %cst_18 = arith.constant dense<0.000000e+00> : vector<8x8xf32>
    %73 = vector.multi_reduction <add>, %72, %cst_18 [2] : vector<8x8x8xf32> to vector<8x8xf32>
    %74 = vector.shape_cast %73 : vector<8x8xf32> to vector<8x8x1xf32>
    %75 = tpu.reciprocal %74 {approx = true} : vector<8x8x1xf32> -> vector<8x8x1xf32>
    %76 = vector.broadcast %75 : vector<8x8x1xf32> to vector<8x8x8xf32>
    %77 = arith.mulf %72, %76 : vector<8x8x8xf32>
    %78 = arith.truncf %77 : vector<8x8x8xf32> to vector<8x8x8xbf16>
    %79 = arith.truncf %62 : vector<8x8x8xf32> to vector<8x8x8xbf16>
    "tpu.trace_start"() <{level = 10 : i32, message = "gqk,gkd->gqd"}> : () -> ()
    %cst_19 = arith.constant dense<0.000000e+00> : vector<8x8x8xf32>
    %80 = tpu.matmul %78, %79, %cst_19 {dimension_numbers = #tpu.dot_dimension_numbers<[2], [1], [1], [2], [0, 0, 0, 1, 1, 2], [0], [0]>} : vector<8x8x8xbf16>, vector<8x8x8xbf16>, vector<8x8x8xf32> -> vector<8x8x8xf32>
    "tpu.trace_stop"() : () -> ()
    %81 = vector.shape_cast %80 : vector<8x8x8xf32> to vector<64x8xf32>
    %82 = vector.extract_strided_slice %6 {offsets = [0, 24], sizes = [64, 8], strides = [1, 1]} : vector<64x96xf32> to vector<64x8xf32>
    %83 = vector.shape_cast %82 : vector<64x8xf32> to vector<8x8x8xf32>
    %84 = vector.extract_strided_slice %6 {offsets = [0, 56], sizes = [64, 8], strides = [1, 1]} : vector<64x96xf32> to vector<64x8xf32>
    %85 = vector.shape_cast %84 : vector<64x8xf32> to vector<8x8x8xf32>
    %86 = vector.extract_strided_slice %6 {offsets = [0, 88], sizes = [64, 8], strides = [1, 1]} : vector<64x96xf32> to vector<64x8xf32>
    %87 = vector.shape_cast %86 : vector<64x8xf32> to vector<8x8x8xf32>
    %88 = arith.truncf %83 : vector<8x8x8xf32> to vector<8x8x8xbf16>
    %89 = arith.truncf %85 : vector<8x8x8xf32> to vector<8x8x8xbf16>
    "tpu.trace_start"() <{level = 10 : i32, message = "gqd,gkd->gqk"}> : () -> ()
    %cst_20 = arith.constant dense<0.000000e+00> : vector<8x8x8xf32>
    %90 = tpu.matmul %88, %89, %cst_20 {dimension_numbers = #tpu.dot_dimension_numbers<[2], [2], [1], [1], [0, 0, 0, 1, 1, 1], [0], [0]>} : vector<8x8x8xbf16>, vector<8x8x8xbf16>, vector<8x8x8xf32> -> vector<8x8x8xf32>
    "tpu.trace_stop"() : () -> ()
    %cst_21 = arith.constant 0.353553385 : f32
    %91 = vector.broadcast %cst_21 : f32 to vector<8x8x8xf32>
    %92 = arith.mulf %90, %91 : vector<8x8x8xf32>
    %cst_22 = arith.constant dense<0xFF800000> : vector<8x8xf32>
    %93 = vector.multi_reduction <maximumf>, %92, %cst_22 [2] : vector<8x8x8xf32> to vector<8x8xf32>
    %94 = vector.shape_cast %93 : vector<8x8xf32> to vector<8x8x1xf32>
    %95 = vector.broadcast %94 : vector<8x8x1xf32> to vector<8x8x8xf32>
    %96 = arith.subf %92, %95 : vector<8x8x8xf32>
    %97 = math.exp %96 : vector<8x8x8xf32>
    %cst_23 = arith.constant dense<0.000000e+00> : vector<8x8xf32>
    %98 = vector.multi_reduction <add>, %97, %cst_23 [2] : vector<8x8x8xf32> to vector<8x8xf32>
    %99 = vector.shape_cast %98 : vector<8x8xf32> to vector<8x8x1xf32>
    %100 = tpu.reciprocal %99 {approx = true} : vector<8x8x1xf32> -> vector<8x8x1xf32>
    %101 = vector.broadcast %100 : vector<8x8x1xf32> to vector<8x8x8xf32>
    %102 = arith.mulf %97, %101 : vector<8x8x8xf32>
    %103 = arith.truncf %102 : vector<8x8x8xf32> to vector<8x8x8xbf16>
    %104 = arith.truncf %87 : vector<8x8x8xf32> to vector<8x8x8xbf16>
    "tpu.trace_start"() <{level = 10 : i32, message = "gqk,gkd->gqd"}> : () -> ()
    %cst_24 = arith.constant dense<0.000000e+00> : vector<8x8x8xf32>
    %105 = tpu.matmul %103, %104, %cst_24 {dimension_numbers = #tpu.dot_dimension_numbers<[2], [1], [1], [2], [0, 0, 0, 1, 1, 2], [0], [0]>} : vector<8x8x8xbf16>, vector<8x8x8xbf16>, vector<8x8x8xf32> -> vector<8x8x8xf32>
    "tpu.trace_stop"() : () -> ()
    %106 = vector.shape_cast %105 : vector<8x8x8xf32> to vector<64x8xf32>
    %107 = tpu.concatenate %31, %56, %81, %106 in 1 : vector<64x8xf32>, vector<64x8xf32>, vector<64x8xf32>, vector<64x8xf32> -> vector<64x32xf32>
    %108 = arith.truncf %107 : vector<64x32xf32> to vector<64x32xbf16>
    %c0_25 = arith.constant 0 : index
    %c0_26 = arith.constant 0 : index
    %109 = vector.load %arg4[%c0_25, %c0_26] : memref<32x32xbf16, #tpu.memory_space<vmem>>, vector<32x32xbf16>
    %cst_27 = arith.constant dense<0.000000e+00> : vector<64x32xf32>
    %110 = tpu.matmul %108, %109, %cst_27 {dimension_numbers = #tpu.dot_dimension_numbers<[1], [0], [0], [1], [0, 0, 1, 1], [], []>} : vector<64x32xbf16>, vector<32x32xbf16>, vector<64x32xf32> -> vector<64x32xf32>
    %c0_28 = arith.constant 0 : index
    %c0_29 = arith.constant 0 : index
    %111 = vector.load %arg5[%c0_28, %c0_29] : memref<1x32xf32, #tpu.memory_space<vmem>>, vector<1x32xf32>
    %112 = vector.broadcast %111 : vector<1x32xf32> to vector<64x32xf32>
    %113 = arith.addf %110, %112 : vector<64x32xf32>
    %114 = arith.addf %0, %113 : vector<64x32xf32>
    %c0_30 = arith.constant 0 : index
    %c0_31 = arith.constant 0 : index
    %115 = vector.load %arg6[%c0_30, %c0_31] : memref<1x32xf32, #tpu.memory_space<vmem>>, vector<1x32xf32>
    %c0_32 = arith.constant 0 : index
    %c0_33 = arith.constant 0 : index
    %116 = vector.load %arg7[%c0_32, %c0_33] : memref<1x32xf32, #tpu.memory_space<vmem>>, vector<1x32xf32>
    %cst_34 = arith.constant dense<0.000000e+00> : vector<64xf32>
    %117 = vector.multi_reduction <add>, %114, %cst_34 [1] : vector<64x32xf32> to vector<64xf32>
    %118 = vector.shape_cast %117 : vector<64xf32> to vector<64x1xf32>
    %cst_35 = arith.constant 3.200000e+01 : f32
    %119 = vector.broadcast %cst_35 : f32 to vector<64x1xf32>
    %120 = arith.divf %118, %119 : vector<64x1xf32>
    %121 = vector.broadcast %120 : vector<64x1xf32> to vector<64x32xf32>
    %122 = arith.subf %114, %121 : vector<64x32xf32>
    %123 = arith.mulf %122, %122 : vector<64x32xf32>
    %cst_36 = arith.constant dense<0.000000e+00> : vector<64xf32>
    %124 = vector.multi_reduction <add>, %123, %cst_36 [1] : vector<64x32xf32> to vector<64xf32>
    %125 = vector.shape_cast %124 : vector<64xf32> to vector<64x1xf32>
    %cst_37 = arith.constant 3.200000e+01 : f32
    %126 = vector.broadcast %cst_37 : f32 to vector<64x1xf32>
    %127 = arith.divf %125, %126 : vector<64x1xf32>
    %cst_38 = arith.constant 9.99999974E-6 : f32
    %128 = vector.broadcast %cst_38 : f32 to vector<64x1xf32>
    %129 = arith.addf %127, %128 : vector<64x1xf32>
    %130 = math.rsqrt %129 : vector<64x1xf32>
    %131 = vector.broadcast %130 : vector<64x1xf32> to vector<64x32xf32>
    %132 = arith.mulf %122, %131 : vector<64x32xf32>
    %133 = vector.broadcast %115 : vector<1x32xf32> to vector<64x32xf32>
    %134 = arith.mulf %132, %133 : vector<64x32xf32>
    %135 = vector.broadcast %116 : vector<1x32xf32> to vector<64x32xf32>
    %136 = arith.addf %134, %135 : vector<64x32xf32>
    %c0_39 = arith.constant 0 : index
    %c0_40 = arith.constant 0 : index
    %137 = vector.load %arg8[%c0_39, %c0_40] : memref<64x32xf32, #tpu.memory_space<vmem>>, vector<64x32xf32>
    tpu.vector_store %arg8[%c0_39, %c0_40], %136 {strides = array<i32>} : memref<64x32xf32, #tpu.memory_space<vmem>>, vector<64x32xf32>,
    return
  }
  func.func @transform_0(%arg0: i32) -> (i32, i32) {
    %c0_i32 = arith.constant 0 : i32
    %c0_i32_0 = arith.constant 0 : i32
    return %arg0, %c0_i32 : i32, i32
  }
  func.func @transform_1(%arg0: i32) -> (i32, i32) {
    %c0_i32 = arith.constant 0 : i32
    %c0_i32_0 = arith.constant 0 : i32
    %c0_i32_1 = arith.constant 0 : i32
    return %c0_i32, %c0_i32_0 : i32, i32
  }
  func.func @transform_2(%arg0: i32) -> (i32, i32) {
    %c0_i32 = arith.constant 0 : i32
    %c0_i32_0 = arith.constant 0 : i32
    %c0_i32_1 = arith.constant 0 : i32
    return %c0_i32, %c0_i32_0 : i32, i32
  }
  func.func @transform_3(%arg0: i32) -> (i32, i32) {
    %c0_i32 = arith.constant 0 : i32
    %c0_i32_0 = arith.constant 0 : i32
    %c0_i32_1 = arith.constant 0 : i32
    return %c0_i32, %c0_i32_0 : i32, i32
  }
  func.func @transform_4(%arg0: i32) -> (i32, i32) {
    %c0_i32 = arith.constant 0 : i32
    %c0_i32_0 = arith.constant 0 : i32
    %c0_i32_1 = arith.constant 0 : i32
    return %c0_i32, %c0_i32_0 : i32, i32
  }
  func.func @transform_5(%arg0: i32) -> (i32, i32) {
    %c0_i32 = arith.constant 0 : i32
    %c0_i32_0 = arith.constant 0 : i32
    %c0_i32_1 = arith.constant 0 : i32
    return %c0_i32, %c0_i32_0 : i32, i32
  }
  func.func @transform_6(%arg0: i32) -> (i32, i32) {
    %c0_i32 = arith.constant 0 : i32
    %c0_i32_0 = arith.constant 0 : i32
    %c0_i32_1 = arith.constant 0 : i32
    return %c0_i32, %c0_i32_0 : i32, i32
  }
  func.func @transform_7(%arg0: i32) -> (i32, i32) {
    %c0_i32 = arith.constant 0 : i32
    %c0_i32_0 = arith.constant 0 : i32
    return %arg0, %c0_i32 : i32, i32
  }
}

module attributes {stable_mosaic.version = 11 : i64} {
  func.func @_attn_ln_kernel(%arg0: i32, %arg1: memref<64x32xf32, #tpu.memory_space<vmem>>, %arg2: memref<32x96xbf16, #tpu.memory_space<vmem>>, %arg3: memref<1x96xf32, #tpu.memory_space<vmem>>, %arg4: memref<32x32xbf16, #tpu.memory_space<vmem>>, %arg5: memref<1x32xf32, #tpu.memory_space<vmem>>, %arg6: memref<1x32xf32, #tpu.memory_space<vmem>>, %arg7: memref<1x32xf32, #tpu.memory_space<vmem>>, %arg8: memref<64x32xf32, #tpu.memory_space<vmem>>) attributes {dimension_semantics = [#tpu.dimension_semantics<parallel>], iteration_bounds = array<i64: 1>, scalar_prefetch = 0 : i64, scratch_operands = 0 : i64, tpu.core_type = #tpu.core_type<tc>, window_params = [{transform_indices = @transform_0, window_bounds = array<i64: 64, 32>}, {pipeline_mode = #tpu.pipeline_mode<synchronous>, transform_indices = @transform_1, window_bounds = array<i64: 32, 96>}, {pipeline_mode = #tpu.pipeline_mode<synchronous>, transform_indices = @transform_2, window_bounds = array<i64: 1, 96>}, {pipeline_mode = #tpu.pipeline_mode<synchronous>, transform_indices = @transform_3, window_bounds = array<i64: 32, 32>}, {pipeline_mode = #tpu.pipeline_mode<synchronous>, transform_indices = @transform_4, window_bounds = array<i64: 1, 32>}, {pipeline_mode = #tpu.pipeline_mode<synchronous>, transform_indices = @transform_5, window_bounds = array<i64: 1, 32>}, {pipeline_mode = #tpu.pipeline_mode<synchronous>, transform_indices = @transform_6, window_bounds = array<i64: 1, 32>}, {transform_indices = @transform_7, window_bounds = array<i64: 64, 32>}]} {
    %c0 = arith.constant 0 : index
    %c0_0 = arith.constant 0 : index
    %0 = vector.load %arg1[%c0, %c0_0] : memref<64x32xf32, #tpu.memory_space<vmem>>, vector<64x32xf32>
    %1 = arith.truncf %0 : vector<64x32xf32> to vector<64x32xbf16>
    %c0_1 = arith.constant 0 : index
    %c0_2 = arith.constant 0 : index
    %2 = vector.load %arg2[%c0_1, %c0_2] : memref<32x96xbf16, #tpu.memory_space<vmem>>, vector<32x96xbf16>
    %cst = arith.constant dense<0.000000e+00> : vector<64x96xf32>
    %3 = tpu.matmul %1, %2, %cst {dimension_numbers = #tpu.dot_dimension_numbers<[1], [0], [0], [1], [0, 0, 1, 1], [], []>} : vector<64x32xbf16>, vector<32x96xbf16>, vector<64x96xf32> -> vector<64x96xf32>
    %c0_3 = arith.constant 0 : index
    %c0_4 = arith.constant 0 : index
    %4 = vector.load %arg3[%c0_3, %c0_4] : memref<1x96xf32, #tpu.memory_space<vmem>>, vector<1x96xf32>
    %5 = vector.broadcast %4 : vector<1x96xf32> to vector<64x96xf32>
    %6 = arith.addf %3, %5 : vector<64x96xf32>
    %7 = vector.extract_strided_slice %6 {offsets = [0, 0], sizes = [64, 8], strides = [1, 1]} : vector<64x96xf32> to vector<64x8xf32>
    %8 = vector.shape_cast %7 : vector<64x8xf32> to vector<16x4x8xf32>
    %9 = vector.extract_strided_slice %6 {offsets = [0, 32], sizes = [64, 8], strides = [1, 1]} : vector<64x96xf32> to vector<64x8xf32>
    %10 = vector.shape_cast %9 : vector<64x8xf32> to vector<16x4x8xf32>
    %11 = vector.extract_strided_slice %6 {offsets = [0, 64], sizes = [64, 8], strides = [1, 1]} : vector<64x96xf32> to vector<64x8xf32>
    %12 = vector.shape_cast %11 : vector<64x8xf32> to vector<16x4x8xf32>
    %13 = arith.truncf %8 : vector<16x4x8xf32> to vector<16x4x8xbf16>
    %14 = arith.truncf %10 : vector<16x4x8xf32> to vector<16x4x8xbf16>
    "tpu.trace_start"() <{level = 10 : i32, message = "gqd,gkd->gqk"}> : () -> ()
    %cst_5 = arith.constant dense<0.000000e+00> : vector<16x4x4xf32>
    %15 = tpu.matmul %13, %14, %cst_5 {dimension_numbers = #tpu.dot_dimension_numbers<[2], [2], [1], [1], [0, 0, 0, 1, 1, 1], [0], [0]>} : vector<16x4x8xbf16>, vector<16x4x8xbf16>, vector<16x4x4xf32> -> vector<16x4x4xf32>
    "tpu.trace_stop"() : () -> ()
    %cst_6 = arith.constant 0.353553385 : f32
    %16 = vector.broadcast %cst_6 : f32 to vector<16x4x4xf32>
    %17 = arith.mulf %15, %16 : vector<16x4x4xf32>
    %cst_7 = arith.constant dense<0xFF800000> : vector<16x4xf32>
    %18 = vector.multi_reduction <maximumf>, %17, %cst_7 [2] : vector<16x4x4xf32> to vector<16x4xf32>
    %19 = vector.shape_cast %18 : vector<16x4xf32> to vector<16x4x1xf32>
    %20 = vector.broadcast %19 : vector<16x4x1xf32> to vector<16x4x4xf32>
    %21 = arith.subf %17, %20 : vector<16x4x4xf32>
    %22 = math.exp %21 : vector<16x4x4xf32>
    %cst_8 = arith.constant dense<0.000000e+00> : vector<16x4xf32>
    %23 = vector.multi_reduction <add>, %22, %cst_8 [2] : vector<16x4x4xf32> to vector<16x4xf32>
    %24 = vector.shape_cast %23 : vector<16x4xf32> to vector<16x4x1xf32>
    %25 = tpu.reciprocal %24 {approx = true} : vector<16x4x1xf32> -> vector<16x4x1xf32>
    %26 = vector.broadcast %25 : vector<16x4x1xf32> to vector<16x4x4xf32>
    %27 = arith.mulf %22, %26 : vector<16x4x4xf32>
    %28 = arith.truncf %27 : vector<16x4x4xf32> to vector<16x4x4xbf16>
    %29 = arith.truncf %12 : vector<16x4x8xf32> to vector<16x4x8xbf16>
    "tpu.trace_start"() <{level = 10 : i32, message = "gqk,gkd->gqd"}> : () -> ()
    %cst_9 = arith.constant dense<0.000000e+00> : vector<16x4x8xf32>
    %30 = tpu.matmul %28, %29, %cst_9 {dimension_numbers = #tpu.dot_dimension_numbers<[2], [1], [1], [2], [0, 0, 0, 1, 1, 2], [0], [0]>} : vector<16x4x4xbf16>, vector<16x4x8xbf16>, vector<16x4x8xf32> -> vector<16x4x8xf32>
    "tpu.trace_stop"() : () -> ()
    %31 = vector.shape_cast %30 : vector<16x4x8xf32> to vector<64x8xf32>
    %32 = vector.extract_strided_slice %6 {offsets = [0, 8], sizes = [64, 8], strides = [1, 1]} : vector<64x96xf32> to vector<64x8xf32>
    %33 = vector.shape_cast %32 : vector<64x8xf32> to vector<16x4x8xf32>
    %34 = vector.extract_strided_slice %6 {offsets = [0, 40], sizes = [64, 8], strides = [1, 1]} : vector<64x96xf32> to vector<64x8xf32>
    %35 = vector.shape_cast %34 : vector<64x8xf32> to vector<16x4x8xf32>
    %36 = vector.extract_strided_slice %6 {offsets = [0, 72], sizes = [64, 8], strides = [1, 1]} : vector<64x96xf32> to vector<64x8xf32>
    %37 = vector.shape_cast %36 : vector<64x8xf32> to vector<16x4x8xf32>
    %38 = arith.truncf %33 : vector<16x4x8xf32> to vector<16x4x8xbf16>
    %39 = arith.truncf %35 : vector<16x4x8xf32> to vector<16x4x8xbf16>
    "tpu.trace_start"() <{level = 10 : i32, message = "gqd,gkd->gqk"}> : () -> ()
    %cst_10 = arith.constant dense<0.000000e+00> : vector<16x4x4xf32>
    %40 = tpu.matmul %38, %39, %cst_10 {dimension_numbers = #tpu.dot_dimension_numbers<[2], [2], [1], [1], [0, 0, 0, 1, 1, 1], [0], [0]>} : vector<16x4x8xbf16>, vector<16x4x8xbf16>, vector<16x4x4xf32> -> vector<16x4x4xf32>
    "tpu.trace_stop"() : () -> ()
    %cst_11 = arith.constant 0.353553385 : f32
    %41 = vector.broadcast %cst_11 : f32 to vector<16x4x4xf32>
    %42 = arith.mulf %40, %41 : vector<16x4x4xf32>
    %cst_12 = arith.constant dense<0xFF800000> : vector<16x4xf32>
    %43 = vector.multi_reduction <maximumf>, %42, %cst_12 [2] : vector<16x4x4xf32> to vector<16x4xf32>
    %44 = vector.shape_cast %43 : vector<16x4xf32> to vector<16x4x1xf32>
    %45 = vector.broadcast %44 : vector<16x4x1xf32> to vector<16x4x4xf32>
    %46 = arith.subf %42, %45 : vector<16x4x4xf32>
    %47 = math.exp %46 : vector<16x4x4xf32>
    %cst_13 = arith.constant dense<0.000000e+00> : vector<16x4xf32>
    %48 = vector.multi_reduction <add>, %47, %cst_13 [2] : vector<16x4x4xf32> to vector<16x4xf32>
    %49 = vector.shape_cast %48 : vector<16x4xf32> to vector<16x4x1xf32>
    %50 = tpu.reciprocal %49 {approx = true} : vector<16x4x1xf32> -> vector<16x4x1xf32>
    %51 = vector.broadcast %50 : vector<16x4x1xf32> to vector<16x4x4xf32>
    %52 = arith.mulf %47, %51 : vector<16x4x4xf32>
    %53 = arith.truncf %52 : vector<16x4x4xf32> to vector<16x4x4xbf16>
    %54 = arith.truncf %37 : vector<16x4x8xf32> to vector<16x4x8xbf16>
    "tpu.trace_start"() <{level = 10 : i32, message = "gqk,gkd->gqd"}> : () -> ()
    %cst_14 = arith.constant dense<0.000000e+00> : vector<16x4x8xf32>
    %55 = tpu.matmul %53, %54, %cst_14 {dimension_numbers = #tpu.dot_dimension_numbers<[2], [1], [1], [2], [0, 0, 0, 1, 1, 2], [0], [0]>} : vector<16x4x4xbf16>, vector<16x4x8xbf16>, vector<16x4x8xf32> -> vector<16x4x8xf32>
    "tpu.trace_stop"() : () -> ()
    %56 = vector.shape_cast %55 : vector<16x4x8xf32> to vector<64x8xf32>
    %57 = vector.extract_strided_slice %6 {offsets = [0, 16], sizes = [64, 8], strides = [1, 1]} : vector<64x96xf32> to vector<64x8xf32>
    %58 = vector.shape_cast %57 : vector<64x8xf32> to vector<16x4x8xf32>
    %59 = vector.extract_strided_slice %6 {offsets = [0, 48], sizes = [64, 8], strides = [1, 1]} : vector<64x96xf32> to vector<64x8xf32>
    %60 = vector.shape_cast %59 : vector<64x8xf32> to vector<16x4x8xf32>
    %61 = vector.extract_strided_slice %6 {offsets = [0, 80], sizes = [64, 8], strides = [1, 1]} : vector<64x96xf32> to vector<64x8xf32>
    %62 = vector.shape_cast %61 : vector<64x8xf32> to vector<16x4x8xf32>
    %63 = arith.truncf %58 : vector<16x4x8xf32> to vector<16x4x8xbf16>
    %64 = arith.truncf %60 : vector<16x4x8xf32> to vector<16x4x8xbf16>
    "tpu.trace_start"() <{level = 10 : i32, message = "gqd,gkd->gqk"}> : () -> ()
    %cst_15 = arith.constant dense<0.000000e+00> : vector<16x4x4xf32>
    %65 = tpu.matmul %63, %64, %cst_15 {dimension_numbers = #tpu.dot_dimension_numbers<[2], [2], [1], [1], [0, 0, 0, 1, 1, 1], [0], [0]>} : vector<16x4x8xbf16>, vector<16x4x8xbf16>, vector<16x4x4xf32> -> vector<16x4x4xf32>
    "tpu.trace_stop"() : () -> ()
    %cst_16 = arith.constant 0.353553385 : f32
    %66 = vector.broadcast %cst_16 : f32 to vector<16x4x4xf32>
    %67 = arith.mulf %65, %66 : vector<16x4x4xf32>
    %cst_17 = arith.constant dense<0xFF800000> : vector<16x4xf32>
    %68 = vector.multi_reduction <maximumf>, %67, %cst_17 [2] : vector<16x4x4xf32> to vector<16x4xf32>
    %69 = vector.shape_cast %68 : vector<16x4xf32> to vector<16x4x1xf32>
    %70 = vector.broadcast %69 : vector<16x4x1xf32> to vector<16x4x4xf32>
    %71 = arith.subf %67, %70 : vector<16x4x4xf32>
    %72 = math.exp %71 : vector<16x4x4xf32>
    %cst_18 = arith.constant dense<0.000000e+00> : vector<16x4xf32>
    %73 = vector.multi_reduction <add>, %72, %cst_18 [2] : vector<16x4x4xf32> to vector<16x4xf32>
    %74 = vector.shape_cast %73 : vector<16x4xf32> to vector<16x4x1xf32>
    %75 = tpu.reciprocal %74 {approx = true} : vector<16x4x1xf32> -> vector<16x4x1xf32>
    %76 = vector.broadcast %75 : vector<16x4x1xf32> to vector<16x4x4xf32>
    %77 = arith.mulf %72, %76 : vector<16x4x4xf32>
    %78 = arith.truncf %77 : vector<16x4x4xf32> to vector<16x4x4xbf16>
    %79 = arith.truncf %62 : vector<16x4x8xf32> to vector<16x4x8xbf16>
    "tpu.trace_start"() <{level = 10 : i32, message = "gqk,gkd->gqd"}> : () -> ()
    %cst_19 = arith.constant dense<0.000000e+00> : vector<16x4x8xf32>
    %80 = tpu.matmul %78, %79, %cst_19 {dimension_numbers = #tpu.dot_dimension_numbers<[2], [1], [1], [2], [0, 0, 0, 1, 1, 2], [0], [0]>} : vector<16x4x4xbf16>, vector<16x4x8xbf16>, vector<16x4x8xf32> -> vector<16x4x8xf32>
    "tpu.trace_stop"() : () -> ()
    %81 = vector.shape_cast %80 : vector<16x4x8xf32> to vector<64x8xf32>
    %82 = vector.extract_strided_slice %6 {offsets = [0, 24], sizes = [64, 8], strides = [1, 1]} : vector<64x96xf32> to vector<64x8xf32>
    %83 = vector.shape_cast %82 : vector<64x8xf32> to vector<16x4x8xf32>
    %84 = vector.extract_strided_slice %6 {offsets = [0, 56], sizes = [64, 8], strides = [1, 1]} : vector<64x96xf32> to vector<64x8xf32>
    %85 = vector.shape_cast %84 : vector<64x8xf32> to vector<16x4x8xf32>
    %86 = vector.extract_strided_slice %6 {offsets = [0, 88], sizes = [64, 8], strides = [1, 1]} : vector<64x96xf32> to vector<64x8xf32>
    %87 = vector.shape_cast %86 : vector<64x8xf32> to vector<16x4x8xf32>
    %88 = arith.truncf %83 : vector<16x4x8xf32> to vector<16x4x8xbf16>
    %89 = arith.truncf %85 : vector<16x4x8xf32> to vector<16x4x8xbf16>
    "tpu.trace_start"() <{level = 10 : i32, message = "gqd,gkd->gqk"}> : () -> ()
    %cst_20 = arith.constant dense<0.000000e+00> : vector<16x4x4xf32>
    %90 = tpu.matmul %88, %89, %cst_20 {dimension_numbers = #tpu.dot_dimension_numbers<[2], [2], [1], [1], [0, 0, 0, 1, 1, 1], [0], [0]>} : vector<16x4x8xbf16>, vector<16x4x8xbf16>, vector<16x4x4xf32> -> vector<16x4x4xf32>
    "tpu.trace_stop"() : () -> ()
    %cst_21 = arith.constant 0.353553385 : f32
    %91 = vector.broadcast %cst_21 : f32 to vector<16x4x4xf32>
    %92 = arith.mulf %90, %91 : vector<16x4x4xf32>
    %cst_22 = arith.constant dense<0xFF800000> : vector<16x4xf32>
    %93 = vector.multi_reduction <maximumf>, %92, %cst_22 [2] : vector<16x4x4xf32> to vector<16x4xf32>
    %94 = vector.shape_cast %93 : vector<16x4xf32> to vector<16x4x1xf32>
    %95 = vector.broadcast %94 : vector<16x4x1xf32> to vector<16x4x4xf32>
    %96 = arith.subf %92, %95 : vector<16x4x4xf32>
    %97 = math.exp %96 : vector<16x4x4xf32>
    %cst_23 = arith.constant dense<0.000000e+00> : vector<16x4xf32>
    %98 = vector.multi_reduction <add>, %97, %cst_23 [2] : vector<16x4x4xf32> to vector<16x4xf32>
    %99 = vector.shape_cast %98 : vector<16x4xf32> to vector<16x4x1xf32>
    %100 = tpu.reciprocal %99 {approx = true} : vector<16x4x1xf32> -> vector<16x4x1xf32>
    %101 = vector.broadcast %100 : vector<16x4x1xf32> to vector<16x4x4xf32>
    %102 = arith.mulf %97, %101 : vector<16x4x4xf32>
    %103 = arith.truncf %102 : vector<16x4x4xf32> to vector<16x4x4xbf16>
    %104 = arith.truncf %87 : vector<16x4x8xf32> to vector<16x4x8xbf16>
    "tpu.trace_start"() <{level = 10 : i32, message = "gqk,gkd->gqd"}> : () -> ()
    %cst_24 = arith.constant dense<0.000000e+00> : vector<16x4x8xf32>
    %105 = tpu.matmul %103, %104, %cst_24 {dimension_numbers = #tpu.dot_dimension_numbers<[2], [1], [1], [2], [0, 0, 0, 1, 1, 2], [0], [0]>} : vector<16x4x4xbf16>, vector<16x4x8xbf16>, vector<16x4x8xf32> -> vector<16x4x8xf32>
    "tpu.trace_stop"() : () -> ()
    %106 = vector.shape_cast %105 : vector<16x4x8xf32> to vector<64x8xf32>
    %107 = tpu.concatenate %31, %56, %81, %106 in 1 : vector<64x8xf32>, vector<64x8xf32>, vector<64x8xf32>, vector<64x8xf32> -> vector<64x32xf32>
    %108 = arith.truncf %107 : vector<64x32xf32> to vector<64x32xbf16>
    %c0_25 = arith.constant 0 : index
    %c0_26 = arith.constant 0 : index
    %109 = vector.load %arg4[%c0_25, %c0_26] : memref<32x32xbf16, #tpu.memory_space<vmem>>, vector<32x32xbf16>
    %cst_27 = arith.constant dense<0.000000e+00> : vector<64x32xf32>
    %110 = tpu.matmul %108, %109, %cst_27 {dimension_numbers = #tpu.dot_dimension_numbers<[1], [0], [0], [1], [0, 0, 1, 1], [], []>} : vector<64x32xbf16>, vector<32x32xbf16>, vector<64x32xf32> -> vector<64x32xf32>
    %c0_28 = arith.constant 0 : index
    %c0_29 = arith.constant 0 : index
    %111 = vector.load %arg5[%c0_28, %c0_29] : memref<1x32xf32, #tpu.memory_space<vmem>>, vector<1x32xf32>
    %112 = vector.broadcast %111 : vector<1x32xf32> to vector<64x32xf32>
    %113 = arith.addf %110, %112 : vector<64x32xf32>
    %114 = arith.addf %0, %113 : vector<64x32xf32>
    %c0_30 = arith.constant 0 : index
    %c0_31 = arith.constant 0 : index
    %115 = vector.load %arg6[%c0_30, %c0_31] : memref<1x32xf32, #tpu.memory_space<vmem>>, vector<1x32xf32>
    %c0_32 = arith.constant 0 : index
    %c0_33 = arith.constant 0 : index
    %116 = vector.load %arg7[%c0_32, %c0_33] : memref<1x32xf32, #tpu.memory_space<vmem>>, vector<1x32xf32>
    %cst_34 = arith.constant dense<0.000000e+00> : vector<64xf32>
    %117 = vector.multi_reduction <add>, %114, %cst_34 [1] : vector<64x32xf32> to vector<64xf32>
    %118 = vector.shape_cast %117 : vector<64xf32> to vector<64x1xf32>
    %cst_35 = arith.constant 3.200000e+01 : f32
    %119 = vector.broadcast %cst_35 : f32 to vector<64x1xf32>
    %120 = arith.divf %118, %119 : vector<64x1xf32>
    %121 = vector.broadcast %120 : vector<64x1xf32> to vector<64x32xf32>
    %122 = arith.subf %114, %121 : vector<64x32xf32>
    %123 = arith.mulf %122, %122 : vector<64x32xf32>
    %cst_36 = arith.constant dense<0.000000e+00> : vector<64xf32>
    %124 = vector.multi_reduction <add>, %123, %cst_36 [1] : vector<64x32xf32> to vector<64xf32>
    %125 = vector.shape_cast %124 : vector<64xf32> to vector<64x1xf32>
    %cst_37 = arith.constant 3.200000e+01 : f32
    %126 = vector.broadcast %cst_37 : f32 to vector<64x1xf32>
    %127 = arith.divf %125, %126 : vector<64x1xf32>
    %cst_38 = arith.constant 9.99999974E-6 : f32
    %128 = vector.broadcast %cst_38 : f32 to vector<64x1xf32>
    %129 = arith.addf %127, %128 : vector<64x1xf32>
    %130 = math.rsqrt %129 : vector<64x1xf32>
    %131 = vector.broadcast %130 : vector<64x1xf32> to vector<64x32xf32>
    %132 = arith.mulf %122, %131 : vector<64x32xf32>
    %133 = vector.broadcast %115 : vector<1x32xf32> to vector<64x32xf32>
    %134 = arith.mulf %132, %133 : vector<64x32xf32>
    %135 = vector.broadcast %116 : vector<1x32xf32> to vector<64x32xf32>
    %136 = arith.addf %134, %135 : vector<64x32xf32>
    %c0_39 = arith.constant 0 : index
    %c0_40 = arith.constant 0 : index
    %137 = vector.load %arg8[%c0_39, %c0_40] : memref<64x32xf32, #tpu.memory_space<vmem>>, vector<64x32xf32>
    tpu.vector_store %arg8[%c0_39, %c0_40], %136 {strides = array<i32>} : memref<64x32xf32, #tpu.memory_space<vmem>>, vector<64x32xf32>,
    return
  }
  func.func @transform_0(%arg0: i32) -> (i32, i32) {
    %c0_i32 = arith.constant 0 : i32
    %c0_i32_0 = arith.constant 0 : i32
    return %arg0, %c0_i32 : i32, i32
  }
  func.func @transform_1(%arg0: i32) -> (i32, i32) {
    %c0_i32 = arith.constant 0 : i32
    %c0_i32_0 = arith.constant 0 : i32
    %c0_i32_1 = arith.constant 0 : i32
    return %c0_i32, %c0_i32_0 : i32, i32
  }
  func.func @transform_2(%arg0: i32) -> (i32, i32) {
    %c0_i32 = arith.constant 0 : i32
    %c0_i32_0 = arith.constant 0 : i32
    %c0_i32_1 = arith.constant 0 : i32
    return %c0_i32, %c0_i32_0 : i32, i32
  }
  func.func @transform_3(%arg0: i32) -> (i32, i32) {
    %c0_i32 = arith.constant 0 : i32
    %c0_i32_0 = arith.constant 0 : i32
    %c0_i32_1 = arith.constant 0 : i32
    return %c0_i32, %c0_i32_0 : i32, i32
  }
  func.func @transform_4(%arg0: i32) -> (i32, i32) {
    %c0_i32 = arith.constant 0 : i32
    %c0_i32_0 = arith.constant 0 : i32
    %c0_i32_1 = arith.constant 0 : i32
    return %c0_i32, %c0_i32_0 : i32, i32
  }
  func.func @transform_5(%arg0: i32) -> (i32, i32) {
    %c0_i32 = arith.constant 0 : i32
    %c0_i32_0 = arith.constant 0 : i32
    %c0_i32_1 = arith.constant 0 : i32
    return %c0_i32, %c0_i32_0 : i32, i32
  }
  func.func @transform_6(%arg0: i32) -> (i32, i32) {
    %c0_i32 = arith.constant 0 : i32
    %c0_i32_0 = arith.constant 0 : i32
    %c0_i32_1 = arith.constant 0 : i32
    return %c0_i32, %c0_i32_0 : i32, i32
  }
  func.func @transform_7(%arg0: i32) -> (i32, i32) {
    %c0_i32 = arith.constant 0 : i32
    %c0_i32_0 = arith.constant 0 : i32
    return %arg0, %c0_i32 : i32, i32
  }
}

module attributes {stable_mosaic.version = 11 : i64} {
  func.func @_ffn_ln_kernel(%arg0: i32, %arg1: memref<64x32xf32, #tpu.memory_space<vmem>>, %arg2: memref<32x64xbf16, #tpu.memory_space<vmem>>, %arg3: memref<1x64xf32, #tpu.memory_space<vmem>>, %arg4: memref<64x32xbf16, #tpu.memory_space<vmem>>, %arg5: memref<1x32xf32, #tpu.memory_space<vmem>>, %arg6: memref<1x32xf32, #tpu.memory_space<vmem>>, %arg7: memref<1x32xf32, #tpu.memory_space<vmem>>, %arg8: memref<64x32xf32, #tpu.memory_space<vmem>>) attributes {dimension_semantics = [#tpu.dimension_semantics<parallel>], iteration_bounds = array<i64: 1>, scalar_prefetch = 0 : i64, scratch_operands = 0 : i64, tpu.core_type = #tpu.core_type<tc>, window_params = [{transform_indices = @transform_0, window_bounds = array<i64: 64, 32>}, {pipeline_mode = #tpu.pipeline_mode<synchronous>, transform_indices = @transform_1, window_bounds = array<i64: 32, 64>}, {pipeline_mode = #tpu.pipeline_mode<synchronous>, transform_indices = @transform_2, window_bounds = array<i64: 1, 64>}, {pipeline_mode = #tpu.pipeline_mode<synchronous>, transform_indices = @transform_3, window_bounds = array<i64: 64, 32>}, {pipeline_mode = #tpu.pipeline_mode<synchronous>, transform_indices = @transform_4, window_bounds = array<i64: 1, 32>}, {pipeline_mode = #tpu.pipeline_mode<synchronous>, transform_indices = @transform_5, window_bounds = array<i64: 1, 32>}, {pipeline_mode = #tpu.pipeline_mode<synchronous>, transform_indices = @transform_6, window_bounds = array<i64: 1, 32>}, {transform_indices = @transform_7, window_bounds = array<i64: 64, 32>}]} {
    %c0 = arith.constant 0 : index
    %c0_0 = arith.constant 0 : index
    %0 = vector.load %arg1[%c0, %c0_0] : memref<64x32xf32, #tpu.memory_space<vmem>>, vector<64x32xf32>
    %1 = arith.truncf %0 : vector<64x32xf32> to vector<64x32xbf16>
    %c0_1 = arith.constant 0 : index
    %c0_2 = arith.constant 0 : index
    %2 = vector.load %arg2[%c0_1, %c0_2] : memref<32x64xbf16, #tpu.memory_space<vmem>>, vector<32x64xbf16>
    %cst = arith.constant dense<0.000000e+00> : vector<64x64xf32>
    %3 = tpu.matmul %1, %2, %cst {dimension_numbers = #tpu.dot_dimension_numbers<[1], [0], [0], [1], [0, 0, 1, 1], [], []>} : vector<64x32xbf16>, vector<32x64xbf16>, vector<64x64xf32> -> vector<64x64xf32>
    %c0_3 = arith.constant 0 : index
    %c0_4 = arith.constant 0 : index
    %4 = vector.load %arg3[%c0_3, %c0_4] : memref<1x64xf32, #tpu.memory_space<vmem>>, vector<1x64xf32>
    %5 = vector.broadcast %4 : vector<1x64xf32> to vector<64x64xf32>
    %6 = arith.addf %3, %5 : vector<64x64xf32>
    %cst_5 = arith.constant 0.000000e+00 : f32
    %7 = vector.broadcast %cst_5 : f32 to vector<64x64xf32>
    %8 = arith.cmpf ogt, %6, %7 : vector<64x64xf32>
    %9 = math.exp %6 : vector<64x64xf32>
    %cst_6 = arith.constant 1.000000e+00 : f32
    %10 = vector.broadcast %cst_6 : f32 to vector<64x64xf32>
    %11 = arith.subf %9, %10 : vector<64x64xf32>
    %12 = arith.select %8, %6, %11 : vector<64x64xi1>, vector<64x64xf32>
    %13 = arith.truncf %12 : vector<64x64xf32> to vector<64x64xbf16>
    %c0_7 = arith.constant 0 : index
    %c0_8 = arith.constant 0 : index
    %14 = vector.load %arg4[%c0_7, %c0_8] : memref<64x32xbf16, #tpu.memory_space<vmem>>, vector<64x32xbf16>
    %cst_9 = arith.constant dense<0.000000e+00> : vector<64x32xf32>
    %15 = tpu.matmul %13, %14, %cst_9 {dimension_numbers = #tpu.dot_dimension_numbers<[1], [0], [0], [1], [0, 0, 1, 1], [], []>} : vector<64x64xbf16>, vector<64x32xbf16>, vector<64x32xf32> -> vector<64x32xf32>
    %c0_10 = arith.constant 0 : index
    %c0_11 = arith.constant 0 : index
    %16 = vector.load %arg5[%c0_10, %c0_11] : memref<1x32xf32, #tpu.memory_space<vmem>>, vector<1x32xf32>
    %17 = vector.broadcast %16 : vector<1x32xf32> to vector<64x32xf32>
    %18 = arith.addf %15, %17 : vector<64x32xf32>
    %19 = arith.addf %0, %18 : vector<64x32xf32>
    %c0_12 = arith.constant 0 : index
    %c0_13 = arith.constant 0 : index
    %20 = vector.load %arg6[%c0_12, %c0_13] : memref<1x32xf32, #tpu.memory_space<vmem>>, vector<1x32xf32>
    %c0_14 = arith.constant 0 : index
    %c0_15 = arith.constant 0 : index
    %21 = vector.load %arg7[%c0_14, %c0_15] : memref<1x32xf32, #tpu.memory_space<vmem>>, vector<1x32xf32>
    %cst_16 = arith.constant dense<0.000000e+00> : vector<64xf32>
    %22 = vector.multi_reduction <add>, %19, %cst_16 [1] : vector<64x32xf32> to vector<64xf32>
    %23 = vector.shape_cast %22 : vector<64xf32> to vector<64x1xf32>
    %cst_17 = arith.constant 3.200000e+01 : f32
    %24 = vector.broadcast %cst_17 : f32 to vector<64x1xf32>
    %25 = arith.divf %23, %24 : vector<64x1xf32>
    %26 = vector.broadcast %25 : vector<64x1xf32> to vector<64x32xf32>
    %27 = arith.subf %19, %26 : vector<64x32xf32>
    %28 = arith.mulf %27, %27 : vector<64x32xf32>
    %cst_18 = arith.constant dense<0.000000e+00> : vector<64xf32>
    %29 = vector.multi_reduction <add>, %28, %cst_18 [1] : vector<64x32xf32> to vector<64xf32>
    %30 = vector.shape_cast %29 : vector<64xf32> to vector<64x1xf32>
    %cst_19 = arith.constant 3.200000e+01 : f32
    %31 = vector.broadcast %cst_19 : f32 to vector<64x1xf32>
    %32 = arith.divf %30, %31 : vector<64x1xf32>
    %cst_20 = arith.constant 9.99999974E-6 : f32
    %33 = vector.broadcast %cst_20 : f32 to vector<64x1xf32>
    %34 = arith.addf %32, %33 : vector<64x1xf32>
    %35 = math.rsqrt %34 : vector<64x1xf32>
    %36 = vector.broadcast %35 : vector<64x1xf32> to vector<64x32xf32>
    %37 = arith.mulf %27, %36 : vector<64x32xf32>
    %38 = vector.broadcast %20 : vector<1x32xf32> to vector<64x32xf32>
    %39 = arith.mulf %37, %38 : vector<64x32xf32>
    %40 = vector.broadcast %21 : vector<1x32xf32> to vector<64x32xf32>
    %41 = arith.addf %39, %40 : vector<64x32xf32>
    %c0_21 = arith.constant 0 : index
    %c0_22 = arith.constant 0 : index
    %42 = vector.load %arg8[%c0_21, %c0_22] : memref<64x32xf32, #tpu.memory_space<vmem>>, vector<64x32xf32>
    tpu.vector_store %arg8[%c0_21, %c0_22], %41 {strides = array<i32>} : memref<64x32xf32, #tpu.memory_space<vmem>>, vector<64x32xf32>,
    return
  }
  func.func @transform_0(%arg0: i32) -> (i32, i32) {
    %c0_i32 = arith.constant 0 : i32
    %c0_i32_0 = arith.constant 0 : i32
    return %arg0, %c0_i32 : i32, i32
  }
  func.func @transform_1(%arg0: i32) -> (i32, i32) {
    %c0_i32 = arith.constant 0 : i32
    %c0_i32_0 = arith.constant 0 : i32
    %c0_i32_1 = arith.constant 0 : i32
    return %c0_i32, %c0_i32_0 : i32, i32
  }
  func.func @transform_2(%arg0: i32) -> (i32, i32) {
    %c0_i32 = arith.constant 0 : i32
    %c0_i32_0 = arith.constant 0 : i32
    %c0_i32_1 = arith.constant 0 : i32
    return %c0_i32, %c0_i32_0 : i32, i32
  }
  func.func @transform_3(%arg0: i32) -> (i32, i32) {
    %c0_i32 = arith.constant 0 : i32
    %c0_i32_0 = arith.constant 0 : i32
    %c0_i32_1 = arith.constant 0 : i32
    return %c0_i32, %c0_i32_0 : i32, i32
  }
  func.func @transform_4(%arg0: i32) -> (i32, i32) {
    %c0_i32 = arith.constant 0 : i32
    %c0_i32_0 = arith.constant 0 : i32
    %c0_i32_1 = arith.constant 0 : i32
    return %c0_i32, %c0_i32_0 : i32, i32
  }
  func.func @transform_5(%arg0: i32) -> (i32, i32) {
    %c0_i32 = arith.constant 0 : i32
    %c0_i32_0 = arith.constant 0 : i32
    %c0_i32_1 = arith.constant 0 : i32
    return %c0_i32, %c0_i32_0 : i32, i32
  }
  func.func @transform_6(%arg0: i32) -> (i32, i32) {
    %c0_i32 = arith.constant 0 : i32
    %c0_i32_0 = arith.constant 0 : i32
    %c0_i32_1 = arith.constant 0 : i32
    return %c0_i32, %c0_i32_0 : i32, i32
  }
  func.func @transform_7(%arg0: i32) -> (i32, i32) {
    %c0_i32 = arith.constant 0 : i32
    %c0_i32_0 = arith.constant 0 : i32
    return %arg0, %c0_i32 : i32, i32
  }
}

</mosaic_0001>

<llo_original>
// kernel: encoder_layer_forward.5
$region0: #{encoder_layer_forward.5}
  #allocation0 [shape = 'u32[]', space=smem, size = 0x4, offset = 0x4, fixed_abs, tag = 'smem constant byte address 0x4 - core index']
  #allocation1 [shape = 'u32[144,128]{1,0:T(1,128)}', space=vmem, size = 0x12000, scoped, tag = 'internal scratch']
  %s0 = inlined_call_operand.vmem [shape: f32[64,32], index: 0, kind: input, shape index: {}]
  %s1 = inlined_call_operand.vmem [shape: bf16[32,64], index: 1, kind: input, shape index: {}]
  %s2 = inlined_call_operand.vmem [shape: f32[1,64], index: 2, kind: input, shape index: {}]
  %s3 = inlined_call_operand.vmem [shape: bf16[64,32], index: 3, kind: input, shape index: {}]
  %s4 = inlined_call_operand.vmem [shape: f32[1,32], index: 4, kind: input, shape index: {}]
  %s5 = inlined_call_operand.vmem [shape: f32[1,32], index: 5, kind: input, shape index: {}]
  %s6 = inlined_call_operand.vmem [shape: f32[1,32], index: 6, kind: input, shape index: {}]
  %s7 = inlined_call_operand.hbm [shape: f32[64,32], index: 7, kind: output, shape index: {}]
  %s8 = sld [smem:[#allocation0]]
  $region38: #{encoder_layer_forward.5} parent=0
    _
  %s10 = ssub.s32 1, %s8
  %s11 = scalar_select 0, %s10, %s8
  $region1: #{encoder_layer_forward.5} parent=0
    #allocation2 [shape = 'u8[32768]{0}', space=vmem, size = 0x8000, scoped, tag = 'output window, operand 0, single buffered']
    #allocation3 [shape = 's32[1]{0}', space=sflag, size = 0x4, scoped, tag = 'scoped memory for encoder_layer_forward.5']
    %12 = vsyncpa [#allocation3], 0
    // Predicated region
    $region2: #{encoder_layer_forward.5} parent=1 // pred_check
      _
    $region3: #{encoder_layer_forward.5} parent=1 // pred_check_branch
      %14 = sbr.rel (0) target = $region5
    $region4: #{encoder_layer_forward.5} parent=1 // pred_region
      _
    $region5: #{encoder_layer_forward.5} parent=1 // pred_fallthru
      _
    // Predicated region
    $region6: #{encoder_layer_forward.5} parent=1 // pred_check
      _
    $region7: #{encoder_layer_forward.5} parent=1 // pred_check_branch
      %16 = sbr.rel (0) target = $region9
    $region8: #{encoder_layer_forward.5} parent=1 // pred_region
      _
    $region9: #{encoder_layer_forward.5} parent=1 // pred_fallthru
      _
    // Predicated region
    $region10: #{encoder_layer_forward.5} parent=1 // pred_check
      _
    $region11: #{encoder_layer_forward.5} parent=1 // pred_check_branch
      %18 = sbr.rel (0) target = $region13
    $region12: #{encoder_layer_forward.5} parent=1 // pred_region
      _
    $region13: #{encoder_layer_forward.5} parent=1 // pred_fallthru
      _
    // Predicated region
    $region14: #{encoder_layer_forward.5} parent=1 // pred_check
      _
    $region15: #{encoder_layer_forward.5} parent=1 // pred_check_branch
      %20 = sbr.rel (0) target = $region17
    $region16: #{encoder_layer_forward.5} parent=1 // pred_region
      _
    $region17: #{encoder_layer_forward.5} parent=1 // pred_fallthru
      _
    // Predicated region
    $region18: #{encoder_layer_forward.5} parent=1 // pred_check
      _
    $region19: #{encoder_layer_forward.5} parent=1 // pred_check_branch
      %22 = sbr.rel (0) target = $region21
    $region20: #{encoder_layer_forward.5} parent=1 // pred_region
      _
    $region21: #{encoder_layer_forward.5} parent=1 // pred_fallthru
      _
    // Predicated region
    $region22: #{encoder_layer_forward.5} parent=1 // pred_check
      _
    $region23: #{encoder_layer_forward.5} parent=1 // pred_check_branch
      %24 = sbr.rel (0) target = $region25
    $region24: #{encoder_layer_forward.5} parent=1 // pred_region
      _
    $region25: #{encoder_layer_forward.5} parent=1 // pred_fallthru
      _
    // Predicated region
    $region26: #{encoder_layer_forward.5} parent=1 // pred_check
      _
    $region27: #{encoder_layer_forward.5} parent=1 // pred_check_branch
      %26 = sbr.rel (0) target = $region29
    $region28: #{encoder_layer_forward.5} parent=1 // pred_region
      _
    $region29: #{encoder_layer_forward.5} parent=1 // pred_fallthru
      _
    %v28 = vld [vmem:[%s0] sm:$0xff]
    %v29 = vld [vmem:[%s0 + $0x8] sm:$0xff]
    %v30 = vld [vmem:[%s0 + $0x10] sm:$0xff]
    %v31 = vld [vmem:[%s0 + $0x18] sm:$0xff]
    %v32 = vld [vmem:[%s0 + $0x20] sm:$0xff]
    %v33 = vld [vmem:[%s0 + $0x28] sm:$0xff]
    %v34 = vld [vmem:[%s0 + $0x30] sm:$0xff]
    %v35 = vld [vmem:[%s0 + $0x38] sm:$0xff]
    %v36 = vpack.c.bf16 %v29, %v28
    %v37 = vpack.c.bf16 %v31, %v30
    %v38 = vpack.c.bf16 %v33, %v32
    %v39 = vpack.c.bf16 %v35, %v34
    %v40 = vld [vmem:[%s1] sm:$0xf]
    %v41 = vld [vmem:[%s1 + $0x4] sm:$0xf]
    %v42 = vld [vmem:[%s1 + $0x8] sm:$0xf]
    %v43 = vld [vmem:[%s1 + $0xc] sm:$0xf]
    %v44 = vld [vmem:[%s2] sm:$0x1]
    %v46 = vlaneseq
    %v47 = vshrl.u32 %v46, 7
    %v48 = vsub.s32 0, %v47
    %v49 = vrot.slane %v44, %v48
    %v55 = vunpack.c.l.b16 %v40
    %v56 = vunpack.c.l.b16 %v41
    %v57 = vunpack.c.l.b16 %v42
    %v58 = vunpack.c.l.b16 %v43
    %v59 = vpack.c.b16 %v56, %v55
    %v60 = vpack.c.b16 %v58, %v57
    %vm63 = vcmask 261120
    %v65 = vsel %vm63, %v36, 0
    %v68 = vsel %vm63, %v37, 0
    %v71 = vsel %vm63, %v38, 0
    %v74 = vsel %vm63, %v39, 0
    %76 = vmatprep.subr.bf16.mxu0 0
    %77 = vmatpush1.bf16.msra.mxu0 %v59
    %78 = vmatprep.subr.bf16.mxu0 0
    %79 = vmatpush1.bf16.msra.mxu0 %v60
    %80 = vmatprep.subr.bf16.mxu0 0
    %81 = vmatpush1.bf16.msra.mxu0 0
    %82 = vmatprep.subr.bf16.mxu0 0
    %83 = vmatpush1.bf16.msra.mxu0 0
    %84 = vmatprep.subr.bf16.mxu0 0
    %85 = vmatpush1.bf16.msra.mxu0 0
    %86 = vmatprep.subr.bf16.mxu0 0
    %87 = vmatpush1.bf16.msra.mxu0 0
    %88 = vmatprep.subr.bf16.mxu0 0
    %89 = vmatpush1.bf16.msra.mxu0 0
    %90 = vmatprep.subr.bf16.mxu0 0
    %91 = vmatpush1.bf16.msra.mxu0 0
    %92 = vmatprep.subr.bf16.mxu0 0
    %93 = vmatpush1.bf16.msra.mxu0 0
    %94 = vmatprep.subr.bf16.mxu0 0
    %95 = vmatpush1.bf16.msra.mxu0 0
    %96 = vmatprep.subr.bf16.mxu0 0
    %97 = vmatpush1.bf16.msra.mxu0 0
    %98 = vmatprep.subr.bf16.mxu0 0
    %99 = vmatpush1.bf16.msra.mxu0 0
    %100 = vmatprep.subr.bf16.mxu0 0
    %101 = vmatpush1.bf16.msra.mxu0 0
    %102 = vmatprep.subr.bf16.mxu0 0
    %103 = vmatpush1.bf16.msra.mxu0 0
    %104 = vmatprep.subr.bf16.mxu0 0
    %105 = vmatpush1.bf16.msra.mxu0 0
    %106 = vmatprep.subr.bf16.mxu0 0
    %107 = vmatpush1.bf16.msra.mxu0 0
    %108 = vmatprep.mubr.bf16.mxu0 0
    %109 = vmatmul.mubr.bf16.gmra.mrb[0].mxu0 %v65
    %v110 = vpop.f32.mrb[0].mxu0
    %v111 = vadd.f32 %v49, %v110
    %v112 = vpop.f32.mrb[0].mxu0
    %v113 = vpop.f32.mrb[0].mxu0
    %v114 = vadd.f32 %v49, %v113
    %v115 = vpop.f32.mrb[0].mxu0
    %116 = vmatprep.mubr.bf16.mxu0 0
    %117 = vmatmul.mubr.bf16.gmra.mrb[0].mxu0 %v68
    %v118 = vpop.f32.mrb[0].mxu0
    %v119 = vadd.f32 %v49, %v118
    %v120 = vpop.f32.mrb[0].mxu0
    %v121 = vpop.f32.mrb[0].mxu0
    %v122 = vadd.f32 %v49, %v121
    %v123 = vpop.f32.mrb[0].mxu0
    %124 = vmatprep.mubr.bf16.mxu0 0
    %125 = vmatmul.mubr.bf16.gmra.mrb[0].mxu0 %v71
    %v126 = vpop.f32.mrb[0].mxu0
    %v127 = vadd.f32 %v49, %v126
    %v128 = vpop.f32.mrb[0].mxu0
    %v129 = vpop.f32.mrb[0].mxu0
    %v130 = vadd.f32 %v49, %v129
    %v131 = vpop.f32.mrb[0].mxu0
    %132 = vmatprep.mubr.bf16.mxu0 0
    %133 = vmatmul.mubr.bf16.gmra.mrb[0].mxu0 %v74
    %v134 = vpop.f32.mrb[0].mxu0
    %v135 = vadd.f32 %v49, %v134
    %v136 = vpop.f32.mrb[0].mxu0
    %v137 = vpop.f32.mrb[0].mxu0
    %v138 = vadd.f32 %v49, %v137
    %v139 = vpop.f32.mrb[0].mxu0
    %140 = vdwg.mxu0
    %vm141 = vcmp.gt.f32.partialorder %v111, 0.0
    %vm142 = vcmp.gt.f32.partialorder %v114, 0.0
    %vm143 = vcmp.gt.f32.partialorder %v119, 0.0
    %vm144 = vcmp.gt.f32.partialorder %v122, 0.0
    %vm145 = vcmp.gt.f32.partialorder %v127, 0.0
    %vm146 = vcmp.gt.f32.partialorder %v130, 0.0
    %vm147 = vcmp.gt.f32.partialorder %v135, 0.0
    %vm148 = vcmp.gt.f32.partialorder %v138, 0.0
    %v149 = vmul.f32 %v111, 1.442695
    %v150 = vpow.pop %v149
    %v151 = vmul.f32 %v114, 1.442695
    %v152 = vpow.pop %v151
    %v153 = vmul.f32 %v119, 1.442695
    %v154 = vpow.pop %v153
    %v155 = vmul.f32 %v122, 1.442695
    %v156 = vpow.pop %v155
    %v157 = vmul.f32 %v127, 1.442695
    %v158 = vpow.pop %v157
    %v159 = vmul.f32 %v130, 1.442695
    %v160 = vpow.pop %v159
    %v161 = vmul.f32 %v135, 1.442695
    %v162 = vpow.pop %v161
    %v163 = vmul.f32 %v138, 1.442695
    %v164 = vpow.pop %v163
    %v165 = vsub.f32 %v150, 1.0
    %v166 = vsub.f32 %v152, 1.0
    %v167 = vsub.f32 %v154, 1.0
    %v168 = vsub.f32 %v156, 1.0
    %v169 = vsub.f32 %v158, 1.0
    %v170 = vsub.f32 %v160, 1.0
    %v171 = vsub.f32 %v162, 1.0
    %v172 = vsub.f32 %v164, 1.0
    %v173 = vsel %vm141, %v111, %v165
    %v174 = vsel %vm142, %v114, %v166
    %v175 = vsel %vm143, %v119, %v167
    %v176 = vsel %vm144, %v122, %v168
    %v177 = vsel %vm145, %v127, %v169
    %v178 = vsel %vm146, %v130, %v170
    %v179 = vsel %vm147, %v135, %v171
    %v180 = vsel %vm148, %v138, %v172
    %v181 = vpack.c.bf16 %v174, %v173
    %v182 = vpack.c.bf16 %v176, %v175
    %v183 = vpack.c.bf16 %v178, %v177
    %v184 = vpack.c.bf16 %v180, %v179
    %v185 = vld [vmem:[%s3] sm:$0xf]
    %v186 = vld [vmem:[%s3 + $0x4] sm:$0xf]
    %v187 = vld [vmem:[%s3 + $0x8] sm:$0xf]
    %v188 = vld [vmem:[%s3 + $0xc] sm:$0xf]
    %v189 = vld [vmem:[%s3 + $0x10] sm:$0xf]
    %v190 = vld [vmem:[%s3 + $0x14] sm:$0xf]
    %v191 = vld [vmem:[%s3 + $0x18] sm:$0xf]
    %v192 = vld [vmem:[%s3 + $0x1c] sm:$0xf]
    %v193 = vld [vmem:[%s4] sm:$0x1]
    %v195 = vlaneseq
    %v196 = vshrl.u32 %v195, 7
    %v197 = vsub.s32 0, %v196
    %v198 = vrot.slane %v193, %v197
    %v208 = vunpack.c.l.b16 %v185
    %v209 = vunpack.c.l.b16 %v186
    %v210 = vunpack.c.l.b16 %v187
    %v211 = vunpack.c.l.b16 %v188
    %v212 = vunpack.c.l.b16 %v189
    %v213 = vunpack.c.l.b16 %v190
    %v214 = vunpack.c.l.b16 %v191
    %v215 = vunpack.c.l.b16 %v192
    %v216 = vpack.c.b16 %v209, %v208
    %v217 = vpack.c.b16 %v211, %v210
    %v218 = vpack.c.b16 %v213, %v212
    %v219 = vpack.c.b16 %v215, %v214
    %vm224 = vcmask 523264
    %v226 = vsel %vm224, %v181, 0
    %v229 = vsel %vm224, %v182, 0
    %v232 = vsel %vm224, %v183, 0
    %v235 = vsel %vm224, %v184, 0
    %237 = vmatprep.subr.bf16.mxu0 0
    %238 = vmatpush1.bf16.msra.mxu0 %v216
    %239 = vmatprep.subr.bf16.mxu0 0
    %240 = vmatpush1.bf16.msra.mxu0 %v217
    %241 = vmatprep.subr.bf16.mxu0 0
    %242 = vmatpush1.bf16.msra.mxu0 %v218
    %243 = vmatprep.subr.bf16.mxu0 0
    %244 = vmatpush1.bf16.msra.mxu0 %v219
    %245 = vmatprep.subr.bf16.mxu0 0
    %246 = vmatpush1.bf16.msra.mxu0 0
    %247 = vmatprep.subr.bf16.mxu0 0
    %248 = vmatpush1.bf16.msra.mxu0 0
    %249 = vmatprep.subr.bf16.mxu0 0
    %250 = vmatpush1.bf16.msra.mxu0 0
    %251 = vmatprep.subr.bf16.mxu0 0
    %252 = vmatpush1.bf16.msra.mxu0 0
    %253 = vmatprep.subr.bf16.mxu0 0
    %254 = vmatpush1.bf16.msra.mxu0 0
    %255 = vmatprep.subr.bf16.mxu0 0
    %256 = vmatpush1.bf16.msra.mxu0 0
    %257 = vmatprep.subr.bf16.mxu0 0
    %258 = vmatpush1.bf16.msra.mxu0 0
    %259 = vmatprep.subr.bf16.mxu0 0
    %260 = vmatpush1.bf16.msra.mxu0 0
    %261 = vmatprep.subr.bf16.mxu0 0
    %262 = vmatpush1.bf16.msra.mxu0 0
    %263 = vmatprep.subr.bf16.mxu0 0
    %264 = vmatpush1.bf16.msra.mxu0 0
    %265 = vmatprep.subr.bf16.mxu0 0
    %266 = vmatpush1.bf16.msra.mxu0 0
    %267 = vmatprep.subr.bf16.mxu0 0
    %268 = vmatpush1.bf16.msra.mxu0 0
    %269 = vmatprep.mubr.bf16.mxu0 0
    %270 = vmatmul.mubr.bf16.gmra.mrb[0].mxu0 %v226
    %v271 = vpop.f32.mrb[0].mxu0
    %v272 = vadd.f32 %v198, %v271
    %v273 = vpop.f32.mrb[0].mxu0
    %v274 = vpop.f32.mrb[0].mxu0
    %v275 = vadd.f32 %v198, %v274
    %v276 = vpop.f32.mrb[0].mxu0
    %277 = vmatprep.mubr.bf16.mxu0 0
    %278 = vmatmul.mubr.bf16.gmra.mrb[0].mxu0 %v229
    %v279 = vpop.f32.mrb[0].mxu0
    %v280 = vadd.f32 %v198, %v279
    %v281 = vpop.f32.mrb[0].mxu0
    %v282 = vpop.f32.mrb[0].mxu0
    %v283 = vadd.f32 %v198, %v282
    %v284 = vpop.f32.mrb[0].mxu0
    %285 = vmatprep.mubr.bf16.mxu0 0
    %286 = vmatmul.mubr.bf16.gmra.mrb[0].mxu0 %v232
    %v287 = vpop.f32.mrb[0].mxu0
    %v288 = vadd.f32 %v198, %v287
    %v289 = vpop.f32.mrb[0].mxu0
    %v290 = vpop.f32.mrb[0].mxu0
    %v291 = vadd.f32 %v198, %v290
    %v292 = vpop.f32.mrb[0].mxu0
    %293 = vmatprep.mubr.bf16.mxu0 0
    %294 = vmatmul.mubr.bf16.gmra.mrb[0].mxu0 %v235
    %v295 = vpop.f32.mrb[0].mxu0
    %v296 = vadd.f32 %v198, %v295
    %v297 = vpop.f32.mrb[0].mxu0
    %v298 = vpop.f32.mrb[0].mxu0
    %v299 = vadd.f32 %v198, %v298
    %v300 = vpop.f32.mrb[0].mxu0
    %301 = vdwg.mxu0
    %v302 = vadd.f32 %v28, %v272
    %v303 = vadd.f32 %v29, %v275
    %v304 = vadd.f32 %v30, %v280
    %v305 = vadd.f32 %v31, %v283
    %v306 = vadd.f32 %v32, %v288
    %v307 = vadd.f32 %v33, %v291
    %v308 = vadd.f32 %v34, %v296
    %v309 = vadd.f32 %v35, %v299
    %v310 = vld [vmem:[%s5] sm:$0x1]
    %v311 = vld [vmem:[%s6] sm:$0x1]
    %v312 = vsel %vm63, %v302, 0.0
    %313 = vadd.xlane.f32.xlu0 %v312
    %v314 = vpop.xlane.xlu0 %313
    %v315 = vsel %vm63, %v303, 0.0
    %316 = vadd.xlane.f32.xlu0 %v315
    %v317 = vpop.xlane.xlu0 %316
    %v318 = vsel %vm63, %v304, 0.0
    %319 = vadd.xlane.f32.xlu0 %v318
    %v320 = vpop.xlane.xlu0 %319
    %v321 = vsel %vm63, %v305, 0.0
    %322 = vadd.xlane.f32.xlu0 %v321
    %v323 = vpop.xlane.xlu0 %322
    %v324 = vsel %vm63, %v306, 0.0
    %325 = vadd.xlane.f32.xlu0 %v324
    %v326 = vpop.xlane.xlu0 %325
    %v327 = vsel %vm63, %v307, 0.0
    %328 = vadd.xlane.f32.xlu0 %v327
    %v329 = vpop.xlane.xlu0 %328
    %v330 = vsel %vm63, %v308, 0.0
    %331 = vadd.xlane.f32.xlu0 %v330
    %v332 = vpop.xlane.xlu0 %331
    %v333 = vsel %vm63, %v309, 0.0
    %334 = vadd.xlane.f32.xlu0 %v333
    %v335 = vpop.xlane.xlu0 %334
    %v336 = vrcp.pop 32.0
    %v337 = vmul.f32 %v314, %v336
    %v338 = vmul.f32 %v317, %v336
    %v339 = vmul.f32 %v320, %v336
    %v340 = vmul.f32 %v323, %v336
    %v341 = vmul.f32 %v326, %v336
    %v342 = vmul.f32 %v329, %v336
    %v343 = vmul.f32 %v332, %v336
    %v344 = vmul.f32 %v335, %v336
    %v345 = vsub.f32 %v302, %v337
    %v346 = vsub.f32 %v303, %v338
    %v347 = vsub.f32 %v304, %v339
    %v348 = vsub.f32 %v305, %v340
    %v349 = vsub.f32 %v306, %v341
    %v350 = vsub.f32 %v307, %v342
    %v351 = vsub.f32 %v308, %v343
    %v352 = vsub.f32 %v309, %v344
    %v353 = vmul.f32 %v345, %v345
    %v354 = vmul.f32 %v346, %v346
    %v355 = vmul.f32 %v347, %v347
    %v356 = vmul.f32 %v348, %v348
    %v357 = vmul.f32 %v349, %v349
    %v358 = vmul.f32 %v350, %v350
    %v359 = vmul.f32 %v351, %v351
    %v360 = vmul.f32 %v352, %v352
    %v361 = vsel %vm63, %v353, 0.0
    %362 = vadd.xlane.f32.xlu0 %v361
    %v363 = vpop.xlane.xlu0 %362
    %v364 = vsel %vm63, %v354, 0.0
    %365 = vadd.xlane.f32.xlu0 %v364
    %v366 = vpop.xlane.xlu0 %365
    %v367 = vsel %vm63, %v355, 0.0
    %368 = vadd.xlane.f32.xlu0 %v367
    %v369 = vpop.xlane.xlu0 %368
    %v370 = vsel %vm63, %v356, 0.0
    %371 = vadd.xlane.f32.xlu0 %v370
    %v372 = vpop.xlane.xlu0 %371
    %v373 = vsel %vm63, %v357, 0.0
    %374 = vadd.xlane.f32.xlu0 %v373
    %v375 = vpop.xlane.xlu0 %374
    %v376 = vsel %vm63, %v358, 0.0
    %377 = vadd.xlane.f32.xlu0 %v376
    %v378 = vpop.xlane.xlu0 %377
    %v379 = vsel %vm63, %v359, 0.0
    %380 = vadd.xlane.f32.xlu0 %v379
    %v381 = vpop.xlane.xlu0 %380
    %v382 = vsel %vm63, %v360, 0.0
    %383 = vadd.xlane.f32.xlu0 %v382
    %v384 = vpop.xlane.xlu0 %383
    %v385 = vmul.f32 %v363, %v336
    %v386 = vmul.f32 %v366, %v336
    %v387 = vmul.f32 %v369, %v336
    %v388 = vmul.f32 %v372, %v336
    %v389 = vmul.f32 %v375, %v336
    %v390 = vmul.f32 %v378, %v336
    %v391 = vmul.f32 %v381, %v336
    %v392 = vmul.f32 %v384, %v336
    %v393 = vadd.f32 %v385, 1e-05
    %v394 = vadd.f32 %v386, 1e-05
    %v395 = vadd.f32 %v387, 1e-05
    %v396 = vadd.f32 %v388, 1e-05
    %v397 = vadd.f32 %v389, 1e-05
    %v398 = vadd.f32 %v390, 1e-05
    %v399 = vadd.f32 %v391, 1e-05
    %v400 = vadd.f32 %v392, 1e-05
    %v401 = vrsqrt.pop %v393
    %v402 = vrsqrt.pop %v394
    %v403 = vrsqrt.pop %v395
    %v404 = vrsqrt.pop %v396
    %v405 = vrsqrt.pop %v397
    %v406 = vrsqrt.pop %v398
    %v407 = vrsqrt.pop %v399
    %v408 = vrsqrt.pop %v400
    %v409 = vmul.f32 %v345, %v401
    %v410 = vmul.f32 %v346, %v402
    %v411 = vmul.f32 %v347, %v403
    %v412 = vmul.f32 %v348, %v404
    %v413 = vmul.f32 %v349, %v405
    %v414 = vmul.f32 %v350, %v406
    %v415 = vmul.f32 %v351, %v407
    %v416 = vmul.f32 %v352, %v408
    %v418 = vlaneseq
    %v419 = vshrl.u32 %v418, 7
    %v420 = vsub.s32 0, %v419
    %v421 = vrot.slane %v310, %v420
    %v423 = vmul.f32 %v409, %v421
    %v424 = vmul.f32 %v410, %v421
    %v425 = vmul.f32 %v411, %v421
    %v426 = vmul.f32 %v412, %v421
    %v427 = vmul.f32 %v413, %v421
    %v428 = vmul.f32 %v414, %v421
    %v429 = vmul.f32 %v415, %v421
    %v430 = vmul.f32 %v416, %v421
    %v432 = vlaneseq
    %v433 = vshrl.u32 %v432, 7
    %v434 = vsub.s32 0, %v433
    %v435 = vrot.slane %v311, %v434
    %v437 = vadd.f32 %v423, %v435
    %v438 = vadd.f32 %v424, %v435
    %v439 = vadd.f32 %v425, %v435
    %v440 = vadd.f32 %v426, %v435
    %v441 = vadd.f32 %v427, %v435
    %v442 = vadd.f32 %v428, %v435
    %v443 = vadd.f32 %v429, %v435
    %v444 = vadd.f32 %v430, %v435
    %445 = vst.msk [vmem:[#allocation2] sm:$0xff] %vm63, %v437
    %446 = vst.msk [vmem:[#allocation2 + $0x8] sm:$0xff] %vm63, %v438
    %447 = vst.msk [vmem:[#allocation2 + $0x10] sm:$0xff] %vm63, %v439
    %448 = vst.msk [vmem:[#allocation2 + $0x18] sm:$0xff] %vm63, %v440
    %449 = vst.msk [vmem:[#allocation2 + $0x20] sm:$0xff] %vm63, %v441
    %450 = vst.msk [vmem:[#allocation2 + $0x28] sm:$0xff] %vm63, %v442
    %451 = vst.msk [vmem:[#allocation2 + $0x30] sm:$0xff] %vm63, %v443
    %452 = vst.msk [vmem:[#allocation2 + $0x38] sm:$0xff] %vm63, %v444
    // Predicated region
    $region30: #{encoder_layer_forward.5} parent=1 // pred_check
      _
    $region31: #{encoder_layer_forward.5} parent=1 // pred_check_branch
      %454 = sbr.rel (0) target = $region33
    $region32: #{encoder_layer_forward.5} parent=1 // pred_region
      %s456 = ssub.s32 1024, 1024
      %457 = vsyncadd [#allocation3], %s456
      %s458 = sshll.u32 [#allocation2], 4
      %s459 = int_to_ptr.vmem [resolvable:$true] %s458
      %464 = dma.vmem_to_hbm [thread:$0]  %s459, 1024, %s7, [#allocation3], 128, 128, 8
    $region33: #{encoder_layer_forward.5} parent=1 // pred_fallthru
      _
    // Predicated region
    $region34: #{encoder_layer_forward.5} parent=1 // pred_check
      _
    $region35: #{encoder_layer_forward.5} parent=1 // pred_check_branch
      %466 = sbr.rel (0) target = $region37
    $region36: #{encoder_layer_forward.5} parent=1 // pred_region
      %467 = dma.done [#allocation3], 1024
    $region37: #{encoder_layer_forward.5} parent=1 // pred_fallthru
      _
    %468 = vsyncpa [#allocation3], 1

// kernel: encoder_layer_forward.3
$region0: #{encoder_layer_forward.3}
  #allocation0 [shape = 'u32[]', space=smem, size = 0x4, offset = 0x4, fixed_abs, tag = 'smem constant byte address 0x4 - core index']
  #allocation1 [shape = 'u32[144,128]{1,0:T(1,128)}', space=vmem, size = 0x12000, scoped, tag = 'internal scratch']
  %s0 = inlined_call_operand.vmem [shape: f32[64,32], index: 0, kind: input, shape index: {}]
  %s1 = inlined_call_operand.vmem [shape: bf16[32,96], index: 1, kind: input, shape index: {}]
  %s2 = inlined_call_operand.vmem [shape: f32[1,96], index: 2, kind: input, shape index: {}]
  %s3 = inlined_call_operand.vmem [shape: bf16[32,32], index: 3, kind: input, shape index: {}]
  %s4 = inlined_call_operand.vmem [shape: f32[1,32], index: 4, kind: input, shape index: {}]
  %s5 = inlined_call_operand.vmem [shape: f32[1,32], index: 5, kind: input, shape index: {}]
  %s6 = inlined_call_operand.vmem [shape: f32[1,32], index: 6, kind: input, shape index: {}]
  %s7 = inlined_call_operand.vmem [shape: f32[64,32], index: 7, kind: output, shape index: {}]
  %s8 = sld [smem:[#allocation0]]
  $region38: #{encoder_layer_forward.3} parent=0
    _
  %s10 = ssub.s32 1, %s8
  %s11 = scalar_select 0, %s10, %s8
  // Predicated region
  $region2: #{encoder_layer_forward.3} parent=0 // pred_check
    _
  $region3: #{encoder_layer_forward.3} parent=0 // pred_check_branch
    %13 = sbr.rel (0) target = $region5
  $region4: #{encoder_layer_forward.3} parent=0 // pred_region
    _
  $region5: #{encoder_layer_forward.3} parent=0 // pred_fallthru
    _
  // Predicated region
  $region6: #{encoder_layer_forward.3} parent=0 // pred_check
    _
  $region7: #{encoder_layer_forward.3} parent=0 // pred_check_branch
    %15 = sbr.rel (0) target = $region9
  $region8: #{encoder_layer_forward.3} parent=0 // pred_region
    _
  $region9: #{encoder_layer_forward.3} parent=0 // pred_fallthru
    _
  // Predicated region
  $region10: #{encoder_layer_forward.3} parent=0 // pred_check
    _
  $region11: #{encoder_layer_forward.3} parent=0 // pred_check_branch
    %17 = sbr.rel (0) target = $region13
  $region12: #{encoder_layer_forward.3} parent=0 // pred_region
    _
  $region13: #{encoder_layer_forward.3} parent=0 // pred_fallthru
    _
  // Predicated region
  $region14: #{encoder_layer_forward.3} parent=0 // pred_check
    _
  $region15: #{encoder_layer_forward.3} parent=0 // pred_check_branch
    %19 = sbr.rel (0) target = $region17
  $region16: #{encoder_layer_forward.3} parent=0 // pred_region
    _
  $region17: #{encoder_layer_forward.3} parent=0 // pred_fallthru
    _
  // Predicated region
  $region18: #{encoder_layer_forward.3} parent=0 // pred_check
    _
  $region19: #{encoder_layer_forward.3} parent=0 // pred_check_branch
    %21 = sbr.rel (0) target = $region21
  $region20: #{encoder_layer_forward.3} parent=0 // pred_region
    _
  $region21: #{encoder_layer_forward.3} parent=0 // pred_fallthru
    _
  // Predicated region
  $region22: #{encoder_layer_forward.3} parent=0 // pred_check
    _
  $region23: #{encoder_layer_forward.3} parent=0 // pred_check_branch
    %23 = sbr.rel (0) target = $region25
  $region24: #{encoder_layer_forward.3} parent=0 // pred_region
    _
  $region25: #{encoder_layer_forward.3} parent=0 // pred_fallthru
    _
  // Predicated region
  $region26: #{encoder_layer_forward.3} parent=0 // pred_check
    _
  $region27: #{encoder_layer_forward.3} parent=0 // pred_check_branch
    %25 = sbr.rel (0) target = $region29
  $region28: #{encoder_layer_forward.3} parent=0 // pred_region
    _
  $region29: #{encoder_layer_forward.3} parent=0 // pred_fallthru
    _
  %v27 = vld [vmem:[%s0] sm:$0xff]
  %v28 = vld [vmem:[%s0 + $0x8] sm:$0xff]
  %v29 = vld [vmem:[%s0 + $0x10] sm:$0xff]
  %v30 = vld [vmem:[%s0 + $0x18] sm:$0xff]
  %v31 = vld [vmem:[%s0 + $0x20] sm:$0xff]
  %v32 = vld [vmem:[%s0 + $0x28] sm:$0xff]
  %v33 = vld [vmem:[%s0 + $0x30] sm:$0xff]
  %v34 = vld [vmem:[%s0 + $0x38] sm:$0xff]
  %v35 = vpack.c.bf16 %v28, %v27
  %v36 = vpack.c.bf16 %v30, %v29
  %v37 = vpack.c.bf16 %v32, %v31
  %v38 = vpack.c.bf16 %v34, %v33
  %v39 = vld [vmem:[%s1] sm:$0xf]
  %v40 = vld [vmem:[%s1 + $0x4] sm:$0xf]
  %v41 = vld [vmem:[%s1 + $0x8] sm:$0xf]
  %v42 = vld [vmem:[%s1 + $0xc] sm:$0xf]
  %v43 = vld [vmem:[%s2] sm:$0x1]
  %v45 = vlaneseq
  %v46 = vshrl.u32 %v45, 7
  %v47 = vsub.s32 0, %v46
  %v48 = vrot.slane %v43, %v47
  %v54 = vunpack.c.l.b16 %v39
  %v55 = vunpack.c.l.b16 %v40
  %v56 = vunpack.c.l.b16 %v41
  %v57 = vunpack.c.l.b16 %v42
  %v58 = vpack.c.b16 %v55, %v54
  %v59 = vpack.c.b16 %v57, %v56
  %vm62 = vcmask 261120
  %v64 = vsel %vm62, %v35, 0
  %v67 = vsel %vm62, %v36, 0
  %v70 = vsel %vm62, %v37, 0
  %v73 = vsel %vm62, %v38, 0
  %75 = vmatprep.subr.bf16.mxu0 0
  %76 = vmatpush1.bf16.msra.mxu0 %v58
  %77 = vmatprep.subr.bf16.mxu0 0
  %78 = vmatpush1.bf16.msra.mxu0 %v59
  %79 = vmatprep.subr.bf16.mxu0 0
  %80 = vmatpush1.bf16.msra.mxu0 0
  %81 = vmatprep.subr.bf16.mxu0 0
  %82 = vmatpush1.bf16.msra.mxu0 0
  %83 = vmatprep.subr.bf16.mxu0 0
  %84 = vmatpush1.bf16.msra.mxu0 0
  %85 = vmatprep.subr.bf16.mxu0 0
  %86 = vmatpush1.bf16.msra.mxu0 0
  %87 = vmatprep.subr.bf16.mxu0 0
  %88 = vmatpush1.bf16.msra.mxu0 0
  %89 = vmatprep.subr.bf16.mxu0 0
  %90 = vmatpush1.bf16.msra.mxu0 0
  %91 = vmatprep.subr.bf16.mxu0 0
  %92 = vmatpush1.bf16.msra.mxu0 0
  %93 = vmatprep.subr.bf16.mxu0 0
  %94 = vmatpush1.bf16.msra.mxu0 0
  %95 = vmatprep.subr.bf16.mxu0 0
  %96 = vmatpush1.bf16.msra.mxu0 0
  %97 = vmatprep.subr.bf16.mxu0 0
  %98 = vmatpush1.bf16.msra.mxu0 0
  %99 = vmatprep.subr.bf16.mxu0 0
  %100 = vmatpush1.bf16.msra.mxu0 0
  %101 = vmatprep.subr.bf16.mxu0 0
  %102 = vmatpush1.bf16.msra.mxu0 0
  %103 = vmatprep.subr.bf16.mxu0 0
  %104 = vmatpush1.bf16.msra.mxu0 0
  %105 = vmatprep.subr.bf16.mxu0 0
  %106 = vmatpush1.bf16.msra.mxu0 0
  %107 = vmatprep.mubr.bf16.mxu0 0
  %108 = vmatmul.mubr.bf16.gmra.mrb[0].mxu0 %v64
  %v109 = vpop.f32.mrb[0].mxu0
  %v110 = vadd.f32 %v48, %v109
  %v111 = vpop.f32.mrb[0].mxu0
  %v112 = vpop.f32.mrb[0].mxu0
  %v113 = vadd.f32 %v48, %v112
  %v114 = vpop.f32.mrb[0].mxu0
  %115 = vmatprep.mubr.bf16.mxu0 0
  %116 = vmatmul.mubr.bf16.gmra.mrb[0].mxu0 %v67
  %v117 = vpop.f32.mrb[0].mxu0
  %v118 = vadd.f32 %v48, %v117
  %v119 = vpop.f32.mrb[0].mxu0
  %v120 = vpop.f32.mrb[0].mxu0
  %v121 = vadd.f32 %v48, %v120
  %v122 = vpop.f32.mrb[0].mxu0
  %123 = vmatprep.mubr.bf16.mxu0 0
  %124 = vmatmul.mubr.bf16.gmra.mrb[0].mxu0 %v70
  %v125 = vpop.f32.mrb[0].mxu0
  %v126 = vadd.f32 %v48, %v125
  %v127 = vpop.f32.mrb[0].mxu0
  %v128 = vpop.f32.mrb[0].mxu0
  %v129 = vadd.f32 %v48, %v128
  %v130 = vpop.f32.mrb[0].mxu0
  %131 = vmatprep.mubr.bf16.mxu0 0
  %132 = vmatmul.mubr.bf16.gmra.mrb[0].mxu0 %v73
  %v133 = vpop.f32.mrb[0].mxu0
  %v134 = vadd.f32 %v48, %v133
  %v135 = vpop.f32.mrb[0].mxu0
  %v136 = vpop.f32.mrb[0].mxu0
  %v137 = vadd.f32 %v48, %v136
  %v138 = vpop.f32.mrb[0].mxu0
  %139 = vdwg.mxu0
  %v140 = vpack.c.bf16 %v110, %v110
  %v141 = vpack.c.bf16 %v113, %v113
  %v142 = vpack.c.bf16 %v118, %v118
  %v143 = vpack.c.bf16 %v121, %v121
  %v144 = vpack.c.bf16 %v126, %v126
  %v145 = vpack.c.bf16 %v129, %v129
  %v146 = vpack.c.bf16 %v134, %v134
  %v147 = vpack.c.bf16 %v137, %v137
  %149 = vrot.lane.b32.xlu0 %v140, 96
  %v150 = vpop.permute.xlu0 %149
  %vm151 = vcmask 64512
  %v153 = vsel %vm151, %v140, 0
  %v156 = vsel %vm151, %v150, 0
  %158 = vmatprep.subr.bf16.mxu0 0
  %159 = vmatpush1.bf16.xpose.msra.mxu0 %v156
  %160 = vmatprep.subr.bf16.mxu0 0
  %161 = vmatpush1.bf16.xpose.msra.mxu0 0
  %162 = vmatprep.subr.bf16.mxu0 0
  %163 = vmatpush1.bf16.xpose.msra.mxu0 0
  %164 = vmatprep.subr.bf16.mxu0 0
  %165 = vmatpush1.bf16.xpose.msra.mxu0 0
  %166 = vmatprep.subr.bf16.mxu0 0
  %167 = vmatpush1.bf16.xpose.msra.mxu0 0
  %168 = vmatprep.subr.bf16.mxu0 0
  %169 = vmatpush1.bf16.xpose.msra.mxu0 0
  %170 = vmatprep.subr.bf16.mxu0 0
  %171 = vmatpush1.bf16.xpose.msra.mxu0 0
  %172 = vmatprep.subr.bf16.mxu0 0
  %173 = vmatpush1.bf16.xpose.msra.mxu0 0
  %174 = vmatprep.subr.bf16.mxu0 0
  %175 = vmatpush1.bf16.xpose.msra.mxu0 0
  %176 = vmatprep.subr.bf16.mxu0 0
  %177 = vmatpush1.bf16.xpose.msra.mxu0 0
  %178 = vmatprep.subr.bf16.mxu0 0
  %179 = vmatpush1.bf16.xpose.msra.mxu0 0
  %180 = vmatprep.subr.bf16.mxu0 0
  %181 = vmatpush1.bf16.xpose.msra.mxu0 0
  %182 = vmatprep.subr.bf16.mxu0 0
  %183 = vmatpush1.bf16.xpose.msra.mxu0 0
  %184 = vmatprep.subr.bf16.mxu0 0
  %185 = vmatpush1.bf16.xpose.msra.mxu0 0
  %186 = vmatprep.subr.bf16.mxu0 0
  %187 = vmatpush1.bf16.xpose.msra.mxu0 0
  %188 = vmatprep.subr.bf16.mxu0 0
  %189 = vmatpush1.bf16.xpose.msra.mxu0 0
  %190 = vmatprep.mubr.bf16.mxu0 0
  %191 = vmatmul.mubr.bf16.gmra.mrb[0].mxu0 %v153
  %v192 = vpop.f32.mrb[0].mxu0
  %v193 = vadd.f32 0.0, %v192
  %v194 = vpop.f32.mrb[0].mxu0
  %v195 = vpop.f32.mrb[0].mxu0
  %v196 = vpop.f32.mrb[0].mxu0
  %197 = vdwg.mxu0
  %199 = vrot.lane.b32.xlu0 %v141, 96
  %v200 = vpop.permute.xlu0 %199
  %v202 = vsel %vm151, %v141, 0
  %v205 = vsel %vm151, %v200, 0
  %207 = vmatprep.subr.bf16.mxu0 0
  %208 = vmatpush1.bf16.xpose.msra.mxu0 %v205
  %209 = vmatprep.subr.bf16.mxu0 0
  %210 = vmatpush1.bf16.xpose.msra.mxu0 0
  %211 = vmatprep.subr.bf16.mxu0 0
  %212 = vmatpush1.bf16.xpose.msra.mxu0 0
  %213 = vmatprep.subr.bf16.mxu0 0
  %214 = vmatpush1.bf16.xpose.msra.mxu0 0
  %215 = vmatprep.subr.bf16.mxu0 0
  %216 = vmatpush1.bf16.xpose.msra.mxu0 0
  %217 = vmatprep.subr.bf16.mxu0 0
  %218 = vmatpush1.bf16.xpose.msra.mxu0 0
  %219 = vmatprep.subr.bf16.mxu0 0
  %220 = vmatpush1.bf16.xpose.msra.mxu0 0
  %221 = vmatprep.subr.bf16.mxu0 0
  %222 = vmatpush1.bf16.xpose.msra.mxu0 0
  %223 = vmatprep.subr.bf16.mxu0 0
  %224 = vmatpush1.bf16.xpose.msra.mxu0 0
  %225 = vmatprep.subr.bf16.mxu0 0
  %226 = vmatpush1.bf16.xpose.msra.mxu0 0
  %227 = vmatprep.subr.bf16.mxu0 0
  %228 = vmatpush1.bf16.xpose.msra.mxu0 0
  %229 = vmatprep.subr.bf16.mxu0 0
  %230 = vmatpush1.bf16.xpose.msra.mxu0 0
  %231 = vmatprep.subr.bf16.mxu0 0
  %232 = vmatpush1.bf16.xpose.msra.mxu0 0
  %233 = vmatprep.subr.bf16.mxu0 0
  %234 = vmatpush1.bf16.xpose.msra.mxu0 0
  %235 = vmatprep.subr.bf16.mxu0 0
  %236 = vmatpush1.bf16.xpose.msra.mxu0 0
  %237 = vmatprep.subr.bf16.mxu0 0
  %238 = vmatpush1.bf16.xpose.msra.mxu0 0
  %239 = vmatprep.mubr.bf16.mxu0 0
  %240 = vmatmul.mubr.bf16.gmra.mrb[0].mxu0 %v202
  %v241 = vpop.f32.mrb[0].mxu0
  %v242 = vadd.f32 0.0, %v241
  %v243 = vpop.f32.mrb[0].mxu0
  %v244 = vpop.f32.mrb[0].mxu0
  %v245 = vpop.f32.mrb[0].mxu0
  %246 = vdwg.mxu0
  %248 = vrot.lane.b32.xlu0 %v142, 96
  %v249 = vpop.permute.xlu0 %248
  %v251 = vsel %vm151, %v142, 0
  %v254 = vsel %vm151, %v249, 0
  %256 = vmatprep.subr.bf16.mxu0 0
  %257 = vmatpush1.bf16.xpose.msra.mxu0 %v254
  %258 = vmatprep.subr.bf16.mxu0 0
  %259 = vmatpush1.bf16.xpose.msra.mxu0 0
  %260 = vmatprep.subr.bf16.mxu0 0
  %261 = vmatpush1.bf16.xpose.msra.mxu0 0
  %262 = vmatprep.subr.bf16.mxu0 0
  %263 = vmatpush1.bf16.xpose.msra.mxu0 0
  %264 = vmatprep.subr.bf16.mxu0 0
  %265 = vmatpush1.bf16.xpose.msra.mxu0 0
  %266 = vmatprep.subr.bf16.mxu0 0
  %267 = vmatpush1.bf16.xpose.msra.mxu0 0
  %268 = vmatprep.subr.bf16.mxu0 0
  %269 = vmatpush1.bf16.xpose.msra.mxu0 0
  %270 = vmatprep.subr.bf16.mxu0 0
  %271 = vmatpush1.bf16.xpose.msra.mxu0 0
  %272 = vmatprep.subr.bf16.mxu0 0
  %273 = vmatpush1.bf16.xpose.msra.mxu0 0
  %274 = vmatprep.subr.bf16.mxu0 0
  %275 = vmatpush1.bf16.xpose.msra.mxu0 0
  %276 = vmatprep.subr.bf16.mxu0 0
  %277 = vmatpush1.bf16.xpose.msra.mxu0 0
  %278 = vmatprep.subr.bf16.mxu0 0
  %279 = vmatpush1.bf16.xpose.msra.mxu0 0
  %280 = vmatprep.subr.bf16.mxu0 0
  %281 = vmatpush1.bf16.xpose.msra.mxu0 0
  %282 = vmatprep.subr.bf16.mxu0 0
  %283 = vmatpush1.bf16.xpose.msra.mxu0 0
  %284 = vmatprep.subr.bf16.mxu0 0
  %285 = vmatpush1.bf16.xpose.msra.mxu0 0
  %286 = vmatprep.subr.bf16.mxu0 0
  %287 = vmatpush1.bf16.xpose.msra.mxu0 0
  %288 = vmatprep.mubr.bf16.mxu0 0
  %289 = vmatmul.mubr.bf16.gmra.mrb[0].mxu0 %v251
  %v290 = vpop.f32.mrb[0].mxu0
  %v291 = vadd.f32 0.0, %v290
  %v292 = vpop.f32.mrb[0].mxu0
  %v293 = vpop.f32.mrb[0].mxu0
  %v294 = vpop.f32.mrb[0].mxu0
  %295 = vdwg.mxu0
  %297 = vrot.lane.b32.xlu0 %v143, 96
  %v298 = vpop.permute.xlu0 %297
  %v300 = vsel %vm151, %v143, 0
  %v303 = vsel %vm151, %v298, 0
  %305 = vmatprep.subr.bf16.mxu0 0
  %306 = vmatpush1.bf16.xpose.msra.mxu0 %v303
  %307 = vmatprep.subr.bf16.mxu0 0
  %308 = vmatpush1.bf16.xpose.msra.mxu0 0
  %309 = vmatprep.subr.bf16.mxu0 0
  %310 = vmatpush1.bf16.xpose.msra.mxu0 0
  %311 = vmatprep.subr.bf16.mxu0 0
  %312 = vmatpush1.bf16.xpose.msra.mxu0 0
  %313 = vmatprep.subr.bf16.mxu0 0
  %314 = vmatpush1.bf16.xpose.msra.mxu0 0
  %315 = vmatprep.subr.bf16.mxu0 0
  %316 = vmatpush1.bf16.xpose.msra.mxu0 0
  %317 = vmatprep.subr.bf16.mxu0 0
  %318 = vmatpush1.bf16.xpose.msra.mxu0 0
  %319 = vmatprep.subr.bf16.mxu0 0
  %320 = vmatpush1.bf16.xpose.msra.mxu0 0
  %321 = vmatprep.subr.bf16.mxu0 0
  %322 = vmatpush1.bf16.xpose.msra.mxu0 0
  %323 = vmatprep.subr.bf16.mxu0 0
  %324 = vmatpush1.bf16.xpose.msra.mxu0 0
  %325 = vmatprep.subr.bf16.mxu0 0
  %326 = vmatpush1.bf16.xpose.msra.mxu0 0
  %327 = vmatprep.subr.bf16.mxu0 0
  %328 = vmatpush1.bf16.xpose.msra.mxu0 0
  %329 = vmatprep.subr.bf16.mxu0 0
  %330 = vmatpush1.bf16.xpose.msra.mxu0 0
  %331 = vmatprep.subr.bf16.mxu0 0
  %332 = vmatpush1.bf16.xpose.msra.mxu0 0
  %333 = vmatprep.subr.bf16.mxu0 0
  %334 = vmatpush1.bf16.xpose.msra.mxu0 0
  %335 = vmatprep.subr.bf16.mxu0 0
  %336 = vmatpush1.bf16.xpose.msra.mxu0 0
  %337 = vmatprep.mubr.bf16.mxu0 0
  %338 = vmatmul.mubr.bf16.gmra.mrb[0].mxu0 %v300
  %v339 = vpop.f32.mrb[0].mxu0
  %v340 = vadd.f32 0.0, %v339
  %v341 = vpop.f32.mrb[0].mxu0
  %v342 = vpop.f32.mrb[0].mxu0
  %v343 = vpop.f32.mrb[0].mxu0
  %344 = vdwg.mxu0
  %346 = vrot.lane.b32.xlu0 %v144, 96
  %v347 = vpop.permute.xlu0 %346
  %v349 = vsel %vm151, %v144, 0
  %v352 = vsel %vm151, %v347, 0
  %354 = vmatprep.subr.bf16.mxu0 0
  %355 = vmatpush1.bf16.xpose.msra.mxu0 %v352
  %356 = vmatprep.subr.bf16.mxu0 0
  %357 = vmatpush1.bf16.xpose.msra.mxu0 0
  %358 = vmatprep.subr.bf16.mxu0 0
  %359 = vmatpush1.bf16.xpose.msra.mxu0 0
  %360 = vmatprep.subr.bf16.mxu0 0
  %361 = vmatpush1.bf16.xpose.msra.mxu0 0
  %362 = vmatprep.subr.bf16.mxu0 0
  %363 = vmatpush1.bf16.xpose.msra.mxu0 0
  %364 = vmatprep.subr.bf16.mxu0 0
  %365 = vmatpush1.bf16.xpose.msra.mxu0 0
  %366 = vmatprep.subr.bf16.mxu0 0
  %367 = vmatpush1.bf16.xpose.msra.mxu0 0
  %368 = vmatprep.subr.bf16.mxu0 0
  %369 = vmatpush1.bf16.xpose.msra.mxu0 0
  %370 = vmatprep.subr.bf16.mxu0 0
  %371 = vmatpush1.bf16.xpose.msra.mxu0 0
  %372 = vmatprep.subr.bf16.mxu0 0
  %373 = vmatpush1.bf16.xpose.msra.mxu0 0
  %374 = vmatprep.subr.bf16.mxu0 0
  %375 = vmatpush1.bf16.xpose.msra.mxu0 0
  %376 = vmatprep.subr.bf16.mxu0 0
  %377 = vmatpush1.bf16.xpose.msra.mxu0 0
  %378 = vmatprep.subr.bf16.mxu0 0
  %379 = vmatpush1.bf16.xpose.msra.mxu0 0
  %380 = vmatprep.subr.bf16.mxu0 0
  %381 = vmatpush1.bf16.xpose.msra.mxu0 0
  %382 = vmatprep.subr.bf16.mxu0 0
  %383 = vmatpush1.bf16.xpose.msra.mxu0 0
  %384 = vmatprep.subr.bf16.mxu0 0
  %385 = vmatpush1.bf16.xpose.msra.mxu0 0
  %386 = vmatprep.mubr.bf16.mxu0 0
  %387 = vmatmul.mubr.bf16.gmra.mrb[0].mxu0 %v349
  %v388 = vpop.f32.mrb[0].mxu0
  %v389 = vadd.f32 0.0, %v388
  %v390 = vpop.f32.mrb[0].mxu0
  %v391 = vpop.f32.mrb[0].mxu0
  %v392 = vpop.f32.mrb[0].mxu0
  %393 = vdwg.mxu0
  %395 = vrot.lane.b32.xlu0 %v145, 96
  %v396 = vpop.permute.xlu0 %395
  %v398 = vsel %vm151, %v145, 0
  %v401 = vsel %vm151, %v396, 0
  %403 = vmatprep.subr.bf16.mxu0 0
  %404 = vmatpush1.bf16.xpose.msra.mxu0 %v401
  %405 = vmatprep.subr.bf16.mxu0 0
  %406 = vmatpush1.bf16.xpose.msra.mxu0 0
  %407 = vmatprep.subr.bf16.mxu0 0
  %408 = vmatpush1.bf16.xpose.msra.mxu0 0
  %409 = vmatprep.subr.bf16.mxu0 0
  %410 = vmatpush1.bf16.xpose.msra.mxu0 0
  %411 = vmatprep.subr.bf16.mxu0 0
  %412 = vmatpush1.bf16.xpose.msra.mxu0 0
  %413 = vmatprep.subr.bf16.mxu0 0
  %414 = vmatpush1.bf16.xpose.msra.mxu0 0
  %415 = vmatprep.subr.bf16.mxu0 0
  %416 = vmatpush1.bf16.xpose.msra.mxu0 0
  %417 = vmatprep.subr.bf16.mxu0 0
  %418 = vmatpush1.bf16.xpose.msra.mxu0 0
  %419 = vmatprep.subr.bf16.mxu0 0
  %420 = vmatpush1.bf16.xpose.msra.mxu0 0
  %421 = vmatprep.subr.bf16.mxu0 0
  %422 = vmatpush1.bf16.xpose.msra.mxu0 0
  %423 = vmatprep.subr.bf16.mxu0 0
  %424 = vmatpush1.bf16.xpose.msra.mxu0 0
  %425 = vmatprep.subr.bf16.mxu0 0
  %426 = vmatpush1.bf16.xpose.msra.mxu0 0
  %427 = vmatprep.subr.bf16.mxu0 0
  %428 = vmatpush1.bf16.xpose.msra.mxu0 0
  %429 = vmatprep.subr.bf16.mxu0 0
  %430 = vmatpush1.bf16.xpose.msra.mxu0 0
  %431 = vmatprep.subr.bf16.mxu0 0
  %432 = vmatpush1.bf16.xpose.msra.mxu0 0
  %433 = vmatprep.subr.bf16.mxu0 0
  %434 = vmatpush1.bf16.xpose.msra.mxu0 0
  %435 = vmatprep.mubr.bf16.mxu0 0
  %436 = vmatmul.mubr.bf16.gmra.mrb[0].mxu0 %v398
  %v437 = vpop.f32.mrb[0].mxu0
  %v438 = vadd.f32 0.0, %v437
  %v439 = vpop.f32.mrb[0].mxu0
  %v440 = vpop.f32.mrb[0].mxu0
  %v441 = vpop.f32.mrb[0].mxu0
  %442 = vdwg.mxu0
  %444 = vrot.lane.b32.xlu0 %v146, 96
  %v445 = vpop.permute.xlu0 %444
  %v447 = vsel %vm151, %v146, 0
  %v450 = vsel %vm151, %v445, 0
  %452 = vmatprep.subr.bf16.mxu0 0
  %453 = vmatpush1.bf16.xpose.msra.mxu0 %v450
  %454 = vmatprep.subr.bf16.mxu0 0
  %455 = vmatpush1.bf16.xpose.msra.mxu0 0
  %456 = vmatprep.subr.bf16.mxu0 0
  %457 = vmatpush1.bf16.xpose.msra.mxu0 0
  %458 = vmatprep.subr.bf16.mxu0 0
  %459 = vmatpush1.bf16.xpose.msra.mxu0 0
  %460 = vmatprep.subr.bf16.mxu0 0
  %461 = vmatpush1.bf16.xpose.msra.mxu0 0
  %462 = vmatprep.subr.bf16.mxu0 0
  %463 = vmatpush1.bf16.xpose.msra.mxu0 0
  %464 = vmatprep.subr.bf16.mxu0 0
  %465 = vmatpush1.bf16.xpose.msra.mxu0 0
  %466 = vmatprep.subr.bf16.mxu0 0
  %467 = vmatpush1.bf16.xpose.msra.mxu0 0
  %468 = vmatprep.subr.bf16.mxu0 0
  %469 = vmatpush1.bf16.xpose.msra.mxu0 0
  %470 = vmatprep.subr.bf16.mxu0 0
  %471 = vmatpush1.bf16.xpose.msra.mxu0 0
  %472 = vmatprep.subr.bf16.mxu0 0
  %473 = vmatpush1.bf16.xpose.msra.mxu0 0
  %474 = vmatprep.subr.bf16.mxu0 0
  %475 = vmatpush1.bf16.xpose.msra.mxu0 0
  %476 = vmatprep.subr.bf16.mxu0 0
  %477 = vmatpush1.bf16.xpose.msra.mxu0 0
  %478 = vmatprep.subr.bf16.mxu0 0
  %479 = vmatpush1.bf16.xpose.msra.mxu0 0
  %480 = vmatprep.subr.bf16.mxu0 0
  %481 = vmatpush1.bf16.xpose.msra.mxu0 0
  %482 = vmatprep.subr.bf16.mxu0 0
  %483 = vmatpush1.bf16.xpose.msra.mxu0 0
  %484 = vmatprep.mubr.bf16.mxu0 0
  %485 = vmatmul.mubr.bf16.gmra.mrb[0].mxu0 %v447
  %v486 = vpop.f32.mrb[0].mxu0
  %v487 = vadd.f32 0.0, %v486
  %v488 = vpop.f32.mrb[0].mxu0
  %v489 = vpop.f32.mrb[0].mxu0
  %v490 = vpop.f32.mrb[0].mxu0
  %491 = vdwg.mxu0
  %493 = vrot.lane.b32.xlu0 %v147, 96
  %v494 = vpop.permute.xlu0 %493
  %v496 = vsel %vm151, %v147, 0
  %v499 = vsel %vm151, %v494, 0
  %501 = vmatprep.subr.bf16.mxu0 0
  %502 = vmatpush1.bf16.xpose.msra.mxu0 %v499
  %503 = vmatprep.subr.bf16.mxu0 0
  %504 = vmatpush1.bf16.xpose.msra.mxu0 0
  %505 = vmatprep.subr.bf16.mxu0 0
  %506 = vmatpush1.bf16.xpose.msra.mxu0 0
  %507 = vmatprep.subr.bf16.mxu0 0
  %508 = vmatpush1.bf16.xpose.msra.mxu0 0
  %509 = vmatprep.subr.bf16.mxu0 0
  %510 = vmatpush1.bf16.xpose.msra.mxu0 0
  %511 = vmatprep.subr.bf16.mxu0 0
  %512 = vmatpush1.bf16.xpose.msra.mxu0 0
  %513 = vmatprep.subr.bf16.mxu0 0
  %514 = vmatpush1.bf16.xpose.msra.mxu0 0
  %515 = vmatprep.subr.bf16.mxu0 0
  %516 = vmatpush1.bf16.xpose.msra.mxu0 0
  %517 = vmatprep.subr.bf16.mxu0 0
  %518 = vmatpush1.bf16.xpose.msra.mxu0 0
  %519 = vmatprep.subr.bf16.mxu0 0
  %520 = vmatpush1.bf16.xpose.msra.mxu0 0
  %521 = vmatprep.subr.bf16.mxu0 0
  %522 = vmatpush1.bf16.xpose.msra.mxu0 0
  %523 = vmatprep.subr.bf16.mxu0 0
  %524 = vmatpush1.bf16.xpose.msra.mxu0 0
  %525 = vmatprep.subr.bf16.mxu0 0
  %526 = vmatpush1.bf16.xpose.msra.mxu0 0
  %527 = vmatprep.subr.bf16.mxu0 0
  %528 = vmatpush1.bf16.xpose.msra.mxu0 0
  %529 = vmatprep.subr.bf16.mxu0 0
  %530 = vmatpush1.bf16.xpose.msra.mxu0 0
  %531 = vmatprep.subr.bf16.mxu0 0
  %532 = vmatpush1.bf16.xpose.msra.mxu0 0
  %533 = vmatprep.mubr.bf16.mxu0 0
  %534 = vmatmul.mubr.bf16.gmra.mrb[0].mxu0 %v496
  %v535 = vpop.f32.mrb[0].mxu0
  %v536 = vadd.f32 0.0, %v535
  %v537 = vpop.f32.mrb[0].mxu0
  %v538 = vpop.f32.mrb[0].mxu0
  %v539 = vpop.f32.mrb[0].mxu0
  %540 = vdwg.mxu0
  %v541 = vmul.f32 %v193, 0.35355338
  %v542 = vmul.f32 %v242, 0.35355338
  %v543 = vmul.f32 %v291, 0.35355338
  %v544 = vmul.f32 %v340, 0.35355338
  %v545 = vmul.f32 %v389, 0.35355338
  %v546 = vmul.f32 %v438, 0.35355338
  %v547 = vmul.f32 %v487, 0.35355338
  %v548 = vmul.f32 %v536, 0.35355338
  %v549 = vsel %vm151, %v541, -inf
  %550 = vmax.xlane.f32.xlu0 %v549
  %v551 = vpop.xlane.xlu0 %550
  %v552 = vsel %vm151, %v542, -inf
  %553 = vmax.xlane.f32.xlu0 %v552
  %v554 = vpop.xlane.xlu0 %553
  %v555 = vsel %vm151, %v543, -inf
  %556 = vmax.xlane.f32.xlu0 %v555
  %v557 = vpop.xlane.xlu0 %556
  %v558 = vsel %vm151, %v544, -inf
  %559 = vmax.xlane.f32.xlu0 %v558
  %v560 = vpop.xlane.xlu0 %559
  %v561 = vsel %vm151, %v545, -inf
  %562 = vmax.xlane.f32.xlu0 %v561
  %v563 = vpop.xlane.xlu0 %562
  %v564 = vsel %vm151, %v546, -inf
  %565 = vmax.xlane.f32.xlu0 %v564
  %v566 = vpop.xlane.xlu0 %565
  %v567 = vsel %vm151, %v547, -inf
  %568 = vmax.xlane.f32.xlu0 %v567
  %v569 = vpop.xlane.xlu0 %568
  %v570 = vsel %vm151, %v548, -inf
  %571 = vmax.xlane.f32.xlu0 %v570
  %v572 = vpop.xlane.xlu0 %571
  %v573 = vsub.f32 %v541, %v551
  %v574 = vsub.f32 %v542, %v554
  %v575 = vsub.f32 %v543, %v557
  %v576 = vsub.f32 %v544, %v560
  %v577 = vsub.f32 %v545, %v563
  %v578 = vsub.f32 %v546, %v566
  %v579 = vsub.f32 %v547, %v569
  %v580 = vsub.f32 %v548, %v572
  %v581 = vmul.f32 %v573, 1.442695
  %v582 = vpow.pop %v581
  %v583 = vmul.f32 %v574, 1.442695
  %v584 = vpow.pop %v583
  %v585 = vmul.f32 %v575, 1.442695
  %v586 = vpow.pop %v585
  %v587 = vmul.f32 %v576, 1.442695
  %v588 = vpow.pop %v587
  %v589 = vmul.f32 %v577, 1.442695
  %v590 = vpow.pop %v589
  %v591 = vmul.f32 %v578, 1.442695
  %v592 = vpow.pop %v591
  %v593 = vmul.f32 %v579, 1.442695
  %v594 = vpow.pop %v593
  %v595 = vmul.f32 %v580, 1.442695
  %v596 = vpow.pop %v595
  %v597 = vsel %vm151, %v582, 0.0
  %598 = vadd.xlane.f32.xlu0 %v597
  %v599 = vpop.xlane.xlu0 %598
  %v600 = vsel %vm151, %v584, 0.0
  %601 = vadd.xlane.f32.xlu0 %v600
  %v602 = vpop.xlane.xlu0 %601
  %v603 = vsel %vm151, %v586, 0.0
  %604 = vadd.xlane.f32.xlu0 %v603
  %v605 = vpop.xlane.xlu0 %604
  %v606 = vsel %vm151, %v588, 0.0
  %607 = vadd.xlane.f32.xlu0 %v606
  %v608 = vpop.xlane.xlu0 %607
  %v609 = vsel %vm151, %v590, 0.0
  %610 = vadd.xlane.f32.xlu0 %v609
  %v611 = vpop.xlane.xlu0 %610
  %v612 = vsel %vm151, %v592, 0.0
  %613 = vadd.xlane.f32.xlu0 %v612
  %v614 = vpop.xlane.xlu0 %613
  %v615 = vsel %vm151, %v594, 0.0
  %616 = vadd.xlane.f32.xlu0 %v615
  %v617 = vpop.xlane.xlu0 %616
  %v618 = vsel %vm151, %v596, 0.0
  %619 = vadd.xlane.f32.xlu0 %v618
  %v620 = vpop.xlane.xlu0 %619
  %v621 = vrcp.pop %v599
  %v622 = vrcp.pop %v602
  %v623 = vrcp.pop %v605
  %v624 = vrcp.pop %v608
  %v625 = vrcp.pop %v611
  %v626 = vrcp.pop %v614
  %v627 = vrcp.pop %v617
  %v628 = vrcp.pop %v620
  %v629 = vmul.f32 %v582, %v621
  %v630 = vmul.f32 %v584, %v622
  %v631 = vmul.f32 %v586, %v623
  %v632 = vmul.f32 %v588, %v624
  %v633 = vmul.f32 %v590, %v625
  %v634 = vmul.f32 %v592, %v626
  %v635 = vmul.f32 %v594, %v627
  %v636 = vmul.f32 %v596, %v628
  %v637 = vpack.c.bf16 %v629, %v629
  %v638 = vpack.c.bf16 %v630, %v630
  %v639 = vpack.c.bf16 %v631, %v631
  %v640 = vpack.c.bf16 %v632, %v632
  %v641 = vpack.c.bf16 %v633, %v633
  %v642 = vpack.c.bf16 %v634, %v634
  %v643 = vpack.c.bf16 %v635, %v635
  %v644 = vpack.c.bf16 %v636, %v636
  %645 = vrot.lane.b32.xlu0 %v140, 64
  %v646 = vpop.permute.xlu0 %645
  %v648 = vsel %vm151, %v637, 0
  %vm650 = vcmask 1043456
  %v652 = vsel %vm650, %v646, 0
  %654 = vmatprep.subr.bf16.mxu0 0
  %655 = vmatpush1.bf16.msra.mxu0 %v652
  %656 = vmatprep.subr.bf16.mxu0 0
  %657 = vmatpush1.bf16.msra.mxu0 0
  %658 = vmatprep.subr.bf16.mxu0 0
  %659 = vmatpush1.bf16.msra.mxu0 0
  %660 = vmatprep.subr.bf16.mxu0 0
  %661 = vmatpush1.bf16.msra.mxu0 0
  %662 = vmatprep.subr.bf16.mxu0 0
  %663 = vmatpush1.bf16.msra.mxu0 0
  %664 = vmatprep.subr.bf16.mxu0 0
  %665 = vmatpush1.bf16.msra.mxu0 0
  %666 = vmatprep.subr.bf16.mxu0 0
  %667 = vmatpush1.bf16.msra.mxu0 0
  %668 = vmatprep.subr.bf16.mxu0 0
  %669 = vmatpush1.bf16.msra.mxu0 0
  %670 = vmatprep.subr.bf16.mxu0 0
  %671 = vmatpush1.bf16.msra.mxu0 0
  %672 = vmatprep.subr.bf16.mxu0 0
  %673 = vmatpush1.bf16.msra.mxu0 0
  %674 = vmatprep.subr.bf16.mxu0 0
  %675 = vmatpush1.bf16.msra.mxu0 0
  %676 = vmatprep.subr.bf16.mxu0 0
  %677 = vmatpush1.bf16.msra.mxu0 0
  %678 = vmatprep.subr.bf16.mxu0 0
  %679 = vmatpush1.bf16.msra.mxu0 0
  %680 = vmatprep.subr.bf16.mxu0 0
  %681 = vmatpush1.bf16.msra.mxu0 0
  %682 = vmatprep.subr.bf16.mxu0 0
  %683 = vmatpush1.bf16.msra.mxu0 0
  %684 = vmatprep.subr.bf16.mxu0 0
  %685 = vmatpush1.bf16.msra.mxu0 0
  %686 = vmatprep.mubr.bf16.mxu0 0
  %687 = vmatmul.mubr.bf16.gmra.mrb[0].mxu0 %v648
  %v688 = vpop.f32.mrb[0].mxu0
  %v689 = vadd.f32 0.0, %v688
  %v690 = vpop.f32.mrb[0].mxu0
  %v691 = vpop.f32.mrb[0].mxu0
  %v692 = vpop.f32.mrb[0].mxu0
  %693 = vdwg.mxu0
  %694 = vrot.lane.b32.xlu0 %v141, 64
  %v695 = vpop.permute.xlu0 %694
  %v697 = vsel %vm151, %v638, 0
  %v700 = vsel %vm650, %v695, 0
  %702 = vmatprep.subr.bf16.mxu0 0
  %703 = vmatpush1.bf16.msra.mxu0 %v700
  %704 = vmatprep.subr.bf16.mxu0 0
  %705 = vmatpush1.bf16.msra.mxu0 0
  %706 = vmatprep.subr.bf16.mxu0 0
  %707 = vmatpush1.bf16.msra.mxu0 0
  %708 = vmatprep.subr.bf16.mxu0 0
  %709 = vmatpush1.bf16.msra.mxu0 0
  %710 = vmatprep.subr.bf16.mxu0 0
  %711 = vmatpush1.bf16.msra.mxu0 0
  %712 = vmatprep.subr.bf16.mxu0 0
  %713 = vmatpush1.bf16.msra.mxu0 0
  %714 = vmatprep.subr.bf16.mxu0 0
  %715 = vmatpush1.bf16.msra.mxu0 0
  %716 = vmatprep.subr.bf16.mxu0 0
  %717 = vmatpush1.bf16.msra.mxu0 0
  %718 = vmatprep.subr.bf16.mxu0 0
  %719 = vmatpush1.bf16.msra.mxu0 0
  %720 = vmatprep.subr.bf16.mxu0 0
  %721 = vmatpush1.bf16.msra.mxu0 0
  %722 = vmatprep.subr.bf16.mxu0 0
  %723 = vmatpush1.bf16.msra.mxu0 0
  %724 = vmatprep.subr.bf16.mxu0 0
  %725 = vmatpush1.bf16.msra.mxu0 0
  %726 = vmatprep.subr.bf16.mxu0 0
  %727 = vmatpush1.bf16.msra.mxu0 0
  %728 = vmatprep.subr.bf16.mxu0 0
  %729 = vmatpush1.bf16.msra.mxu0 0
  %730 = vmatprep.subr.bf16.mxu0 0
  %731 = vmatpush1.bf16.msra.mxu0 0
  %732 = vmatprep.subr.bf16.mxu0 0
  %733 = vmatpush1.bf16.msra.mxu0 0
  %734 = vmatprep.mubr.bf16.mxu0 0
  %735 = vmatmul.mubr.bf16.gmra.mrb[0].mxu0 %v697
  %v736 = vpop.f32.mrb[0].mxu0
  %v737 = vadd.f32 0.0, %v736
  %v738 = vpop.f32.mrb[0].mxu0
  %v739 = vpop.f32.mrb[0].mxu0
  %v740 = vpop.f32.mrb[0].mxu0
  %741 = vdwg.mxu0
  %742 = vrot.lane.b32.xlu0 %v142, 64
  %v743 = vpop.permute.xlu0 %742
  %v745 = vsel %vm151, %v639, 0
  %v748 = vsel %vm650, %v743, 0
  %750 = vmatprep.subr.bf16.mxu0 0
  %751 = vmatpush1.bf16.msra.mxu0 %v748
  %752 = vmatprep.subr.bf16.mxu0 0
  %753 = vmatpush1.bf16.msra.mxu0 0
  %754 = vmatprep.subr.bf16.mxu0 0
  %755 = vmatpush1.bf16.msra.mxu0 0
  %756 = vmatprep.subr.bf16.mxu0 0
  %757 = vmatpush1.bf16.msra.mxu0 0
  %758 = vmatprep.subr.bf16.mxu0 0
  %759 = vmatpush1.bf16.msra.mxu0 0
  %760 = vmatprep.subr.bf16.mxu0 0
  %761 = vmatpush1.bf16.msra.mxu0 0
  %762 = vmatprep.subr.bf16.mxu0 0
  %763 = vmatpush1.bf16.msra.mxu0 0
  %764 = vmatprep.subr.bf16.mxu0 0
  %765 = vmatpush1.bf16.msra.mxu0 0
  %766 = vmatprep.subr.bf16.mxu0 0
  %767 = vmatpush1.bf16.msra.mxu0 0
  %768 = vmatprep.subr.bf16.mxu0 0
  %769 = vmatpush1.bf16.msra.mxu0 0
  %770 = vmatprep.subr.bf16.mxu0 0
  %771 = vmatpush1.bf16.msra.mxu0 0
  %772 = vmatprep.subr.bf16.mxu0 0
  %773 = vmatpush1.bf16.msra.mxu0 0
  %774 = vmatprep.subr.bf16.mxu0 0
  %775 = vmatpush1.bf16.msra.mxu0 0
  %776 = vmatprep.subr.bf16.mxu0 0
  %777 = vmatpush1.bf16.msra.mxu0 0
  %778 = vmatprep.subr.bf16.mxu0 0
  %779 = vmatpush1.bf16.msra.mxu0 0
  %780 = vmatprep.subr.bf16.mxu0 0
  %781 = vmatpush1.bf16.msra.mxu0 0
  %782 = vmatprep.mubr.bf16.mxu0 0
  %783 = vmatmul.mubr.bf16.gmra.mrb[0].mxu0 %v745
  %v784 = vpop.f32.mrb[0].mxu0
  %v785 = vadd.f32 0.0, %v784
  %v786 = vpop.f32.mrb[0].mxu0
  %v787 = vpop.f32.mrb[0].mxu0
  %v788 = vpop.f32.mrb[0].mxu0
  %789 = vdwg.mxu0
  %790 = vrot.lane.b32.xlu0 %v143, 64
  %v791 = vpop.permute.xlu0 %790
  %v793 = vsel %vm151, %v640, 0
  %v796 = vsel %vm650, %v791, 0
  %798 = vmatprep.subr.bf16.mxu0 0
  %799 = vmatpush1.bf16.msra.mxu0 %v796
  %800 = vmatprep.subr.bf16.mxu0 0
  %801 = vmatpush1.bf16.msra.mxu0 0
  %802 = vmatprep.subr.bf16.mxu0 0
  %803 = vmatpush1.bf16.msra.mxu0 0
  %804 = vmatprep.subr.bf16.mxu0 0
  %805 = vmatpush1.bf16.msra.mxu0 0
  %806 = vmatprep.subr.bf16.mxu0 0
  %807 = vmatpush1.bf16.msra.mxu0 0
  %808 = vmatprep.subr.bf16.mxu0 0
  %809 = vmatpush1.bf16.msra.mxu0 0
  %810 = vmatprep.subr.bf16.mxu0 0
  %811 = vmatpush1.bf16.msra.mxu0 0
  %812 = vmatprep.subr.bf16.mxu0 0
  %813 = vmatpush1.bf16.msra.mxu0 0
  %814 = vmatprep.subr.bf16.mxu0 0
  %815 = vmatpush1.bf16.msra.mxu0 0
  %816 = vmatprep.subr.bf16.mxu0 0
  %817 = vmatpush1.bf16.msra.mxu0 0
  %818 = vmatprep.subr.bf16.mxu0 0
  %819 = vmatpush1.bf16.msra.mxu0 0
  %820 = vmatprep.subr.bf16.mxu0 0
  %821 = vmatpush1.bf16.msra.mxu0 0
  %822 = vmatprep.subr.bf16.mxu0 0
  %823 = vmatpush1.bf16.msra.mxu0 0
  %824 = vmatprep.subr.bf16.mxu0 0
  %825 = vmatpush1.bf16.msra.mxu0 0
  %826 = vmatprep.subr.bf16.mxu0 0
  %827 = vmatpush1.bf16.msra.mxu0 0
  %828 = vmatprep.subr.bf16.mxu0 0
  %829 = vmatpush1.bf16.msra.mxu0 0
  %830 = vmatprep.mubr.bf16.mxu0 0
  %831 = vmatmul.mubr.bf16.gmra.mrb[0].mxu0 %v793
  %v832 = vpop.f32.mrb[0].mxu0
  %v833 = vadd.f32 0.0, %v832
  %v834 = vpop.f32.mrb[0].mxu0
  %v835 = vpop.f32.mrb[0].mxu0
  %v836 = vpop.f32.mrb[0].mxu0
  %837 = vdwg.mxu0
  %838 = vrot.lane.b32.xlu0 %v144, 64
  %v839 = vpop.permute.xlu0 %838
  %v841 = vsel %vm151, %v641, 0
  %v844 = vsel %vm650, %v839, 0
  %846 = vmatprep.subr.bf16.mxu0 0
  %847 = vmatpush1.bf16.msra.mxu0 %v844
  %848 = vmatprep.subr.bf16.mxu0 0
  %849 = vmatpush1.bf16.msra.mxu0 0
  %850 = vmatprep.subr.bf16.mxu0 0
  %851 = vmatpush1.bf16.msra.mxu0 0
  %852 = vmatprep.subr.bf16.mxu0 0
  %853 = vmatpush1.bf16.msra.mxu0 0
  %854 = vmatprep.subr.bf16.mxu0 0
  %855 = vmatpush1.bf16.msra.mxu0 0
  %856 = vmatprep.subr.bf16.mxu0 0
  %857 = vmatpush1.bf16.msra.mxu0 0
  %858 = vmatprep.subr.bf16.mxu0 0
  %859 = vmatpush1.bf16.msra.mxu0 0
  %860 = vmatprep.subr.bf16.mxu0 0
  %861 = vmatpush1.bf16.msra.mxu0 0
  %862 = vmatprep.subr.bf16.mxu0 0
  %863 = vmatpush1.bf16.msra.mxu0 0
  %864 = vmatprep.subr.bf16.mxu0 0
  %865 = vmatpush1.bf16.msra.mxu0 0
  %866 = vmatprep.subr.bf16.mxu0 0
  %867 = vmatpush1.bf16.msra.mxu0 0
  %868 = vmatprep.subr.bf16.mxu0 0
  %869 = vmatpush1.bf16.msra.mxu0 0
  %870 = vmatprep.subr.bf16.mxu0 0
  %871 = vmatpush1.bf16.msra.mxu0 0
  %872 = vmatprep.subr.bf16.mxu0 0
  %873 = vmatpush1.bf16.msra.mxu0 0
  %874 = vmatprep.subr.bf16.mxu0 0
  %875 = vmatpush1.bf16.msra.mxu0 0
  %876 = vmatprep.subr.bf16.mxu0 0
  %877 = vmatpush1.bf16.msra.mxu0 0
  %878 = vmatprep.mubr.bf16.mxu0 0
  %879 = vmatmul.mubr.bf16.gmra.mrb[0].mxu0 %v841
  %v880 = vpop.f32.mrb[0].mxu0
  %v881 = vadd.f32 0.0, %v880
  %v882 = vpop.f32.mrb[0].mxu0
  %v883 = vpop.f32.mrb[0].mxu0
  %v884 = vpop.f32.mrb[0].mxu0
  %885 = vdwg.mxu0
  %886 = vrot.lane.b32.xlu0 %v145, 64
  %v887 = vpop.permute.xlu0 %886
  %v889 = vsel %vm151, %v642, 0
  %v892 = vsel %vm650, %v887, 0
  %894 = vmatprep.subr.bf16.mxu0 0
  %895 = vmatpush1.bf16.msra.mxu0 %v892
  %896 = vmatprep.subr.bf16.mxu0 0
  %897 = vmatpush1.bf16.msra.mxu0 0
  %898 = vmatprep.subr.bf16.mxu0 0
  %899 = vmatpush1.bf16.msra.mxu0 0
  %900 = vmatprep.subr.bf16.mxu0 0
  %901 = vmatpush1.bf16.msra.mxu0 0
  %902 = vmatprep.subr.bf16.mxu0 0
  %903 = vmatpush1.bf16.msra.mxu0 0
  %904 = vmatprep.subr.bf16.mxu0 0
  %905 = vmatpush1.bf16.msra.mxu0 0
  %906 = vmatprep.subr.bf16.mxu0 0
  %907 = vmatpush1.bf16.msra.mxu0 0
  %908 = vmatprep.subr.bf16.mxu0 0
  %909 = vmatpush1.bf16.msra.mxu0 0
  %910 = vmatprep.subr.bf16.mxu0 0
  %911 = vmatpush1.bf16.msra.mxu0 0
  %912 = vmatprep.subr.bf16.mxu0 0
  %913 = vmatpush1.bf16.msra.mxu0 0
  %914 = vmatprep.subr.bf16.mxu0 0
  %915 = vmatpush1.bf16.msra.mxu0 0
  %916 = vmatprep.subr.bf16.mxu0 0
  %917 = vmatpush1.bf16.msra.mxu0 0
  %918 = vmatprep.subr.bf16.mxu0 0
  %919 = vmatpush1.bf16.msra.mxu0 0
  %920 = vmatprep.subr.bf16.mxu0 0
  %921 = vmatpush1.bf16.msra.mxu0 0
  %922 = vmatprep.subr.bf16.mxu0 0
  %923 = vmatpush1.bf16.msra.mxu0 0
  %924 = vmatprep.subr.bf16.mxu0 0
  %925 = vmatpush1.bf16.msra.mxu0 0
  %926 = vmatprep.mubr.bf16.mxu0 0
  %927 = vmatmul.mubr.bf16.gmra.mrb[0].mxu0 %v889
  %v928 = vpop.f32.mrb[0].mxu0
  %v929 = vadd.f32 0.0, %v928
  %v930 = vpop.f32.mrb[0].mxu0
  %v931 = vpop.f32.mrb[0].mxu0
  %v932 = vpop.f32.mrb[0].mxu0
  %933 = vdwg.mxu0
  %934 = vrot.lane.b32.xlu0 %v146, 64
  %v935 = vpop.permute.xlu0 %934
  %v937 = vsel %vm151, %v643, 0
  %v940 = vsel %vm650, %v935, 0
  %942 = vmatprep.subr.bf16.mxu0 0
  %943 = vmatpush1.bf16.msra.mxu0 %v940
  %944 = vmatprep.subr.bf16.mxu0 0
  %945 = vmatpush1.bf16.msra.mxu0 0
  %946 = vmatprep.subr.bf16.mxu0 0
  %947 = vmatpush1.bf16.msra.mxu0 0
  %948 = vmatprep.subr.bf16.mxu0 0
  %949 = vmatpush1.bf16.msra.mxu0 0
  %950 = vmatprep.subr.bf16.mxu0 0
  %951 = vmatpush1.bf16.msra.mxu0 0
  %952 = vmatprep.subr.bf16.mxu0 0
  %953 = vmatpush1.bf16.msra.mxu0 0
  %954 = vmatprep.subr.bf16.mxu0 0
  %955 = vmatpush1.bf16.msra.mxu0 0
  %956 = vmatprep.subr.bf16.mxu0 0
  %957 = vmatpush1.bf16.msra.mxu0 0
  %958 = vmatprep.subr.bf16.mxu0 0
  %959 = vmatpush1.bf16.msra.mxu0 0
  %960 = vmatprep.subr.bf16.mxu0 0
  %961 = vmatpush1.bf16.msra.mxu0 0
  %962 = vmatprep.subr.bf16.mxu0 0
  %963 = vmatpush1.bf16.msra.mxu0 0
  %964 = vmatprep.subr.bf16.mxu0 0
  %965 = vmatpush1.bf16.msra.mxu0 0
  %966 = vmatprep.subr.bf16.mxu0 0
  %967 = vmatpush1.bf16.msra.mxu0 0
  %968 = vmatprep.subr.bf16.mxu0 0
  %969 = vmatpush1.bf16.msra.mxu0 0
  %970 = vmatprep.subr.bf16.mxu0 0
  %971 = vmatpush1.bf16.msra.mxu0 0
  %972 = vmatprep.subr.bf16.mxu0 0
  %973 = vmatpush1.bf16.msra.mxu0 0
  %974 = vmatprep.mubr.bf16.mxu0 0
  %975 = vmatmul.mubr.bf16.gmra.mrb[0].mxu0 %v937
  %v976 = vpop.f32.mrb[0].mxu0
  %v977 = vadd.f32 0.0, %v976
  %v978 = vpop.f32.mrb[0].mxu0
  %v979 = vpop.f32.mrb[0].mxu0
  %v980 = vpop.f32.mrb[0].mxu0
  %981 = vdwg.mxu0
  %982 = vrot.lane.b32.xlu0 %v147, 64
  %v983 = vpop.permute.xlu0 %982
  %v985 = vsel %vm151, %v644, 0
  %v988 = vsel %vm650, %v983, 0
  %990 = vmatprep.subr.bf16.mxu0 0
  %991 = vmatpush1.bf16.msra.mxu0 %v988
  %992 = vmatprep.subr.bf16.mxu0 0
  %993 = vmatpush1.bf16.msra.mxu0 0
  %994 = vmatprep.subr.bf16.mxu0 0
  %995 = vmatpush1.bf16.msra.mxu0 0
  %996 = vmatprep.subr.bf16.mxu0 0
  %997 = vmatpush1.bf16.msra.mxu0 0
  %998 = vmatprep.subr.bf16.mxu0 0
  %999 = vmatpush1.bf16.msra.mxu0 0
  %1000 = vmatprep.subr.bf16.mxu0 0
  %1001 = vmatpush1.bf16.msra.mxu0 0
  %1002 = vmatprep.subr.bf16.mxu0 0
  %1003 = vmatpush1.bf16.msra.mxu0 0
  %1004 = vmatprep.subr.bf16.mxu0 0
  %1005 = vmatpush1.bf16.msra.mxu0 0
  %1006 = vmatprep.subr.bf16.mxu0 0
  %1007 = vmatpush1.bf16.msra.mxu0 0
  %1008 = vmatprep.subr.bf16.mxu0 0
  %1009 = vmatpush1.bf16.msra.mxu0 0
  %1010 = vmatprep.subr.bf16.mxu0 0
  %1011 = vmatpush1.bf16.msra.mxu0 0
  %1012 = vmatprep.subr.bf16.mxu0 0
  %1013 = vmatpush1.bf16.msra.mxu0 0
  %1014 = vmatprep.subr.bf16.mxu0 0
  %1015 = vmatpush1.bf16.msra.mxu0 0
  %1016 = vmatprep.subr.bf16.mxu0 0
  %1017 = vmatpush1.bf16.msra.mxu0 0
  %1018 = vmatprep.subr.bf16.mxu0 0
  %1019 = vmatpush1.bf16.msra.mxu0 0
  %1020 = vmatprep.subr.bf16.mxu0 0
  %1021 = vmatpush1.bf16.msra.mxu0 0
  %1022 = vmatprep.mubr.bf16.mxu0 0
  %1023 = vmatmul.mubr.bf16.gmra.mrb[0].mxu0 %v985
  %v1024 = vpop.f32.mrb[0].mxu0
  %v1025 = vadd.f32 0.0, %v1024
  %v1026 = vpop.f32.mrb[0].mxu0
  %v1027 = vpop.f32.mrb[0].mxu0
  %v1028 = vpop.f32.mrb[0].mxu0
  %1029 = vdwg.mxu0
  %1030 = vrot.lane.b32.xlu0 %v140, 120
  %v1031 = vpop.permute.xlu0 %1030
  %1032 = vrot.lane.b32.xlu0 %v140, 88
  %v1033 = vpop.permute.xlu0 %1032
  %v1035 = vsel %vm151, %v1031, 0
  %v1038 = vsel %vm151, %v1033, 0
  %1040 = vmatprep.subr.bf16.mxu0 0
  %1041 = vmatpush1.bf16.xpose.msra.mxu0 %v1038
  %1042 = vmatprep.subr.bf16.mxu0 0
  %1043 = vmatpush1.bf16.xpose.msra.mxu0 0
  %1044 = vmatprep.subr.bf16.mxu0 0
  %1045 = vmatpush1.bf16.xpose.msra.mxu0 0
  %1046 = vmatprep.subr.bf16.mxu0 0
  %1047 = vmatpush1.bf16.xpose.msra.mxu0 0
  %1048 = vmatprep.subr.bf16.mxu0 0
  %1049 = vmatpush1.bf16.xpose.msra.mxu0 0
  %1050 = vmatprep.subr.bf16.mxu0 0
  %1051 = vmatpush1.bf16.xpose.msra.mxu0 0
  %1052 = vmatprep.subr.bf16.mxu0 0
  %1053 = vmatpush1.bf16.xpose.msra.mxu0 0
  %1054 = vmatprep.subr.bf16.mxu0 0
  %1055 = vmatpush1.bf16.xpose.msra.mxu0 0
  %1056 = vmatprep.subr.bf16.mxu0 0
  %1057 = vmatpush1.bf16.xpose.msra.mxu0 0
  %1058 = vmatprep.subr.bf16.mxu0 0
  %1059 = vmatpush1.bf16.xpose.msra.mxu0 0
  %1060 = vmatprep.subr.bf16.mxu0 0
  %1061 = vmatpush1.bf16.xpose.msra.mxu0 0
  %1062 = vmatprep.subr.bf16.mxu0 0
  %1063 = vmatpush1.bf16.xpose.msra.mxu0 0
  %1064 = vmatprep.subr.bf16.mxu0 0
  %1065 = vmatpush1.bf16.xpose.msra.mxu0 0
  %1066 = vmatprep.subr.bf16.mxu0 0
  %1067 = vmatpush1.bf16.xpose.msra.mxu0 0
  %1068 = vmatprep.subr.bf16.mxu0 0
  %1069 = vmatpush1.bf16.xpose.msra.mxu0 0
  %1070 = vmatprep.subr.bf16.mxu0 0
  %1071 = vmatpush1.bf16.xpose.msra.mxu0 0
  %1072 = vmatprep.mubr.bf16.mxu0 0
  %1073 = vmatmul.mubr.bf16.gmra.mrb[0].mxu0 %v1035
  %v1074 = vpop.f32.mrb[0].mxu0
  %v1075 = vadd.f32 0.0, %v1074
  %v1076 = vpop.f32.mrb[0].mxu0
  %v1077 = vpop.f32.mrb[0].mxu0
  %v1078 = vpop.f32.mrb[0].mxu0
  %1079 = vdwg.mxu0
  %1080 = vrot.lane.b32.xlu0 %v141, 120
  %v1081 = vpop.permute.xlu0 %1080
  %1082 = vrot.lane.b32.xlu0 %v141, 88
  %v1083 = vpop.permute.xlu0 %1082
  %v1085 = vsel %vm151, %v1081, 0
  %v1088 = vsel %vm151, %v1083, 0
  %1090 = vmatprep.subr.bf16.mxu0 0
  %1091 = vmatpush1.bf16.xpose.msra.mxu0 %v1088
  %1092 = vmatprep.subr.bf16.mxu0 0
  %1093 = vmatpush1.bf16.xpose.msra.mxu0 0
  %1094 = vmatprep.subr.bf16.mxu0 0
  %1095 = vmatpush1.bf16.xpose.msra.mxu0 0
  %1096 = vmatprep.subr.bf16.mxu0 0
  %1097 = vmatpush1.bf16.xpose.msra.mxu0 0
  %1098 = vmatprep.subr.bf16.mxu0 0
  %1099 = vmatpush1.bf16.xpose.msra.mxu0 0
  %1100 = vmatprep.subr.bf16.mxu0 0
  %1101 = vmatpush1.bf16.xpose.msra.mxu0 0
  %1102 = vmatprep.subr.bf16.mxu0 0
  %1103 = vmatpush1.bf16.xpose.msra.mxu0 0
  %1104 = vmatprep.subr.bf16.mxu0 0
  %1105 = vmatpush1.bf16.xpose.msra.mxu0 0
  %1106 = vmatprep.subr.bf16.mxu0 0
  %1107 = vmatpush1.bf16.xpose.msra.mxu0 0
  %1108 = vmatprep.subr.bf16.mxu0 0
  %1109 = vmatpush1.bf16.xpose.msra.mxu0 0
  %1110 = vmatprep.subr.bf16.mxu0 0
  %1111 = vmatpush1.bf16.xpose.msra.mxu0 0
  %1112 = vmatprep.subr.bf16.mxu0 0
  %1113 = vmatpush1.bf16.xpose.msra.mxu0 0
  %1114 = vmatprep.subr.bf16.mxu0 0
  %1115 = vmatpush1.bf16.xpose.msra.mxu0 0
  %1116 = vmatprep.subr.bf16.mxu0 0
  %1117 = vmatpush1.bf16.xpose.msra.mxu0 0
  %1118 = vmatprep.subr.bf16.mxu0 0
  %1119 = vmatpush1.bf16.xpose.msra.mxu0 0
  %1120 = vmatprep.subr.bf16.mxu0 0
  %1121 = vmatpush1.bf16.xpose.msra.mxu0 0
  %1122 = vmatprep.mubr.bf16.mxu0 0
  %1123 = vmatmul.mubr.bf16.gmra.mrb[0].mxu0 %v1085
  %v1124 = vpop.f32.mrb[0].mxu0
  %v1125 = vadd.f32 0.0, %v1124
  %v1126 = vpop.f32.mrb[0].mxu0
  %v1127 = vpop.f32.mrb[0].mxu0
  %v1128 = vpop.f32.mrb[0].mxu0
  %1129 = vdwg.mxu0
  %1130 = vrot.lane.b32.xlu0 %v142, 120
  %v1131 = vpop.permute.xlu0 %1130
  %1132 = vrot.lane.b32.xlu0 %v142, 88
  %v1133 = vpop.permute.xlu0 %1132
  %v1135 = vsel %vm151, %v1131, 0
  %v1138 = vsel %vm151, %v1133, 0
  %1140 = vmatprep.subr.bf16.mxu0 0
  %1141 = vmatpush1.bf16.xpose.msra.mxu0 %v1138
  %1142 = vmatprep.subr.bf16.mxu0 0
  %1143 = vmatpush1.bf16.xpose.msra.mxu0 0
  %1144 = vmatprep.subr.bf16.mxu0 0
  %1145 = vmatpush1.bf16.xpose.msra.mxu0 0
  %1146 = vmatprep.subr.bf16.mxu0 0
  %1147 = vmatpush1.bf16.xpose.msra.mxu0 0
  %1148 = vmatprep.subr.bf16.mxu0 0
  %1149 = vmatpush1.bf16.xpose.msra.mxu0 0
  %1150 = vmatprep.subr.bf16.mxu0 0
  %1151 = vmatpush1.bf16.xpose.msra.mxu0 0
  %1152 = vmatprep.subr.bf16.mxu0 0
  %1153 = vmatpush1.bf16.xpose.msra.mxu0 0
  %1154 = vmatprep.subr.bf16.mxu0 0
  %1155 = vmatpush1.bf16.xpose.msra.mxu0 0
  %1156 = vmatprep.subr.bf16.mxu0 0
  %1157 = vmatpush1.bf16.xpose.msra.mxu0 0
  %1158 = vmatprep.subr.bf16.mxu0 0
  %1159 = vmatpush1.bf16.xpose.msra.mxu0 0
  %1160 = vmatprep.subr.bf16.mxu0 0
  %1161 = vmatpush1.bf16.xpose.msra.mxu0 0
  %1162 = vmatprep.subr.bf16.mxu0 0
  %1163 = vmatpush1.bf16.xpose.msra.mxu0 0
  %1164 = vmatprep.subr.bf16.mxu0 0
  %1165 = vmatpush1.bf16.xpose.msra.mxu0 0
  %1166 = vmatprep.subr.bf16.mxu0 0
  %1167 = vmatpush1.bf16.xpose.msra.mxu0 0
  %1168 = vmatprep.subr.bf16.mxu0 0
  %1169 = vmatpush1.bf16.xpose.msra.mxu0 0
  %1170 = vmatprep.subr.bf16.mxu0 0
  %1171 = vmatpush1.bf16.xpose.msra.mxu0 0
  %1172 = vmatprep.mubr.bf16.mxu0 0
  %1173 = vmatmul.mubr.bf16.gmra.mrb[0].mxu0 %v1135
  %v1174 = vpop.f32.mrb[0].mxu0
  %v1175 = vadd.f32 0.0, %v1174
  %v1176 = vpop.f32.mrb[0].mxu0
  %v1177 = vpop.f32.mrb[0].mxu0
  %v1178 = vpop.f32.mrb[0].mxu0
  %1179 = vdwg.mxu0
  %1180 = vrot.lane.b32.xlu0 %v143, 120
  %v1181 = vpop.permute.xlu0 %1180
  %1182 = vrot.lane.b32.xlu0 %v143, 88
  %v1183 = vpop.permute.xlu0 %1182
  %v1185 = vsel %vm151, %v1181, 0
  %v1188 = vsel %vm151, %v1183, 0
  %1190 = vmatprep.subr.bf16.mxu0 0
  %1191 = vmatpush1.bf16.xpose.msra.mxu0 %v1188
  %1192 = vmatprep.subr.bf16.mxu0 0
  %1193 = vmatpush1.bf16.xpose.msra.mxu0 0
  %1194 = vmatprep.subr.bf16.mxu0 0
  %1195 = vmatpush1.bf16.xpose.msra.mxu0 0
  %1196 = vmatprep.subr.bf16.mxu0 0
  %1197 = vmatpush1.bf16.xpose.msra.mxu0 0
  %1198 = vmatprep.subr.bf16.mxu0 0
  %1199 = vmatpush1.bf16.xpose.msra.mxu0 0
  %1200 = vmatprep.subr.bf16.mxu0 0
  %1201 = vmatpush1.bf16.xpose.msra.mxu0 0
  %1202 = vmatprep.subr.bf16.mxu0 0
  %1203 = vmatpush1.bf16.xpose.msra.mxu0 0
  %1204 = vmatprep.subr.bf16.mxu0 0
  %1205 = vmatpush1.bf16.xpose.msra.mxu0 0
  %1206 = vmatprep.subr.bf16.mxu0 0
  %1207 = vmatpush1.bf16.xpose.msra.mxu0 0
  %1208 = vmatprep.subr.bf16.mxu0 0
  %1209 = vmatpush1.bf16.xpose.msra.mxu0 0
  %1210 = vmatprep.subr.bf16.mxu0 0
  %1211 = vmatpush1.bf16.xpose.msra.mxu0 0
  %1212 = vmatprep.subr.bf16.mxu0 0
  %1213 = vmatpush1.bf16.xpose.msra.mxu0 0
  %1214 = vmatprep.subr.bf16.mxu0 0
  %1215 = vmatpush1.bf16.xpose.msra.mxu0 0
  %1216 = vmatprep.subr.bf16.mxu0 0
  %1217 = vmatpush1.bf16.xpose.msra.mxu0 0
  %1218 = vmatprep.subr.bf16.mxu0 0
  %1219 = vmatpush1.bf16.xpose.msra.mxu0 0
  %1220 = vmatprep.subr.bf16.mxu0 0
  %1221 = vmatpush1.bf16.xpose.msra.mxu0 0
  %1222 = vmatprep.mubr.bf16.mxu0 0
  %1223 = vmatmul.mubr.bf16.gmra.mrb[0].mxu0 %v1185
  %v1224 = vpop.f32.mrb[0].mxu0
  %v1225 = vadd.f32 0.0, %v1224
  %v1226 = vpop.f32.mrb[0].mxu0
  %v1227 = vpop.f32.mrb[0].mxu0
  %v1228 = vpop.f32.mrb[0].mxu0
  %1229 = vdwg.mxu0
  %1230 = vrot.lane.b32.xlu0 %v144, 120
  %v1231 = vpop.permute.xlu0 %1230
  %1232 = vrot.lane.b32.xlu0 %v144, 88
  %v1233 = vpop.permute.xlu0 %1232
  %v1235 = vsel %vm151, %v1231, 0
  %v1238 = vsel %vm151, %v1233, 0
  %1240 = vmatprep.subr.bf16.mxu0 0
  %1241 = vmatpush1.bf16.xpose.msra.mxu0 %v1238
  %1242 = vmatprep.subr.bf16.mxu0 0
  %1243 = vmatpush1.bf16.xpose.msra.mxu0 0
  %1244 = vmatprep.subr.bf16.mxu0 0
  %1245 = vmatpush1.bf16.xpose.msra.mxu0 0
  %1246 = vmatprep.subr.bf16.mxu0 0
  %1247 = vmatpush1.bf16.xpose.msra.mxu0 0
  %1248 = vmatprep.subr.bf16.mxu0 0
  %1249 = vmatpush1.bf16.xpose.msra.mxu0 0
  %1250 = vmatprep.subr.bf16.mxu0 0
  %1251 = vmatpush1.bf16.xpose.msra.mxu0 0
  %1252 = vmatprep.subr.bf16.mxu0 0
  %1253 = vmatpush1.bf16.xpose.msra.mxu0 0
  %1254 = vmatprep.subr.bf16.mxu0 0
  %1255 = vmatpush1.bf16.xpose.msra.mxu0 0
  %1256 = vmatprep.subr.bf16.mxu0 0
  %1257 = vmatpush1.bf16.xpose.msra.mxu0 0
  %1258 = vmatprep.subr.bf16.mxu0 0
  %1259 = vmatpush1.bf16.xpose.msra.mxu0 0
  %1260 = vmatprep.subr.bf16.mxu0 0
  %1261 = vmatpush1.bf16.xpose.msra.mxu0 0
  %1262 = vmatprep.subr.bf16.mxu0 0
  %1263 = vmatpush1.bf16.xpose.msra.mxu0 0
  %1264 = vmatprep.subr.bf16.mxu0 0
  %1265 = vmatpush1.bf16.xpose.msra.mxu0 0
  %1266 = vmatprep.subr.bf16.mxu0 0
  %1267 = vmatpush1.bf16.xpose.msra.mxu0 0
  %1268 = vmatprep.subr.bf16.mxu0 0
  %1269 = vmatpush1.bf16.xpose.msra.mxu0 0
  %1270 = vmatprep.subr.bf16.mxu0 0
  %1271 = vmatpush1.bf16.xpose.msra.mxu0 0
  %1272 = vmatprep.mubr.bf16.mxu0 0
  %1273 = vmatmul.mubr.bf16.gmra.mrb[0].mxu0 %v1235
  %v1274 = vpop.f32.mrb[0].mxu0
  %v1275 = vadd.f32 0.0, %v1274
  %v1276 = vpop.f32.mrb[0].mxu0
  %v1277 = vpop.f32.mrb[0].mxu0
  %v1278 = vpop.f32.mrb[0].mxu0
  %1279 = vdwg.mxu0
  %1280 = vrot.lane.b32.xlu0 %v145, 120
  %v1281 = vpop.permute.xlu0 %1280
  %1282 = vrot.lane.b32.xlu0 %v145, 88
  %v1283 = vpop.permute.xlu0 %1282
  %v1285 = vsel %vm151, %v1281, 0
  %v1288 = vsel %vm151, %v1283, 0
  %1290 = vmatprep.subr.bf16.mxu0 0
  %1291 = vmatpush1.bf16.xpose.msra.mxu0 %v1288
  %1292 = vmatprep.subr.bf16.mxu0 0
  %1293 = vmatpush1.bf16.xpose.msra.mxu0 0
  %1294 = vmatprep.subr.bf16.mxu0 0
  %1295 = vmatpush1.bf16.xpose.msra.mxu0 0
  %1296 = vmatprep.subr.bf16.mxu0 0
  %1297 = vmatpush1.bf16.xpose.msra.mxu0 0
  %1298 = vmatprep.subr.bf16.mxu0 0
  %1299 = vmatpush1.bf16.xpose.msra.mxu0 0
  %1300 = vmatprep.subr.bf16.mxu0 0
  %1301 = vmatpush1.bf16.xpose.msra.mxu0 0
  %1302 = vmatprep.subr.bf16.mxu0 0
  %1303 = vmatpush1.bf16.xpose.msra.mxu0 0
  %1304 = vmatprep.subr.bf16.mxu0 0
  %1305 = vmatpush1.bf16.xpose.msra.mxu0 0
  %1306 = vmatprep.subr.bf16.mxu0 0
  %1307 = vmatpush1.bf16.xpose.msra.mxu0 0
  %1308 = vmatprep.subr.bf16.mxu0 0
  %1309 = vmatpush1.bf16.xpose.msra.mxu0 0
  %1310 = vmatprep.subr.bf16.mxu0 0
  %1311 = vmatpush1.bf16.xpose.msra.mxu0 0
  %1312 = vmatprep.subr.bf16.mxu0 0
  %1313 = vmatpush1.bf16.xpose.msra.mxu0 0
  %1314 = vmatprep.subr.bf16.mxu0 0
  %1315 = vmatpush1.bf16.xpose.msra.mxu0 0
  %1316 = vmatprep.subr.bf16.mxu0 0
  %1317 = vmatpush1.bf16.xpose.msra.mxu0 0
  %1318 = vmatprep.subr.bf16.mxu0 0
  %1319 = vmatpush1.bf16.xpose.msra.mxu0 0
  %1320 = vmatprep.subr.bf16.mxu0 0
  %1321 = vmatpush1.bf16.xpose.msra.mxu0 0
  %1322 = vmatprep.mubr.bf16.mxu0 0
  %1323 = vmatmul.mubr.bf16.gmra.mrb[0].mxu0 %v1285
  %v1324 = vpop.f32.mrb[0].mxu0
  %v1325 = vadd.f32 0.0, %v1324
  %v1326 = vpop.f32.mrb[0].mxu0
  %v1327 = vpop.f32.mrb[0].mxu0
  %v1328 = vpop.f32.mrb[0].mxu0
  %1329 = vdwg.mxu0
  %1330 = vrot.lane.b32.xlu0 %v146, 120
  %v1331 = vpop.permute.xlu0 %1330
  %1332 = vrot.lane.b32.xlu0 %v146, 88
  %v1333 = vpop.permute.xlu0 %1332
  %v1335 = vsel %vm151, %v1331, 0
  %v1338 = vsel %vm151, %v1333, 0
  %1340 = vmatprep.subr.bf16.mxu0 0
  %1341 = vmatpush1.bf16.xpose.msra.mxu0 %v1338
  %1342 = vmatprep.subr.bf16.mxu0 0
  %1343 = vmatpush1.bf16.xpose.msra.mxu0 0
  %1344 = vmatprep.subr.bf16.mxu0 0
  %1345 = vmatpush1.bf16.xpose.msra.mxu0 0
  %1346 = vmatprep.subr.bf16.mxu0 0
  %1347 = vmatpush1.bf16.xpose.msra.mxu0 0
  %1348 = vmatprep.subr.bf16.mxu0 0
  %1349 = vmatpush1.bf16.xpose.msra.mxu0 0
  %1350 = vmatprep.subr.bf16.mxu0 0
  %1351 = vmatpush1.bf16.xpose.msra.mxu0 0
  %1352 = vmatprep.subr.bf16.mxu0 0
  %1353 = vmatpush1.bf16.xpose.msra.mxu0 0
  %1354 = vmatprep.subr.bf16.mxu0 0
  %1355 = vmatpush1.bf16.xpose.msra.mxu0 0
  %1356 = vmatprep.subr.bf16.mxu0 0
  %1357 = vmatpush1.bf16.xpose.msra.mxu0 0
  %1358 = vmatprep.subr.bf16.mxu0 0
  %1359 = vmatpush1.bf16.xpose.msra.mxu0 0
  %1360 = vmatprep.subr.bf16.mxu0 0
  %1361 = vmatpush1.bf16.xpose.msra.mxu0 0
  %1362 = vmatprep.subr.bf16.mxu0 0
  %1363 = vmatpush1.bf16.xpose.msra.mxu0 0
  %1364 = vmatprep.subr.bf16.mxu0 0
  %1365 = vmatpush1.bf16.xpose.msra.mxu0 0
  %1366 = vmatprep.subr.bf16.mxu0 0
  %1367 = vmatpush1.bf16.xpose.msra.mxu0 0
  %1368 = vmatprep.subr.bf16.mxu0 0
  %1369 = vmatpush1.bf16.xpose.msra.mxu0 0
  %1370 = vmatprep.subr.bf16.mxu0 0
  %1371 = vmatpush1.bf16.xpose.msra.mxu0 0
  %1372 = vmatprep.mubr.bf16.mxu0 0
  %1373 = vmatmul.mubr.bf16.gmra.mrb[0].mxu0 %v1335
  %v1374 = vpop.f32.mrb[0].mxu0
  %v1375 = vadd.f32 0.0, %v1374
  %v1376 = vpop.f32.mrb[0].mxu0
  %v1377 = vpop.f32.mrb[0].mxu0
  %v1378 = vpop.f32.mrb[0].mxu0
  %1379 = vdwg.mxu0
  %1380 = vrot.lane.b32.xlu0 %v147, 120
  %v1381 = vpop.permute.xlu0 %1380
  %1382 = vrot.lane.b32.xlu0 %v147, 88
  %v1383 = vpop.permute.xlu0 %1382
  %v1385 = vsel %vm151, %v1381, 0
  %v1388 = vsel %vm151, %v1383, 0
  %1390 = vmatprep.subr.bf16.mxu0 0
  %1391 = vmatpush1.bf16.xpose.msra.mxu0 %v1388
  %1392 = vmatprep.subr.bf16.mxu0 0
  %1393 = vmatpush1.bf16.xpose.msra.mxu0 0
  %1394 = vmatprep.subr.bf16.mxu0 0
  %1395 = vmatpush1.bf16.xpose.msra.mxu0 0
  %1396 = vmatprep.subr.bf16.mxu0 0
  %1397 = vmatpush1.bf16.xpose.msra.mxu0 0
  %1398 = vmatprep.subr.bf16.mxu0 0
  %1399 = vmatpush1.bf16.xpose.msra.mxu0 0
  %1400 = vmatprep.subr.bf16.mxu0 0
  %1401 = vmatpush1.bf16.xpose.msra.mxu0 0
  %1402 = vmatprep.subr.bf16.mxu0 0
  %1403 = vmatpush1.bf16.xpose.msra.mxu0 0
  %1404 = vmatprep.subr.bf16.mxu0 0
  %1405 = vmatpush1.bf16.xpose.msra.mxu0 0
  %1406 = vmatprep.subr.bf16.mxu0 0
  %1407 = vmatpush1.bf16.xpose.msra.mxu0 0
  %1408 = vmatprep.subr.bf16.mxu0 0
  %1409 = vmatpush1.bf16.xpose.msra.mxu0 0
  %1410 = vmatprep.subr.bf16.mxu0 0
  %1411 = vmatpush1.bf16.xpose.msra.mxu0 0
  %1412 = vmatprep.subr.bf16.mxu0 0
  %1413 = vmatpush1.bf16.xpose.msra.mxu0 0
  %1414 = vmatprep.subr.bf16.mxu0 0
  %1415 = vmatpush1.bf16.xpose.msra.mxu0 0
  %1416 = vmatprep.subr.bf16.mxu0 0
  %1417 = vmatpush1.bf16.xpose.msra.mxu0 0
  %1418 = vmatprep.subr.bf16.mxu0 0
  %1419 = vmatpush1.bf16.xpose.msra.mxu0 0
  %1420 = vmatprep.subr.bf16.mxu0 0
  %1421 = vmatpush1.bf16.xpose.msra.mxu0 0
  %1422 = vmatprep.mubr.bf16.mxu0 0
  %1423 = vmatmul.mubr.bf16.gmra.mrb[0].mxu0 %v1385
  %v1424 = vpop.f32.mrb[0].mxu0
  %v1425 = vadd.f32 0.0, %v1424
  %v1426 = vpop.f32.mrb[0].mxu0
  %v1427 = vpop.f32.mrb[0].mxu0
  %v1428 = vpop.f32.mrb[0].mxu0
  %1429 = vdwg.mxu0
  %v1430 = vmul.f32 %v1075, 0.35355338
  %v1431 = vmul.f32 %v1125, 0.35355338
  %v1432 = vmul.f32 %v1175, 0.35355338
  %v1433 = vmul.f32 %v1225, 0.35355338
  %v1434 = vmul.f32 %v1275, 0.35355338
  %v1435 = vmul.f32 %v1325, 0.35355338
  %v1436 = vmul.f32 %v1375, 0.35355338
  %v1437 = vmul.f32 %v1425, 0.35355338
  %v1438 = vsel %vm151, %v1430, -inf
  %1439 = vmax.xlane.f32.xlu0 %v1438
  %v1440 = vpop.xlane.xlu0 %1439
  %v1441 = vsel %vm151, %v1431, -inf
  %1442 = vmax.xlane.f32.xlu0 %v1441
  %v1443 = vpop.xlane.xlu0 %1442
  %v1444 = vsel %vm151, %v1432, -inf
  %1445 = vmax.xlane.f32.xlu0 %v1444
  %v1446 = vpop.xlane.xlu0 %1445
  %v1447 = vsel %vm151, %v1433, -inf
  %1448 = vmax.xlane.f32.xlu0 %v1447
  %v1449 = vpop.xlane.xlu0 %1448
  %v1450 = vsel %vm151, %v1434, -inf
  %1451 = vmax.xlane.f32.xlu0 %v1450
  %v1452 = vpop.xlane.xlu0 %1451
  %v1453 = vsel %vm151, %v1435, -inf
  %1454 = vmax.xlane.f32.xlu0 %v1453
  %v1455 = vpop.xlane.xlu0 %1454
  %v1456 = vsel %vm151, %v1436, -inf
  %1457 = vmax.xlane.f32.xlu0 %v1456
  %v1458 = vpop.xlane.xlu0 %1457
  %v1459 = vsel %vm151, %v1437, -inf
  %1460 = vmax.xlane.f32.xlu0 %v1459
  %v1461 = vpop.xlane.xlu0 %1460
  %v1462 = vsub.f32 %v1430, %v1440
  %v1463 = vsub.f32 %v1431, %v1443
  %v1464 = vsub.f32 %v1432, %v1446
  %v1465 = vsub.f32 %v1433, %v1449
  %v1466 = vsub.f32 %v1434, %v1452
  %v1467 = vsub.f32 %v1435, %v1455
  %v1468 = vsub.f32 %v1436, %v1458
  %v1469 = vsub.f32 %v1437, %v1461
  %v1470 = vmul.f32 %v1462, 1.442695
  %v1471 = vpow.pop %v1470
  %v1472 = vmul.f32 %v1463, 1.442695
  %v1473 = vpow.pop %v1472
  %v1474 = vmul.f32 %v1464, 1.442695
  %v1475 = vpow.pop %v1474
  %v1476 = vmul.f32 %v1465, 1.442695
  %v1477 = vpow.pop %v1476
  %v1478 = vmul.f32 %v1466, 1.442695
  %v1479 = vpow.pop %v1478
  %v1480 = vmul.f32 %v1467, 1.442695
  %v1481 = vpow.pop %v1480
  %v1482 = vmul.f32 %v1468, 1.442695
  %v1483 = vpow.pop %v1482
  %v1484 = vmul.f32 %v1469, 1.442695
  %v1485 = vpow.pop %v1484
  %v1486 = vsel %vm151, %v1471, 0.0
  %1487 = vadd.xlane.f32.xlu0 %v1486
  %v1488 = vpop.xlane.xlu0 %1487
  %v1489 = vsel %vm151, %v1473, 0.0
  %1490 = vadd.xlane.f32.xlu0 %v1489
  %v1491 = vpop.xlane.xlu0 %1490
  %v1492 = vsel %vm151, %v1475, 0.0
  %1493 = vadd.xlane.f32.xlu0 %v1492
  %v1494 = vpop.xlane.xlu0 %1493
  %v1495 = vsel %vm151, %v1477, 0.0
  %1496 = vadd.xlane.f32.xlu0 %v1495
  %v1497 = vpop.xlane.xlu0 %1496
  %v1498 = vsel %vm151, %v1479, 0.0
  %1499 = vadd.xlane.f32.xlu0 %v1498
  %v1500 = vpop.xlane.xlu0 %1499
  %v1501 = vsel %vm151, %v1481, 0.0
  %1502 = vadd.xlane.f32.xlu0 %v1501
  %v1503 = vpop.xlane.xlu0 %1502
  %v1504 = vsel %vm151, %v1483, 0.0
  %1505 = vadd.xlane.f32.xlu0 %v1504
  %v1506 = vpop.xlane.xlu0 %1505
  %v1507 = vsel %vm151, %v1485, 0.0
  %1508 = vadd.xlane.f32.xlu0 %v1507
  %v1509 = vpop.xlane.xlu0 %1508
  %v1510 = vrcp.pop %v1488
  %v1511 = vrcp.pop %v1491
  %v1512 = vrcp.pop %v1494
  %v1513 = vrcp.pop %v1497
  %v1514 = vrcp.pop %v1500
  %v1515 = vrcp.pop %v1503
  %v1516 = vrcp.pop %v1506
  %v1517 = vrcp.pop %v1509
  %v1518 = vmul.f32 %v1471, %v1510
  %v1519 = vmul.f32 %v1473, %v1511
  %v1520 = vmul.f32 %v1475, %v1512
  %v1521 = vmul.f32 %v1477, %v1513
  %v1522 = vmul.f32 %v1479, %v1514
  %v1523 = vmul.f32 %v1481, %v1515
  %v1524 = vmul.f32 %v1483, %v1516
  %v1525 = vmul.f32 %v1485, %v1517
  %v1526 = vpack.c.bf16 %v1518, %v1518
  %v1527 = vpack.c.bf16 %v1519, %v1519
  %v1528 = vpack.c.bf16 %v1520, %v1520
  %v1529 = vpack.c.bf16 %v1521, %v1521
  %v1530 = vpack.c.bf16 %v1522, %v1522
  %v1531 = vpack.c.bf16 %v1523, %v1523
  %v1532 = vpack.c.bf16 %v1524, %v1524
  %v1533 = vpack.c.bf16 %v1525, %v1525
  %1534 = vrot.lane.b32.xlu0 %v140, 56
  %v1535 = vpop.permute.xlu0 %1534
  %v1537 = vsel %vm151, %v1526, 0
  %v1540 = vsel %vm650, %v1535, 0
  %1542 = vmatprep.subr.bf16.mxu0 0
  %1543 = vmatpush1.bf16.msra.mxu0 %v1540
  %1544 = vmatprep.subr.bf16.mxu0 0
  %1545 = vmatpush1.bf16.msra.mxu0 0
  %1546 = vmatprep.subr.bf16.mxu0 0
  %1547 = vmatpush1.bf16.msra.mxu0 0
  %1548 = vmatprep.subr.bf16.mxu0 0
  %1549 = vmatpush1.bf16.msra.mxu0 0
  %1550 = vmatprep.subr.bf16.mxu0 0
  %1551 = vmatpush1.bf16.msra.mxu0 0
  %1552 = vmatprep.subr.bf16.mxu0 0
  %1553 = vmatpush1.bf16.msra.mxu0 0
  %1554 = vmatprep.subr.bf16.mxu0 0
  %1555 = vmatpush1.bf16.msra.mxu0 0
  %1556 = vmatprep.subr.bf16.mxu0 0
  %1557 = vmatpush1.bf16.msra.mxu0 0
  %1558 = vmatprep.subr.bf16.mxu0 0
  %1559 = vmatpush1.bf16.msra.mxu0 0
  %1560 = vmatprep.subr.bf16.mxu0 0
  %1561 = vmatpush1.bf16.msra.mxu0 0
  %1562 = vmatprep.subr.bf16.mxu0 0
  %1563 = vmatpush1.bf16.msra.mxu0 0
  %1564 = vmatprep.subr.bf16.mxu0 0
  %1565 = vmatpush1.bf16.msra.mxu0 0
  %1566 = vmatprep.subr.bf16.mxu0 0
  %1567 = vmatpush1.bf16.msra.mxu0 0
  %1568 = vmatprep.subr.bf16.mxu0 0
  %1569 = vmatpush1.bf16.msra.mxu0 0
  %1570 = vmatprep.subr.bf16.mxu0 0
  %1571 = vmatpush1.bf16.msra.mxu0 0
  %1572 = vmatprep.subr.bf16.mxu0 0
  %1573 = vmatpush1.bf16.msra.mxu0 0
  %1574 = vmatprep.mubr.bf16.mxu0 0
  %1575 = vmatmul.mubr.bf16.gmra.mrb[0].mxu0 %v1537
  %v1576 = vpop.f32.mrb[0].mxu0
  %v1577 = vadd.f32 0.0, %v1576
  %v1578 = vpop.f32.mrb[0].mxu0
  %v1579 = vpop.f32.mrb[0].mxu0
  %v1580 = vpop.f32.mrb[0].mxu0
  %1581 = vdwg.mxu0
  %1582 = vrot.lane.b32.xlu0 %v141, 56
  %v1583 = vpop.permute.xlu0 %1582
  %v1585 = vsel %vm151, %v1527, 0
  %v1588 = vsel %vm650, %v1583, 0
  %1590 = vmatprep.subr.bf16.mxu0 0
  %1591 = vmatpush1.bf16.msra.mxu0 %v1588
  %1592 = vmatprep.subr.bf16.mxu0 0
  %1593 = vmatpush1.bf16.msra.mxu0 0
  %1594 = vmatprep.subr.bf16.mxu0 0
  %1595 = vmatpush1.bf16.msra.mxu0 0
  %1596 = vmatprep.subr.bf16.mxu0 0
  %1597 = vmatpush1.bf16.msra.mxu0 0
  %1598 = vmatprep.subr.bf16.mxu0 0
  %1599 = vmatpush1.bf16.msra.mxu0 0
  %1600 = vmatprep.subr.bf16.mxu0 0
  %1601 = vmatpush1.bf16.msra.mxu0 0
  %1602 = vmatprep.subr.bf16.mxu0 0
  %1603 = vmatpush1.bf16.msra.mxu0 0
  %1604 = vmatprep.subr.bf16.mxu0 0
  %1605 = vmatpush1.bf16.msra.mxu0 0
  %1606 = vmatprep.subr.bf16.mxu0 0
  %1607 = vmatpush1.bf16.msra.mxu0 0
  %1608 = vmatprep.subr.bf16.mxu0 0
  %1609 = vmatpush1.bf16.msra.mxu0 0
  %1610 = vmatprep.subr.bf16.mxu0 0
  %1611 = vmatpush1.bf16.msra.mxu0 0
  %1612 = vmatprep.subr.bf16.mxu0 0
  %1613 = vmatpush1.bf16.msra.mxu0 0
  %1614 = vmatprep.subr.bf16.mxu0 0
  %1615 = vmatpush1.bf16.msra.mxu0 0
  %1616 = vmatprep.subr.bf16.mxu0 0
  %1617 = vmatpush1.bf16.msra.mxu0 0
  %1618 = vmatprep.subr.bf16.mxu0 0
  %1619 = vmatpush1.bf16.msra.mxu0 0
  %1620 = vmatprep.subr.bf16.mxu0 0
  %1621 = vmatpush1.bf16.msra.mxu0 0
  %1622 = vmatprep.mubr.bf16.mxu0 0
  %1623 = vmatmul.mubr.bf16.gmra.mrb[0].mxu0 %v1585
  %v1624 = vpop.f32.mrb[0].mxu0
  %v1625 = vadd.f32 0.0, %v1624
  %v1626 = vpop.f32.mrb[0].mxu0
  %v1627 = vpop.f32.mrb[0].mxu0
  %v1628 = vpop.f32.mrb[0].mxu0
  %1629 = vdwg.mxu0
  %1630 = vrot.lane.b32.xlu0 %v142, 56
  %v1631 = vpop.permute.xlu0 %1630
  %v1633 = vsel %vm151, %v1528, 0
  %v1636 = vsel %vm650, %v1631, 0
  %1638 = vmatprep.subr.bf16.mxu0 0
  %1639 = vmatpush1.bf16.msra.mxu0 %v1636
  %1640 = vmatprep.subr.bf16.mxu0 0
  %1641 = vmatpush1.bf16.msra.mxu0 0
  %1642 = vmatprep.subr.bf16.mxu0 0
  %1643 = vmatpush1.bf16.msra.mxu0 0
  %1644 = vmatprep.subr.bf16.mxu0 0
  %1645 = vmatpush1.bf16.msra.mxu0 0
  %1646 = vmatprep.subr.bf16.mxu0 0
  %1647 = vmatpush1.bf16.msra.mxu0 0
  %1648 = vmatprep.subr.bf16.mxu0 0
  %1649 = vmatpush1.bf16.msra.mxu0 0
  %1650 = vmatprep.subr.bf16.mxu0 0
  %1651 = vmatpush1.bf16.msra.mxu0 0
  %1652 = vmatprep.subr.bf16.mxu0 0
  %1653 = vmatpush1.bf16.msra.mxu0 0
  %1654 = vmatprep.subr.bf16.mxu0 0
  %1655 = vmatpush1.bf16.msra.mxu0 0
  %1656 = vmatprep.subr.bf16.mxu0 0
  %1657 = vmatpush1.bf16.msra.mxu0 0
  %1658 = vmatprep.subr.bf16.mxu0 0
  %1659 = vmatpush1.bf16.msra.mxu0 0
  %1660 = vmatprep.subr.bf16.mxu0 0
  %1661 = vmatpush1.bf16.msra.mxu0 0
  %1662 = vmatprep.subr.bf16.mxu0 0
  %1663 = vmatpush1.bf16.msra.mxu0 0
  %1664 = vmatprep.subr.bf16.mxu0 0
  %1665 = vmatpush1.bf16.msra.mxu0 0
  %1666 = vmatprep.subr.bf16.mxu0 0
  %1667 = vmatpush1.bf16.msra.mxu0 0
  %1668 = vmatprep.subr.bf16.mxu0 0
  %1669 = vmatpush1.bf16.msra.mxu0 0
  %1670 = vmatprep.mubr.bf16.mxu0 0
  %1671 = vmatmul.mubr.bf16.gmra.mrb[0].mxu0 %v1633
  %v1672 = vpop.f32.mrb[0].mxu0
  %v1673 = vadd.f32 0.0, %v1672
  %v1674 = vpop.f32.mrb[0].mxu0
  %v1675 = vpop.f32.mrb[0].mxu0
  %v1676 = vpop.f32.mrb[0].mxu0
  %1677 = vdwg.mxu0
  %1678 = vrot.lane.b32.xlu0 %v143, 56
  %v1679 = vpop.permute.xlu0 %1678
  %v1681 = vsel %vm151, %v1529, 0
  %v1684 = vsel %vm650, %v1679, 0
  %1686 = vmatprep.subr.bf16.mxu0 0
  %1687 = vmatpush1.bf16.msra.mxu0 %v1684
  %1688 = vmatprep.subr.bf16.mxu0 0
  %1689 = vmatpush1.bf16.msra.mxu0 0
  %1690 = vmatprep.subr.bf16.mxu0 0
  %1691 = vmatpush1.bf16.msra.mxu0 0
  %1692 = vmatprep.subr.bf16.mxu0 0
  %1693 = vmatpush1.bf16.msra.mxu0 0
  %1694 = vmatprep.subr.bf16.mxu0 0
  %1695 = vmatpush1.bf16.msra.mxu0 0
  %1696 = vmatprep.subr.bf16.mxu0 0
  %1697 = vmatpush1.bf16.msra.mxu0 0
  %1698 = vmatprep.subr.bf16.mxu0 0
  %1699 = vmatpush1.bf16.msra.mxu0 0
  %1700 = vmatprep.subr.bf16.mxu0 0
  %1701 = vmatpush1.bf16.msra.mxu0 0
  %1702 = vmatprep.subr.bf16.mxu0 0
  %1703 = vmatpush1.bf16.msra.mxu0 0
  %1704 = vmatprep.subr.bf16.mxu0 0
  %1705 = vmatpush1.bf16.msra.mxu0 0
  %1706 = vmatprep.subr.bf16.mxu0 0
  %1707 = vmatpush1.bf16.msra.mxu0 0
  %1708 = vmatprep.subr.bf16.mxu0 0
  %1709 = vmatpush1.bf16.msra.mxu0 0
  %1710 = vmatprep.subr.bf16.mxu0 0
  %1711 = vmatpush1.bf16.msra.mxu0 0
  %1712 = vmatprep.subr.bf16.mxu0 0
  %1713 = vmatpush1.bf16.msra.mxu0 0
  %1714 = vmatprep.subr.bf16.mxu0 0
  %1715 = vmatpush1.bf16.msra.mxu0 0
  %1716 = vmatprep.subr.bf16.mxu0 0
  %1717 = vmatpush1.bf16.msra.mxu0 0
  %1718 = vmatprep.mubr.bf16.mxu0 0
  %1719 = vmatmul.mubr.bf16.gmra.mrb[0].mxu0 %v1681
  %v1720 = vpop.f32.mrb[0].mxu0
  %v1721 = vadd.f32 0.0, %v1720
  %v1722 = vpop.f32.mrb[0].mxu0
  %v1723 = vpop.f32.mrb[0].mxu0
  %v1724 = vpop.f32.mrb[0].mxu0
  %1725 = vdwg.mxu0
  %1726 = vrot.lane.b32.xlu0 %v144, 56
  %v1727 = vpop.permute.xlu0 %1726
  %v1729 = vsel %vm151, %v1530, 0
  %v1732 = vsel %vm650, %v1727, 0
  %1734 = vmatprep.subr.bf16.mxu0 0
  %1735 = vmatpush1.bf16.msra.mxu0 %v1732
  %1736 = vmatprep.subr.bf16.mxu0 0
  %1737 = vmatpush1.bf16.msra.mxu0 0
  %1738 = vmatprep.subr.bf16.mxu0 0
  %1739 = vmatpush1.bf16.msra.mxu0 0
  %1740 = vmatprep.subr.bf16.mxu0 0
  %1741 = vmatpush1.bf16.msra.mxu0 0
  %1742 = vmatprep.subr.bf16.mxu0 0
  %1743 = vmatpush1.bf16.msra.mxu0 0
  %1744 = vmatprep.subr.bf16.mxu0 0
  %1745 = vmatpush1.bf16.msra.mxu0 0
  %1746 = vmatprep.subr.bf16.mxu0 0
  %1747 = vmatpush1.bf16.msra.mxu0 0
  %1748 = vmatprep.subr.bf16.mxu0 0
  %1749 = vmatpush1.bf16.msra.mxu0 0
  %1750 = vmatprep.subr.bf16.mxu0 0
  %1751 = vmatpush1.bf16.msra.mxu0 0
  %1752 = vmatprep.subr.bf16.mxu0 0
  %1753 = vmatpush1.bf16.msra.mxu0 0
  %1754 = vmatprep.subr.bf16.mxu0 0
  %1755 = vmatpush1.bf16.msra.mxu0 0
  %1756 = vmatprep.subr.bf16.mxu0 0
  %1757 = vmatpush1.bf16.msra.mxu0 0
  %1758 = vmatprep.subr.bf16.mxu0 0
  %1759 = vmatpush1.bf16.msra.mxu0 0
  %1760 = vmatprep.subr.bf16.mxu0 0
  %1761 = vmatpush1.bf16.msra.mxu0 0
  %1762 = vmatprep.subr.bf16.mxu0 0
  %1763 = vmatpush1.bf16.msra.mxu0 0
  %1764 = vmatprep.subr.bf16.mxu0 0
  %1765 = vmatpush1.bf16.msra.mxu0 0
  %1766 = vmatprep.mubr.bf16.mxu0 0
  %1767 = vmatmul.mubr.bf16.gmra.mrb[0].mxu0 %v1729
  %v1768 = vpop.f32.mrb[0].mxu0
  %v1769 = vadd.f32 0.0, %v1768
  %v1770 = vpop.f32.mrb[0].mxu0
  %v1771 = vpop.f32.mrb[0].mxu0
  %v1772 = vpop.f32.mrb[0].mxu0
  %1773 = vdwg.mxu0
  %1774 = vrot.lane.b32.xlu0 %v145, 56
  %v1775 = vpop.permute.xlu0 %1774
  %v1777 = vsel %vm151, %v1531, 0
  %v1780 = vsel %vm650, %v1775, 0
  %1782 = vmatprep.subr.bf16.mxu0 0
  %1783 = vmatpush1.bf16.msra.mxu0 %v1780
  %1784 = vmatprep.subr.bf16.mxu0 0
  %1785 = vmatpush1.bf16.msra.mxu0 0
  %1786 = vmatprep.subr.bf16.mxu0 0
  %1787 = vmatpush1.bf16.msra.mxu0 0
  %1788 = vmatprep.subr.bf16.mxu0 0
  %1789 = vmatpush1.bf16.msra.mxu0 0
  %1790 = vmatprep.subr.bf16.mxu0 0
  %1791 = vmatpush1.bf16.msra.mxu0 0
  %1792 = vmatprep.subr.bf16.mxu0 0
  %1793 = vmatpush1.bf16.msra.mxu0 0
  %1794 = vmatprep.subr.bf16.mxu0 0
  %1795 = vmatpush1.bf16.msra.mxu0 0
  %1796 = vmatprep.subr.bf16.mxu0 0
  %1797 = vmatpush1.bf16.msra.mxu0 0
  %1798 = vmatprep.subr.bf16.mxu0 0
  %1799 = vmatpush1.bf16.msra.mxu0 0
  %1800 = vmatprep.subr.bf16.mxu0 0
  %1801 = vmatpush1.bf16.msra.mxu0 0
  %1802 = vmatprep.subr.bf16.mxu0 0
  %1803 = vmatpush1.bf16.msra.mxu0 0
  %1804 = vmatprep.subr.bf16.mxu0 0
  %1805 = vmatpush1.bf16.msra.mxu0 0
  %1806 = vmatprep.subr.bf16.mxu0 0
  %1807 = vmatpush1.bf16.msra.mxu0 0
  %1808 = vmatprep.subr.bf16.mxu0 0
  %1809 = vmatpush1.bf16.msra.mxu0 0
  %1810 = vmatprep.subr.bf16.mxu0 0
  %1811 = vmatpush1.bf16.msra.mxu0 0
  %1812 = vmatprep.subr.bf16.mxu0 0
  %1813 = vmatpush1.bf16.msra.mxu0 0
  %1814 = vmatprep.mubr.bf16.mxu0 0
  %1815 = vmatmul.mubr.bf16.gmra.mrb[0].mxu0 %v1777
  %v1816 = vpop.f32.mrb[0].mxu0
  %v1817 = vadd.f32 0.0, %v1816
  %v1818 = vpop.f32.mrb[0].mxu0
  %v1819 = vpop.f32.mrb[0].mxu0
  %v1820 = vpop.f32.mrb[0].mxu0
  %1821 = vdwg.mxu0
  %1822 = vrot.lane.b32.xlu0 %v146, 56
  %v1823 = vpop.permute.xlu0 %1822
  %v1825 = vsel %vm151, %v1532, 0
  %v1828 = vsel %vm650, %v1823, 0
  %1830 = vmatprep.subr.bf16.mxu0 0
  %1831 = vmatpush1.bf16.msra.mxu0 %v1828
  %1832 = vmatprep.subr.bf16.mxu0 0
  %1833 = vmatpush1.bf16.msra.mxu0 0
  %1834 = vmatprep.subr.bf16.mxu0 0
  %1835 = vmatpush1.bf16.msra.mxu0 0
  %1836 = vmatprep.subr.bf16.mxu0 0
  %1837 = vmatpush1.bf16.msra.mxu0 0
  %1838 = vmatprep.subr.bf16.mxu0 0
  %1839 = vmatpush1.bf16.msra.mxu0 0
  %1840 = vmatprep.subr.bf16.mxu0 0
  %1841 = vmatpush1.bf16.msra.mxu0 0
  %1842 = vmatprep.subr.bf16.mxu0 0
  %1843 = vmatpush1.bf16.msra.mxu0 0
  %1844 = vmatprep.subr.bf16.mxu0 0
  %1845 = vmatpush1.bf16.msra.mxu0 0
  %1846 = vmatprep.subr.bf16.mxu0 0
  %1847 = vmatpush1.bf16.msra.mxu0 0
  %1848 = vmatprep.subr.bf16.mxu0 0
  %1849 = vmatpush1.bf16.msra.mxu0 0
  %1850 = vmatprep.subr.bf16.mxu0 0
  %1851 = vmatpush1.bf16.msra.mxu0 0
  %1852 = vmatprep.subr.bf16.mxu0 0
  %1853 = vmatpush1.bf16.msra.mxu0 0
  %1854 = vmatprep.subr.bf16.mxu0 0
  %1855 = vmatpush1.bf16.msra.mxu0 0
  %1856 = vmatprep.subr.bf16.mxu0 0
  %1857 = vmatpush1.bf16.msra.mxu0 0
  %1858 = vmatprep.subr.bf16.mxu0 0
  %1859 = vmatpush1.bf16.msra.mxu0 0
  %1860 = vmatprep.subr.bf16.mxu0 0
  %1861 = vmatpush1.bf16.msra.mxu0 0
  %1862 = vmatprep.mubr.bf16.mxu0 0
  %1863 = vmatmul.mubr.bf16.gmra.mrb[0].mxu0 %v1825
  %v1864 = vpop.f32.mrb[0].mxu0
  %v1865 = vadd.f32 0.0, %v1864
  %v1866 = vpop.f32.mrb[0].mxu0
  %v1867 = vpop.f32.mrb[0].mxu0
  %v1868 = vpop.f32.mrb[0].mxu0
  %1869 = vdwg.mxu0
  %1870 = vrot.lane.b32.xlu0 %v147, 56
  %v1871 = vpop.permute.xlu0 %1870
  %v1873 = vsel %vm151, %v1533, 0
  %v1876 = vsel %vm650, %v1871, 0
  %1878 = vmatprep.subr.bf16.mxu0 0
  %1879 = vmatpush1.bf16.msra.mxu0 %v1876
  %1880 = vmatprep.subr.bf16.mxu0 0
  %1881 = vmatpush1.bf16.msra.mxu0 0
  %1882 = vmatprep.subr.bf16.mxu0 0
  %1883 = vmatpush1.bf16.msra.mxu0 0
  %1884 = vmatprep.subr.bf16.mxu0 0
  %1885 = vmatpush1.bf16.msra.mxu0 0
  %1886 = vmatprep.subr.bf16.mxu0 0
  %1887 = vmatpush1.bf16.msra.mxu0 0
  %1888 = vmatprep.subr.bf16.mxu0 0
  %1889 = vmatpush1.bf16.msra.mxu0 0
  %1890 = vmatprep.subr.bf16.mxu0 0
  %1891 = vmatpush1.bf16.msra.mxu0 0
  %1892 = vmatprep.subr.bf16.mxu0 0
  %1893 = vmatpush1.bf16.msra.mxu0 0
  %1894 = vmatprep.subr.bf16.mxu0 0
  %1895 = vmatpush1.bf16.msra.mxu0 0
  %1896 = vmatprep.subr.bf16.mxu0 0
  %1897 = vmatpush1.bf16.msra.mxu0 0
  %1898 = vmatprep.subr.bf16.mxu0 0
  %1899 = vmatpush1.bf16.msra.mxu0 0
  %1900 = vmatprep.subr.bf16.mxu0 0
  %1901 = vmatpush1.bf16.msra.mxu0 0
  %1902 = vmatprep.subr.bf16.mxu0 0
  %1903 = vmatpush1.bf16.msra.mxu0 0
  %1904 = vmatprep.subr.bf16.mxu0 0
  %1905 = vmatpush1.bf16.msra.mxu0 0
  %1906 = vmatprep.subr.bf16.mxu0 0
  %1907 = vmatpush1.bf16.msra.mxu0 0
  %1908 = vmatprep.subr.bf16.mxu0 0
  %1909 = vmatpush1.bf16.msra.mxu0 0
  %1910 = vmatprep.mubr.bf16.mxu0 0
  %1911 = vmatmul.mubr.bf16.gmra.mrb[0].mxu0 %v1873
  %v1912 = vpop.f32.mrb[0].mxu0
  %v1913 = vadd.f32 0.0, %v1912
  %v1914 = vpop.f32.mrb[0].mxu0
  %v1915 = vpop.f32.mrb[0].mxu0
  %v1916 = vpop.f32.mrb[0].mxu0
  %1917 = vdwg.mxu0
  %1918 = vrot.lane.b32.xlu0 %v140, 112
  %v1919 = vpop.permute.xlu0 %1918
  %1920 = vrot.lane.b32.xlu0 %v140, 80
  %v1921 = vpop.permute.xlu0 %1920
  %v1923 = vsel %vm151, %v1919, 0
  %v1926 = vsel %vm151, %v1921, 0
  %1928 = vmatprep.subr.bf16.mxu0 0
  %1929 = vmatpush1.bf16.xpose.msra.mxu0 %v1926
  %1930 = vmatprep.subr.bf16.mxu0 0
  %1931 = vmatpush1.bf16.xpose.msra.mxu0 0
  %1932 = vmatprep.subr.bf16.mxu0 0
  %1933 = vmatpush1.bf16.xpose.msra.mxu0 0
  %1934 = vmatprep.subr.bf16.mxu0 0
  %1935 = vmatpush1.bf16.xpose.msra.mxu0 0
  %1936 = vmatprep.subr.bf16.mxu0 0
  %1937 = vmatpush1.bf16.xpose.msra.mxu0 0
  %1938 = vmatprep.subr.bf16.mxu0 0
  %1939 = vmatpush1.bf16.xpose.msra.mxu0 0
  %1940 = vmatprep.subr.bf16.mxu0 0
  %1941 = vmatpush1.bf16.xpose.msra.mxu0 0
  %1942 = vmatprep.subr.bf16.mxu0 0
  %1943 = vmatpush1.bf16.xpose.msra.mxu0 0
  %1944 = vmatprep.subr.bf16.mxu0 0
  %1945 = vmatpush1.bf16.xpose.msra.mxu0 0
  %1946 = vmatprep.subr.bf16.mxu0 0
  %1947 = vmatpush1.bf16.xpose.msra.mxu0 0
  %1948 = vmatprep.subr.bf16.mxu0 0
  %1949 = vmatpush1.bf16.xpose.msra.mxu0 0
  %1950 = vmatprep.subr.bf16.mxu0 0
  %1951 = vmatpush1.bf16.xpose.msra.mxu0 0
  %1952 = vmatprep.subr.bf16.mxu0 0
  %1953 = vmatpush1.bf16.xpose.msra.mxu0 0
  %1954 = vmatprep.subr.bf16.mxu0 0
  %1955 = vmatpush1.bf16.xpose.msra.mxu0 0
  %1956 = vmatprep.subr.bf16.mxu0 0
  %1957 = vmatpush1.bf16.xpose.msra.mxu0 0
  %1958 = vmatprep.subr.bf16.mxu0 0
  %1959 = vmatpush1.bf16.xpose.msra.mxu0 0
  %1960 = vmatprep.mubr.bf16.mxu0 0
  %1961 = vmatmul.mubr.bf16.gmra.mrb[0].mxu0 %v1923
  %v1962 = vpop.f32.mrb[0].mxu0
  %v1963 = vadd.f32 0.0, %v1962
  %v1964 = vpop.f32.mrb[0].mxu0
  %v1965 = vpop.f32.mrb[0].mxu0
  %v1966 = vpop.f32.mrb[0].mxu0
  %1967 = vdwg.mxu0
  %1968 = vrot.lane.b32.xlu0 %v141, 112
  %v1969 = vpop.permute.xlu0 %1968
  %1970 = vrot.lane.b32.xlu0 %v141, 80
  %v1971 = vpop.permute.xlu0 %1970
  %v1973 = vsel %vm151, %v1969, 0
  %v1976 = vsel %vm151, %v1971, 0
  %1978 = vmatprep.subr.bf16.mxu0 0
  %1979 = vmatpush1.bf16.xpose.msra.mxu0 %v1976
  %1980 = vmatprep.subr.bf16.mxu0 0
  %1981 = vmatpush1.bf16.xpose.msra.mxu0 0
  %1982 = vmatprep.subr.bf16.mxu0 0
  %1983 = vmatpush1.bf16.xpose.msra.mxu0 0
  %1984 = vmatprep.subr.bf16.mxu0 0
  %1985 = vmatpush1.bf16.xpose.msra.mxu0 0
  %1986 = vmatprep.subr.bf16.mxu0 0
  %1987 = vmatpush1.bf16.xpose.msra.mxu0 0
  %1988 = vmatprep.subr.bf16.mxu0 0
  %1989 = vmatpush1.bf16.xpose.msra.mxu0 0
  %1990 = vmatprep.subr.bf16.mxu0 0
  %1991 = vmatpush1.bf16.xpose.msra.mxu0 0
  %1992 = vmatprep.subr.bf16.mxu0 0
  %1993 = vmatpush1.bf16.xpose.msra.mxu0 0
  %1994 = vmatprep.subr.bf16.mxu0 0
  %1995 = vmatpush1.bf16.xpose.msra.mxu0 0
  %1996 = vmatprep.subr.bf16.mxu0 0
  %1997 = vmatpush1.bf16.xpose.msra.mxu0 0
  %1998 = vmatprep.subr.bf16.mxu0 0
  %1999 = vmatpush1.bf16.xpose.msra.mxu0 0
  %2000 = vmatprep.subr.bf16.mxu0 0
  %2001 = vmatpush1.bf16.xpose.msra.mxu0 0
  %2002 = vmatprep.subr.bf16.mxu0 0
  %2003 = vmatpush1.bf16.xpose.msra.mxu0 0
  %2004 = vmatprep.subr.bf16.mxu0 0
  %2005 = vmatpush1.bf16.xpose.msra.mxu0 0
  %2006 = vmatprep.subr.bf16.mxu0 0
  %2007 = vmatpush1.bf16.xpose.msra.mxu0 0
  %2008 = vmatprep.subr.bf16.mxu0 0
  %2009 = vmatpush1.bf16.xpose.msra.mxu0 0
  %2010 = vmatprep.mubr.bf16.mxu0 0
  %2011 = vmatmul.mubr.bf16.gmra.mrb[0].mxu0 %v1973
  %v2012 = vpop.f32.mrb[0].mxu0
  %v2013 = vadd.f32 0.0, %v2012
  %v2014 = vpop.f32.mrb[0].mxu0
  %v2015 = vpop.f32.mrb[0].mxu0
  %v2016 = vpop.f32.mrb[0].mxu0
  %2017 = vdwg.mxu0
  %2018 = vrot.lane.b32.xlu0 %v142, 112
  %v2019 = vpop.permute.xlu0 %2018
  %2020 = vrot.lane.b32.xlu0 %v142, 80
  %v2021 = vpop.permute.xlu0 %2020
  %v2023 = vsel %vm151, %v2019, 0
  %v2026 = vsel %vm151, %v2021, 0
  %2028 = vmatprep.subr.bf16.mxu0 0
  %2029 = vmatpush1.bf16.xpose.msra.mxu0 %v2026
  %2030 = vmatprep.subr.bf16.mxu0 0
  %2031 = vmatpush1.bf16.xpose.msra.mxu0 0
  %2032 = vmatprep.subr.bf16.mxu0 0
  %2033 = vmatpush1.bf16.xpose.msra.mxu0 0
  %2034 = vmatprep.subr.bf16.mxu0 0
  %2035 = vmatpush1.bf16.xpose.msra.mxu0 0
  %2036 = vmatprep.subr.bf16.mxu0 0
  %2037 = vmatpush1.bf16.xpose.msra.mxu0 0
  %2038 = vmatprep.subr.bf16.mxu0 0
  %2039 = vmatpush1.bf16.xpose.msra.mxu0 0
  %2040 = vmatprep.subr.bf16.mxu0 0
  %2041 = vmatpush1.bf16.xpose.msra.mxu0 0
  %2042 = vmatprep.subr.bf16.mxu0 0
  %2043 = vmatpush1.bf16.xpose.msra.mxu0 0
  %2044 = vmatprep.subr.bf16.mxu0 0
  %2045 = vmatpush1.bf16.xpose.msra.mxu0 0
  %2046 = vmatprep.subr.bf16.mxu0 0
  %2047 = vmatpush1.bf16.xpose.msra.mxu0 0
  %2048 = vmatprep.subr.bf16.mxu0 0
  %2049 = vmatpush1.bf16.xpose.msra.mxu0 0
  %2050 = vmatprep.subr.bf16.mxu0 0
  %2051 = vmatpush1.bf16.xpose.msra.mxu0 0
  %2052 = vmatprep.subr.bf16.mxu0 0
  %2053 = vmatpush1.bf16.xpose.msra.mxu0 0
  %2054 = vmatprep.subr.bf16.mxu0 0
  %2055 = vmatpush1.bf16.xpose.msra.mxu0 0
  %2056 = vmatprep.subr.bf16.mxu0 0
  %2057 = vmatpush1.bf16.xpose.msra.mxu0 0
  %2058 = vmatprep.subr.bf16.mxu0 0
  %2059 = vmatpush1.bf16.xpose.msra.mxu0 0
  %2060 = vmatprep.mubr.bf16.mxu0 0
  %2061 = vmatmul.mubr.bf16.gmra.mrb[0].mxu0 %v2023
  %v2062 = vpop.f32.mrb[0].mxu0
  %v2063 = vadd.f32 0.0, %v2062
  %v2064 = vpop.f32.mrb[0].mxu0
  %v2065 = vpop.f32.mrb[0].mxu0
  %v2066 = vpop.f32.mrb[0].mxu0
  %2067 = vdwg.mxu0
  %2068 = vrot.lane.b32.xlu0 %v143, 112
  %v2069 = vpop.permute.xlu0 %2068
  %2070 = vrot.lane.b32.xlu0 %v143, 80
  %v2071 = vpop.permute.xlu0 %2070
  %v2073 = vsel %vm151, %v2069, 0
  %v2076 = vsel %vm151, %v2071, 0
  %2078 = vmatprep.subr.bf16.mxu0 0
  %2079 = vmatpush1.bf16.xpose.msra.mxu0 %v2076
  %2080 = vmatprep.subr.bf16.mxu0 0
  %2081 = vmatpush1.bf16.xpose.msra.mxu0 0
  %2082 = vmatprep.subr.bf16.mxu0 0
  %2083 = vmatpush1.bf16.xpose.msra.mxu0 0
  %2084 = vmatprep.subr.bf16.mxu0 0
  %2085 = vmatpush1.bf16.xpose.msra.mxu0 0
  %2086 = vmatprep.subr.bf16.mxu0 0
  %2087 = vmatpush1.bf16.xpose.msra.mxu0 0
  %2088 = vmatprep.subr.bf16.mxu0 0
  %2089 = vmatpush1.bf16.xpose.msra.mxu0 0
  %2090 = vmatprep.subr.bf16.mxu0 0
  %2091 = vmatpush1.bf16.xpose.msra.mxu0 0
  %2092 = vmatprep.subr.bf16.mxu0 0
  %2093 = vmatpush1.bf16.xpose.msra.mxu0 0
  %2094 = vmatprep.subr.bf16.mxu0 0
  %2095 = vmatpush1.bf16.xpose.msra.mxu0 0
  %2096 = vmatprep.subr.bf16.mxu0 0
  %2097 = vmatpush1.bf16.xpose.msra.mxu0 0
  %2098 = vmatprep.subr.bf16.mxu0 0
  %2099 = vmatpush1.bf16.xpose.msra.mxu0 0
  %2100 = vmatprep.subr.bf16.mxu0 0
  %2101 = vmatpush1.bf16.xpose.msra.mxu0 0
  %2102 = vmatprep.subr.bf16.mxu0 0
  %2103 = vmatpush1.bf16.xpose.msra.mxu0 0
  %2104 = vmatprep.subr.bf16.mxu0 0
  %2105 = vmatpush1.bf16.xpose.msra.mxu0 0
  %2106 = vmatprep.subr.bf16.mxu0 0
  %2107 = vmatpush1.bf16.xpose.msra.mxu0 0
  %2108 = vmatprep.subr.bf16.mxu0 0
  %2109 = vmatpush1.bf16.xpose.msra.mxu0 0
  %2110 = vmatprep.mubr.bf16.mxu0 0
  %2111 = vmatmul.mubr.bf16.gmra.mrb[0].mxu0 %v2073
  %v2112 = vpop.f32.mrb[0].mxu0
  %v2113 = vadd.f32 0.0, %v2112
  %v2114 = vpop.f32.mrb[0].mxu0
  %v2115 = vpop.f32.mrb[0].mxu0
  %v2116 = vpop.f32.mrb[0].mxu0
  %2117 = vdwg.mxu0
  %2118 = vrot.lane.b32.xlu0 %v144, 112
  %v2119 = vpop.permute.xlu0 %2118
  %2120 = vrot.lane.b32.xlu0 %v144, 80
  %v2121 = vpop.permute.xlu0 %2120
  %v2123 = vsel %vm151, %v2119, 0
  %v2126 = vsel %vm151, %v2121, 0
  %2128 = vmatprep.subr.bf16.mxu0 0
  %2129 = vmatpush1.bf16.xpose.msra.mxu0 %v2126
  %2130 = vmatprep.subr.bf16.mxu0 0
  %2131 = vmatpush1.bf16.xpose.msra.mxu0 0
  %2132 = vmatprep.subr.bf16.mxu0 0
  %2133 = vmatpush1.bf16.xpose.msra.mxu0 0
  %2134 = vmatprep.subr.bf16.mxu0 0
  %2135 = vmatpush1.bf16.xpose.msra.mxu0 0
  %2136 = vmatprep.subr.bf16.mxu0 0
  %2137 = vmatpush1.bf16.xpose.msra.mxu0 0
  %2138 = vmatprep.subr.bf16.mxu0 0
  %2139 = vmatpush1.bf16.xpose.msra.mxu0 0
  %2140 = vmatprep.subr.bf16.mxu0 0
  %2141 = vmatpush1.bf16.xpose.msra.mxu0 0
  %2142 = vmatprep.subr.bf16.mxu0 0
  %2143 = vmatpush1.bf16.xpose.msra.mxu0 0
  %2144 = vmatprep.subr.bf16.mxu0 0
  %2145 = vmatpush1.bf16.xpose.msra.mxu0 0
  %2146 = vmatprep.subr.bf16.mxu0 0
  %2147 = vmatpush1.bf16.xpose.msra.mxu0 0
  %2148 = vmatprep.subr.bf16.mxu0 0
  %2149 = vmatpush1.bf16.xpose.msra.mxu0 0
  %2150 = vmatprep.subr.bf16.mxu0 0
  %2151 = vmatpush1.bf16.xpose.msra.mxu0 0
  %2152 = vmatprep.subr.bf16.mxu0 0
  %2153 = vmatpush1.bf16.xpose.msra.mxu0 0
  %2154 = vmatprep.subr.bf16.mxu0 0
  %2155 = vmatpush1.bf16.xpose.msra.mxu0 0
  %2156 = vmatprep.subr.bf16.mxu0 0
  %2157 = vmatpush1.bf16.xpose.msra.mxu0 0
  %2158 = vmatprep.subr.bf16.mxu0 0
  %2159 = vmatpush1.bf16.xpose.msra.mxu0 0
  %2160 = vmatprep.mubr.bf16.mxu0 0
  %2161 = vmatmul.mubr.bf16.gmra.mrb[0].mxu0 %v2123
  %v2162 = vpop.f32.mrb[0].mxu0
  %v2163 = vadd.f32 0.0, %v2162
  %v2164 = vpop.f32.mrb[0].mxu0
  %v2165 = vpop.f32.mrb[0].mxu0
  %v2166 = vpop.f32.mrb[0].mxu0
  %2167 = vdwg.mxu0
  %2168 = vrot.lane.b32.xlu0 %v145, 112
  %v2169 = vpop.permute.xlu0 %2168
  %2170 = vrot.lane.b32.xlu0 %v145, 80
  %v2171 = vpop.permute.xlu0 %2170
  %v2173 = vsel %vm151, %v2169, 0
  %v2176 = vsel %vm151, %v2171, 0
  %2178 = vmatprep.subr.bf16.mxu0 0
  %2179 = vmatpush1.bf16.xpose.msra.mxu0 %v2176
  %2180 = vmatprep.subr.bf16.mxu0 0
  %2181 = vmatpush1.bf16.xpose.msra.mxu0 0
  %2182 = vmatprep.subr.bf16.mxu0 0
  %2183 = vmatpush1.bf16.xpose.msra.mxu0 0
  %2184 = vmatprep.subr.bf16.mxu0 0
  %2185 = vmatpush1.bf16.xpose.msra.mxu0 0
  %2186 = vmatprep.subr.bf16.mxu0 0
  %2187 = vmatpush1.bf16.xpose.msra.mxu0 0
  %2188 = vmatprep.subr.bf16.mxu0 0
  %2189 = vmatpush1.bf16.xpose.msra.mxu0 0
  %2190 = vmatprep.subr.bf16.mxu0 0
  %2191 = vmatpush1.bf16.xpose.msra.mxu0 0
  %2192 = vmatprep.subr.bf16.mxu0 0
  %2193 = vmatpush1.bf16.xpose.msra.mxu0 0
  %2194 = vmatprep.subr.bf16.mxu0 0
  %2195 = vmatpush1.bf16.xpose.msra.mxu0 0
  %2196 = vmatprep.subr.bf16.mxu0 0
  %2197 = vmatpush1.bf16.xpose.msra.mxu0 0
  %2198 = vmatprep.subr.bf16.mxu0 0
  %2199 = vmatpush1.bf16.xpose.msra.mxu0 0
  %2200 = vmatprep.subr.bf16.mxu0 0
  %2201 = vmatpush1.bf16.xpose.msra.mxu0 0
  %2202 = vmatprep.subr.bf16.mxu0 0
  %2203 = vmatpush1.bf16.xpose.msra.mxu0 0
  %2204 = vmatprep.subr.bf16.mxu0 0
  %2205 = vmatpush1.bf16.xpose.msra.mxu0 0
  %2206 = vmatprep.subr.bf16.mxu0 0
  %2207 = vmatpush1.bf16.xpose.msra.mxu0 0
  %2208 = vmatprep.subr.bf16.mxu0 0
  %2209 = vmatpush1.bf16.xpose.msra.mxu0 0
  %2210 = vmatprep.mubr.bf16.mxu0 0
  %2211 = vmatmul.mubr.bf16.gmra.mrb[0].mxu0 %v2173
  %v2212 = vpop.f32.mrb[0].mxu0
  %v2213 = vadd.f32 0.0, %v2212
  %v2214 = vpop.f32.mrb[0].mxu0
  %v2215 = vpop.f32.mrb[0].mxu0
  %v2216 = vpop.f32.mrb[0].mxu0
  %2217 = vdwg.mxu0
  %2218 = vrot.lane.b32.xlu0 %v146, 112
  %v2219 = vpop.permute.xlu0 %2218
  %2220 = vrot.lane.b32.xlu0 %v146, 80
  %v2221 = vpop.permute.xlu0 %2220
  %v2223 = vsel %vm151, %v2219, 0
  %v2226 = vsel %vm151, %v2221, 0
  %2228 = vmatprep.subr.bf16.mxu0 0
  %2229 = vmatpush1.bf16.xpose.msra.mxu0 %v2226
  %2230 = vmatprep.subr.bf16.mxu0 0
  %2231 = vmatpush1.bf16.xpose.msra.mxu0 0
  %2232 = vmatprep.subr.bf16.mxu0 0
  %2233 = vmatpush1.bf16.xpose.msra.mxu0 0
  %2234 = vmatprep.subr.bf16.mxu0 0
  %2235 = vmatpush1.bf16.xpose.msra.mxu0 0
  %2236 = vmatprep.subr.bf16.mxu0 0
  %2237 = vmatpush1.bf16.xpose.msra.mxu0 0
  %2238 = vmatprep.subr.bf16.mxu0 0
  %2239 = vmatpush1.bf16.xpose.msra.mxu0 0
  %2240 = vmatprep.subr.bf16.mxu0 0
  %2241 = vmatpush1.bf16.xpose.msra.mxu0 0
  %2242 = vmatprep.subr.bf16.mxu0 0
  %2243 = vmatpush1.bf16.xpose.msra.mxu0 0
  %2244 = vmatprep.subr.bf16.mxu0 0
  %2245 = vmatpush1.bf16.xpose.msra.mxu0 0
  %2246 = vmatprep.subr.bf16.mxu0 0
  %2247 = vmatpush1.bf16.xpose.msra.mxu0 0
  %2248 = vmatprep.subr.bf16.mxu0 0
  %2249 = vmatpush1.bf16.xpose.msra.mxu0 0
  %2250 = vmatprep.subr.bf16.mxu0 0
  %2251 = vmatpush1.bf16.xpose.msra.mxu0 0
  %2252 = vmatprep.subr.bf16.mxu0 0
  %2253 = vmatpush1.bf16.xpose.msra.mxu0 0
  %2254 = vmatprep.subr.bf16.mxu0 0
  %2255 = vmatpush1.bf16.xpose.msra.mxu0 0
  %2256 = vmatprep.subr.bf16.mxu0 0
  %2257 = vmatpush1.bf16.xpose.msra.mxu0 0
  %2258 = vmatprep.subr.bf16.mxu0 0
  %2259 = vmatpush1.bf16.xpose.msra.mxu0 0
  %2260 = vmatprep.mubr.bf16.mxu0 0
  %2261 = vmatmul.mubr.bf16.gmra.mrb[0].mxu0 %v2223
  %v2262 = vpop.f32.mrb[0].mxu0
  %v2263 = vadd.f32 0.0, %v2262
  %v2264 = vpop.f32.mrb[0].mxu0
  %v2265 = vpop.f32.mrb[0].mxu0
  %v2266 = vpop.f32.mrb[0].mxu0
  %2267 = vdwg.mxu0
  %2268 = vrot.lane.b32.xlu0 %v147, 112
  %v2269 = vpop.permute.xlu0 %2268
  %2270 = vrot.lane.b32.xlu0 %v147, 80
  %v2271 = vpop.permute.xlu0 %2270
  %v2273 = vsel %vm151, %v2269, 0
  %v2276 = vsel %vm151, %v2271, 0
  %2278 = vmatprep.subr.bf16.mxu0 0
  %2279 = vmatpush1.bf16.xpose.msra.mxu0 %v2276
  %2280 = vmatprep.subr.bf16.mxu0 0
  %2281 = vmatpush1.bf16.xpose.msra.mxu0 0
  %2282 = vmatprep.subr.bf16.mxu0 0
  %2283 = vmatpush1.bf16.xpose.msra.mxu0 0
  %2284 = vmatprep.subr.bf16.mxu0 0
  %2285 = vmatpush1.bf16.xpose.msra.mxu0 0
  %2286 = vmatprep.subr.bf16.mxu0 0
  %2287 = vmatpush1.bf16.xpose.msra.mxu0 0
  %2288 = vmatprep.subr.bf16.mxu0 0
  %2289 = vmatpush1.bf16.xpose.msra.mxu0 0
  %2290 = vmatprep.subr.bf16.mxu0 0
  %2291 = vmatpush1.bf16.xpose.msra.mxu0 0
  %2292 = vmatprep.subr.bf16.mxu0 0
  %2293 = vmatpush1.bf16.xpose.msra.mxu0 0
  %2294 = vmatprep.subr.bf16.mxu0 0
  %2295 = vmatpush1.bf16.xpose.msra.mxu0 0
  %2296 = vmatprep.subr.bf16.mxu0 0
  %2297 = vmatpush1.bf16.xpose.msra.mxu0 0
  %2298 = vmatprep.subr.bf16.mxu0 0
  %2299 = vmatpush1.bf16.xpose.msra.mxu0 0
  %2300 = vmatprep.subr.bf16.mxu0 0
  %2301 = vmatpush1.bf16.xpose.msra.mxu0 0
  %2302 = vmatprep.subr.bf16.mxu0 0
  %2303 = vmatpush1.bf16.xpose.msra.mxu0 0
  %2304 = vmatprep.subr.bf16.mxu0 0
  %2305 = vmatpush1.bf16.xpose.msra.mxu0 0
  %2306 = vmatprep.subr.bf16.mxu0 0
  %2307 = vmatpush1.bf16.xpose.msra.mxu0 0
  %2308 = vmatprep.subr.bf16.mxu0 0
  %2309 = vmatpush1.bf16.xpose.msra.mxu0 0
  %2310 = vmatprep.mubr.bf16.mxu0 0
  %2311 = vmatmul.mubr.bf16.gmra.mrb[0].mxu0 %v2273
  %v2312 = vpop.f32.mrb[0].mxu0
  %v2313 = vadd.f32 0.0, %v2312
  %v2314 = vpop.f32.mrb[0].mxu0
  %v2315 = vpop.f32.mrb[0].mxu0
  %v2316 = vpop.f32.mrb[0].mxu0
  %2317 = vdwg.mxu0
  %v2318 = vmul.f32 %v1963, 0.35355338
  %v2319 = vmul.f32 %v2013, 0.35355338
  %v2320 = vmul.f32 %v2063, 0.35355338
  %v2321 = vmul.f32 %v2113, 0.35355338
  %v2322 = vmul.f32 %v2163, 0.35355338
  %v2323 = vmul.f32 %v2213, 0.35355338
  %v2324 = vmul.f32 %v2263, 0.35355338
  %v2325 = vmul.f32 %v2313, 0.35355338
  %v2326 = vsel %vm151, %v2318, -inf
  %2327 = vmax.xlane.f32.xlu0 %v2326
  %v2328 = vpop.xlane.xlu0 %2327
  %v2329 = vsel %vm151, %v2319, -inf
  %2330 = vmax.xlane.f32.xlu0 %v2329
  %v2331 = vpop.xlane.xlu0 %2330
  %v2332 = vsel %vm151, %v2320, -inf
  %2333 = vmax.xlane.f32.xlu0 %v2332
  %v2334 = vpop.xlane.xlu0 %2333
  %v2335 = vsel %vm151, %v2321, -inf
  %2336 = vmax.xlane.f32.xlu0 %v2335
  %v2337 = vpop.xlane.xlu0 %2336
  %v2338 = vsel %vm151, %v2322, -inf
  %2339 = vmax.xlane.f32.xlu0 %v2338
  %v2340 = vpop.xlane.xlu0 %2339
  %v2341 = vsel %vm151, %v2323, -inf
  %2342 = vmax.xlane.f32.xlu0 %v2341
  %v2343 = vpop.xlane.xlu0 %2342
  %v2344 = vsel %vm151, %v2324, -inf
  %2345 = vmax.xlane.f32.xlu0 %v2344
  %v2346 = vpop.xlane.xlu0 %2345
  %v2347 = vsel %vm151, %v2325, -inf
  %2348 = vmax.xlane.f32.xlu0 %v2347
  %v2349 = vpop.xlane.xlu0 %2348
  %v2350 = vsub.f32 %v2318, %v2328
  %v2351 = vsub.f32 %v2319, %v2331
  %v2352 = vsub.f32 %v2320, %v2334
  %v2353 = vsub.f32 %v2321, %v2337
  %v2354 = vsub.f32 %v2322, %v2340
  %v2355 = vsub.f32 %v2323, %v2343
  %v2356 = vsub.f32 %v2324, %v2346
  %v2357 = vsub.f32 %v2325, %v2349
  %v2358 = vmul.f32 %v2350, 1.442695
  %v2359 = vpow.pop %v2358
  %v2360 = vmul.f32 %v2351, 1.442695
  %v2361 = vpow.pop %v2360
  %v2362 = vmul.f32 %v2352, 1.442695
  %v2363 = vpow.pop %v2362
  %v2364 = vmul.f32 %v2353, 1.442695
  %v2365 = vpow.pop %v2364
  %v2366 = vmul.f32 %v2354, 1.442695
  %v2367 = vpow.pop %v2366
  %v2368 = vmul.f32 %v2355, 1.442695
  %v2369 = vpow.pop %v2368
  %v2370 = vmul.f32 %v2356, 1.442695
  %v2371 = vpow.pop %v2370
  %v2372 = vmul.f32 %v2357, 1.442695
  %v2373 = vpow.pop %v2372
  %v2374 = vsel %vm151, %v2359, 0.0
  %2375 = vadd.xlane.f32.xlu0 %v2374
  %v2376 = vpop.xlane.xlu0 %2375
  %v2377 = vsel %vm151, %v2361, 0.0
  %2378 = vadd.xlane.f32.xlu0 %v2377
  %v2379 = vpop.xlane.xlu0 %2378
  %v2380 = vsel %vm151, %v2363, 0.0
  %2381 = vadd.xlane.f32.xlu0 %v2380
  %v2382 = vpop.xlane.xlu0 %2381
  %v2383 = vsel %vm151, %v2365, 0.0
  %2384 = vadd.xlane.f32.xlu0 %v2383
  %v2385 = vpop.xlane.xlu0 %2384
  %v2386 = vsel %vm151, %v2367, 0.0
  %2387 = vadd.xlane.f32.xlu0 %v2386
  %v2388 = vpop.xlane.xlu0 %2387
  %v2389 = vsel %vm151, %v2369, 0.0
  %2390 = vadd.xlane.f32.xlu0 %v2389
  %v2391 = vpop.xlane.xlu0 %2390
  %v2392 = vsel %vm151, %v2371, 0.0
  %2393 = vadd.xlane.f32.xlu0 %v2392
  %v2394 = vpop.xlane.xlu0 %2393
  %v2395 = vsel %vm151, %v2373, 0.0
  %2396 = vadd.xlane.f32.xlu0 %v2395
  %v2397 = vpop.xlane.xlu0 %2396
  %v2398 = vrcp.pop %v2376
  %v2399 = vrcp.pop %v2379
  %v2400 = vrcp.pop %v2382
  %v2401 = vrcp.pop %v2385
  %v2402 = vrcp.pop %v2388
  %v2403 = vrcp.pop %v2391
  %v2404 = vrcp.pop %v2394
  %v2405 = vrcp.pop %v2397
  %v2406 = vmul.f32 %v2359, %v2398
  %v2407 = vmul.f32 %v2361, %v2399
  %v2408 = vmul.f32 %v2363, %v2400
  %v2409 = vmul.f32 %v2365, %v2401
  %v2410 = vmul.f32 %v2367, %v2402
  %v2411 = vmul.f32 %v2369, %v2403
  %v2412 = vmul.f32 %v2371, %v2404
  %v2413 = vmul.f32 %v2373, %v2405
  %v2414 = vpack.c.bf16 %v2406, %v2406
  %v2415 = vpack.c.bf16 %v2407, %v2407
  %v2416 = vpack.c.bf16 %v2408, %v2408
  %v2417 = vpack.c.bf16 %v2409, %v2409
  %v2418 = vpack.c.bf16 %v2410, %v2410
  %v2419 = vpack.c.bf16 %v2411, %v2411
  %v2420 = vpack.c.bf16 %v2412, %v2412
  %v2421 = vpack.c.bf16 %v2413, %v2413
  %2422 = vrot.lane.b32.xlu0 %v140, 48
  %v2423 = vpop.permute.xlu0 %2422
  %v2425 = vsel %vm151, %v2414, 0
  %v2428 = vsel %vm650, %v2423, 0
  %2430 = vmatprep.subr.bf16.mxu0 0
  %2431 = vmatpush1.bf16.msra.mxu0 %v2428
  %2432 = vmatprep.subr.bf16.mxu0 0
  %2433 = vmatpush1.bf16.msra.mxu0 0
  %2434 = vmatprep.subr.bf16.mxu0 0
  %2435 = vmatpush1.bf16.msra.mxu0 0
  %2436 = vmatprep.subr.bf16.mxu0 0
  %2437 = vmatpush1.bf16.msra.mxu0 0
  %2438 = vmatprep.subr.bf16.mxu0 0
  %2439 = vmatpush1.bf16.msra.mxu0 0
  %2440 = vmatprep.subr.bf16.mxu0 0
  %2441 = vmatpush1.bf16.msra.mxu0 0
  %2442 = vmatprep.subr.bf16.mxu0 0
  %2443 = vmatpush1.bf16.msra.mxu0 0
  %2444 = vmatprep.subr.bf16.mxu0 0
  %2445 = vmatpush1.bf16.msra.mxu0 0
  %2446 = vmatprep.subr.bf16.mxu0 0
  %2447 = vmatpush1.bf16.msra.mxu0 0
  %2448 = vmatprep.subr.bf16.mxu0 0
  %2449 = vmatpush1.bf16.msra.mxu0 0
  %2450 = vmatprep.subr.bf16.mxu0 0
  %2451 = vmatpush1.bf16.msra.mxu0 0
  %2452 = vmatprep.subr.bf16.mxu0 0
  %2453 = vmatpush1.bf16.msra.mxu0 0
  %2454 = vmatprep.subr.bf16.mxu0 0
  %2455 = vmatpush1.bf16.msra.mxu0 0
  %2456 = vmatprep.subr.bf16.mxu0 0
  %2457 = vmatpush1.bf16.msra.mxu0 0
  %2458 = vmatprep.subr.bf16.mxu0 0
  %2459 = vmatpush1.bf16.msra.mxu0 0
  %2460 = vmatprep.subr.bf16.mxu0 0
  %2461 = vmatpush1.bf16.msra.mxu0 0
  %2462 = vmatprep.mubr.bf16.mxu0 0
  %2463 = vmatmul.mubr.bf16.gmra.mrb[0].mxu0 %v2425
  %v2464 = vpop.f32.mrb[0].mxu0
  %v2465 = vadd.f32 0.0, %v2464
  %v2466 = vpop.f32.mrb[0].mxu0
  %v2467 = vpop.f32.mrb[0].mxu0
  %v2468 = vpop.f32.mrb[0].mxu0
  %2469 = vdwg.mxu0
  %2470 = vrot.lane.b32.xlu0 %v141, 48
  %v2471 = vpop.permute.xlu0 %2470
  %v2473 = vsel %vm151, %v2415, 0
  %v2476 = vsel %vm650, %v2471, 0
  %2478 = vmatprep.subr.bf16.mxu0 0
  %2479 = vmatpush1.bf16.msra.mxu0 %v2476
  %2480 = vmatprep.subr.bf16.mxu0 0
  %2481 = vmatpush1.bf16.msra.mxu0 0
  %2482 = vmatprep.subr.bf16.mxu0 0
  %2483 = vmatpush1.bf16.msra.mxu0 0
  %2484 = vmatprep.subr.bf16.mxu0 0
  %2485 = vmatpush1.bf16.msra.mxu0 0
  %2486 = vmatprep.subr.bf16.mxu0 0
  %2487 = vmatpush1.bf16.msra.mxu0 0
  %2488 = vmatprep.subr.bf16.mxu0 0
  %2489 = vmatpush1.bf16.msra.mxu0 0
  %2490 = vmatprep.subr.bf16.mxu0 0
  %2491 = vmatpush1.bf16.msra.mxu0 0
  %2492 = vmatprep.subr.bf16.mxu0 0
  %2493 = vmatpush1.bf16.msra.mxu0 0
  %2494 = vmatprep.subr.bf16.mxu0 0
  %2495 = vmatpush1.bf16.msra.mxu0 0
  %2496 = vmatprep.subr.bf16.mxu0 0
  %2497 = vmatpush1.bf16.msra.mxu0 0
  %2498 = vmatprep.subr.bf16.mxu0 0
  %2499 = vmatpush1.bf16.msra.mxu0 0
  %2500 = vmatprep.subr.bf16.mxu0 0
  %2501 = vmatpush1.bf16.msra.mxu0 0
  %2502 = vmatprep.subr.bf16.mxu0 0
  %2503 = vmatpush1.bf16.msra.mxu0 0
  %2504 = vmatprep.subr.bf16.mxu0 0
  %2505 = vmatpush1.bf16.msra.mxu0 0
  %2506 = vmatprep.subr.bf16.mxu0 0
  %2507 = vmatpush1.bf16.msra.mxu0 0
  %2508 = vmatprep.subr.bf16.mxu0 0
  %2509 = vmatpush1.bf16.msra.mxu0 0
  %2510 = vmatprep.mubr.bf16.mxu0 0
  %2511 = vmatmul.mubr.bf16.gmra.mrb[0].mxu0 %v2473
  %v2512 = vpop.f32.mrb[0].mxu0
  %v2513 = vadd.f32 0.0, %v2512
  %v2514 = vpop.f32.mrb[0].mxu0
  %v2515 = vpop.f32.mrb[0].mxu0
  %v2516 = vpop.f32.mrb[0].mxu0
  %2517 = vdwg.mxu0
  %2518 = vrot.lane.b32.xlu0 %v142, 48
  %v2519 = vpop.permute.xlu0 %2518
  %v2521 = vsel %vm151, %v2416, 0
  %v2524 = vsel %vm650, %v2519, 0
  %2526 = vmatprep.subr.bf16.mxu0 0
  %2527 = vmatpush1.bf16.msra.mxu0 %v2524
  %2528 = vmatprep.subr.bf16.mxu0 0
  %2529 = vmatpush1.bf16.msra.mxu0 0
  %2530 = vmatprep.subr.bf16.mxu0 0
  %2531 = vmatpush1.bf16.msra.mxu0 0
  %2532 = vmatprep.subr.bf16.mxu0 0
  %2533 = vmatpush1.bf16.msra.mxu0 0
  %2534 = vmatprep.subr.bf16.mxu0 0
  %2535 = vmatpush1.bf16.msra.mxu0 0
  %2536 = vmatprep.subr.bf16.mxu0 0
  %2537 = vmatpush1.bf16.msra.mxu0 0
  %2538 = vmatprep.subr.bf16.mxu0 0
  %2539 = vmatpush1.bf16.msra.mxu0 0
  %2540 = vmatprep.subr.bf16.mxu0 0
  %2541 = vmatpush1.bf16.msra.mxu0 0
  %2542 = vmatprep.subr.bf16.mxu0 0
  %2543 = vmatpush1.bf16.msra.mxu0 0
  %2544 = vmatprep.subr.bf16.mxu0 0
  %2545 = vmatpush1.bf16.msra.mxu0 0
  %2546 = vmatprep.subr.bf16.mxu0 0
  %2547 = vmatpush1.bf16.msra.mxu0 0
  %2548 = vmatprep.subr.bf16.mxu0 0
  %2549 = vmatpush1.bf16.msra.mxu0 0
  %2550 = vmatprep.subr.bf16.mxu0 0
  %2551 = vmatpush1.bf16.msra.mxu0 0
  %2552 = vmatprep.subr.bf16.mxu0 0
  %2553 = vmatpush1.bf16.msra.mxu0 0
  %2554 = vmatprep.subr.bf16.mxu0 0
  %2555 = vmatpush1.bf16.msra.mxu0 0
  %2556 = vmatprep.subr.bf16.mxu0 0
  %2557 = vmatpush1.bf16.msra.mxu0 0
  %2558 = vmatprep.mubr.bf16.mxu0 0
  %2559 = vmatmul.mubr.bf16.gmra.mrb[0].mxu0 %v2521
  %v2560 = vpop.f32.mrb[0].mxu0
  %v2561 = vadd.f32 0.0, %v2560
  %v2562 = vpop.f32.mrb[0].mxu0
  %v2563 = vpop.f32.mrb[0].mxu0
  %v2564 = vpop.f32.mrb[0].mxu0
  %2565 = vdwg.mxu0
  %2566 = vrot.lane.b32.xlu0 %v143, 48
  %v2567 = vpop.permute.xlu0 %2566
  %v2569 = vsel %vm151, %v2417, 0
  %v2572 = vsel %vm650, %v2567, 0
  %2574 = vmatprep.subr.bf16.mxu0 0
  %2575 = vmatpush1.bf16.msra.mxu0 %v2572
  %2576 = vmatprep.subr.bf16.mxu0 0
  %2577 = vmatpush1.bf16.msra.mxu0 0
  %2578 = vmatprep.subr.bf16.mxu0 0
  %2579 = vmatpush1.bf16.msra.mxu0 0
  %2580 = vmatprep.subr.bf16.mxu0 0
  %2581 = vmatpush1.bf16.msra.mxu0 0
  %2582 = vmatprep.subr.bf16.mxu0 0
  %2583 = vmatpush1.bf16.msra.mxu0 0
  %2584 = vmatprep.subr.bf16.mxu0 0
  %2585 = vmatpush1.bf16.msra.mxu0 0
  %2586 = vmatprep.subr.bf16.mxu0 0
  %2587 = vmatpush1.bf16.msra.mxu0 0
  %2588 = vmatprep.subr.bf16.mxu0 0
  %2589 = vmatpush1.bf16.msra.mxu0 0
  %2590 = vmatprep.subr.bf16.mxu0 0
  %2591 = vmatpush1.bf16.msra.mxu0 0
  %2592 = vmatprep.subr.bf16.mxu0 0
  %2593 = vmatpush1.bf16.msra.mxu0 0
  %2594 = vmatprep.subr.bf16.mxu0 0
  %2595 = vmatpush1.bf16.msra.mxu0 0
  %2596 = vmatprep.subr.bf16.mxu0 0
  %2597 = vmatpush1.bf16.msra.mxu0 0
  %2598 = vmatprep.subr.bf16.mxu0 0
  %2599 = vmatpush1.bf16.msra.mxu0 0
  %2600 = vmatprep.subr.bf16.mxu0 0
  %2601 = vmatpush1.bf16.msra.mxu0 0
  %2602 = vmatprep.subr.bf16.mxu0 0
  %2603 = vmatpush1.bf16.msra.mxu0 0
  %2604 = vmatprep.subr.bf16.mxu0 0
  %2605 = vmatpush1.bf16.msra.mxu0 0
  %2606 = vmatprep.mubr.bf16.mxu0 0
  %2607 = vmatmul.mubr.bf16.gmra.mrb[0].mxu0 %v2569
  %v2608 = vpop.f32.mrb[0].mxu0
  %v2609 = vadd.f32 0.0, %v2608
  %v2610 = vpop.f32.mrb[0].mxu0
  %v2611 = vpop.f32.mrb[0].mxu0
  %v2612 = vpop.f32.mrb[0].mxu0
  %2613 = vdwg.mxu0
  %2614 = vrot.lane.b32.xlu0 %v144, 48
  %v2615 = vpop.permute.xlu0 %2614
  %v2617 = vsel %vm151, %v2418, 0
  %v2620 = vsel %vm650, %v2615, 0
  %2622 = vmatprep.subr.bf16.mxu0 0
  %2623 = vmatpush1.bf16.msra.mxu0 %v2620
  %2624 = vmatprep.subr.bf16.mxu0 0
  %2625 = vmatpush1.bf16.msra.mxu0 0
  %2626 = vmatprep.subr.bf16.mxu0 0
  %2627 = vmatpush1.bf16.msra.mxu0 0
  %2628 = vmatprep.subr.bf16.mxu0 0
  %2629 = vmatpush1.bf16.msra.mxu0 0
  %2630 = vmatprep.subr.bf16.mxu0 0
  %2631 = vmatpush1.bf16.msra.mxu0 0
  %2632 = vmatprep.subr.bf16.mxu0 0
  %2633 = vmatpush1.bf16.msra.mxu0 0
  %2634 = vmatprep.subr.bf16.mxu0 0
  %2635 = vmatpush1.bf16.msra.mxu0 0
  %2636 = vmatprep.subr.bf16.mxu0 0
  %2637 = vmatpush1.bf16.msra.mxu0 0
  %2638 = vmatprep.subr.bf16.mxu0 0
  %2639 = vmatpush1.bf16.msra.mxu0 0
  %2640 = vmatprep.subr.bf16.mxu0 0
  %2641 = vmatpush1.bf16.msra.mxu0 0
  %2642 = vmatprep.subr.bf16.mxu0 0
  %2643 = vmatpush1.bf16.msra.mxu0 0
  %2644 = vmatprep.subr.bf16.mxu0 0
  %2645 = vmatpush1.bf16.msra.mxu0 0
  %2646 = vmatprep.subr.bf16.mxu0 0
  %2647 = vmatpush1.bf16.msra.mxu0 0
  %2648 = vmatprep.subr.bf16.mxu0 0
  %2649 = vmatpush1.bf16.msra.mxu0 0
  %2650 = vmatprep.subr.bf16.mxu0 0
  %2651 = vmatpush1.bf16.msra.mxu0 0
  %2652 = vmatprep.subr.bf16.mxu0 0
  %2653 = vmatpush1.bf16.msra.mxu0 0
  %2654 = vmatprep.mubr.bf16.mxu0 0
  %2655 = vmatmul.mubr.bf16.gmra.mrb[0].mxu0 %v2617
  %v2656 = vpop.f32.mrb[0].mxu0
  %v2657 = vadd.f32 0.0, %v2656
  %v2658 = vpop.f32.mrb[0].mxu0
  %v2659 = vpop.f32.mrb[0].mxu0
  %v2660 = vpop.f32.mrb[0].mxu0
  %2661 = vdwg.mxu0
  %2662 = vrot.lane.b32.xlu0 %v145, 48
  %v2663 = vpop.permute.xlu0 %2662
  %v2665 = vsel %vm151, %v2419, 0
  %v2668 = vsel %vm650, %v2663, 0
  %2670 = vmatprep.subr.bf16.mxu0 0
  %2671 = vmatpush1.bf16.msra.mxu0 %v2668
  %2672 = vmatprep.subr.bf16.mxu0 0
  %2673 = vmatpush1.bf16.msra.mxu0 0
  %2674 = vmatprep.subr.bf16.mxu0 0
  %2675 = vmatpush1.bf16.msra.mxu0 0
  %2676 = vmatprep.subr.bf16.mxu0 0
  %2677 = vmatpush1.bf16.msra.mxu0 0
  %2678 = vmatprep.subr.bf16.mxu0 0
  %2679 = vmatpush1.bf16.msra.mxu0 0
  %2680 = vmatprep.subr.bf16.mxu0 0
  %2681 = vmatpush1.bf16.msra.mxu0 0
  %2682 = vmatprep.subr.bf16.mxu0 0
  %2683 = vmatpush1.bf16.msra.mxu0 0
  %2684 = vmatprep.subr.bf16.mxu0 0
  %2685 = vmatpush1.bf16.msra.mxu0 0
  %2686 = vmatprep.subr.bf16.mxu0 0
  %2687 = vmatpush1.bf16.msra.mxu0 0
  %2688 = vmatprep.subr.bf16.mxu0 0
  %2689 = vmatpush1.bf16.msra.mxu0 0
  %2690 = vmatprep.subr.bf16.mxu0 0
  %2691 = vmatpush1.bf16.msra.mxu0 0
  %2692 = vmatprep.subr.bf16.mxu0 0
  %2693 = vmatpush1.bf16.msra.mxu0 0
  %2694 = vmatprep.subr.bf16.mxu0 0
  %2695 = vmatpush1.bf16.msra.mxu0 0
  %2696 = vmatprep.subr.bf16.mxu0 0
  %2697 = vmatpush1.bf16.msra.mxu0 0
  %2698 = vmatprep.subr.bf16.mxu0 0
  %2699 = vmatpush1.bf16.msra.mxu0 0
  %2700 = vmatprep.subr.bf16.mxu0 0
  %2701 = vmatpush1.bf16.msra.mxu0 0
  %2702 = vmatprep.mubr.bf16.mxu0 0
  %2703 = vmatmul.mubr.bf16.gmra.mrb[0].mxu0 %v2665
  %v2704 = vpop.f32.mrb[0].mxu0
  %v2705 = vadd.f32 0.0, %v2704
  %v2706 = vpop.f32.mrb[0].mxu0
  %v2707 = vpop.f32.mrb[0].mxu0
  %v2708 = vpop.f32.mrb[0].mxu0
  %2709 = vdwg.mxu0
  %2710 = vrot.lane.b32.xlu0 %v146, 48
  %v2711 = vpop.permute.xlu0 %2710
  %v2713 = vsel %vm151, %v2420, 0
  %v2716 = vsel %vm650, %v2711, 0
  %2718 = vmatprep.subr.bf16.mxu0 0
  %2719 = vmatpush1.bf16.msra.mxu0 %v2716
  %2720 = vmatprep.subr.bf16.mxu0 0
  %2721 = vmatpush1.bf16.msra.mxu0 0
  %2722 = vmatprep.subr.bf16.mxu0 0
  %2723 = vmatpush1.bf16.msra.mxu0 0
  %2724 = vmatprep.subr.bf16.mxu0 0
  %2725 = vmatpush1.bf16.msra.mxu0 0
  %2726 = vmatprep.subr.bf16.mxu0 0
  %2727 = vmatpush1.bf16.msra.mxu0 0
  %2728 = vmatprep.subr.bf16.mxu0 0
  %2729 = vmatpush1.bf16.msra.mxu0 0
  %2730 = vmatprep.subr.bf16.mxu0 0
  %2731 = vmatpush1.bf16.msra.mxu0 0
  %2732 = vmatprep.subr.bf16.mxu0 0
  %2733 = vmatpush1.bf16.msra.mxu0 0
  %2734 = vmatprep.subr.bf16.mxu0 0
  %2735 = vmatpush1.bf16.msra.mxu0 0
  %2736 = vmatprep.subr.bf16.mxu0 0
  %2737 = vmatpush1.bf16.msra.mxu0 0
  %2738 = vmatprep.subr.bf16.mxu0 0
  %2739 = vmatpush1.bf16.msra.mxu0 0
  %2740 = vmatprep.subr.bf16.mxu0 0
  %2741 = vmatpush1.bf16.msra.mxu0 0
  %2742 = vmatprep.subr.bf16.mxu0 0
  %2743 = vmatpush1.bf16.msra.mxu0 0
  %2744 = vmatprep.subr.bf16.mxu0 0
  %2745 = vmatpush1.bf16.msra.mxu0 0
  %2746 = vmatprep.subr.bf16.mxu0 0
  %2747 = vmatpush1.bf16.msra.mxu0 0
  %2748 = vmatprep.subr.bf16.mxu0 0
  %2749 = vmatpush1.bf16.msra.mxu0 0
  %2750 = vmatprep.mubr.bf16.mxu0 0
  %2751 = vmatmul.mubr.bf16.gmra.mrb[0].mxu0 %v2713
  %v2752 = vpop.f32.mrb[0].mxu0
  %v2753 = vadd.f32 0.0, %v2752
  %v2754 = vpop.f32.mrb[0].mxu0
  %v2755 = vpop.f32.mrb[0].mxu0
  %v2756 = vpop.f32.mrb[0].mxu0
  %2757 = vdwg.mxu0
  %2758 = vrot.lane.b32.xlu0 %v147, 48
  %v2759 = vpop.permute.xlu0 %2758
  %v2761 = vsel %vm151, %v2421, 0
  %v2764 = vsel %vm650, %v2759, 0
  %2766 = vmatprep.subr.bf16.mxu0 0
  %2767 = vmatpush1.bf16.msra.mxu0 %v2764
  %2768 = vmatprep.subr.bf16.mxu0 0
  %2769 = vmatpush1.bf16.msra.mxu0 0
  %2770 = vmatprep.subr.bf16.mxu0 0
  %2771 = vmatpush1.bf16.msra.mxu0 0
  %2772 = vmatprep.subr.bf16.mxu0 0
  %2773 = vmatpush1.bf16.msra.mxu0 0
  %2774 = vmatprep.subr.bf16.mxu0 0
  %2775 = vmatpush1.bf16.msra.mxu0 0
  %2776 = vmatprep.subr.bf16.mxu0 0
  %2777 = vmatpush1.bf16.msra.mxu0 0
  %2778 = vmatprep.subr.bf16.mxu0 0
  %2779 = vmatpush1.bf16.msra.mxu0 0
  %2780 = vmatprep.subr.bf16.mxu0 0
  %2781 = vmatpush1.bf16.msra.mxu0 0
  %2782 = vmatprep.subr.bf16.mxu0 0
  %2783 = vmatpush1.bf16.msra.mxu0 0
  %2784 = vmatprep.subr.bf16.mxu0 0
  %2785 = vmatpush1.bf16.msra.mxu0 0
  %2786 = vmatprep.subr.bf16.mxu0 0
  %2787 = vmatpush1.bf16.msra.mxu0 0
  %2788 = vmatprep.subr.bf16.mxu0 0
  %2789 = vmatpush1.bf16.msra.mxu0 0
  %2790 = vmatprep.subr.bf16.mxu0 0
  %2791 = vmatpush1.bf16.msra.mxu0 0
  %2792 = vmatprep.subr.bf16.mxu0 0
  %2793 = vmatpush1.bf16.msra.mxu0 0
  %2794 = vmatprep.subr.bf16.mxu0 0
  %2795 = vmatpush1.bf16.msra.mxu0 0
  %2796 = vmatprep.subr.bf16.mxu0 0
  %2797 = vmatpush1.bf16.msra.mxu0 0
  %2798 = vmatprep.mubr.bf16.mxu0 0
  %2799 = vmatmul.mubr.bf16.gmra.mrb[0].mxu0 %v2761
  %v2800 = vpop.f32.mrb[0].mxu0
  %v2801 = vadd.f32 0.0, %v2800
  %v2802 = vpop.f32.mrb[0].mxu0
  %v2803 = vpop.f32.mrb[0].mxu0
  %v2804 = vpop.f32.mrb[0].mxu0
  %2805 = vdwg.mxu0
  %2806 = vrot.lane.b32.xlu0 %v140, 104
  %v2807 = vpop.permute.xlu0 %2806
  %2808 = vrot.lane.b32.xlu0 %v140, 72
  %v2809 = vpop.permute.xlu0 %2808
  %v2811 = vsel %vm151, %v2807, 0
  %v2814 = vsel %vm151, %v2809, 0
  %2816 = vmatprep.subr.bf16.mxu0 0
  %2817 = vmatpush1.bf16.xpose.msra.mxu0 %v2814
  %2818 = vmatprep.subr.bf16.mxu0 0
  %2819 = vmatpush1.bf16.xpose.msra.mxu0 0
  %2820 = vmatprep.subr.bf16.mxu0 0
  %2821 = vmatpush1.bf16.xpose.msra.mxu0 0
  %2822 = vmatprep.subr.bf16.mxu0 0
  %2823 = vmatpush1.bf16.xpose.msra.mxu0 0
  %2824 = vmatprep.subr.bf16.mxu0 0
  %2825 = vmatpush1.bf16.xpose.msra.mxu0 0
  %2826 = vmatprep.subr.bf16.mxu0 0
  %2827 = vmatpush1.bf16.xpose.msra.mxu0 0
  %2828 = vmatprep.subr.bf16.mxu0 0
  %2829 = vmatpush1.bf16.xpose.msra.mxu0 0
  %2830 = vmatprep.subr.bf16.mxu0 0
  %2831 = vmatpush1.bf16.xpose.msra.mxu0 0
  %2832 = vmatprep.subr.bf16.mxu0 0
  %2833 = vmatpush1.bf16.xpose.msra.mxu0 0
  %2834 = vmatprep.subr.bf16.mxu0 0
  %2835 = vmatpush1.bf16.xpose.msra.mxu0 0
  %2836 = vmatprep.subr.bf16.mxu0 0
  %2837 = vmatpush1.bf16.xpose.msra.mxu0 0
  %2838 = vmatprep.subr.bf16.mxu0 0
  %2839 = vmatpush1.bf16.xpose.msra.mxu0 0
  %2840 = vmatprep.subr.bf16.mxu0 0
  %2841 = vmatpush1.bf16.xpose.msra.mxu0 0
  %2842 = vmatprep.subr.bf16.mxu0 0
  %2843 = vmatpush1.bf16.xpose.msra.mxu0 0
  %2844 = vmatprep.subr.bf16.mxu0 0
  %2845 = vmatpush1.bf16.xpose.msra.mxu0 0
  %2846 = vmatprep.subr.bf16.mxu0 0
  %2847 = vmatpush1.bf16.xpose.msra.mxu0 0
  %2848 = vmatprep.mubr.bf16.mxu0 0
  %2849 = vmatmul.mubr.bf16.gmra.mrb[0].mxu0 %v2811
  %v2850 = vpop.f32.mrb[0].mxu0
  %v2851 = vadd.f32 0.0, %v2850
  %v2852 = vpop.f32.mrb[0].mxu0
  %v2853 = vpop.f32.mrb[0].mxu0
  %v2854 = vpop.f32.mrb[0].mxu0
  %2855 = vdwg.mxu0
  %2856 = vrot.lane.b32.xlu0 %v141, 104
  %v2857 = vpop.permute.xlu0 %2856
  %2858 = vrot.lane.b32.xlu0 %v141, 72
  %v2859 = vpop.permute.xlu0 %2858
  %v2861 = vsel %vm151, %v2857, 0
  %v2864 = vsel %vm151, %v2859, 0
  %2866 = vmatprep.subr.bf16.mxu0 0
  %2867 = vmatpush1.bf16.xpose.msra.mxu0 %v2864
  %2868 = vmatprep.subr.bf16.mxu0 0
  %2869 = vmatpush1.bf16.xpose.msra.mxu0 0
  %2870 = vmatprep.subr.bf16.mxu0 0
  %2871 = vmatpush1.bf16.xpose.msra.mxu0 0
  %2872 = vmatprep.subr.bf16.mxu0 0
  %2873 = vmatpush1.bf16.xpose.msra.mxu0 0
  %2874 = vmatprep.subr.bf16.mxu0 0
  %2875 = vmatpush1.bf16.xpose.msra.mxu0 0
  %2876 = vmatprep.subr.bf16.mxu0 0
  %2877 = vmatpush1.bf16.xpose.msra.mxu0 0
  %2878 = vmatprep.subr.bf16.mxu0 0
  %2879 = vmatpush1.bf16.xpose.msra.mxu0 0
  %2880 = vmatprep.subr.bf16.mxu0 0
  %2881 = vmatpush1.bf16.xpose.msra.mxu0 0
  %2882 = vmatprep.subr.bf16.mxu0 0
  %2883 = vmatpush1.bf16.xpose.msra.mxu0 0
  %2884 = vmatprep.subr.bf16.mxu0 0
  %2885 = vmatpush1.bf16.xpose.msra.mxu0 0
  %2886 = vmatprep.subr.bf16.mxu0 0
  %2887 = vmatpush1.bf16.xpose.msra.mxu0 0
  %2888 = vmatprep.subr.bf16.mxu0 0
  %2889 = vmatpush1.bf16.xpose.msra.mxu0 0
  %2890 = vmatprep.subr.bf16.mxu0 0
  %2891 = vmatpush1.bf16.xpose.msra.mxu0 0
  %2892 = vmatprep.subr.bf16.mxu0 0
  %2893 = vmatpush1.bf16.xpose.msra.mxu0 0
  %2894 = vmatprep.subr.bf16.mxu0 0
  %2895 = vmatpush1.bf16.xpose.msra.mxu0 0
  %2896 = vmatprep.subr.bf16.mxu0 0
  %2897 = vmatpush1.bf16.xpose.msra.mxu0 0
  %2898 = vmatprep.mubr.bf16.mxu0 0
  %2899 = vmatmul.mubr.bf16.gmra.mrb[0].mxu0 %v2861
  %v2900 = vpop.f32.mrb[0].mxu0
  %v2901 = vadd.f32 0.0, %v2900
  %v2902 = vpop.f32.mrb[0].mxu0
  %v2903 = vpop.f32.mrb[0].mxu0
  %v2904 = vpop.f32.mrb[0].mxu0
  %2905 = vdwg.mxu0
  %2906 = vrot.lane.b32.xlu0 %v142, 104
  %v2907 = vpop.permute.xlu0 %2906
  %2908 = vrot.lane.b32.xlu0 %v142, 72
  %v2909 = vpop.permute.xlu0 %2908
  %v2911 = vsel %vm151, %v2907, 0
  %v2914 = vsel %vm151, %v2909, 0
  %2916 = vmatprep.subr.bf16.mxu0 0
  %2917 = vmatpush1.bf16.xpose.msra.mxu0 %v2914
  %2918 = vmatprep.subr.bf16.mxu0 0
  %2919 = vmatpush1.bf16.xpose.msra.mxu0 0
  %2920 = vmatprep.subr.bf16.mxu0 0
  %2921 = vmatpush1.bf16.xpose.msra.mxu0 0
  %2922 = vmatprep.subr.bf16.mxu0 0
  %2923 = vmatpush1.bf16.xpose.msra.mxu0 0
  %2924 = vmatprep.subr.bf16.mxu0 0
  %2925 = vmatpush1.bf16.xpose.msra.mxu0 0
  %2926 = vmatprep.subr.bf16.mxu0 0
  %2927 = vmatpush1.bf16.xpose.msra.mxu0 0
  %2928 = vmatprep.subr.bf16.mxu0 0
  %2929 = vmatpush1.bf16.xpose.msra.mxu0 0
  %2930 = vmatprep.subr.bf16.mxu0 0
  %2931 = vmatpush1.bf16.xpose.msra.mxu0 0
  %2932 = vmatprep.subr.bf16.mxu0 0
  %2933 = vmatpush1.bf16.xpose.msra.mxu0 0
  %2934 = vmatprep.subr.bf16.mxu0 0
  %2935 = vmatpush1.bf16.xpose.msra.mxu0 0
  %2936 = vmatprep.subr.bf16.mxu0 0
  %2937 = vmatpush1.bf16.xpose.msra.mxu0 0
  %2938 = vmatprep.subr.bf16.mxu0 0
  %2939 = vmatpush1.bf16.xpose.msra.mxu0 0
  %2940 = vmatprep.subr.bf16.mxu0 0
  %2941 = vmatpush1.bf16.xpose.msra.mxu0 0
  %2942 = vmatprep.subr.bf16.mxu0 0
  %2943 = vmatpush1.bf16.xpose.msra.mxu0 0
  %2944 = vmatprep.subr.bf16.mxu0 0
  %2945 = vmatpush1.bf16.xpose.msra.mxu0 0
  %2946 = vmatprep.subr.bf16.mxu0 0
  %2947 = vmatpush1.bf16.xpose.msra.mxu0 0
  %2948 = vmatprep.mubr.bf16.mxu0 0
  %2949 = vmatmul.mubr.bf16.gmra.mrb[0].mxu0 %v2911
  %v2950 = vpop.f32.mrb[0].mxu0
  %v2951 = vadd.f32 0.0, %v2950
  %v2952 = vpop.f32.mrb[0].mxu0
  %v2953 = vpop.f32.mrb[0].mxu0
  %v2954 = vpop.f32.mrb[0].mxu0
  %2955 = vdwg.mxu0
  %2956 = vrot.lane.b32.xlu0 %v143, 104
  %v2957 = vpop.permute.xlu0 %2956
  %2958 = vrot.lane.b32.xlu0 %v143, 72
  %v2959 = vpop.permute.xlu0 %2958
  %v2961 = vsel %vm151, %v2957, 0
  %v2964 = vsel %vm151, %v2959, 0
  %2966 = vmatprep.subr.bf16.mxu0 0
  %2967 = vmatpush1.bf16.xpose.msra.mxu0 %v2964
  %2968 = vmatprep.subr.bf16.mxu0 0
  %2969 = vmatpush1.bf16.xpose.msra.mxu0 0
  %2970 = vmatprep.subr.bf16.mxu0 0
  %2971 = vmatpush1.bf16.xpose.msra.mxu0 0
  %2972 = vmatprep.subr.bf16.mxu0 0
  %2973 = vmatpush1.bf16.xpose.msra.mxu0 0
  %2974 = vmatprep.subr.bf16.mxu0 0
  %2975 = vmatpush1.bf16.xpose.msra.mxu0 0
  %2976 = vmatprep.subr.bf16.mxu0 0
  %2977 = vmatpush1.bf16.xpose.msra.mxu0 0
  %2978 = vmatprep.subr.bf16.mxu0 0
  %2979 = vmatpush1.bf16.xpose.msra.mxu0 0
  %2980 = vmatprep.subr.bf16.mxu0 0
  %2981 = vmatpush1.bf16.xpose.msra.mxu0 0
  %2982 = vmatprep.subr.bf16.mxu0 0
  %2983 = vmatpush1.bf16.xpose.msra.mxu0 0
  %2984 = vmatprep.subr.bf16.mxu0 0
  %2985 = vmatpush1.bf16.xpose.msra.mxu0 0
  %2986 = vmatprep.subr.bf16.mxu0 0
  %2987 = vmatpush1.bf16.xpose.msra.mxu0 0
  %2988 = vmatprep.subr.bf16.mxu0 0
  %2989 = vmatpush1.bf16.xpose.msra.mxu0 0
  %2990 = vmatprep.subr.bf16.mxu0 0
  %2991 = vmatpush1.bf16.xpose.msra.mxu0 0
  %2992 = vmatprep.subr.bf16.mxu0 0
  %2993 = vmatpush1.bf16.xpose.msra.mxu0 0
  %2994 = vmatprep.subr.bf16.mxu0 0
  %2995 = vmatpush1.bf16.xpose.msra.mxu0 0
  %2996 = vmatprep.subr.bf16.mxu0 0
  %2997 = vmatpush1.bf16.xpose.msra.mxu0 0
  %2998 = vmatprep.mubr.bf16.mxu0 0
  %2999 = vmatmul.mubr.bf16.gmra.mrb[0].mxu0 %v2961
  %v3000 = vpop.f32.mrb[0].mxu0
  %v3001 = vadd.f32 0.0, %v3000
  %v3002 = vpop.f32.mrb[0].mxu0
  %v3003 = vpop.f32.mrb[0].mxu0
  %v3004 = vpop.f32.mrb[0].mxu0
  %3005 = vdwg.mxu0
  %3006 = vrot.lane.b32.xlu0 %v144, 104
  %v3007 = vpop.permute.xlu0 %3006
  %3008 = vrot.lane.b32.xlu0 %v144, 72
  %v3009 = vpop.permute.xlu0 %3008
  %v3011 = vsel %vm151, %v3007, 0
  %v3014 = vsel %vm151, %v3009, 0
  %3016 = vmatprep.subr.bf16.mxu0 0
  %3017 = vmatpush1.bf16.xpose.msra.mxu0 %v3014
  %3018 = vmatprep.subr.bf16.mxu0 0
  %3019 = vmatpush1.bf16.xpose.msra.mxu0 0
  %3020 = vmatprep.subr.bf16.mxu0 0
  %3021 = vmatpush1.bf16.xpose.msra.mxu0 0
  %3022 = vmatprep.subr.bf16.mxu0 0
  %3023 = vmatpush1.bf16.xpose.msra.mxu0 0
  %3024 = vmatprep.subr.bf16.mxu0 0
  %3025 = vmatpush1.bf16.xpose.msra.mxu0 0
  %3026 = vmatprep.subr.bf16.mxu0 0
  %3027 = vmatpush1.bf16.xpose.msra.mxu0 0
  %3028 = vmatprep.subr.bf16.mxu0 0
  %3029 = vmatpush1.bf16.xpose.msra.mxu0 0
  %3030 = vmatprep.subr.bf16.mxu0 0
  %3031 = vmatpush1.bf16.xpose.msra.mxu0 0
  %3032 = vmatprep.subr.bf16.mxu0 0
  %3033 = vmatpush1.bf16.xpose.msra.mxu0 0
  %3034 = vmatprep.subr.bf16.mxu0 0
  %3035 = vmatpush1.bf16.xpose.msra.mxu0 0
  %3036 = vmatprep.subr.bf16.mxu0 0
  %3037 = vmatpush1.bf16.xpose.msra.mxu0 0
  %3038 = vmatprep.subr.bf16.mxu0 0
  %3039 = vmatpush1.bf16.xpose.msra.mxu0 0
  %3040 = vmatprep.subr.bf16.mxu0 0
  %3041 = vmatpush1.bf16.xpose.msra.mxu0 0
  %3042 = vmatprep.subr.bf16.mxu0 0
  %3043 = vmatpush1.bf16.xpose.msra.mxu0 0
  %3044 = vmatprep.subr.bf16.mxu0 0
  %3045 = vmatpush1.bf16.xpose.msra.mxu0 0
  %3046 = vmatprep.subr.bf16.mxu0 0
  %3047 = vmatpush1.bf16.xpose.msra.mxu0 0
  %3048 = vmatprep.mubr.bf16.mxu0 0
  %3049 = vmatmul.mubr.bf16.gmra.mrb[0].mxu0 %v3011
  %v3050 = vpop.f32.mrb[0].mxu0
  %v3051 = vadd.f32 0.0, %v3050
  %v3052 = vpop.f32.mrb[0].mxu0
  %v3053 = vpop.f32.mrb[0].mxu0
  %v3054 = vpop.f32.mrb[0].mxu0
  %3055 = vdwg.mxu0
  %3056 = vrot.lane.b32.xlu0 %v145, 104
  %v3057 = vpop.permute.xlu0 %3056
  %3058 = vrot.lane.b32.xlu0 %v145, 72
  %v3059 = vpop.permute.xlu0 %3058
  %v3061 = vsel %vm151, %v3057, 0
  %v3064 = vsel %vm151, %v3059, 0
  %3066 = vmatprep.subr.bf16.mxu0 0
  %3067 = vmatpush1.bf16.xpose.msra.mxu0 %v3064
  %3068 = vmatprep.subr.bf16.mxu0 0
  %3069 = vmatpush1.bf16.xpose.msra.mxu0 0
  %3070 = vmatprep.subr.bf16.mxu0 0
  %3071 = vmatpush1.bf16.xpose.msra.mxu0 0
  %3072 = vmatprep.subr.bf16.mxu0 0
  %3073 = vmatpush1.bf16.xpose.msra.mxu0 0
  %3074 = vmatprep.subr.bf16.mxu0 0
  %3075 = vmatpush1.bf16.xpose.msra.mxu0 0
  %3076 = vmatprep.subr.bf16.mxu0 0
  %3077 = vmatpush1.bf16.xpose.msra.mxu0 0
  %3078 = vmatprep.subr.bf16.mxu0 0
  %3079 = vmatpush1.bf16.xpose.msra.mxu0 0
  %3080 = vmatprep.subr.bf16.mxu0 0
  %3081 = vmatpush1.bf16.xpose.msra.mxu0 0
  %3082 = vmatprep.subr.bf16.mxu0 0
  %3083 = vmatpush1.bf16.xpose.msra.mxu0 0
  %3084 = vmatprep.subr.bf16.mxu0 0
  %3085 = vmatpush1.bf16.xpose.msra.mxu0 0
  %3086 = vmatprep.subr.bf16.mxu0 0
  %3087 = vmatpush1.bf16.xpose.msra.mxu0 0
  %3088 = vmatprep.subr.bf16.mxu0 0
  %3089 = vmatpush1.bf16.xpose.msra.mxu0 0
  %3090 = vmatprep.subr.bf16.mxu0 0
  %3091 = vmatpush1.bf16.xpose.msra.mxu0 0
  %3092 = vmatprep.subr.bf16.mxu0 0
  %3093 = vmatpush1.bf16.xpose.msra.mxu0 0
  %3094 = vmatprep.subr.bf16.mxu0 0
  %3095 = vmatpush1.bf16.xpose.msra.mxu0 0
  %3096 = vmatprep.subr.bf16.mxu0 0
  %3097 = vmatpush1.bf16.xpose.msra.mxu0 0
  %3098 = vmatprep.mubr.bf16.mxu0 0
  %3099 = vmatmul.mubr.bf16.gmra.mrb[0].mxu0 %v3061
  %v3100 = vpop.f32.mrb[0].mxu0
  %v3101 = vadd.f32 0.0, %v3100
  %v3102 = vpop.f32.mrb[0].mxu0
  %v3103 = vpop.f32.mrb[0].mxu0
  %v3104 = vpop.f32.mrb[0].mxu0
  %3105 = vdwg.mxu0
  %3106 = vrot.lane.b32.xlu0 %v146, 104
  %v3107 = vpop.permute.xlu0 %3106
  %3108 = vrot.lane.b32.xlu0 %v146, 72
  %v3109 = vpop.permute.xlu0 %3108
  %v3111 = vsel %vm151, %v3107, 0
  %v3114 = vsel %vm151, %v3109, 0
  %3116 = vmatprep.subr.bf16.mxu0 0
  %3117 = vmatpush1.bf16.xpose.msra.mxu0 %v3114
  %3118 = vmatprep.subr.bf16.mxu0 0
  %3119 = vmatpush1.bf16.xpose.msra.mxu0 0
  %3120 = vmatprep.subr.bf16.mxu0 0
  %3121 = vmatpush1.bf16.xpose.msra.mxu0 0
  %3122 = vmatprep.subr.bf16.mxu0 0
  %3123 = vmatpush1.bf16.xpose.msra.mxu0 0
  %3124 = vmatprep.subr.bf16.mxu0 0
  %3125 = vmatpush1.bf16.xpose.msra.mxu0 0
  %3126 = vmatprep.subr.bf16.mxu0 0
  %3127 = vmatpush1.bf16.xpose.msra.mxu0 0
  %3128 = vmatprep.subr.bf16.mxu0 0
  %3129 = vmatpush1.bf16.xpose.msra.mxu0 0
  %3130 = vmatprep.subr.bf16.mxu0 0
  %3131 = vmatpush1.bf16.xpose.msra.mxu0 0
  %3132 = vmatprep.subr.bf16.mxu0 0
  %3133 = vmatpush1.bf16.xpose.msra.mxu0 0
  %3134 = vmatprep.subr.bf16.mxu0 0
  %3135 = vmatpush1.bf16.xpose.msra.mxu0 0
  %3136 = vmatprep.subr.bf16.mxu0 0
  %3137 = vmatpush1.bf16.xpose.msra.mxu0 0
  %3138 = vmatprep.subr.bf16.mxu0 0
  %3139 = vmatpush1.bf16.xpose.msra.mxu0 0
  %3140 = vmatprep.subr.bf16.mxu0 0
  %3141 = vmatpush1.bf16.xpose.msra.mxu0 0
  %3142 = vmatprep.subr.bf16.mxu0 0
  %3143 = vmatpush1.bf16.xpose.msra.mxu0 0
  %3144 = vmatprep.subr.bf16.mxu0 0
  %3145 = vmatpush1.bf16.xpose.msra.mxu0 0
  %3146 = vmatprep.subr.bf16.mxu0 0
  %3147 = vmatpush1.bf16.xpose.msra.mxu0 0
  %3148 = vmatprep.mubr.bf16.mxu0 0
  %3149 = vmatmul.mubr.bf16.gmra.mrb[0].mxu0 %v3111
  %v3150 = vpop.f32.mrb[0].mxu0
  %v3151 = vadd.f32 0.0, %v3150
  %v3152 = vpop.f32.mrb[0].mxu0
  %v3153 = vpop.f32.mrb[0].mxu0
  %v3154 = vpop.f32.mrb[0].mxu0
  %3155 = vdwg.mxu0
  %3156 = vrot.lane.b32.xlu0 %v147, 104
  %v3157 = vpop.permute.xlu0 %3156
  %3158 = vrot.lane.b32.xlu0 %v147, 72
  %v3159 = vpop.permute.xlu0 %3158
  %v3161 = vsel %vm151, %v3157, 0
  %v3164 = vsel %vm151, %v3159, 0
  %3166 = vmatprep.subr.bf16.mxu0 0
  %3167 = vmatpush1.bf16.xpose.msra.mxu0 %v3164
  %3168 = vmatprep.subr.bf16.mxu0 0
  %3169 = vmatpush1.bf16.xpose.msra.mxu0 0
  %3170 = vmatprep.subr.bf16.mxu0 0
  %3171 = vmatpush1.bf16.xpose.msra.mxu0 0
  %3172 = vmatprep.subr.bf16.mxu0 0
  %3173 = vmatpush1.bf16.xpose.msra.mxu0 0
  %3174 = vmatprep.subr.bf16.mxu0 0
  %3175 = vmatpush1.bf16.xpose.msra.mxu0 0
  %3176 = vmatprep.subr.bf16.mxu0 0
  %3177 = vmatpush1.bf16.xpose.msra.mxu0 0
  %3178 = vmatprep.subr.bf16.mxu0 0
  %3179 = vmatpush1.bf16.xpose.msra.mxu0 0
  %3180 = vmatprep.subr.bf16.mxu0 0
  %3181 = vmatpush1.bf16.xpose.msra.mxu0 0
  %3182 = vmatprep.subr.bf16.mxu0 0
  %3183 = vmatpush1.bf16.xpose.msra.mxu0 0
  %3184 = vmatprep.subr.bf16.mxu0 0
  %3185 = vmatpush1.bf16.xpose.msra.mxu0 0
  %3186 = vmatprep.subr.bf16.mxu0 0
  %3187 = vmatpush1.bf16.xpose.msra.mxu0 0
  %3188 = vmatprep.subr.bf16.mxu0 0
  %3189 = vmatpush1.bf16.xpose.msra.mxu0 0
  %3190 = vmatprep.subr.bf16.mxu0 0
  %3191 = vmatpush1.bf16.xpose.msra.mxu0 0
  %3192 = vmatprep.subr.bf16.mxu0 0
  %3193 = vmatpush1.bf16.xpose.msra.mxu0 0
  %3194 = vmatprep.subr.bf16.mxu0 0
  %3195 = vmatpush1.bf16.xpose.msra.mxu0 0
  %3196 = vmatprep.subr.bf16.mxu0 0
  %3197 = vmatpush1.bf16.xpose.msra.mxu0 0
  %3198 = vmatprep.mubr.bf16.mxu0 0
  %3199 = vmatmul.mubr.bf16.gmra.mrb[0].mxu0 %v3161
  %v3200 = vpop.f32.mrb[0].mxu0
  %v3201 = vadd.f32 0.0, %v3200
  %v3202 = vpop.f32.mrb[0].mxu0
  %v3203 = vpop.f32.mrb[0].mxu0
  %v3204 = vpop.f32.mrb[0].mxu0
  %3205 = vdwg.mxu0
  %v3206 = vmul.f32 %v2851, 0.35355338
  %v3207 = vmul.f32 %v2901, 0.35355338
  %v3208 = vmul.f32 %v2951, 0.35355338
  %v3209 = vmul.f32 %v3001, 0.35355338
  %v3210 = vmul.f32 %v3051, 0.35355338
  %v3211 = vmul.f32 %v3101, 0.35355338
  %v3212 = vmul.f32 %v3151, 0.35355338
  %v3213 = vmul.f32 %v3201, 0.35355338
  %v3214 = vsel %vm151, %v3206, -inf
  %3215 = vmax.xlane.f32.xlu0 %v3214
  %v3216 = vpop.xlane.xlu0 %3215
  %v3217 = vsel %vm151, %v3207, -inf
  %3218 = vmax.xlane.f32.xlu0 %v3217
  %v3219 = vpop.xlane.xlu0 %3218
  %v3220 = vsel %vm151, %v3208, -inf
  %3221 = vmax.xlane.f32.xlu0 %v3220
  %v3222 = vpop.xlane.xlu0 %3221
  %v3223 = vsel %vm151, %v3209, -inf
  %3224 = vmax.xlane.f32.xlu0 %v3223
  %v3225 = vpop.xlane.xlu0 %3224
  %v3226 = vsel %vm151, %v3210, -inf
  %3227 = vmax.xlane.f32.xlu0 %v3226
  %v3228 = vpop.xlane.xlu0 %3227
  %v3229 = vsel %vm151, %v3211, -inf
  %3230 = vmax.xlane.f32.xlu0 %v3229
  %v3231 = vpop.xlane.xlu0 %3230
  %v3232 = vsel %vm151, %v3212, -inf
  %3233 = vmax.xlane.f32.xlu0 %v3232
  %v3234 = vpop.xlane.xlu0 %3233
  %v3235 = vsel %vm151, %v3213, -inf
  %3236 = vmax.xlane.f32.xlu0 %v3235
  %v3237 = vpop.xlane.xlu0 %3236
  %v3238 = vsub.f32 %v3206, %v3216
  %v3239 = vsub.f32 %v3207, %v3219
  %v3240 = vsub.f32 %v3208, %v3222
  %v3241 = vsub.f32 %v3209, %v3225
  %v3242 = vsub.f32 %v3210, %v3228
  %v3243 = vsub.f32 %v3211, %v3231
  %v3244 = vsub.f32 %v3212, %v3234
  %v3245 = vsub.f32 %v3213, %v3237
  %v3246 = vmul.f32 %v3238, 1.442695
  %v3247 = vpow.pop %v3246
  %v3248 = vmul.f32 %v3239, 1.442695
  %v3249 = vpow.pop %v3248
  %v3250 = vmul.f32 %v3240, 1.442695
  %v3251 = vpow.pop %v3250
  %v3252 = vmul.f32 %v3241, 1.442695
  %v3253 = vpow.pop %v3252
  %v3254 = vmul.f32 %v3242, 1.442695
  %v3255 = vpow.pop %v3254
  %v3256 = vmul.f32 %v3243, 1.442695
  %v3257 = vpow.pop %v3256
  %v3258 = vmul.f32 %v3244, 1.442695
  %v3259 = vpow.pop %v3258
  %v3260 = vmul.f32 %v3245, 1.442695
  %v3261 = vpow.pop %v3260
  %v3262 = vsel %vm151, %v3247, 0.0
  %3263 = vadd.xlane.f32.xlu0 %v3262
  %v3264 = vpop.xlane.xlu0 %3263
  %v3265 = vsel %vm151, %v3249, 0.0
  %3266 = vadd.xlane.f32.xlu0 %v3265
  %v3267 = vpop.xlane.xlu0 %3266
  %v3268 = vsel %vm151, %v3251, 0.0
  %3269 = vadd.xlane.f32.xlu0 %v3268
  %v3270 = vpop.xlane.xlu0 %3269
  %v3271 = vsel %vm151, %v3253, 0.0
  %3272 = vadd.xlane.f32.xlu0 %v3271
  %v3273 = vpop.xlane.xlu0 %3272
  %v3274 = vsel %vm151, %v3255, 0.0
  %3275 = vadd.xlane.f32.xlu0 %v3274
  %v3276 = vpop.xlane.xlu0 %3275
  %v3277 = vsel %vm151, %v3257, 0.0
  %3278 = vadd.xlane.f32.xlu0 %v3277
  %v3279 = vpop.xlane.xlu0 %3278
  %v3280 = vsel %vm151, %v3259, 0.0
  %3281 = vadd.xlane.f32.xlu0 %v3280
  %v3282 = vpop.xlane.xlu0 %3281
  %v3283 = vsel %vm151, %v3261, 0.0
  %3284 = vadd.xlane.f32.xlu0 %v3283
  %v3285 = vpop.xlane.xlu0 %3284
  %v3286 = vrcp.pop %v3264
  %v3287 = vrcp.pop %v3267
  %v3288 = vrcp.pop %v3270
  %v3289 = vrcp.pop %v3273
  %v3290 = vrcp.pop %v3276
  %v3291 = vrcp.pop %v3279
  %v3292 = vrcp.pop %v3282
  %v3293 = vrcp.pop %v3285
  %v3294 = vmul.f32 %v3247, %v3286
  %v3295 = vmul.f32 %v3249, %v3287
  %v3296 = vmul.f32 %v3251, %v3288
  %v3297 = vmul.f32 %v3253, %v3289
  %v3298 = vmul.f32 %v3255, %v3290
  %v3299 = vmul.f32 %v3257, %v3291
  %v3300 = vmul.f32 %v3259, %v3292
  %v3301 = vmul.f32 %v3261, %v3293
  %v3302 = vpack.c.bf16 %v3294, %v3294
  %v3303 = vpack.c.bf16 %v3295, %v3295
  %v3304 = vpack.c.bf16 %v3296, %v3296
  %v3305 = vpack.c.bf16 %v3297, %v3297
  %v3306 = vpack.c.bf16 %v3298, %v3298
  %v3307 = vpack.c.bf16 %v3299, %v3299
  %v3308 = vpack.c.bf16 %v3300, %v3300
  %v3309 = vpack.c.bf16 %v3301, %v3301
  %3310 = vrot.lane.b32.xlu0 %v140, 40
  %v3311 = vpop.permute.xlu0 %3310
  %v3313 = vsel %vm151, %v3302, 0
  %v3316 = vsel %vm650, %v3311, 0
  %3318 = vmatprep.subr.bf16.mxu0 0
  %3319 = vmatpush1.bf16.msra.mxu0 %v3316
  %3320 = vmatprep.subr.bf16.mxu0 0
  %3321 = vmatpush1.bf16.msra.mxu0 0
  %3322 = vmatprep.subr.bf16.mxu0 0
  %3323 = vmatpush1.bf16.msra.mxu0 0
  %3324 = vmatprep.subr.bf16.mxu0 0
  %3325 = vmatpush1.bf16.msra.mxu0 0
  %3326 = vmatprep.subr.bf16.mxu0 0
  %3327 = vmatpush1.bf16.msra.mxu0 0
  %3328 = vmatprep.subr.bf16.mxu0 0
  %3329 = vmatpush1.bf16.msra.mxu0 0
  %3330 = vmatprep.subr.bf16.mxu0 0
  %3331 = vmatpush1.bf16.msra.mxu0 0
  %3332 = vmatprep.subr.bf16.mxu0 0
  %3333 = vmatpush1.bf16.msra.mxu0 0
  %3334 = vmatprep.subr.bf16.mxu0 0
  %3335 = vmatpush1.bf16.msra.mxu0 0
  %3336 = vmatprep.subr.bf16.mxu0 0
  %3337 = vmatpush1.bf16.msra.mxu0 0
  %3338 = vmatprep.subr.bf16.mxu0 0
  %3339 = vmatpush1.bf16.msra.mxu0 0
  %3340 = vmatprep.subr.bf16.mxu0 0
  %3341 = vmatpush1.bf16.msra.mxu0 0
  %3342 = vmatprep.subr.bf16.mxu0 0
  %3343 = vmatpush1.bf16.msra.mxu0 0
  %3344 = vmatprep.subr.bf16.mxu0 0
  %3345 = vmatpush1.bf16.msra.mxu0 0
  %3346 = vmatprep.subr.bf16.mxu0 0
  %3347 = vmatpush1.bf16.msra.mxu0 0
  %3348 = vmatprep.subr.bf16.mxu0 0
  %3349 = vmatpush1.bf16.msra.mxu0 0
  %3350 = vmatprep.mubr.bf16.mxu0 0
  %3351 = vmatmul.mubr.bf16.gmra.mrb[0].mxu0 %v3313
  %v3352 = vpop.f32.mrb[0].mxu0
  %v3353 = vadd.f32 0.0, %v3352
  %v3354 = vpop.f32.mrb[0].mxu0
  %v3355 = vpop.f32.mrb[0].mxu0
  %v3356 = vpop.f32.mrb[0].mxu0
  %3357 = vdwg.mxu0
  %3358 = vrot.lane.b32.xlu0 %v141, 40
  %v3359 = vpop.permute.xlu0 %3358
  %v3361 = vsel %vm151, %v3303, 0
  %v3364 = vsel %vm650, %v3359, 0
  %3366 = vmatprep.subr.bf16.mxu0 0
  %3367 = vmatpush1.bf16.msra.mxu0 %v3364
  %3368 = vmatprep.subr.bf16.mxu0 0
  %3369 = vmatpush1.bf16.msra.mxu0 0
  %3370 = vmatprep.subr.bf16.mxu0 0
  %3371 = vmatpush1.bf16.msra.mxu0 0
  %3372 = vmatprep.subr.bf16.mxu0 0
  %3373 = vmatpush1.bf16.msra.mxu0 0
  %3374 = vmatprep.subr.bf16.mxu0 0
  %3375 = vmatpush1.bf16.msra.mxu0 0
  %3376 = vmatprep.subr.bf16.mxu0 0
  %3377 = vmatpush1.bf16.msra.mxu0 0
  %3378 = vmatprep.subr.bf16.mxu0 0
  %3379 = vmatpush1.bf16.msra.mxu0 0
  %3380 = vmatprep.subr.bf16.mxu0 0
  %3381 = vmatpush1.bf16.msra.mxu0 0
  %3382 = vmatprep.subr.bf16.mxu0 0
  %3383 = vmatpush1.bf16.msra.mxu0 0
  %3384 = vmatprep.subr.bf16.mxu0 0
  %3385 = vmatpush1.bf16.msra.mxu0 0
  %3386 = vmatprep.subr.bf16.mxu0 0
  %3387 = vmatpush1.bf16.msra.mxu0 0
  %3388 = vmatprep.subr.bf16.mxu0 0
  %3389 = vmatpush1.bf16.msra.mxu0 0
  %3390 = vmatprep.subr.bf16.mxu0 0
  %3391 = vmatpush1.bf16.msra.mxu0 0
  %3392 = vmatprep.subr.bf16.mxu0 0
  %3393 = vmatpush1.bf16.msra.mxu0 0
  %3394 = vmatprep.subr.bf16.mxu0 0
  %3395 = vmatpush1.bf16.msra.mxu0 0
  %3396 = vmatprep.subr.bf16.mxu0 0
  %3397 = vmatpush1.bf16.msra.mxu0 0
  %3398 = vmatprep.mubr.bf16.mxu0 0
  %3399 = vmatmul.mubr.bf16.gmra.mrb[0].mxu0 %v3361
  %v3400 = vpop.f32.mrb[0].mxu0
  %v3401 = vadd.f32 0.0, %v3400
  %v3402 = vpop.f32.mrb[0].mxu0
  %v3403 = vpop.f32.mrb[0].mxu0
  %v3404 = vpop.f32.mrb[0].mxu0
  %3405 = vdwg.mxu0
  %3406 = vrot.lane.b32.xlu0 %v142, 40
  %v3407 = vpop.permute.xlu0 %3406
  %v3409 = vsel %vm151, %v3304, 0
  %v3412 = vsel %vm650, %v3407, 0
  %3414 = vmatprep.subr.bf16.mxu0 0
  %3415 = vmatpush1.bf16.msra.mxu0 %v3412
  %3416 = vmatprep.subr.bf16.mxu0 0
  %3417 = vmatpush1.bf16.msra.mxu0 0
  %3418 = vmatprep.subr.bf16.mxu0 0
  %3419 = vmatpush1.bf16.msra.mxu0 0
  %3420 = vmatprep.subr.bf16.mxu0 0
  %3421 = vmatpush1.bf16.msra.mxu0 0
  %3422 = vmatprep.subr.bf16.mxu0 0
  %3423 = vmatpush1.bf16.msra.mxu0 0
  %3424 = vmatprep.subr.bf16.mxu0 0
  %3425 = vmatpush1.bf16.msra.mxu0 0
  %3426 = vmatprep.subr.bf16.mxu0 0
  %3427 = vmatpush1.bf16.msra.mxu0 0
  %3428 = vmatprep.subr.bf16.mxu0 0
  %3429 = vmatpush1.bf16.msra.mxu0 0
  %3430 = vmatprep.subr.bf16.mxu0 0
  %3431 = vmatpush1.bf16.msra.mxu0 0
  %3432 = vmatprep.subr.bf16.mxu0 0
  %3433 = vmatpush1.bf16.msra.mxu0 0
  %3434 = vmatprep.subr.bf16.mxu0 0
  %3435 = vmatpush1.bf16.msra.mxu0 0
  %3436 = vmatprep.subr.bf16.mxu0 0
  %3437 = vmatpush1.bf16.msra.mxu0 0
  %3438 = vmatprep.subr.bf16.mxu0 0
  %3439 = vmatpush1.bf16.msra.mxu0 0
  %3440 = vmatprep.subr.bf16.mxu0 0
  %3441 = vmatpush1.bf16.msra.mxu0 0
  %3442 = vmatprep.subr.bf16.mxu0 0
  %3443 = vmatpush1.bf16.msra.mxu0 0
  %3444 = vmatprep.subr.bf16.mxu0 0
  %3445 = vmatpush1.bf16.msra.mxu0 0
  %3446 = vmatprep.mubr.bf16.mxu0 0
  %3447 = vmatmul.mubr.bf16.gmra.mrb[0].mxu0 %v3409
  %v3448 = vpop.f32.mrb[0].mxu0
  %v3449 = vadd.f32 0.0, %v3448
  %v3450 = vpop.f32.mrb[0].mxu0
  %v3451 = vpop.f32.mrb[0].mxu0
  %v3452 = vpop.f32.mrb[0].mxu0
  %3453 = vdwg.mxu0
  %3454 = vrot.lane.b32.xlu0 %v143, 40
  %v3455 = vpop.permute.xlu0 %3454
  %v3457 = vsel %vm151, %v3305, 0
  %v3460 = vsel %vm650, %v3455, 0
  %3462 = vmatprep.subr.bf16.mxu0 0
  %3463 = vmatpush1.bf16.msra.mxu0 %v3460
  %3464 = vmatprep.subr.bf16.mxu0 0
  %3465 = vmatpush1.bf16.msra.mxu0 0
  %3466 = vmatprep.subr.bf16.mxu0 0
  %3467 = vmatpush1.bf16.msra.mxu0 0
  %3468 = vmatprep.subr.bf16.mxu0 0
  %3469 = vmatpush1.bf16.msra.mxu0 0
  %3470 = vmatprep.subr.bf16.mxu0 0
  %3471 = vmatpush1.bf16.msra.mxu0 0
  %3472 = vmatprep.subr.bf16.mxu0 0
  %3473 = vmatpush1.bf16.msra.mxu0 0
  %3474 = vmatprep.subr.bf16.mxu0 0
  %3475 = vmatpush1.bf16.msra.mxu0 0
  %3476 = vmatprep.subr.bf16.mxu0 0
  %3477 = vmatpush1.bf16.msra.mxu0 0
  %3478 = vmatprep.subr.bf16.mxu0 0
  %3479 = vmatpush1.bf16.msra.mxu0 0
  %3480 = vmatprep.subr.bf16.mxu0 0
  %3481 = vmatpush1.bf16.msra.mxu0 0
  %3482 = vmatprep.subr.bf16.mxu0 0
  %3483 = vmatpush1.bf16.msra.mxu0 0
  %3484 = vmatprep.subr.bf16.mxu0 0
  %3485 = vmatpush1.bf16.msra.mxu0 0
  %3486 = vmatprep.subr.bf16.mxu0 0
  %3487 = vmatpush1.bf16.msra.mxu0 0
  %3488 = vmatprep.subr.bf16.mxu0 0
  %3489 = vmatpush1.bf16.msra.mxu0 0
  %3490 = vmatprep.subr.bf16.mxu0 0
  %3491 = vmatpush1.bf16.msra.mxu0 0
  %3492 = vmatprep.subr.bf16.mxu0 0
  %3493 = vmatpush1.bf16.msra.mxu0 0
  %3494 = vmatprep.mubr.bf16.mxu0 0
  %3495 = vmatmul.mubr.bf16.gmra.mrb[0].mxu0 %v3457
  %v3496 = vpop.f32.mrb[0].mxu0
  %v3497 = vadd.f32 0.0, %v3496
  %v3498 = vpop.f32.mrb[0].mxu0
  %v3499 = vpop.f32.mrb[0].mxu0
  %v3500 = vpop.f32.mrb[0].mxu0
  %3501 = vdwg.mxu0
  %3502 = vrot.lane.b32.xlu0 %v144, 40
  %v3503 = vpop.permute.xlu0 %3502
  %v3505 = vsel %vm151, %v3306, 0
  %v3508 = vsel %vm650, %v3503, 0
  %3510 = vmatprep.subr.bf16.mxu0 0
  %3511 = vmatpush1.bf16.msra.mxu0 %v3508
  %3512 = vmatprep.subr.bf16.mxu0 0
  %3513 = vmatpush1.bf16.msra.mxu0 0
  %3514 = vmatprep.subr.bf16.mxu0 0
  %3515 = vmatpush1.bf16.msra.mxu0 0
  %3516 = vmatprep.subr.bf16.mxu0 0
  %3517 = vmatpush1.bf16.msra.mxu0 0
  %3518 = vmatprep.subr.bf16.mxu0 0
  %3519 = vmatpush1.bf16.msra.mxu0 0
  %3520 = vmatprep.subr.bf16.mxu0 0
  %3521 = vmatpush1.bf16.msra.mxu0 0
  %3522 = vmatprep.subr.bf16.mxu0 0
  %3523 = vmatpush1.bf16.msra.mxu0 0
  %3524 = vmatprep.subr.bf16.mxu0 0
  %3525 = vmatpush1.bf16.msra.mxu0 0
  %3526 = vmatprep.subr.bf16.mxu0 0
  %3527 = vmatpush1.bf16.msra.mxu0 0
  %3528 = vmatprep.subr.bf16.mxu0 0
  %3529 = vmatpush1.bf16.msra.mxu0 0
  %3530 = vmatprep.subr.bf16.mxu0 0
  %3531 = vmatpush1.bf16.msra.mxu0 0
  %3532 = vmatprep.subr.bf16.mxu0 0
  %3533 = vmatpush1.bf16.msra.mxu0 0
  %3534 = vmatprep.subr.bf16.mxu0 0
  %3535 = vmatpush1.bf16.msra.mxu0 0
  %3536 = vmatprep.subr.bf16.mxu0 0
  %3537 = vmatpush1.bf16.msra.mxu0 0
  %3538 = vmatprep.subr.bf16.mxu0 0
  %3539 = vmatpush1.bf16.msra.mxu0 0
  %3540 = vmatprep.subr.bf16.mxu0 0
  %3541 = vmatpush1.bf16.msra.mxu0 0
  %3542 = vmatprep.mubr.bf16.mxu0 0
  %3543 = vmatmul.mubr.bf16.gmra.mrb[0].mxu0 %v3505
  %v3544 = vpop.f32.mrb[0].mxu0
  %v3545 = vadd.f32 0.0, %v3544
  %v3546 = vpop.f32.mrb[0].mxu0
  %v3547 = vpop.f32.mrb[0].mxu0
  %v3548 = vpop.f32.mrb[0].mxu0
  %3549 = vdwg.mxu0
  %3550 = vrot.lane.b32.xlu0 %v145, 40
  %v3551 = vpop.permute.xlu0 %3550
  %v3553 = vsel %vm151, %v3307, 0
  %v3556 = vsel %vm650, %v3551, 0
  %3558 = vmatprep.subr.bf16.mxu0 0
  %3559 = vmatpush1.bf16.msra.mxu0 %v3556
  %3560 = vmatprep.subr.bf16.mxu0 0
  %3561 = vmatpush1.bf16.msra.mxu0 0
  %3562 = vmatprep.subr.bf16.mxu0 0
  %3563 = vmatpush1.bf16.msra.mxu0 0
  %3564 = vmatprep.subr.bf16.mxu0 0
  %3565 = vmatpush1.bf16.msra.mxu0 0
  %3566 = vmatprep.subr.bf16.mxu0 0
  %3567 = vmatpush1.bf16.msra.mxu0 0
  %3568 = vmatprep.subr.bf16.mxu0 0
  %3569 = vmatpush1.bf16.msra.mxu0 0
  %3570 = vmatprep.subr.bf16.mxu0 0
  %3571 = vmatpush1.bf16.msra.mxu0 0
  %3572 = vmatprep.subr.bf16.mxu0 0
  %3573 = vmatpush1.bf16.msra.mxu0 0
  %3574 = vmatprep.subr.bf16.mxu0 0
  %3575 = vmatpush1.bf16.msra.mxu0 0
  %3576 = vmatprep.subr.bf16.mxu0 0
  %3577 = vmatpush1.bf16.msra.mxu0 0
  %3578 = vmatprep.subr.bf16.mxu0 0
  %3579 = vmatpush1.bf16.msra.mxu0 0
  %3580 = vmatprep.subr.bf16.mxu0 0
  %3581 = vmatpush1.bf16.msra.mxu0 0
  %3582 = vmatprep.subr.bf16.mxu0 0
  %3583 = vmatpush1.bf16.msra.mxu0 0
  %3584 = vmatprep.subr.bf16.mxu0 0
  %3585 = vmatpush1.bf16.msra.mxu0 0
  %3586 = vmatprep.subr.bf16.mxu0 0
  %3587 = vmatpush1.bf16.msra.mxu0 0
  %3588 = vmatprep.subr.bf16.mxu0 0
  %3589 = vmatpush1.bf16.msra.mxu0 0
  %3590 = vmatprep.mubr.bf16.mxu0 0
  %3591 = vmatmul.mubr.bf16.gmra.mrb[0].mxu0 %v3553
  %v3592 = vpop.f32.mrb[0].mxu0
  %v3593 = vadd.f32 0.0, %v3592
  %v3594 = vpop.f32.mrb[0].mxu0
  %v3595 = vpop.f32.mrb[0].mxu0
  %v3596 = vpop.f32.mrb[0].mxu0
  %3597 = vdwg.mxu0
  %3598 = vrot.lane.b32.xlu0 %v146, 40
  %v3599 = vpop.permute.xlu0 %3598
  %v3601 = vsel %vm151, %v3308, 0
  %v3604 = vsel %vm650, %v3599, 0
  %3606 = vmatprep.subr.bf16.mxu0 0
  %3607 = vmatpush1.bf16.msra.mxu0 %v3604
  %3608 = vmatprep.subr.bf16.mxu0 0
  %3609 = vmatpush1.bf16.msra.mxu0 0
  %3610 = vmatprep.subr.bf16.mxu0 0
  %3611 = vmatpush1.bf16.msra.mxu0 0
  %3612 = vmatprep.subr.bf16.mxu0 0
  %3613 = vmatpush1.bf16.msra.mxu0 0
  %3614 = vmatprep.subr.bf16.mxu0 0
  %3615 = vmatpush1.bf16.msra.mxu0 0
  %3616 = vmatprep.subr.bf16.mxu0 0
  %3617 = vmatpush1.bf16.msra.mxu0 0
  %3618 = vmatprep.subr.bf16.mxu0 0
  %3619 = vmatpush1.bf16.msra.mxu0 0
  %3620 = vmatprep.subr.bf16.mxu0 0
  %3621 = vmatpush1.bf16.msra.mxu0 0
  %3622 = vmatprep.subr.bf16.mxu0 0
  %3623 = vmatpush1.bf16.msra.mxu0 0
  %3624 = vmatprep.subr.bf16.mxu0 0
  %3625 = vmatpush1.bf16.msra.mxu0 0
  %3626 = vmatprep.subr.bf16.mxu0 0
  %3627 = vmatpush1.bf16.msra.mxu0 0
  %3628 = vmatprep.subr.bf16.mxu0 0
  %3629 = vmatpush1.bf16.msra.mxu0 0
  %3630 = vmatprep.subr.bf16.mxu0 0
  %3631 = vmatpush1.bf16.msra.mxu0 0
  %3632 = vmatprep.subr.bf16.mxu0 0
  %3633 = vmatpush1.bf16.msra.mxu0 0
  %3634 = vmatprep.subr.bf16.mxu0 0
  %3635 = vmatpush1.bf16.msra.mxu0 0
  %3636 = vmatprep.subr.bf16.mxu0 0
  %3637 = vmatpush1.bf16.msra.mxu0 0
  %3638 = vmatprep.mubr.bf16.mxu0 0
  %3639 = vmatmul.mubr.bf16.gmra.mrb[0].mxu0 %v3601
  %v3640 = vpop.f32.mrb[0].mxu0
  %v3641 = vadd.f32 0.0, %v3640
  %v3642 = vpop.f32.mrb[0].mxu0
  %v3643 = vpop.f32.mrb[0].mxu0
  %v3644 = vpop.f32.mrb[0].mxu0
  %3645 = vdwg.mxu0
  %3646 = vrot.lane.b32.xlu0 %v147, 40
  %v3647 = vpop.permute.xlu0 %3646
  %v3649 = vsel %vm151, %v3309, 0
  %v3652 = vsel %vm650, %v3647, 0
  %3654 = vmatprep.subr.bf16.mxu0 0
  %3655 = vmatpush1.bf16.msra.mxu0 %v3652
  %3656 = vmatprep.subr.bf16.mxu0 0
  %3657 = vmatpush1.bf16.msra.mxu0 0
  %3658 = vmatprep.subr.bf16.mxu0 0
  %3659 = vmatpush1.bf16.msra.mxu0 0
  %3660 = vmatprep.subr.bf16.mxu0 0
  %3661 = vmatpush1.bf16.msra.mxu0 0
  %3662 = vmatprep.subr.bf16.mxu0 0
  %3663 = vmatpush1.bf16.msra.mxu0 0
  %3664 = vmatprep.subr.bf16.mxu0 0
  %3665 = vmatpush1.bf16.msra.mxu0 0
  %3666 = vmatprep.subr.bf16.mxu0 0
  %3667 = vmatpush1.bf16.msra.mxu0 0
  %3668 = vmatprep.subr.bf16.mxu0 0
  %3669 = vmatpush1.bf16.msra.mxu0 0
  %3670 = vmatprep.subr.bf16.mxu0 0
  %3671 = vmatpush1.bf16.msra.mxu0 0
  %3672 = vmatprep.subr.bf16.mxu0 0
  %3673 = vmatpush1.bf16.msra.mxu0 0
  %3674 = vmatprep.subr.bf16.mxu0 0
  %3675 = vmatpush1.bf16.msra.mxu0 0
  %3676 = vmatprep.subr.bf16.mxu0 0
  %3677 = vmatpush1.bf16.msra.mxu0 0
  %3678 = vmatprep.subr.bf16.mxu0 0
  %3679 = vmatpush1.bf16.msra.mxu0 0
  %3680 = vmatprep.subr.bf16.mxu0 0
  %3681 = vmatpush1.bf16.msra.mxu0 0
  %3682 = vmatprep.subr.bf16.mxu0 0
  %3683 = vmatpush1.bf16.msra.mxu0 0
  %3684 = vmatprep.subr.bf16.mxu0 0
  %3685 = vmatpush1.bf16.msra.mxu0 0
  %3686 = vmatprep.mubr.bf16.mxu0 0
  %3687 = vmatmul.mubr.bf16.gmra.mrb[0].mxu0 %v3649
  %v3688 = vpop.f32.mrb[0].mxu0
  %v3689 = vadd.f32 0.0, %v3688
  %v3690 = vpop.f32.mrb[0].mxu0
  %v3691 = vpop.f32.mrb[0].mxu0
  %v3692 = vpop.f32.mrb[0].mxu0
  %3693 = vdwg.mxu0
  %3702 = vrot.lane.b32.xlu0 %v1577, 8
  %v3703 = vpop.permute.xlu0 %3702
  %3704 = vrot.lane.b32.xlu0 %v1625, 8
  %v3705 = vpop.permute.xlu0 %3704
  %3706 = vrot.lane.b32.xlu0 %v1673, 8
  %v3707 = vpop.permute.xlu0 %3706
  %3708 = vrot.lane.b32.xlu0 %v1721, 8
  %v3709 = vpop.permute.xlu0 %3708
  %3710 = vrot.lane.b32.xlu0 %v1769, 8
  %v3711 = vpop.permute.xlu0 %3710
  %3712 = vrot.lane.b32.xlu0 %v1817, 8
  %v3713 = vpop.permute.xlu0 %3712
  %3714 = vrot.lane.b32.xlu0 %v1865, 8
  %v3715 = vpop.permute.xlu0 %3714
  %3716 = vrot.lane.b32.xlu0 %v1913, 8
  %v3717 = vpop.permute.xlu0 %3716
  %3734 = vrot.lane.b32.xlu0 %v2465, 16
  %v3735 = vpop.permute.xlu0 %3734
  %3736 = vrot.lane.b32.xlu0 %v2513, 16
  %v3737 = vpop.permute.xlu0 %3736
  %3738 = vrot.lane.b32.xlu0 %v2561, 16
  %v3739 = vpop.permute.xlu0 %3738
  %3740 = vrot.lane.b32.xlu0 %v2609, 16
  %v3741 = vpop.permute.xlu0 %3740
  %3742 = vrot.lane.b32.xlu0 %v2657, 16
  %v3743 = vpop.permute.xlu0 %3742
  %3744 = vrot.lane.b32.xlu0 %v2705, 16
  %v3745 = vpop.permute.xlu0 %3744
  %3746 = vrot.lane.b32.xlu0 %v2753, 16
  %v3747 = vpop.permute.xlu0 %3746
  %3748 = vrot.lane.b32.xlu0 %v2801, 16
  %v3749 = vpop.permute.xlu0 %3748
  %3766 = vrot.lane.b32.xlu0 %v3353, 24
  %v3767 = vpop.permute.xlu0 %3766
  %3768 = vrot.lane.b32.xlu0 %v3401, 24
  %v3769 = vpop.permute.xlu0 %3768
  %3770 = vrot.lane.b32.xlu0 %v3449, 24
  %v3771 = vpop.permute.xlu0 %3770
  %3772 = vrot.lane.b32.xlu0 %v3497, 24
  %v3773 = vpop.permute.xlu0 %3772
  %3774 = vrot.lane.b32.xlu0 %v3545, 24
  %v3775 = vpop.permute.xlu0 %3774
  %3776 = vrot.lane.b32.xlu0 %v3593, 24
  %v3777 = vpop.permute.xlu0 %3776
  %3778 = vrot.lane.b32.xlu0 %v3641, 24
  %v3779 = vpop.permute.xlu0 %3778
  %3780 = vrot.lane.b32.xlu0 %v3689, 24
  %v3781 = vpop.permute.xlu0 %3780
  %v3790 = vsel %vm151, %v689, %v3703
  %v3791 = vsel %vm151, %v737, %v3705
  %v3792 = vsel %vm151, %v785, %v3707
  %v3793 = vsel %vm151, %v833, %v3709
  %v3794 = vsel %vm151, %v881, %v3711
  %v3795 = vsel %vm151, %v929, %v3713
  %v3796 = vsel %vm151, %v977, %v3715
  %v3797 = vsel %vm151, %v1025, %v3717
  %vm3798 = vcmask 130048
  %v3799 = vsel %vm3798, %v3790, %v3735
  %v3800 = vsel %vm3798, %v3791, %v3737
  %v3801 = vsel %vm3798, %v3792, %v3739
  %v3802 = vsel %vm3798, %v3793, %v3741
  %v3803 = vsel %vm3798, %v3794, %v3743
  %v3804 = vsel %vm3798, %v3795, %v3745
  %v3805 = vsel %vm3798, %v3796, %v3747
  %v3806 = vsel %vm3798, %v3797, %v3749
  %vm3807 = vcmask 195584
  %v3808 = vsel %vm3807, %v3799, %v3767
  %v3809 = vsel %vm3807, %v3800, %v3769
  %v3810 = vsel %vm3807, %v3801, %v3771
  %v3811 = vsel %vm3807, %v3802, %v3773
  %v3812 = vsel %vm3807, %v3803, %v3775
  %v3813 = vsel %vm3807, %v3804, %v3777
  %v3814 = vsel %vm3807, %v3805, %v3779
  %v3815 = vsel %vm3807, %v3806, %v3781
  %v3816 = vpack.c.bf16 %v3809, %v3808
  %v3817 = vpack.c.bf16 %v3811, %v3810
  %v3818 = vpack.c.bf16 %v3813, %v3812
  %v3819 = vpack.c.bf16 %v3815, %v3814
  %v3820 = vld [vmem:[%s3] sm:$0xf]
  %v3821 = vld [vmem:[%s3 + $0x4] sm:$0xf]
  %v3822 = vld [vmem:[%s3 + $0x8] sm:$0xf]
  %v3823 = vld [vmem:[%s3 + $0xc] sm:$0xf]
  %v3824 = vld [vmem:[%s4] sm:$0x1]
  %v3826 = vlaneseq
  %v3827 = vshrl.u32 %v3826, 7
  %v3828 = vsub.s32 0, %v3827
  %v3829 = vrot.slane %v3824, %v3828
  %v3835 = vunpack.c.l.b16 %v3820
  %v3836 = vunpack.c.l.b16 %v3821
  %v3837 = vunpack.c.l.b16 %v3822
  %v3838 = vunpack.c.l.b16 %v3823
  %v3839 = vpack.c.b16 %v3836, %v3835
  %v3840 = vpack.c.b16 %v3838, %v3837
  %v3844 = vsel %vm62, %v3816, 0
  %v3847 = vsel %vm62, %v3817, 0
  %v3850 = vsel %vm62, %v3818, 0
  %v3853 = vsel %vm62, %v3819, 0
  %3855 = vmatprep.subr.bf16.mxu0 0
  %3856 = vmatpush1.bf16.msra.mxu0 %v3839
  %3857 = vmatprep.subr.bf16.mxu0 0
  %3858 = vmatpush1.bf16.msra.mxu0 %v3840
  %3859 = vmatprep.subr.bf16.mxu0 0
  %3860 = vmatpush1.bf16.msra.mxu0 0
  %3861 = vmatprep.subr.bf16.mxu0 0
  %3862 = vmatpush1.bf16.msra.mxu0 0
  %3863 = vmatprep.subr.bf16.mxu0 0
  %3864 = vmatpush1.bf16.msra.mxu0 0
  %3865 = vmatprep.subr.bf16.mxu0 0
  %3866 = vmatpush1.bf16.msra.mxu0 0
  %3867 = vmatprep.subr.bf16.mxu0 0
  %3868 = vmatpush1.bf16.msra.mxu0 0
  %3869 = vmatprep.subr.bf16.mxu0 0
  %3870 = vmatpush1.bf16.msra.mxu0 0
  %3871 = vmatprep.subr.bf16.mxu0 0
  %3872 = vmatpush1.bf16.msra.mxu0 0
  %3873 = vmatprep.subr.bf16.mxu0 0
  %3874 = vmatpush1.bf16.msra.mxu0 0
  %3875 = vmatprep.subr.bf16.mxu0 0
  %3876 = vmatpush1.bf16.msra.mxu0 0
  %3877 = vmatprep.subr.bf16.mxu0 0
  %3878 = vmatpush1.bf16.msra.mxu0 0
  %3879 = vmatprep.subr.bf16.mxu0 0
  %3880 = vmatpush1.bf16.msra.mxu0 0
  %3881 = vmatprep.subr.bf16.mxu0 0
  %3882 = vmatpush1.bf16.msra.mxu0 0
  %3883 = vmatprep.subr.bf16.mxu0 0
  %3884 = vmatpush1.bf16.msra.mxu0 0
  %3885 = vmatprep.subr.bf16.mxu0 0
  %3886 = vmatpush1.bf16.msra.mxu0 0
  %3887 = vmatprep.mubr.bf16.mxu0 0
  %3888 = vmatmul.mubr.bf16.gmra.mrb[0].mxu0 %v3844
  %v3889 = vpop.f32.mrb[0].mxu0
  %v3890 = vadd.f32 %v3829, %v3889
  %v3891 = vpop.f32.mrb[0].mxu0
  %v3892 = vpop.f32.mrb[0].mxu0
  %v3893 = vadd.f32 %v3829, %v3892
  %v3894 = vpop.f32.mrb[0].mxu0
  %3895 = vmatprep.mubr.bf16.mxu0 0
  %3896 = vmatmul.mubr.bf16.gmra.mrb[0].mxu0 %v3847
  %v3897 = vpop.f32.mrb[0].mxu0
  %v3898 = vadd.f32 %v3829, %v3897
  %v3899 = vpop.f32.mrb[0].mxu0
  %v3900 = vpop.f32.mrb[0].mxu0
  %v3901 = vadd.f32 %v3829, %v3900
  %v3902 = vpop.f32.mrb[0].mxu0
  %3903 = vmatprep.mubr.bf16.mxu0 0
  %3904 = vmatmul.mubr.bf16.gmra.mrb[0].mxu0 %v3850
  %v3905 = vpop.f32.mrb[0].mxu0
  %v3906 = vadd.f32 %v3829, %v3905
  %v3907 = vpop.f32.mrb[0].mxu0
  %v3908 = vpop.f32.mrb[0].mxu0
  %v3909 = vadd.f32 %v3829, %v3908
  %v3910 = vpop.f32.mrb[0].mxu0
  %3911 = vmatprep.mubr.bf16.mxu0 0
  %3912 = vmatmul.mubr.bf16.gmra.mrb[0].mxu0 %v3853
  %v3913 = vpop.f32.mrb[0].mxu0
  %v3914 = vadd.f32 %v3829, %v3913
  %v3915 = vpop.f32.mrb[0].mxu0
  %v3916 = vpop.f32.mrb[0].mxu0
  %v3917 = vadd.f32 %v3829, %v3916
  %v3918 = vpop.f32.mrb[0].mxu0
  %3919 = vdwg.mxu0
  %v3920 = vadd.f32 %v27, %v3890
  %v3921 = vadd.f32 %v28, %v3893
  %v3922 = vadd.f32 %v29, %v3898
  %v3923 = vadd.f32 %v30, %v3901
  %v3924 = vadd.f32 %v31, %v3906
  %v3925 = vadd.f32 %v32, %v3909
  %v3926 = vadd.f32 %v33, %v3914
  %v3927 = vadd.f32 %v34, %v3917
  %v3928 = vld [vmem:[%s5] sm:$0x1]
  %v3929 = vld [vmem:[%s6] sm:$0x1]
  %v3930 = vsel %vm62, %v3920, 0.0
  %3931 = vadd.xlane.f32.xlu0 %v3930
  %v3932 = vpop.xlane.xlu0 %3931
  %v3933 = vsel %vm62, %v3921, 0.0
  %3934 = vadd.xlane.f32.xlu0 %v3933
  %v3935 = vpop.xlane.xlu0 %3934
  %v3936 = vsel %vm62, %v3922, 0.0
  %3937 = vadd.xlane.f32.xlu0 %v3936
  %v3938 = vpop.xlane.xlu0 %3937
  %v3939 = vsel %vm62, %v3923, 0.0
  %3940 = vadd.xlane.f32.xlu0 %v3939
  %v3941 = vpop.xlane.xlu0 %3940
  %v3942 = vsel %vm62, %v3924, 0.0
  %3943 = vadd.xlane.f32.xlu0 %v3942
  %v3944 = vpop.xlane.xlu0 %3943
  %v3945 = vsel %vm62, %v3925, 0.0
  %3946 = vadd.xlane.f32.xlu0 %v3945
  %v3947 = vpop.xlane.xlu0 %3946
  %v3948 = vsel %vm62, %v3926, 0.0
  %3949 = vadd.xlane.f32.xlu0 %v3948
  %v3950 = vpop.xlane.xlu0 %3949
  %v3951 = vsel %vm62, %v3927, 0.0
  %3952 = vadd.xlane.f32.xlu0 %v3951
  %v3953 = vpop.xlane.xlu0 %3952
  %v3954 = vrcp.pop 32.0
  %v3955 = vmul.f32 %v3932, %v3954
  %v3956 = vmul.f32 %v3935, %v3954
  %v3957 = vmul.f32 %v3938, %v3954
  %v3958 = vmul.f32 %v3941, %v3954
  %v3959 = vmul.f32 %v3944, %v3954
  %v3960 = vmul.f32 %v3947, %v3954
  %v3961 = vmul.f32 %v3950, %v3954
  %v3962 = vmul.f32 %v3953, %v3954
  %v3963 = vsub.f32 %v3920, %v3955
  %v3964 = vsub.f32 %v3921, %v3956
  %v3965 = vsub.f32 %v3922, %v3957
  %v3966 = vsub.f32 %v3923, %v3958
  %v3967 = vsub.f32 %v3924, %v3959
  %v3968 = vsub.f32 %v3925, %v3960
  %v3969 = vsub.f32 %v3926, %v3961
  %v3970 = vsub.f32 %v3927, %v3962
  %v3971 = vmul.f32 %v3963, %v3963
  %v3972 = vmul.f32 %v3964, %v3964
  %v3973 = vmul.f32 %v3965, %v3965
  %v3974 = vmul.f32 %v3966, %v3966
  %v3975 = vmul.f32 %v3967, %v3967
  %v3976 = vmul.f32 %v3968, %v3968
  %v3977 = vmul.f32 %v3969, %v3969
  %v3978 = vmul.f32 %v3970, %v3970
  %v3979 = vsel %vm62, %v3971, 0.0
  %3980 = vadd.xlane.f32.xlu0 %v3979
  %v3981 = vpop.xlane.xlu0 %3980
  %v3982 = vsel %vm62, %v3972, 0.0
  %3983 = vadd.xlane.f32.xlu0 %v3982
  %v3984 = vpop.xlane.xlu0 %3983
  %v3985 = vsel %vm62, %v3973, 0.0
  %3986 = vadd.xlane.f32.xlu0 %v3985
  %v3987 = vpop.xlane.xlu0 %3986
  %v3988 = vsel %vm62, %v3974, 0.0
  %3989 = vadd.xlane.f32.xlu0 %v3988
  %v3990 = vpop.xlane.xlu0 %3989
  %v3991 = vsel %vm62, %v3975, 0.0
  %3992 = vadd.xlane.f32.xlu0 %v3991
  %v3993 = vpop.xlane.xlu0 %3992
  %v3994 = vsel %vm62, %v3976, 0.0
  %3995 = vadd.xlane.f32.xlu0 %v3994
  %v3996 = vpop.xlane.xlu0 %3995
  %v3997 = vsel %vm62, %v3977, 0.0
  %3998 = vadd.xlane.f32.xlu0 %v3997
  %v3999 = vpop.xlane.xlu0 %3998
  %v4000 = vsel %vm62, %v3978, 0.0
  %4001 = vadd.xlane.f32.xlu0 %v4000
  %v4002 = vpop.xlane.xlu0 %4001
  %v4003 = vmul.f32 %v3981, %v3954
  %v4004 = vmul.f32 %v3984, %v3954
  %v4005 = vmul.f32 %v3987, %v3954
  %v4006 = vmul.f32 %v3990, %v3954
  %v4007 = vmul.f32 %v3993, %v3954
  %v4008 = vmul.f32 %v3996, %v3954
  %v4009 = vmul.f32 %v3999, %v3954
  %v4010 = vmul.f32 %v4002, %v3954
  %v4011 = vadd.f32 %v4003, 1e-05
  %v4012 = vadd.f32 %v4004, 1e-05
  %v4013 = vadd.f32 %v4005, 1e-05
  %v4014 = vadd.f32 %v4006, 1e-05
  %v4015 = vadd.f32 %v4007, 1e-05
  %v4016 = vadd.f32 %v4008, 1e-05
  %v4017 = vadd.f32 %v4009, 1e-05
  %v4018 = vadd.f32 %v4010, 1e-05
  %v4019 = vrsqrt.pop %v4011
  %v4020 = vrsqrt.pop %v4012
  %v4021 = vrsqrt.pop %v4013
  %v4022 = vrsqrt.pop %v4014
  %v4023 = vrsqrt.pop %v4015
  %v4024 = vrsqrt.pop %v4016
  %v4025 = vrsqrt.pop %v4017
  %v4026 = vrsqrt.pop %v4018
  %v4027 = vmul.f32 %v3963, %v4019
  %v4028 = vmul.f32 %v3964, %v4020
  %v4029 = vmul.f32 %v3965, %v4021
  %v4030 = vmul.f32 %v3966, %v4022
  %v4031 = vmul.f32 %v3967, %v4023
  %v4032 = vmul.f32 %v3968, %v4024
  %v4033 = vmul.f32 %v3969, %v4025
  %v4034 = vmul.f32 %v3970, %v4026
  %v4036 = vlaneseq
  %v4037 = vshrl.u32 %v4036, 7
  %v4038 = vsub.s32 0, %v4037
  %v4039 = vrot.slane %v3928, %v4038
  %v4041 = vmul.f32 %v4027, %v4039
  %v4042 = vmul.f32 %v4028, %v4039
  %v4043 = vmul.f32 %v4029, %v4039
  %v4044 = vmul.f32 %v4030, %v4039
  %v4045 = vmul.f32 %v4031, %v4039
  %v4046 = vmul.f32 %v4032, %v4039
  %v4047 = vmul.f32 %v4033, %v4039
  %v4048 = vmul.f32 %v4034, %v4039
  %v4050 = vlaneseq
  %v4051 = vshrl.u32 %v4050, 7
  %v4052 = vsub.s32 0, %v4051
  %v4053 = vrot.slane %v3929, %v4052
  %v4055 = vadd.f32 %v4041, %v4053
  %v4056 = vadd.f32 %v4042, %v4053
  %v4057 = vadd.f32 %v4043, %v4053
  %v4058 = vadd.f32 %v4044, %v4053
  %v4059 = vadd.f32 %v4045, %v4053
  %v4060 = vadd.f32 %v4046, %v4053
  %v4061 = vadd.f32 %v4047, %v4053
  %v4062 = vadd.f32 %v4048, %v4053
  %4063 = vst.msk [vmem:[%s7] sm:$0xff] %vm62, %v4055
  %4064 = vst.msk [vmem:[%s7 + $0x8] sm:$0xff] %vm62, %v4056
  %4065 = vst.msk [vmem:[%s7 + $0x10] sm:$0xff] %vm62, %v4057
  %4066 = vst.msk [vmem:[%s7 + $0x18] sm:$0xff] %vm62, %v4058
  %4067 = vst.msk [vmem:[%s7 + $0x20] sm:$0xff] %vm62, %v4059
  %4068 = vst.msk [vmem:[%s7 + $0x28] sm:$0xff] %vm62, %v4060
  %4069 = vst.msk [vmem:[%s7 + $0x30] sm:$0xff] %vm62, %v4061
  %4070 = vst.msk [vmem:[%s7 + $0x38] sm:$0xff] %vm62, %v4062
  // Predicated region
  $region30: #{encoder_layer_forward.3} parent=0 // pred_check
    _
  $region31: #{encoder_layer_forward.3} parent=0 // pred_check_branch
    %4072 = sbr.rel (0) target = $region33
  $region32: #{encoder_layer_forward.3} parent=0 // pred_region
    _
  $region33: #{encoder_layer_forward.3} parent=0 // pred_fallthru
    _
  // Predicated region
  $region34: #{encoder_layer_forward.3} parent=0 // pred_check
    _
  $region35: #{encoder_layer_forward.3} parent=0 // pred_check_branch
    %4074 = sbr.rel (0) target = $region37
  $region36: #{encoder_layer_forward.3} parent=0 // pred_region
    _
  $region37: #{encoder_layer_forward.3} parent=0 // pred_fallthru
    _

// kernel: encoder_layer_forward.4
$region0: #{encoder_layer_forward.4}
  #allocation0 [shape = 'u32[]', space=smem, size = 0x4, offset = 0x4, fixed_abs, tag = 'smem constant byte address 0x4 - core index']
  #allocation1 [shape = 'u32[144,128]{1,0:T(1,128)}', space=vmem, size = 0x12000, scoped, tag = 'internal scratch']
  %s0 = inlined_call_operand.vmem [shape: f32[64,32], index: 0, kind: input, shape index: {}]
  %s1 = inlined_call_operand.vmem [shape: bf16[32,96], index: 1, kind: input, shape index: {}]
  %s2 = inlined_call_operand.vmem [shape: f32[1,96], index: 2, kind: input, shape index: {}]
  %s3 = inlined_call_operand.vmem [shape: bf16[32,32], index: 3, kind: input, shape index: {}]
  %s4 = inlined_call_operand.vmem [shape: f32[1,32], index: 4, kind: input, shape index: {}]
  %s5 = inlined_call_operand.vmem [shape: f32[1,32], index: 5, kind: input, shape index: {}]
  %s6 = inlined_call_operand.vmem [shape: f32[1,32], index: 6, kind: input, shape index: {}]
  %s7 = inlined_call_operand.vmem [shape: f32[64,32], index: 7, kind: output, shape index: {}]
  %s8 = sld [smem:[#allocation0]]
  $region38: #{encoder_layer_forward.4} parent=0
    _
  %s10 = ssub.s32 1, %s8
  %s11 = scalar_select 0, %s10, %s8
  // Predicated region
  $region2: #{encoder_layer_forward.4} parent=0 // pred_check
    _
  $region3: #{encoder_layer_forward.4} parent=0 // pred_check_branch
    %13 = sbr.rel (0) target = $region5
  $region4: #{encoder_layer_forward.4} parent=0 // pred_region
    _
  $region5: #{encoder_layer_forward.4} parent=0 // pred_fallthru
    _
  // Predicated region
  $region6: #{encoder_layer_forward.4} parent=0 // pred_check
    _
  $region7: #{encoder_layer_forward.4} parent=0 // pred_check_branch
    %15 = sbr.rel (0) target = $region9
  $region8: #{encoder_layer_forward.4} parent=0 // pred_region
    _
  $region9: #{encoder_layer_forward.4} parent=0 // pred_fallthru
    _
  // Predicated region
  $region10: #{encoder_layer_forward.4} parent=0 // pred_check
    _
  $region11: #{encoder_layer_forward.4} parent=0 // pred_check_branch
    %17 = sbr.rel (0) target = $region13
  $region12: #{encoder_layer_forward.4} parent=0 // pred_region
    _
  $region13: #{encoder_layer_forward.4} parent=0 // pred_fallthru
    _
  // Predicated region
  $region14: #{encoder_layer_forward.4} parent=0 // pred_check
    _
  $region15: #{encoder_layer_forward.4} parent=0 // pred_check_branch
    %19 = sbr.rel (0) target = $region17
  $region16: #{encoder_layer_forward.4} parent=0 // pred_region
    _
  $region17: #{encoder_layer_forward.4} parent=0 // pred_fallthru
    _
  // Predicated region
  $region18: #{encoder_layer_forward.4} parent=0 // pred_check
    _
  $region19: #{encoder_layer_forward.4} parent=0 // pred_check_branch
    %21 = sbr.rel (0) target = $region21
  $region20: #{encoder_layer_forward.4} parent=0 // pred_region
    _
  $region21: #{encoder_layer_forward.4} parent=0 // pred_fallthru
    _
  // Predicated region
  $region22: #{encoder_layer_forward.4} parent=0 // pred_check
    _
  $region23: #{encoder_layer_forward.4} parent=0 // pred_check_branch
    %23 = sbr.rel (0) target = $region25
  $region24: #{encoder_layer_forward.4} parent=0 // pred_region
    _
  $region25: #{encoder_layer_forward.4} parent=0 // pred_fallthru
    _
  // Predicated region
  $region26: #{encoder_layer_forward.4} parent=0 // pred_check
    _
  $region27: #{encoder_layer_forward.4} parent=0 // pred_check_branch
    %25 = sbr.rel (0) target = $region29
  $region28: #{encoder_layer_forward.4} parent=0 // pred_region
    _
  $region29: #{encoder_layer_forward.4} parent=0 // pred_fallthru
    _
  %v27 = vld [vmem:[%s0] sm:$0xff]
  %v28 = vld [vmem:[%s0 + $0x8] sm:$0xff]
  %v29 = vld [vmem:[%s0 + $0x10] sm:$0xff]
  %v30 = vld [vmem:[%s0 + $0x18] sm:$0xff]
  %v31 = vld [vmem:[%s0 + $0x20] sm:$0xff]
  %v32 = vld [vmem:[%s0 + $0x28] sm:$0xff]
  %v33 = vld [vmem:[%s0 + $0x30] sm:$0xff]
  %v34 = vld [vmem:[%s0 + $0x38] sm:$0xff]
  %v35 = vpack.c.bf16 %v28, %v27
  %v36 = vpack.c.bf16 %v30, %v29
  %v37 = vpack.c.bf16 %v32, %v31
  %v38 = vpack.c.bf16 %v34, %v33
  %v39 = vld [vmem:[%s1] sm:$0xf]
  %v40 = vld [vmem:[%s1 + $0x4] sm:$0xf]
  %v41 = vld [vmem:[%s1 + $0x8] sm:$0xf]
  %v42 = vld [vmem:[%s1 + $0xc] sm:$0xf]
  %v43 = vld [vmem:[%s2] sm:$0x1]
  %v45 = vlaneseq
  %v46 = vshrl.u32 %v45, 7
  %v47 = vsub.s32 0, %v46
  %v48 = vrot.slane %v43, %v47
  %v54 = vunpack.c.l.b16 %v39
  %v55 = vunpack.c.l.b16 %v40
  %v56 = vunpack.c.l.b16 %v41
  %v57 = vunpack.c.l.b16 %v42
  %v58 = vpack.c.b16 %v55, %v54
  %v59 = vpack.c.b16 %v57, %v56
  %vm62 = vcmask 261120
  %v64 = vsel %vm62, %v35, 0
  %v67 = vsel %vm62, %v36, 0
  %v70 = vsel %vm62, %v37, 0
  %v73 = vsel %vm62, %v38, 0
  %75 = vmatprep.subr.bf16.mxu0 0
  %76 = vmatpush1.bf16.msra.mxu0 %v58
  %77 = vmatprep.subr.bf16.mxu0 0
  %78 = vmatpush1.bf16.msra.mxu0 %v59
  %79 = vmatprep.subr.bf16.mxu0 0
  %80 = vmatpush1.bf16.msra.mxu0 0
  %81 = vmatprep.subr.bf16.mxu0 0
  %82 = vmatpush1.bf16.msra.mxu0 0
  %83 = vmatprep.subr.bf16.mxu0 0
  %84 = vmatpush1.bf16.msra.mxu0 0
  %85 = vmatprep.subr.bf16.mxu0 0
  %86 = vmatpush1.bf16.msra.mxu0 0
  %87 = vmatprep.subr.bf16.mxu0 0
  %88 = vmatpush1.bf16.msra.mxu0 0
  %89 = vmatprep.subr.bf16.mxu0 0
  %90 = vmatpush1.bf16.msra.mxu0 0
  %91 = vmatprep.subr.bf16.mxu0 0
  %92 = vmatpush1.bf16.msra.mxu0 0
  %93 = vmatprep.subr.bf16.mxu0 0
  %94 = vmatpush1.bf16.msra.mxu0 0
  %95 = vmatprep.subr.bf16.mxu0 0
  %96 = vmatpush1.bf16.msra.mxu0 0
  %97 = vmatprep.subr.bf16.mxu0 0
  %98 = vmatpush1.bf16.msra.mxu0 0
  %99 = vmatprep.subr.bf16.mxu0 0
  %100 = vmatpush1.bf16.msra.mxu0 0
  %101 = vmatprep.subr.bf16.mxu0 0
  %102 = vmatpush1.bf16.msra.mxu0 0
  %103 = vmatprep.subr.bf16.mxu0 0
  %104 = vmatpush1.bf16.msra.mxu0 0
  %105 = vmatprep.subr.bf16.mxu0 0
  %106 = vmatpush1.bf16.msra.mxu0 0
  %107 = vmatprep.mubr.bf16.mxu0 0
  %108 = vmatmul.mubr.bf16.gmra.mrb[0].mxu0 %v64
  %v109 = vpop.f32.mrb[0].mxu0
  %v110 = vadd.f32 %v48, %v109
  %v111 = vpop.f32.mrb[0].mxu0
  %v112 = vpop.f32.mrb[0].mxu0
  %v113 = vadd.f32 %v48, %v112
  %v114 = vpop.f32.mrb[0].mxu0
  %115 = vmatprep.mubr.bf16.mxu0 0
  %116 = vmatmul.mubr.bf16.gmra.mrb[0].mxu0 %v67
  %v117 = vpop.f32.mrb[0].mxu0
  %v118 = vadd.f32 %v48, %v117
  %v119 = vpop.f32.mrb[0].mxu0
  %v120 = vpop.f32.mrb[0].mxu0
  %v121 = vadd.f32 %v48, %v120
  %v122 = vpop.f32.mrb[0].mxu0
  %123 = vmatprep.mubr.bf16.mxu0 0
  %124 = vmatmul.mubr.bf16.gmra.mrb[0].mxu0 %v70
  %v125 = vpop.f32.mrb[0].mxu0
  %v126 = vadd.f32 %v48, %v125
  %v127 = vpop.f32.mrb[0].mxu0
  %v128 = vpop.f32.mrb[0].mxu0
  %v129 = vadd.f32 %v48, %v128
  %v130 = vpop.f32.mrb[0].mxu0
  %131 = vmatprep.mubr.bf16.mxu0 0
  %132 = vmatmul.mubr.bf16.gmra.mrb[0].mxu0 %v73
  %v133 = vpop.f32.mrb[0].mxu0
  %v134 = vadd.f32 %v48, %v133
  %v135 = vpop.f32.mrb[0].mxu0
  %v136 = vpop.f32.mrb[0].mxu0
  %v137 = vadd.f32 %v48, %v136
  %v138 = vpop.f32.mrb[0].mxu0
  %139 = vdwg.mxu0
  %v148 = vcombine.high %v110, %v110
  %v149 = vcombine.high %v113, %v113
  %v150 = vcombine.high %v118, %v118
  %v151 = vcombine.high %v121, %v121
  %v152 = vcombine.high %v126, %v126
  %v153 = vcombine.high %v129, %v129
  %v154 = vcombine.high %v134, %v134
  %v155 = vcombine.high %v137, %v137
  %v164 = vpack.c.bf16 %v110, %v110
  %v165 = vpack.c.bf16 %v148, %v148
  %v166 = vpack.c.bf16 %v113, %v113
  %v167 = vpack.c.bf16 %v149, %v149
  %v168 = vpack.c.bf16 %v118, %v118
  %v169 = vpack.c.bf16 %v150, %v150
  %v170 = vpack.c.bf16 %v121, %v121
  %v171 = vpack.c.bf16 %v151, %v151
  %v172 = vpack.c.bf16 %v126, %v126
  %v173 = vpack.c.bf16 %v152, %v152
  %v174 = vpack.c.bf16 %v129, %v129
  %v175 = vpack.c.bf16 %v153, %v153
  %v176 = vpack.c.bf16 %v134, %v134
  %v177 = vpack.c.bf16 %v154, %v154
  %v178 = vpack.c.bf16 %v137, %v137
  %v179 = vpack.c.bf16 %v155, %v155
  %181 = vrot.lane.b32.xlu0 %v164, 96
  %v182 = vpop.permute.xlu0 %181
  %vm183 = vcmask 64512
  %v185 = vsel %vm183, %v164, 0
  %v188 = vsel %vm183, %v182, 0
  %190 = vmatprep.subr.bf16.mxu0 0
  %191 = vmatpush1.bf16.xpose.msra.mxu0 %v188
  %192 = vmatprep.subr.bf16.mxu0 0
  %193 = vmatpush1.bf16.xpose.msra.mxu0 0
  %194 = vmatprep.subr.bf16.mxu0 0
  %195 = vmatpush1.bf16.xpose.msra.mxu0 0
  %196 = vmatprep.subr.bf16.mxu0 0
  %197 = vmatpush1.bf16.xpose.msra.mxu0 0
  %198 = vmatprep.subr.bf16.mxu0 0
  %199 = vmatpush1.bf16.xpose.msra.mxu0 0
  %200 = vmatprep.subr.bf16.mxu0 0
  %201 = vmatpush1.bf16.xpose.msra.mxu0 0
  %202 = vmatprep.subr.bf16.mxu0 0
  %203 = vmatpush1.bf16.xpose.msra.mxu0 0
  %204 = vmatprep.subr.bf16.mxu0 0
  %205 = vmatpush1.bf16.xpose.msra.mxu0 0
  %206 = vmatprep.subr.bf16.mxu0 0
  %207 = vmatpush1.bf16.xpose.msra.mxu0 0
  %208 = vmatprep.subr.bf16.mxu0 0
  %209 = vmatpush1.bf16.xpose.msra.mxu0 0
  %210 = vmatprep.subr.bf16.mxu0 0
  %211 = vmatpush1.bf16.xpose.msra.mxu0 0
  %212 = vmatprep.subr.bf16.mxu0 0
  %213 = vmatpush1.bf16.xpose.msra.mxu0 0
  %214 = vmatprep.subr.bf16.mxu0 0
  %215 = vmatpush1.bf16.xpose.msra.mxu0 0
  %216 = vmatprep.subr.bf16.mxu0 0
  %217 = vmatpush1.bf16.xpose.msra.mxu0 0
  %218 = vmatprep.subr.bf16.mxu0 0
  %219 = vmatpush1.bf16.xpose.msra.mxu0 0
  %220 = vmatprep.subr.bf16.mxu0 0
  %221 = vmatpush1.bf16.xpose.msra.mxu0 0
  %222 = vmatprep.mubr.bf16.mxu0 0
  %223 = vmatmul.mubr.bf16.gmra.mrb[0].mxu0 %v185
  %v224 = vpop.f32.mrb[0].mxu0
  %v225 = vadd.f32 0.0, %v224
  %v226 = vpop.f32.mrb[0].mxu0
  %v227 = vpop.f32.mrb[0].mxu0
  %v228 = vpop.f32.mrb[0].mxu0
  %229 = vdwg.mxu0
  %231 = vrot.lane.b32.xlu0 %v165, 96
  %v232 = vpop.permute.xlu0 %231
  %v234 = vsel %vm183, %v165, 0
  %v237 = vsel %vm183, %v232, 0
  %239 = vmatprep.subr.bf16.mxu0 0
  %240 = vmatpush1.bf16.xpose.msra.mxu0 %v237
  %241 = vmatprep.subr.bf16.mxu0 0
  %242 = vmatpush1.bf16.xpose.msra.mxu0 0
  %243 = vmatprep.subr.bf16.mxu0 0
  %244 = vmatpush1.bf16.xpose.msra.mxu0 0
  %245 = vmatprep.subr.bf16.mxu0 0
  %246 = vmatpush1.bf16.xpose.msra.mxu0 0
  %247 = vmatprep.subr.bf16.mxu0 0
  %248 = vmatpush1.bf16.xpose.msra.mxu0 0
  %249 = vmatprep.subr.bf16.mxu0 0
  %250 = vmatpush1.bf16.xpose.msra.mxu0 0
  %251 = vmatprep.subr.bf16.mxu0 0
  %252 = vmatpush1.bf16.xpose.msra.mxu0 0
  %253 = vmatprep.subr.bf16.mxu0 0
  %254 = vmatpush1.bf16.xpose.msra.mxu0 0
  %255 = vmatprep.subr.bf16.mxu0 0
  %256 = vmatpush1.bf16.xpose.msra.mxu0 0
  %257 = vmatprep.subr.bf16.mxu0 0
  %258 = vmatpush1.bf16.xpose.msra.mxu0 0
  %259 = vmatprep.subr.bf16.mxu0 0
  %260 = vmatpush1.bf16.xpose.msra.mxu0 0
  %261 = vmatprep.subr.bf16.mxu0 0
  %262 = vmatpush1.bf16.xpose.msra.mxu0 0
  %263 = vmatprep.subr.bf16.mxu0 0
  %264 = vmatpush1.bf16.xpose.msra.mxu0 0
  %265 = vmatprep.subr.bf16.mxu0 0
  %266 = vmatpush1.bf16.xpose.msra.mxu0 0
  %267 = vmatprep.subr.bf16.mxu0 0
  %268 = vmatpush1.bf16.xpose.msra.mxu0 0
  %269 = vmatprep.subr.bf16.mxu0 0
  %270 = vmatpush1.bf16.xpose.msra.mxu0 0
  %271 = vmatprep.mubr.bf16.mxu0 0
  %272 = vmatmul.mubr.bf16.gmra.mrb[0].mxu0 %v234
  %v273 = vpop.f32.mrb[0].mxu0
  %v274 = vadd.f32 0.0, %v273
  %v275 = vpop.f32.mrb[0].mxu0
  %v276 = vpop.f32.mrb[0].mxu0
  %v277 = vpop.f32.mrb[0].mxu0
  %278 = vdwg.mxu0
  %280 = vrot.lane.b32.xlu0 %v166, 96
  %v281 = vpop.permute.xlu0 %280
  %v283 = vsel %vm183, %v166, 0
  %v286 = vsel %vm183, %v281, 0
  %288 = vmatprep.subr.bf16.mxu0 0
  %289 = vmatpush1.bf16.xpose.msra.mxu0 %v286
  %290 = vmatprep.subr.bf16.mxu0 0
  %291 = vmatpush1.bf16.xpose.msra.mxu0 0
  %292 = vmatprep.subr.bf16.mxu0 0
  %293 = vmatpush1.bf16.xpose.msra.mxu0 0
  %294 = vmatprep.subr.bf16.mxu0 0
  %295 = vmatpush1.bf16.xpose.msra.mxu0 0
  %296 = vmatprep.subr.bf16.mxu0 0
  %297 = vmatpush1.bf16.xpose.msra.mxu0 0
  %298 = vmatprep.subr.bf16.mxu0 0
  %299 = vmatpush1.bf16.xpose.msra.mxu0 0
  %300 = vmatprep.subr.bf16.mxu0 0
  %301 = vmatpush1.bf16.xpose.msra.mxu0 0
  %302 = vmatprep.subr.bf16.mxu0 0
  %303 = vmatpush1.bf16.xpose.msra.mxu0 0
  %304 = vmatprep.subr.bf16.mxu0 0
  %305 = vmatpush1.bf16.xpose.msra.mxu0 0
  %306 = vmatprep.subr.bf16.mxu0 0
  %307 = vmatpush1.bf16.xpose.msra.mxu0 0
  %308 = vmatprep.subr.bf16.mxu0 0
  %309 = vmatpush1.bf16.xpose.msra.mxu0 0
  %310 = vmatprep.subr.bf16.mxu0 0
  %311 = vmatpush1.bf16.xpose.msra.mxu0 0
  %312 = vmatprep.subr.bf16.mxu0 0
  %313 = vmatpush1.bf16.xpose.msra.mxu0 0
  %314 = vmatprep.subr.bf16.mxu0 0
  %315 = vmatpush1.bf16.xpose.msra.mxu0 0
  %316 = vmatprep.subr.bf16.mxu0 0
  %317 = vmatpush1.bf16.xpose.msra.mxu0 0
  %318 = vmatprep.subr.bf16.mxu0 0
  %319 = vmatpush1.bf16.xpose.msra.mxu0 0
  %320 = vmatprep.mubr.bf16.mxu0 0
  %321 = vmatmul.mubr.bf16.gmra.mrb[0].mxu0 %v283
  %v322 = vpop.f32.mrb[0].mxu0
  %v323 = vadd.f32 0.0, %v322
  %v324 = vpop.f32.mrb[0].mxu0
  %v325 = vpop.f32.mrb[0].mxu0
  %v326 = vpop.f32.mrb[0].mxu0
  %327 = vdwg.mxu0
  %329 = vrot.lane.b32.xlu0 %v167, 96
  %v330 = vpop.permute.xlu0 %329
  %v332 = vsel %vm183, %v167, 0
  %v335 = vsel %vm183, %v330, 0
  %337 = vmatprep.subr.bf16.mxu0 0
  %338 = vmatpush1.bf16.xpose.msra.mxu0 %v335
  %339 = vmatprep.subr.bf16.mxu0 0
  %340 = vmatpush1.bf16.xpose.msra.mxu0 0
  %341 = vmatprep.subr.bf16.mxu0 0
  %342 = vmatpush1.bf16.xpose.msra.mxu0 0
  %343 = vmatprep.subr.bf16.mxu0 0
  %344 = vmatpush1.bf16.xpose.msra.mxu0 0
  %345 = vmatprep.subr.bf16.mxu0 0
  %346 = vmatpush1.bf16.xpose.msra.mxu0 0
  %347 = vmatprep.subr.bf16.mxu0 0
  %348 = vmatpush1.bf16.xpose.msra.mxu0 0
  %349 = vmatprep.subr.bf16.mxu0 0
  %350 = vmatpush1.bf16.xpose.msra.mxu0 0
  %351 = vmatprep.subr.bf16.mxu0 0
  %352 = vmatpush1.bf16.xpose.msra.mxu0 0
  %353 = vmatprep.subr.bf16.mxu0 0
  %354 = vmatpush1.bf16.xpose.msra.mxu0 0
  %355 = vmatprep.subr.bf16.mxu0 0
  %356 = vmatpush1.bf16.xpose.msra.mxu0 0
  %357 = vmatprep.subr.bf16.mxu0 0
  %358 = vmatpush1.bf16.xpose.msra.mxu0 0
  %359 = vmatprep.subr.bf16.mxu0 0
  %360 = vmatpush1.bf16.xpose.msra.mxu0 0
  %361 = vmatprep.subr.bf16.mxu0 0
  %362 = vmatpush1.bf16.xpose.msra.mxu0 0
  %363 = vmatprep.subr.bf16.mxu0 0
  %364 = vmatpush1.bf16.xpose.msra.mxu0 0
  %365 = vmatprep.subr.bf16.mxu0 0
  %366 = vmatpush1.bf16.xpose.msra.mxu0 0
  %367 = vmatprep.subr.bf16.mxu0 0
  %368 = vmatpush1.bf16.xpose.msra.mxu0 0
  %369 = vmatprep.mubr.bf16.mxu0 0
  %370 = vmatmul.mubr.bf16.gmra.mrb[0].mxu0 %v332
  %v371 = vpop.f32.mrb[0].mxu0
  %v372 = vadd.f32 0.0, %v371
  %v373 = vpop.f32.mrb[0].mxu0
  %v374 = vpop.f32.mrb[0].mxu0
  %v375 = vpop.f32.mrb[0].mxu0
  %376 = vdwg.mxu0
  %378 = vrot.lane.b32.xlu0 %v168, 96
  %v379 = vpop.permute.xlu0 %378
  %v381 = vsel %vm183, %v168, 0
  %v384 = vsel %vm183, %v379, 0
  %386 = vmatprep.subr.bf16.mxu0 0
  %387 = vmatpush1.bf16.xpose.msra.mxu0 %v384
  %388 = vmatprep.subr.bf16.mxu0 0
  %389 = vmatpush1.bf16.xpose.msra.mxu0 0
  %390 = vmatprep.subr.bf16.mxu0 0
  %391 = vmatpush1.bf16.xpose.msra.mxu0 0
  %392 = vmatprep.subr.bf16.mxu0 0
  %393 = vmatpush1.bf16.xpose.msra.mxu0 0
  %394 = vmatprep.subr.bf16.mxu0 0
  %395 = vmatpush1.bf16.xpose.msra.mxu0 0
  %396 = vmatprep.subr.bf16.mxu0 0
  %397 = vmatpush1.bf16.xpose.msra.mxu0 0
  %398 = vmatprep.subr.bf16.mxu0 0
  %399 = vmatpush1.bf16.xpose.msra.mxu0 0
  %400 = vmatprep.subr.bf16.mxu0 0
  %401 = vmatpush1.bf16.xpose.msra.mxu0 0
  %402 = vmatprep.subr.bf16.mxu0 0
  %403 = vmatpush1.bf16.xpose.msra.mxu0 0
  %404 = vmatprep.subr.bf16.mxu0 0
  %405 = vmatpush1.bf16.xpose.msra.mxu0 0
  %406 = vmatprep.subr.bf16.mxu0 0
  %407 = vmatpush1.bf16.xpose.msra.mxu0 0
  %408 = vmatprep.subr.bf16.mxu0 0
  %409 = vmatpush1.bf16.xpose.msra.mxu0 0
  %410 = vmatprep.subr.bf16.mxu0 0
  %411 = vmatpush1.bf16.xpose.msra.mxu0 0
  %412 = vmatprep.subr.bf16.mxu0 0
  %413 = vmatpush1.bf16.xpose.msra.mxu0 0
  %414 = vmatprep.subr.bf16.mxu0 0
  %415 = vmatpush1.bf16.xpose.msra.mxu0 0
  %416 = vmatprep.subr.bf16.mxu0 0
  %417 = vmatpush1.bf16.xpose.msra.mxu0 0
  %418 = vmatprep.mubr.bf16.mxu0 0
  %419 = vmatmul.mubr.bf16.gmra.mrb[0].mxu0 %v381
  %v420 = vpop.f32.mrb[0].mxu0
  %v421 = vadd.f32 0.0, %v420
  %v422 = vpop.f32.mrb[0].mxu0
  %v423 = vpop.f32.mrb[0].mxu0
  %v424 = vpop.f32.mrb[0].mxu0
  %425 = vdwg.mxu0
  %427 = vrot.lane.b32.xlu0 %v169, 96
  %v428 = vpop.permute.xlu0 %427
  %v430 = vsel %vm183, %v169, 0
  %v433 = vsel %vm183, %v428, 0
  %435 = vmatprep.subr.bf16.mxu0 0
  %436 = vmatpush1.bf16.xpose.msra.mxu0 %v433
  %437 = vmatprep.subr.bf16.mxu0 0
  %438 = vmatpush1.bf16.xpose.msra.mxu0 0
  %439 = vmatprep.subr.bf16.mxu0 0
  %440 = vmatpush1.bf16.xpose.msra.mxu0 0
  %441 = vmatprep.subr.bf16.mxu0 0
  %442 = vmatpush1.bf16.xpose.msra.mxu0 0
  %443 = vmatprep.subr.bf16.mxu0 0
  %444 = vmatpush1.bf16.xpose.msra.mxu0 0
  %445 = vmatprep.subr.bf16.mxu0 0
  %446 = vmatpush1.bf16.xpose.msra.mxu0 0
  %447 = vmatprep.subr.bf16.mxu0 0
  %448 = vmatpush1.bf16.xpose.msra.mxu0 0
  %449 = vmatprep.subr.bf16.mxu0 0
  %450 = vmatpush1.bf16.xpose.msra.mxu0 0
  %451 = vmatprep.subr.bf16.mxu0 0
  %452 = vmatpush1.bf16.xpose.msra.mxu0 0
  %453 = vmatprep.subr.bf16.mxu0 0
  %454 = vmatpush1.bf16.xpose.msra.mxu0 0
  %455 = vmatprep.subr.bf16.mxu0 0
  %456 = vmatpush1.bf16.xpose.msra.mxu0 0
  %457 = vmatprep.subr.bf16.mxu0 0
  %458 = vmatpush1.bf16.xpose.msra.mxu0 0
  %459 = vmatprep.subr.bf16.mxu0 0
  %460 = vmatpush1.bf16.xpose.msra.mxu0 0
  %461 = vmatprep.subr.bf16.mxu0 0
  %462 = vmatpush1.bf16.xpose.msra.mxu0 0
  %463 = vmatprep.subr.bf16.mxu0 0
  %464 = vmatpush1.bf16.xpose.msra.mxu0 0
  %465 = vmatprep.subr.bf16.mxu0 0
  %466 = vmatpush1.bf16.xpose.msra.mxu0 0
  %467 = vmatprep.mubr.bf16.mxu0 0
  %468 = vmatmul.mubr.bf16.gmra.mrb[0].mxu0 %v430
  %v469 = vpop.f32.mrb[0].mxu0
  %v470 = vadd.f32 0.0, %v469
  %v471 = vpop.f32.mrb[0].mxu0
  %v472 = vpop.f32.mrb[0].mxu0
  %v473 = vpop.f32.mrb[0].mxu0
  %474 = vdwg.mxu0
  %476 = vrot.lane.b32.xlu0 %v170, 96
  %v477 = vpop.permute.xlu0 %476
  %v479 = vsel %vm183, %v170, 0
  %v482 = vsel %vm183, %v477, 0
  %484 = vmatprep.subr.bf16.mxu0 0
  %485 = vmatpush1.bf16.xpose.msra.mxu0 %v482
  %486 = vmatprep.subr.bf16.mxu0 0
  %487 = vmatpush1.bf16.xpose.msra.mxu0 0
  %488 = vmatprep.subr.bf16.mxu0 0
  %489 = vmatpush1.bf16.xpose.msra.mxu0 0
  %490 = vmatprep.subr.bf16.mxu0 0
  %491 = vmatpush1.bf16.xpose.msra.mxu0 0
  %492 = vmatprep.subr.bf16.mxu0 0
  %493 = vmatpush1.bf16.xpose.msra.mxu0 0
  %494 = vmatprep.subr.bf16.mxu0 0
  %495 = vmatpush1.bf16.xpose.msra.mxu0 0
  %496 = vmatprep.subr.bf16.mxu0 0
  %497 = vmatpush1.bf16.xpose.msra.mxu0 0
  %498 = vmatprep.subr.bf16.mxu0 0
  %499 = vmatpush1.bf16.xpose.msra.mxu0 0
  %500 = vmatprep.subr.bf16.mxu0 0
  %501 = vmatpush1.bf16.xpose.msra.mxu0 0
  %502 = vmatprep.subr.bf16.mxu0 0
  %503 = vmatpush1.bf16.xpose.msra.mxu0 0
  %504 = vmatprep.subr.bf16.mxu0 0
  %505 = vmatpush1.bf16.xpose.msra.mxu0 0
  %506 = vmatprep.subr.bf16.mxu0 0
  %507 = vmatpush1.bf16.xpose.msra.mxu0 0
  %508 = vmatprep.subr.bf16.mxu0 0
  %509 = vmatpush1.bf16.xpose.msra.mxu0 0
  %510 = vmatprep.subr.bf16.mxu0 0
  %511 = vmatpush1.bf16.xpose.msra.mxu0 0
  %512 = vmatprep.subr.bf16.mxu0 0
  %513 = vmatpush1.bf16.xpose.msra.mxu0 0
  %514 = vmatprep.subr.bf16.mxu0 0
  %515 = vmatpush1.bf16.xpose.msra.mxu0 0
  %516 = vmatprep.mubr.bf16.mxu0 0
  %517 = vmatmul.mubr.bf16.gmra.mrb[0].mxu0 %v479
  %v518 = vpop.f32.mrb[0].mxu0
  %v519 = vadd.f32 0.0, %v518
  %v520 = vpop.f32.mrb[0].mxu0
  %v521 = vpop.f32.mrb[0].mxu0
  %v522 = vpop.f32.mrb[0].mxu0
  %523 = vdwg.mxu0
  %525 = vrot.lane.b32.xlu0 %v171, 96
  %v526 = vpop.permute.xlu0 %525
  %v528 = vsel %vm183, %v171, 0
  %v531 = vsel %vm183, %v526, 0
  %533 = vmatprep.subr.bf16.mxu0 0
  %534 = vmatpush1.bf16.xpose.msra.mxu0 %v531
  %535 = vmatprep.subr.bf16.mxu0 0
  %536 = vmatpush1.bf16.xpose.msra.mxu0 0
  %537 = vmatprep.subr.bf16.mxu0 0
  %538 = vmatpush1.bf16.xpose.msra.mxu0 0
  %539 = vmatprep.subr.bf16.mxu0 0
  %540 = vmatpush1.bf16.xpose.msra.mxu0 0
  %541 = vmatprep.subr.bf16.mxu0 0
  %542 = vmatpush1.bf16.xpose.msra.mxu0 0
  %543 = vmatprep.subr.bf16.mxu0 0
  %544 = vmatpush1.bf16.xpose.msra.mxu0 0
  %545 = vmatprep.subr.bf16.mxu0 0
  %546 = vmatpush1.bf16.xpose.msra.mxu0 0
  %547 = vmatprep.subr.bf16.mxu0 0
  %548 = vmatpush1.bf16.xpose.msra.mxu0 0
  %549 = vmatprep.subr.bf16.mxu0 0
  %550 = vmatpush1.bf16.xpose.msra.mxu0 0
  %551 = vmatprep.subr.bf16.mxu0 0
  %552 = vmatpush1.bf16.xpose.msra.mxu0 0
  %553 = vmatprep.subr.bf16.mxu0 0
  %554 = vmatpush1.bf16.xpose.msra.mxu0 0
  %555 = vmatprep.subr.bf16.mxu0 0
  %556 = vmatpush1.bf16.xpose.msra.mxu0 0
  %557 = vmatprep.subr.bf16.mxu0 0
  %558 = vmatpush1.bf16.xpose.msra.mxu0 0
  %559 = vmatprep.subr.bf16.mxu0 0
  %560 = vmatpush1.bf16.xpose.msra.mxu0 0
  %561 = vmatprep.subr.bf16.mxu0 0
  %562 = vmatpush1.bf16.xpose.msra.mxu0 0
  %563 = vmatprep.subr.bf16.mxu0 0
  %564 = vmatpush1.bf16.xpose.msra.mxu0 0
  %565 = vmatprep.mubr.bf16.mxu0 0
  %566 = vmatmul.mubr.bf16.gmra.mrb[0].mxu0 %v528
  %v567 = vpop.f32.mrb[0].mxu0
  %v568 = vadd.f32 0.0, %v567
  %v569 = vpop.f32.mrb[0].mxu0
  %v570 = vpop.f32.mrb[0].mxu0
  %v571 = vpop.f32.mrb[0].mxu0
  %572 = vdwg.mxu0
  %574 = vrot.lane.b32.xlu0 %v172, 96
  %v575 = vpop.permute.xlu0 %574
  %v577 = vsel %vm183, %v172, 0
  %v580 = vsel %vm183, %v575, 0
  %582 = vmatprep.subr.bf16.mxu0 0
  %583 = vmatpush1.bf16.xpose.msra.mxu0 %v580
  %584 = vmatprep.subr.bf16.mxu0 0
  %585 = vmatpush1.bf16.xpose.msra.mxu0 0
  %586 = vmatprep.subr.bf16.mxu0 0
  %587 = vmatpush1.bf16.xpose.msra.mxu0 0
  %588 = vmatprep.subr.bf16.mxu0 0
  %589 = vmatpush1.bf16.xpose.msra.mxu0 0
  %590 = vmatprep.subr.bf16.mxu0 0
  %591 = vmatpush1.bf16.xpose.msra.mxu0 0
  %592 = vmatprep.subr.bf16.mxu0 0
  %593 = vmatpush1.bf16.xpose.msra.mxu0 0
  %594 = vmatprep.subr.bf16.mxu0 0
  %595 = vmatpush1.bf16.xpose.msra.mxu0 0
  %596 = vmatprep.subr.bf16.mxu0 0
  %597 = vmatpush1.bf16.xpose.msra.mxu0 0
  %598 = vmatprep.subr.bf16.mxu0 0
  %599 = vmatpush1.bf16.xpose.msra.mxu0 0
  %600 = vmatprep.subr.bf16.mxu0 0
  %601 = vmatpush1.bf16.xpose.msra.mxu0 0
  %602 = vmatprep.subr.bf16.mxu0 0
  %603 = vmatpush1.bf16.xpose.msra.mxu0 0
  %604 = vmatprep.subr.bf16.mxu0 0
  %605 = vmatpush1.bf16.xpose.msra.mxu0 0
  %606 = vmatprep.subr.bf16.mxu0 0
  %607 = vmatpush1.bf16.xpose.msra.mxu0 0
  %608 = vmatprep.subr.bf16.mxu0 0
  %609 = vmatpush1.bf16.xpose.msra.mxu0 0
  %610 = vmatprep.subr.bf16.mxu0 0
  %611 = vmatpush1.bf16.xpose.msra.mxu0 0
  %612 = vmatprep.subr.bf16.mxu0 0
  %613 = vmatpush1.bf16.xpose.msra.mxu0 0
  %614 = vmatprep.mubr.bf16.mxu0 0
  %615 = vmatmul.mubr.bf16.gmra.mrb[0].mxu0 %v577
  %v616 = vpop.f32.mrb[0].mxu0
  %v617 = vadd.f32 0.0, %v616
  %v618 = vpop.f32.mrb[0].mxu0
  %v619 = vpop.f32.mrb[0].mxu0
  %v620 = vpop.f32.mrb[0].mxu0
  %621 = vdwg.mxu0
  %623 = vrot.lane.b32.xlu0 %v173, 96
  %v624 = vpop.permute.xlu0 %623
  %v626 = vsel %vm183, %v173, 0
  %v629 = vsel %vm183, %v624, 0
  %631 = vmatprep.subr.bf16.mxu0 0
  %632 = vmatpush1.bf16.xpose.msra.mxu0 %v629
  %633 = vmatprep.subr.bf16.mxu0 0
  %634 = vmatpush1.bf16.xpose.msra.mxu0 0
  %635 = vmatprep.subr.bf16.mxu0 0
  %636 = vmatpush1.bf16.xpose.msra.mxu0 0
  %637 = vmatprep.subr.bf16.mxu0 0
  %638 = vmatpush1.bf16.xpose.msra.mxu0 0
  %639 = vmatprep.subr.bf16.mxu0 0
  %640 = vmatpush1.bf16.xpose.msra.mxu0 0
  %641 = vmatprep.subr.bf16.mxu0 0
  %642 = vmatpush1.bf16.xpose.msra.mxu0 0
  %643 = vmatprep.subr.bf16.mxu0 0
  %644 = vmatpush1.bf16.xpose.msra.mxu0 0
  %645 = vmatprep.subr.bf16.mxu0 0
  %646 = vmatpush1.bf16.xpose.msra.mxu0 0
  %647 = vmatprep.subr.bf16.mxu0 0
  %648 = vmatpush1.bf16.xpose.msra.mxu0 0
  %649 = vmatprep.subr.bf16.mxu0 0
  %650 = vmatpush1.bf16.xpose.msra.mxu0 0
  %651 = vmatprep.subr.bf16.mxu0 0
  %652 = vmatpush1.bf16.xpose.msra.mxu0 0
  %653 = vmatprep.subr.bf16.mxu0 0
  %654 = vmatpush1.bf16.xpose.msra.mxu0 0
  %655 = vmatprep.subr.bf16.mxu0 0
  %656 = vmatpush1.bf16.xpose.msra.mxu0 0
  %657 = vmatprep.subr.bf16.mxu0 0
  %658 = vmatpush1.bf16.xpose.msra.mxu0 0
  %659 = vmatprep.subr.bf16.mxu0 0
  %660 = vmatpush1.bf16.xpose.msra.mxu0 0
  %661 = vmatprep.subr.bf16.mxu0 0
  %662 = vmatpush1.bf16.xpose.msra.mxu0 0
  %663 = vmatprep.mubr.bf16.mxu0 0
  %664 = vmatmul.mubr.bf16.gmra.mrb[0].mxu0 %v626
  %v665 = vpop.f32.mrb[0].mxu0
  %v666 = vadd.f32 0.0, %v665
  %v667 = vpop.f32.mrb[0].mxu0
  %v668 = vpop.f32.mrb[0].mxu0
  %v669 = vpop.f32.mrb[0].mxu0
  %670 = vdwg.mxu0
  %672 = vrot.lane.b32.xlu0 %v174, 96
  %v673 = vpop.permute.xlu0 %672
  %v675 = vsel %vm183, %v174, 0
  %v678 = vsel %vm183, %v673, 0
  %680 = vmatprep.subr.bf16.mxu0 0
  %681 = vmatpush1.bf16.xpose.msra.mxu0 %v678
  %682 = vmatprep.subr.bf16.mxu0 0
  %683 = vmatpush1.bf16.xpose.msra.mxu0 0
  %684 = vmatprep.subr.bf16.mxu0 0
  %685 = vmatpush1.bf16.xpose.msra.mxu0 0
  %686 = vmatprep.subr.bf16.mxu0 0
  %687 = vmatpush1.bf16.xpose.msra.mxu0 0
  %688 = vmatprep.subr.bf16.mxu0 0
  %689 = vmatpush1.bf16.xpose.msra.mxu0 0
  %690 = vmatprep.subr.bf16.mxu0 0
  %691 = vmatpush1.bf16.xpose.msra.mxu0 0
  %692 = vmatprep.subr.bf16.mxu0 0
  %693 = vmatpush1.bf16.xpose.msra.mxu0 0
  %694 = vmatprep.subr.bf16.mxu0 0
  %695 = vmatpush1.bf16.xpose.msra.mxu0 0
  %696 = vmatprep.subr.bf16.mxu0 0
  %697 = vmatpush1.bf16.xpose.msra.mxu0 0
  %698 = vmatprep.subr.bf16.mxu0 0
  %699 = vmatpush1.bf16.xpose.msra.mxu0 0
  %700 = vmatprep.subr.bf16.mxu0 0
  %701 = vmatpush1.bf16.xpose.msra.mxu0 0
  %702 = vmatprep.subr.bf16.mxu0 0
  %703 = vmatpush1.bf16.xpose.msra.mxu0 0
  %704 = vmatprep.subr.bf16.mxu0 0
  %705 = vmatpush1.bf16.xpose.msra.mxu0 0
  %706 = vmatprep.subr.bf16.mxu0 0
  %707 = vmatpush1.bf16.xpose.msra.mxu0 0
  %708 = vmatprep.subr.bf16.mxu0 0
  %709 = vmatpush1.bf16.xpose.msra.mxu0 0
  %710 = vmatprep.subr.bf16.mxu0 0
  %711 = vmatpush1.bf16.xpose.msra.mxu0 0
  %712 = vmatprep.mubr.bf16.mxu0 0
  %713 = vmatmul.mubr.bf16.gmra.mrb[0].mxu0 %v675
  %v714 = vpop.f32.mrb[0].mxu0
  %v715 = vadd.f32 0.0, %v714
  %v716 = vpop.f32.mrb[0].mxu0
  %v717 = vpop.f32.mrb[0].mxu0
  %v718 = vpop.f32.mrb[0].mxu0
  %719 = vdwg.mxu0
  %721 = vrot.lane.b32.xlu0 %v175, 96
  %v722 = vpop.permute.xlu0 %721
  %v724 = vsel %vm183, %v175, 0
  %v727 = vsel %vm183, %v722, 0
  %729 = vmatprep.subr.bf16.mxu0 0
  %730 = vmatpush1.bf16.xpose.msra.mxu0 %v727
  %731 = vmatprep.subr.bf16.mxu0 0
  %732 = vmatpush1.bf16.xpose.msra.mxu0 0
  %733 = vmatprep.subr.bf16.mxu0 0
  %734 = vmatpush1.bf16.xpose.msra.mxu0 0
  %735 = vmatprep.subr.bf16.mxu0 0
  %736 = vmatpush1.bf16.xpose.msra.mxu0 0
  %737 = vmatprep.subr.bf16.mxu0 0
  %738 = vmatpush1.bf16.xpose.msra.mxu0 0
  %739 = vmatprep.subr.bf16.mxu0 0
  %740 = vmatpush1.bf16.xpose.msra.mxu0 0
  %741 = vmatprep.subr.bf16.mxu0 0
  %742 = vmatpush1.bf16.xpose.msra.mxu0 0
  %743 = vmatprep.subr.bf16.mxu0 0
  %744 = vmatpush1.bf16.xpose.msra.mxu0 0
  %745 = vmatprep.subr.bf16.mxu0 0
  %746 = vmatpush1.bf16.xpose.msra.mxu0 0
  %747 = vmatprep.subr.bf16.mxu0 0
  %748 = vmatpush1.bf16.xpose.msra.mxu0 0
  %749 = vmatprep.subr.bf16.mxu0 0
  %750 = vmatpush1.bf16.xpose.msra.mxu0 0
  %751 = vmatprep.subr.bf16.mxu0 0
  %752 = vmatpush1.bf16.xpose.msra.mxu0 0
  %753 = vmatprep.subr.bf16.mxu0 0
  %754 = vmatpush1.bf16.xpose.msra.mxu0 0
  %755 = vmatprep.subr.bf16.mxu0 0
  %756 = vmatpush1.bf16.xpose.msra.mxu0 0
  %757 = vmatprep.subr.bf16.mxu0 0
  %758 = vmatpush1.bf16.xpose.msra.mxu0 0
  %759 = vmatprep.subr.bf16.mxu0 0
  %760 = vmatpush1.bf16.xpose.msra.mxu0 0
  %761 = vmatprep.mubr.bf16.mxu0 0
  %762 = vmatmul.mubr.bf16.gmra.mrb[0].mxu0 %v724
  %v763 = vpop.f32.mrb[0].mxu0
  %v764 = vadd.f32 0.0, %v763
  %v765 = vpop.f32.mrb[0].mxu0
  %v766 = vpop.f32.mrb[0].mxu0
  %v767 = vpop.f32.mrb[0].mxu0
  %768 = vdwg.mxu0
  %770 = vrot.lane.b32.xlu0 %v176, 96
  %v771 = vpop.permute.xlu0 %770
  %v773 = vsel %vm183, %v176, 0
  %v776 = vsel %vm183, %v771, 0
  %778 = vmatprep.subr.bf16.mxu0 0
  %779 = vmatpush1.bf16.xpose.msra.mxu0 %v776
  %780 = vmatprep.subr.bf16.mxu0 0
  %781 = vmatpush1.bf16.xpose.msra.mxu0 0
  %782 = vmatprep.subr.bf16.mxu0 0
  %783 = vmatpush1.bf16.xpose.msra.mxu0 0
  %784 = vmatprep.subr.bf16.mxu0 0
  %785 = vmatpush1.bf16.xpose.msra.mxu0 0
  %786 = vmatprep.subr.bf16.mxu0 0
  %787 = vmatpush1.bf16.xpose.msra.mxu0 0
  %788 = vmatprep.subr.bf16.mxu0 0
  %789 = vmatpush1.bf16.xpose.msra.mxu0 0
  %790 = vmatprep.subr.bf16.mxu0 0
  %791 = vmatpush1.bf16.xpose.msra.mxu0 0
  %792 = vmatprep.subr.bf16.mxu0 0
  %793 = vmatpush1.bf16.xpose.msra.mxu0 0
  %794 = vmatprep.subr.bf16.mxu0 0
  %795 = vmatpush1.bf16.xpose.msra.mxu0 0
  %796 = vmatprep.subr.bf16.mxu0 0
  %797 = vmatpush1.bf16.xpose.msra.mxu0 0
  %798 = vmatprep.subr.bf16.mxu0 0
  %799 = vmatpush1.bf16.xpose.msra.mxu0 0
  %800 = vmatprep.subr.bf16.mxu0 0
  %801 = vmatpush1.bf16.xpose.msra.mxu0 0
  %802 = vmatprep.subr.bf16.mxu0 0
  %803 = vmatpush1.bf16.xpose.msra.mxu0 0
  %804 = vmatprep.subr.bf16.mxu0 0
  %805 = vmatpush1.bf16.xpose.msra.mxu0 0
  %806 = vmatprep.subr.bf16.mxu0 0
  %807 = vmatpush1.bf16.xpose.msra.mxu0 0
  %808 = vmatprep.subr.bf16.mxu0 0
  %809 = vmatpush1.bf16.xpose.msra.mxu0 0
  %810 = vmatprep.mubr.bf16.mxu0 0
  %811 = vmatmul.mubr.bf16.gmra.mrb[0].mxu0 %v773
  %v812 = vpop.f32.mrb[0].mxu0
  %v813 = vadd.f32 0.0, %v812
  %v814 = vpop.f32.mrb[0].mxu0
  %v815 = vpop.f32.mrb[0].mxu0
  %v816 = vpop.f32.mrb[0].mxu0
  %817 = vdwg.mxu0
  %819 = vrot.lane.b32.xlu0 %v177, 96
  %v820 = vpop.permute.xlu0 %819
  %v822 = vsel %vm183, %v177, 0
  %v825 = vsel %vm183, %v820, 0
  %827 = vmatprep.subr.bf16.mxu0 0
  %828 = vmatpush1.bf16.xpose.msra.mxu0 %v825
  %829 = vmatprep.subr.bf16.mxu0 0
  %830 = vmatpush1.bf16.xpose.msra.mxu0 0
  %831 = vmatprep.subr.bf16.mxu0 0
  %832 = vmatpush1.bf16.xpose.msra.mxu0 0
  %833 = vmatprep.subr.bf16.mxu0 0
  %834 = vmatpush1.bf16.xpose.msra.mxu0 0
  %835 = vmatprep.subr.bf16.mxu0 0
  %836 = vmatpush1.bf16.xpose.msra.mxu0 0
  %837 = vmatprep.subr.bf16.mxu0 0
  %838 = vmatpush1.bf16.xpose.msra.mxu0 0
  %839 = vmatprep.subr.bf16.mxu0 0
  %840 = vmatpush1.bf16.xpose.msra.mxu0 0
  %841 = vmatprep.subr.bf16.mxu0 0
  %842 = vmatpush1.bf16.xpose.msra.mxu0 0
  %843 = vmatprep.subr.bf16.mxu0 0
  %844 = vmatpush1.bf16.xpose.msra.mxu0 0
  %845 = vmatprep.subr.bf16.mxu0 0
  %846 = vmatpush1.bf16.xpose.msra.mxu0 0
  %847 = vmatprep.subr.bf16.mxu0 0
  %848 = vmatpush1.bf16.xpose.msra.mxu0 0
  %849 = vmatprep.subr.bf16.mxu0 0
  %850 = vmatpush1.bf16.xpose.msra.mxu0 0
  %851 = vmatprep.subr.bf16.mxu0 0
  %852 = vmatpush1.bf16.xpose.msra.mxu0 0
  %853 = vmatprep.subr.bf16.mxu0 0
  %854 = vmatpush1.bf16.xpose.msra.mxu0 0
  %855 = vmatprep.subr.bf16.mxu0 0
  %856 = vmatpush1.bf16.xpose.msra.mxu0 0
  %857 = vmatprep.subr.bf16.mxu0 0
  %858 = vmatpush1.bf16.xpose.msra.mxu0 0
  %859 = vmatprep.mubr.bf16.mxu0 0
  %860 = vmatmul.mubr.bf16.gmra.mrb[0].mxu0 %v822
  %v861 = vpop.f32.mrb[0].mxu0
  %v862 = vadd.f32 0.0, %v861
  %v863 = vpop.f32.mrb[0].mxu0
  %v864 = vpop.f32.mrb[0].mxu0
  %v865 = vpop.f32.mrb[0].mxu0
  %866 = vdwg.mxu0
  %868 = vrot.lane.b32.xlu0 %v178, 96
  %v869 = vpop.permute.xlu0 %868
  %v871 = vsel %vm183, %v178, 0
  %v874 = vsel %vm183, %v869, 0
  %876 = vmatprep.subr.bf16.mxu0 0
  %877 = vmatpush1.bf16.xpose.msra.mxu0 %v874
  %878 = vmatprep.subr.bf16.mxu0 0
  %879 = vmatpush1.bf16.xpose.msra.mxu0 0
  %880 = vmatprep.subr.bf16.mxu0 0
  %881 = vmatpush1.bf16.xpose.msra.mxu0 0
  %882 = vmatprep.subr.bf16.mxu0 0
  %883 = vmatpush1.bf16.xpose.msra.mxu0 0
  %884 = vmatprep.subr.bf16.mxu0 0
  %885 = vmatpush1.bf16.xpose.msra.mxu0 0
  %886 = vmatprep.subr.bf16.mxu0 0
  %887 = vmatpush1.bf16.xpose.msra.mxu0 0
  %888 = vmatprep.subr.bf16.mxu0 0
  %889 = vmatpush1.bf16.xpose.msra.mxu0 0
  %890 = vmatprep.subr.bf16.mxu0 0
  %891 = vmatpush1.bf16.xpose.msra.mxu0 0
  %892 = vmatprep.subr.bf16.mxu0 0
  %893 = vmatpush1.bf16.xpose.msra.mxu0 0
  %894 = vmatprep.subr.bf16.mxu0 0
  %895 = vmatpush1.bf16.xpose.msra.mxu0 0
  %896 = vmatprep.subr.bf16.mxu0 0
  %897 = vmatpush1.bf16.xpose.msra.mxu0 0
  %898 = vmatprep.subr.bf16.mxu0 0
  %899 = vmatpush1.bf16.xpose.msra.mxu0 0
  %900 = vmatprep.subr.bf16.mxu0 0
  %901 = vmatpush1.bf16.xpose.msra.mxu0 0
  %902 = vmatprep.subr.bf16.mxu0 0
  %903 = vmatpush1.bf16.xpose.msra.mxu0 0
  %904 = vmatprep.subr.bf16.mxu0 0
  %905 = vmatpush1.bf16.xpose.msra.mxu0 0
  %906 = vmatprep.subr.bf16.mxu0 0
  %907 = vmatpush1.bf16.xpose.msra.mxu0 0
  %908 = vmatprep.mubr.bf16.mxu0 0
  %909 = vmatmul.mubr.bf16.gmra.mrb[0].mxu0 %v871
  %v910 = vpop.f32.mrb[0].mxu0
  %v911 = vadd.f32 0.0, %v910
  %v912 = vpop.f32.mrb[0].mxu0
  %v913 = vpop.f32.mrb[0].mxu0
  %v914 = vpop.f32.mrb[0].mxu0
  %915 = vdwg.mxu0
  %917 = vrot.lane.b32.xlu0 %v179, 96
  %v918 = vpop.permute.xlu0 %917
  %v920 = vsel %vm183, %v179, 0
  %v923 = vsel %vm183, %v918, 0
  %925 = vmatprep.subr.bf16.mxu0 0
  %926 = vmatpush1.bf16.xpose.msra.mxu0 %v923
  %927 = vmatprep.subr.bf16.mxu0 0
  %928 = vmatpush1.bf16.xpose.msra.mxu0 0
  %929 = vmatprep.subr.bf16.mxu0 0
  %930 = vmatpush1.bf16.xpose.msra.mxu0 0
  %931 = vmatprep.subr.bf16.mxu0 0
  %932 = vmatpush1.bf16.xpose.msra.mxu0 0
  %933 = vmatprep.subr.bf16.mxu0 0
  %934 = vmatpush1.bf16.xpose.msra.mxu0 0
  %935 = vmatprep.subr.bf16.mxu0 0
  %936 = vmatpush1.bf16.xpose.msra.mxu0 0
  %937 = vmatprep.subr.bf16.mxu0 0
  %938 = vmatpush1.bf16.xpose.msra.mxu0 0
  %939 = vmatprep.subr.bf16.mxu0 0
  %940 = vmatpush1.bf16.xpose.msra.mxu0 0
  %941 = vmatprep.subr.bf16.mxu0 0
  %942 = vmatpush1.bf16.xpose.msra.mxu0 0
  %943 = vmatprep.subr.bf16.mxu0 0
  %944 = vmatpush1.bf16.xpose.msra.mxu0 0
  %945 = vmatprep.subr.bf16.mxu0 0
  %946 = vmatpush1.bf16.xpose.msra.mxu0 0
  %947 = vmatprep.subr.bf16.mxu0 0
  %948 = vmatpush1.bf16.xpose.msra.mxu0 0
  %949 = vmatprep.subr.bf16.mxu0 0
  %950 = vmatpush1.bf16.xpose.msra.mxu0 0
  %951 = vmatprep.subr.bf16.mxu0 0
  %952 = vmatpush1.bf16.xpose.msra.mxu0 0
  %953 = vmatprep.subr.bf16.mxu0 0
  %954 = vmatpush1.bf16.xpose.msra.mxu0 0
  %955 = vmatprep.subr.bf16.mxu0 0
  %956 = vmatpush1.bf16.xpose.msra.mxu0 0
  %957 = vmatprep.mubr.bf16.mxu0 0
  %958 = vmatmul.mubr.bf16.gmra.mrb[0].mxu0 %v920
  %v959 = vpop.f32.mrb[0].mxu0
  %v960 = vadd.f32 0.0, %v959
  %v961 = vpop.f32.mrb[0].mxu0
  %v962 = vpop.f32.mrb[0].mxu0
  %v963 = vpop.f32.mrb[0].mxu0
  %964 = vdwg.mxu0
  %v965 = vmul.f32 %v225, 0.35355338
  %v966 = vmul.f32 %v274, 0.35355338
  %v967 = vmul.f32 %v323, 0.35355338
  %v968 = vmul.f32 %v372, 0.35355338
  %v969 = vmul.f32 %v421, 0.35355338
  %v970 = vmul.f32 %v470, 0.35355338
  %v971 = vmul.f32 %v519, 0.35355338
  %v972 = vmul.f32 %v568, 0.35355338
  %v973 = vmul.f32 %v617, 0.35355338
  %v974 = vmul.f32 %v666, 0.35355338
  %v975 = vmul.f32 %v715, 0.35355338
  %v976 = vmul.f32 %v764, 0.35355338
  %v977 = vmul.f32 %v813, 0.35355338
  %v978 = vmul.f32 %v862, 0.35355338
  %v979 = vmul.f32 %v911, 0.35355338
  %v980 = vmul.f32 %v960, 0.35355338
  %vm981 = vcmask 27648
  %v982 = vsel %vm981, %v965, -inf
  %983 = vmax.xlane.f32.xlu0 %v982
  %v984 = vpop.xlane.xlu0 %983
  %v985 = vsel %vm981, %v966, -inf
  %986 = vmax.xlane.f32.xlu0 %v985
  %v987 = vpop.xlane.xlu0 %986
  %v988 = vsel %vm981, %v967, -inf
  %989 = vmax.xlane.f32.xlu0 %v988
  %v990 = vpop.xlane.xlu0 %989
  %v991 = vsel %vm981, %v968, -inf
  %992 = vmax.xlane.f32.xlu0 %v991
  %v993 = vpop.xlane.xlu0 %992
  %v994 = vsel %vm981, %v969, -inf
  %995 = vmax.xlane.f32.xlu0 %v994
  %v996 = vpop.xlane.xlu0 %995
  %v997 = vsel %vm981, %v970, -inf
  %998 = vmax.xlane.f32.xlu0 %v997
  %v999 = vpop.xlane.xlu0 %998
  %v1000 = vsel %vm981, %v971, -inf
  %1001 = vmax.xlane.f32.xlu0 %v1000
  %v1002 = vpop.xlane.xlu0 %1001
  %v1003 = vsel %vm981, %v972, -inf
  %1004 = vmax.xlane.f32.xlu0 %v1003
  %v1005 = vpop.xlane.xlu0 %1004
  %v1006 = vsel %vm981, %v973, -inf
  %1007 = vmax.xlane.f32.xlu0 %v1006
  %v1008 = vpop.xlane.xlu0 %1007
  %v1009 = vsel %vm981, %v974, -inf
  %1010 = vmax.xlane.f32.xlu0 %v1009
  %v1011 = vpop.xlane.xlu0 %1010
  %v1012 = vsel %vm981, %v975, -inf
  %1013 = vmax.xlane.f32.xlu0 %v1012
  %v1014 = vpop.xlane.xlu0 %1013
  %v1015 = vsel %vm981, %v976, -inf
  %1016 = vmax.xlane.f32.xlu0 %v1015
  %v1017 = vpop.xlane.xlu0 %1016
  %v1018 = vsel %vm981, %v977, -inf
  %1019 = vmax.xlane.f32.xlu0 %v1018
  %v1020 = vpop.xlane.xlu0 %1019
  %v1021 = vsel %vm981, %v978, -inf
  %1022 = vmax.xlane.f32.xlu0 %v1021
  %v1023 = vpop.xlane.xlu0 %1022
  %v1024 = vsel %vm981, %v979, -inf
  %1025 = vmax.xlane.f32.xlu0 %v1024
  %v1026 = vpop.xlane.xlu0 %1025
  %v1027 = vsel %vm981, %v980, -inf
  %1028 = vmax.xlane.f32.xlu0 %v1027
  %v1029 = vpop.xlane.xlu0 %1028
  %v1030 = vsub.f32 %v965, %v984
  %v1031 = vsub.f32 %v966, %v987
  %v1032 = vsub.f32 %v967, %v990
  %v1033 = vsub.f32 %v968, %v993
  %v1034 = vsub.f32 %v969, %v996
  %v1035 = vsub.f32 %v970, %v999
  %v1036 = vsub.f32 %v971, %v1002
  %v1037 = vsub.f32 %v972, %v1005
  %v1038 = vsub.f32 %v973, %v1008
  %v1039 = vsub.f32 %v974, %v1011
  %v1040 = vsub.f32 %v975, %v1014
  %v1041 = vsub.f32 %v976, %v1017
  %v1042 = vsub.f32 %v977, %v1020
  %v1043 = vsub.f32 %v978, %v1023
  %v1044 = vsub.f32 %v979, %v1026
  %v1045 = vsub.f32 %v980, %v1029
  %v1046 = vmul.f32 %v1030, 1.442695
  %v1047 = vpow.pop %v1046
  %v1048 = vmul.f32 %v1031, 1.442695
  %v1049 = vpow.pop %v1048
  %v1050 = vmul.f32 %v1032, 1.442695
  %v1051 = vpow.pop %v1050
  %v1052 = vmul.f32 %v1033, 1.442695
  %v1053 = vpow.pop %v1052
  %v1054 = vmul.f32 %v1034, 1.442695
  %v1055 = vpow.pop %v1054
  %v1056 = vmul.f32 %v1035, 1.442695
  %v1057 = vpow.pop %v1056
  %v1058 = vmul.f32 %v1036, 1.442695
  %v1059 = vpow.pop %v1058
  %v1060 = vmul.f32 %v1037, 1.442695
  %v1061 = vpow.pop %v1060
  %v1062 = vmul.f32 %v1038, 1.442695
  %v1063 = vpow.pop %v1062
  %v1064 = vmul.f32 %v1039, 1.442695
  %v1065 = vpow.pop %v1064
  %v1066 = vmul.f32 %v1040, 1.442695
  %v1067 = vpow.pop %v1066
  %v1068 = vmul.f32 %v1041, 1.442695
  %v1069 = vpow.pop %v1068
  %v1070 = vmul.f32 %v1042, 1.442695
  %v1071 = vpow.pop %v1070
  %v1072 = vmul.f32 %v1043, 1.442695
  %v1073 = vpow.pop %v1072
  %v1074 = vmul.f32 %v1044, 1.442695
  %v1075 = vpow.pop %v1074
  %v1076 = vmul.f32 %v1045, 1.442695
  %v1077 = vpow.pop %v1076
  %v1078 = vsel %vm981, %v1047, 0.0
  %1079 = vadd.xlane.f32.xlu0 %v1078
  %v1080 = vpop.xlane.xlu0 %1079
  %v1081 = vsel %vm981, %v1049, 0.0
  %1082 = vadd.xlane.f32.xlu0 %v1081
  %v1083 = vpop.xlane.xlu0 %1082
  %v1084 = vsel %vm981, %v1051, 0.0
  %1085 = vadd.xlane.f32.xlu0 %v1084
  %v1086 = vpop.xlane.xlu0 %1085
  %v1087 = vsel %vm981, %v1053, 0.0
  %1088 = vadd.xlane.f32.xlu0 %v1087
  %v1089 = vpop.xlane.xlu0 %1088
  %v1090 = vsel %vm981, %v1055, 0.0
  %1091 = vadd.xlane.f32.xlu0 %v1090
  %v1092 = vpop.xlane.xlu0 %1091
  %v1093 = vsel %vm981, %v1057, 0.0
  %1094 = vadd.xlane.f32.xlu0 %v1093
  %v1095 = vpop.xlane.xlu0 %1094
  %v1096 = vsel %vm981, %v1059, 0.0
  %1097 = vadd.xlane.f32.xlu0 %v1096
  %v1098 = vpop.xlane.xlu0 %1097
  %v1099 = vsel %vm981, %v1061, 0.0
  %1100 = vadd.xlane.f32.xlu0 %v1099
  %v1101 = vpop.xlane.xlu0 %1100
  %v1102 = vsel %vm981, %v1063, 0.0
  %1103 = vadd.xlane.f32.xlu0 %v1102
  %v1104 = vpop.xlane.xlu0 %1103
  %v1105 = vsel %vm981, %v1065, 0.0
  %1106 = vadd.xlane.f32.xlu0 %v1105
  %v1107 = vpop.xlane.xlu0 %1106
  %v1108 = vsel %vm981, %v1067, 0.0
  %1109 = vadd.xlane.f32.xlu0 %v1108
  %v1110 = vpop.xlane.xlu0 %1109
  %v1111 = vsel %vm981, %v1069, 0.0
  %1112 = vadd.xlane.f32.xlu0 %v1111
  %v1113 = vpop.xlane.xlu0 %1112
  %v1114 = vsel %vm981, %v1071, 0.0
  %1115 = vadd.xlane.f32.xlu0 %v1114
  %v1116 = vpop.xlane.xlu0 %1115
  %v1117 = vsel %vm981, %v1073, 0.0
  %1118 = vadd.xlane.f32.xlu0 %v1117
  %v1119 = vpop.xlane.xlu0 %1118
  %v1120 = vsel %vm981, %v1075, 0.0
  %1121 = vadd.xlane.f32.xlu0 %v1120
  %v1122 = vpop.xlane.xlu0 %1121
  %v1123 = vsel %vm981, %v1077, 0.0
  %1124 = vadd.xlane.f32.xlu0 %v1123
  %v1125 = vpop.xlane.xlu0 %1124
  %v1126 = vrcp.pop %v1080
  %v1127 = vrcp.pop %v1083
  %v1128 = vrcp.pop %v1086
  %v1129 = vrcp.pop %v1089
  %v1130 = vrcp.pop %v1092
  %v1131 = vrcp.pop %v1095
  %v1132 = vrcp.pop %v1098
  %v1133 = vrcp.pop %v1101
  %v1134 = vrcp.pop %v1104
  %v1135 = vrcp.pop %v1107
  %v1136 = vrcp.pop %v1110
  %v1137 = vrcp.pop %v1113
  %v1138 = vrcp.pop %v1116
  %v1139 = vrcp.pop %v1119
  %v1140 = vrcp.pop %v1122
  %v1141 = vrcp.pop %v1125
  %v1142 = vmul.f32 %v1047, %v1126
  %v1143 = vmul.f32 %v1049, %v1127
  %v1144 = vmul.f32 %v1051, %v1128
  %v1145 = vmul.f32 %v1053, %v1129
  %v1146 = vmul.f32 %v1055, %v1130
  %v1147 = vmul.f32 %v1057, %v1131
  %v1148 = vmul.f32 %v1059, %v1132
  %v1149 = vmul.f32 %v1061, %v1133
  %v1150 = vmul.f32 %v1063, %v1134
  %v1151 = vmul.f32 %v1065, %v1135
  %v1152 = vmul.f32 %v1067, %v1136
  %v1153 = vmul.f32 %v1069, %v1137
  %v1154 = vmul.f32 %v1071, %v1138
  %v1155 = vmul.f32 %v1073, %v1139
  %v1156 = vmul.f32 %v1075, %v1140
  %v1157 = vmul.f32 %v1077, %v1141
  %v1158 = vpack.c.bf16 %v1142, %v1142
  %v1159 = vpack.c.bf16 %v1143, %v1143
  %v1160 = vpack.c.bf16 %v1144, %v1144
  %v1161 = vpack.c.bf16 %v1145, %v1145
  %v1162 = vpack.c.bf16 %v1146, %v1146
  %v1163 = vpack.c.bf16 %v1147, %v1147
  %v1164 = vpack.c.bf16 %v1148, %v1148
  %v1165 = vpack.c.bf16 %v1149, %v1149
  %v1166 = vpack.c.bf16 %v1150, %v1150
  %v1167 = vpack.c.bf16 %v1151, %v1151
  %v1168 = vpack.c.bf16 %v1152, %v1152
  %v1169 = vpack.c.bf16 %v1153, %v1153
  %v1170 = vpack.c.bf16 %v1154, %v1154
  %v1171 = vpack.c.bf16 %v1155, %v1155
  %v1172 = vpack.c.bf16 %v1156, %v1156
  %v1173 = vpack.c.bf16 %v1157, %v1157
  %1174 = vrot.lane.b32.xlu0 %v164, 64
  %v1175 = vpop.permute.xlu0 %1174
  %vm1176 = vcmask 31744
  %v1178 = vsel %vm1176, %v1158, 0
  %vm1180 = vcmask 1041408
  %v1182 = vsel %vm1180, %v1175, 0
  %1184 = vmatprep.subr.bf16.mxu0 0
  %1185 = vmatpush1.bf16.msra.mxu0 %v1182
  %1186 = vmatprep.subr.bf16.mxu0 0
  %1187 = vmatpush1.bf16.msra.mxu0 0
  %1188 = vmatprep.subr.bf16.mxu0 0
  %1189 = vmatpush1.bf16.msra.mxu0 0
  %1190 = vmatprep.subr.bf16.mxu0 0
  %1191 = vmatpush1.bf16.msra.mxu0 0
  %1192 = vmatprep.subr.bf16.mxu0 0
  %1193 = vmatpush1.bf16.msra.mxu0 0
  %1194 = vmatprep.subr.bf16.mxu0 0
  %1195 = vmatpush1.bf16.msra.mxu0 0
  %1196 = vmatprep.subr.bf16.mxu0 0
  %1197 = vmatpush1.bf16.msra.mxu0 0
  %1198 = vmatprep.subr.bf16.mxu0 0
  %1199 = vmatpush1.bf16.msra.mxu0 0
  %1200 = vmatprep.subr.bf16.mxu0 0
  %1201 = vmatpush1.bf16.msra.mxu0 0
  %1202 = vmatprep.subr.bf16.mxu0 0
  %1203 = vmatpush1.bf16.msra.mxu0 0
  %1204 = vmatprep.subr.bf16.mxu0 0
  %1205 = vmatpush1.bf16.msra.mxu0 0
  %1206 = vmatprep.subr.bf16.mxu0 0
  %1207 = vmatpush1.bf16.msra.mxu0 0
  %1208 = vmatprep.subr.bf16.mxu0 0
  %1209 = vmatpush1.bf16.msra.mxu0 0
  %1210 = vmatprep.subr.bf16.mxu0 0
  %1211 = vmatpush1.bf16.msra.mxu0 0
  %1212 = vmatprep.subr.bf16.mxu0 0
  %1213 = vmatpush1.bf16.msra.mxu0 0
  %1214 = vmatprep.subr.bf16.mxu0 0
  %1215 = vmatpush1.bf16.msra.mxu0 0
  %1216 = vmatprep.mubr.bf16.mxu0 0
  %1217 = vmatmul.mubr.bf16.gmra.mrb[0].mxu0 %v1178
  %v1218 = vpop.f32.mrb[0].mxu0
  %v1219 = vadd.f32 0.0, %v1218
  %v1220 = vpop.f32.mrb[0].mxu0
  %v1221 = vpop.f32.mrb[0].mxu0
  %v1222 = vpop.f32.mrb[0].mxu0
  %1223 = vdwg.mxu0
  %1224 = vrot.lane.b32.xlu0 %v165, 64
  %v1225 = vpop.permute.xlu0 %1224
  %v1227 = vsel %vm1176, %v1159, 0
  %v1230 = vsel %vm1180, %v1225, 0
  %1232 = vmatprep.subr.bf16.mxu0 0
  %1233 = vmatpush1.bf16.msra.mxu0 %v1230
  %1234 = vmatprep.subr.bf16.mxu0 0
  %1235 = vmatpush1.bf16.msra.mxu0 0
  %1236 = vmatprep.subr.bf16.mxu0 0
  %1237 = vmatpush1.bf16.msra.mxu0 0
  %1238 = vmatprep.subr.bf16.mxu0 0
  %1239 = vmatpush1.bf16.msra.mxu0 0
  %1240 = vmatprep.subr.bf16.mxu0 0
  %1241 = vmatpush1.bf16.msra.mxu0 0
  %1242 = vmatprep.subr.bf16.mxu0 0
  %1243 = vmatpush1.bf16.msra.mxu0 0
  %1244 = vmatprep.subr.bf16.mxu0 0
  %1245 = vmatpush1.bf16.msra.mxu0 0
  %1246 = vmatprep.subr.bf16.mxu0 0
  %1247 = vmatpush1.bf16.msra.mxu0 0
  %1248 = vmatprep.subr.bf16.mxu0 0
  %1249 = vmatpush1.bf16.msra.mxu0 0
  %1250 = vmatprep.subr.bf16.mxu0 0
  %1251 = vmatpush1.bf16.msra.mxu0 0
  %1252 = vmatprep.subr.bf16.mxu0 0
  %1253 = vmatpush1.bf16.msra.mxu0 0
  %1254 = vmatprep.subr.bf16.mxu0 0
  %1255 = vmatpush1.bf16.msra.mxu0 0
  %1256 = vmatprep.subr.bf16.mxu0 0
  %1257 = vmatpush1.bf16.msra.mxu0 0
  %1258 = vmatprep.subr.bf16.mxu0 0
  %1259 = vmatpush1.bf16.msra.mxu0 0
  %1260 = vmatprep.subr.bf16.mxu0 0
  %1261 = vmatpush1.bf16.msra.mxu0 0
  %1262 = vmatprep.subr.bf16.mxu0 0
  %1263 = vmatpush1.bf16.msra.mxu0 0
  %1264 = vmatprep.mubr.bf16.mxu0 0
  %1265 = vmatmul.mubr.bf16.gmra.mrb[0].mxu0 %v1227
  %v1266 = vpop.f32.mrb[0].mxu0
  %v1267 = vadd.f32 0.0, %v1266
  %v1268 = vpop.f32.mrb[0].mxu0
  %v1269 = vpop.f32.mrb[0].mxu0
  %v1270 = vpop.f32.mrb[0].mxu0
  %1271 = vdwg.mxu0
  %1272 = vrot.lane.b32.xlu0 %v166, 64
  %v1273 = vpop.permute.xlu0 %1272
  %v1275 = vsel %vm1176, %v1160, 0
  %v1278 = vsel %vm1180, %v1273, 0
  %1280 = vmatprep.subr.bf16.mxu0 0
  %1281 = vmatpush1.bf16.msra.mxu0 %v1278
  %1282 = vmatprep.subr.bf16.mxu0 0
  %1283 = vmatpush1.bf16.msra.mxu0 0
  %1284 = vmatprep.subr.bf16.mxu0 0
  %1285 = vmatpush1.bf16.msra.mxu0 0
  %1286 = vmatprep.subr.bf16.mxu0 0
  %1287 = vmatpush1.bf16.msra.mxu0 0
  %1288 = vmatprep.subr.bf16.mxu0 0
  %1289 = vmatpush1.bf16.msra.mxu0 0
  %1290 = vmatprep.subr.bf16.mxu0 0
  %1291 = vmatpush1.bf16.msra.mxu0 0
  %1292 = vmatprep.subr.bf16.mxu0 0
  %1293 = vmatpush1.bf16.msra.mxu0 0
  %1294 = vmatprep.subr.bf16.mxu0 0
  %1295 = vmatpush1.bf16.msra.mxu0 0
  %1296 = vmatprep.subr.bf16.mxu0 0
  %1297 = vmatpush1.bf16.msra.mxu0 0
  %1298 = vmatprep.subr.bf16.mxu0 0
  %1299 = vmatpush1.bf16.msra.mxu0 0
  %1300 = vmatprep.subr.bf16.mxu0 0
  %1301 = vmatpush1.bf16.msra.mxu0 0
  %1302 = vmatprep.subr.bf16.mxu0 0
  %1303 = vmatpush1.bf16.msra.mxu0 0
  %1304 = vmatprep.subr.bf16.mxu0 0
  %1305 = vmatpush1.bf16.msra.mxu0 0
  %1306 = vmatprep.subr.bf16.mxu0 0
  %1307 = vmatpush1.bf16.msra.mxu0 0
  %1308 = vmatprep.subr.bf16.mxu0 0
  %1309 = vmatpush1.bf16.msra.mxu0 0
  %1310 = vmatprep.subr.bf16.mxu0 0
  %1311 = vmatpush1.bf16.msra.mxu0 0
  %1312 = vmatprep.mubr.bf16.mxu0 0
  %1313 = vmatmul.mubr.bf16.gmra.mrb[0].mxu0 %v1275
  %v1314 = vpop.f32.mrb[0].mxu0
  %v1315 = vadd.f32 0.0, %v1314
  %v1316 = vpop.f32.mrb[0].mxu0
  %v1317 = vpop.f32.mrb[0].mxu0
  %v1318 = vpop.f32.mrb[0].mxu0
  %1319 = vdwg.mxu0
  %1320 = vrot.lane.b32.xlu0 %v167, 64
  %v1321 = vpop.permute.xlu0 %1320
  %v1323 = vsel %vm1176, %v1161, 0
  %v1326 = vsel %vm1180, %v1321, 0
  %1328 = vmatprep.subr.bf16.mxu0 0
  %1329 = vmatpush1.bf16.msra.mxu0 %v1326
  %1330 = vmatprep.subr.bf16.mxu0 0
  %1331 = vmatpush1.bf16.msra.mxu0 0
  %1332 = vmatprep.subr.bf16.mxu0 0
  %1333 = vmatpush1.bf16.msra.mxu0 0
  %1334 = vmatprep.subr.bf16.mxu0 0
  %1335 = vmatpush1.bf16.msra.mxu0 0
  %1336 = vmatprep.subr.bf16.mxu0 0
  %1337 = vmatpush1.bf16.msra.mxu0 0
  %1338 = vmatprep.subr.bf16.mxu0 0
  %1339 = vmatpush1.bf16.msra.mxu0 0
  %1340 = vmatprep.subr.bf16.mxu0 0
  %1341 = vmatpush1.bf16.msra.mxu0 0
  %1342 = vmatprep.subr.bf16.mxu0 0
  %1343 = vmatpush1.bf16.msra.mxu0 0
  %1344 = vmatprep.subr.bf16.mxu0 0
  %1345 = vmatpush1.bf16.msra.mxu0 0
  %1346 = vmatprep.subr.bf16.mxu0 0
  %1347 = vmatpush1.bf16.msra.mxu0 0
  %1348 = vmatprep.subr.bf16.mxu0 0
  %1349 = vmatpush1.bf16.msra.mxu0 0
  %1350 = vmatprep.subr.bf16.mxu0 0
  %1351 = vmatpush1.bf16.msra.mxu0 0
  %1352 = vmatprep.subr.bf16.mxu0 0
  %1353 = vmatpush1.bf16.msra.mxu0 0
  %1354 = vmatprep.subr.bf16.mxu0 0
  %1355 = vmatpush1.bf16.msra.mxu0 0
  %1356 = vmatprep.subr.bf16.mxu0 0
  %1357 = vmatpush1.bf16.msra.mxu0 0
  %1358 = vmatprep.subr.bf16.mxu0 0
  %1359 = vmatpush1.bf16.msra.mxu0 0
  %1360 = vmatprep.mubr.bf16.mxu0 0
  %1361 = vmatmul.mubr.bf16.gmra.mrb[0].mxu0 %v1323
  %v1362 = vpop.f32.mrb[0].mxu0
  %v1363 = vadd.f32 0.0, %v1362
  %v1364 = vpop.f32.mrb[0].mxu0
  %v1365 = vpop.f32.mrb[0].mxu0
  %v1366 = vpop.f32.mrb[0].mxu0
  %1367 = vdwg.mxu0
  %1368 = vrot.lane.b32.xlu0 %v168, 64
  %v1369 = vpop.permute.xlu0 %1368
  %v1371 = vsel %vm1176, %v1162, 0
  %v1374 = vsel %vm1180, %v1369, 0
  %1376 = vmatprep.subr.bf16.mxu0 0
  %1377 = vmatpush1.bf16.msra.mxu0 %v1374
  %1378 = vmatprep.subr.bf16.mxu0 0
  %1379 = vmatpush1.bf16.msra.mxu0 0
  %1380 = vmatprep.subr.bf16.mxu0 0
  %1381 = vmatpush1.bf16.msra.mxu0 0
  %1382 = vmatprep.subr.bf16.mxu0 0
  %1383 = vmatpush1.bf16.msra.mxu0 0
  %1384 = vmatprep.subr.bf16.mxu0 0
  %1385 = vmatpush1.bf16.msra.mxu0 0
  %1386 = vmatprep.subr.bf16.mxu0 0
  %1387 = vmatpush1.bf16.msra.mxu0 0
  %1388 = vmatprep.subr.bf16.mxu0 0
  %1389 = vmatpush1.bf16.msra.mxu0 0
  %1390 = vmatprep.subr.bf16.mxu0 0
  %1391 = vmatpush1.bf16.msra.mxu0 0
  %1392 = vmatprep.subr.bf16.mxu0 0
  %1393 = vmatpush1.bf16.msra.mxu0 0
  %1394 = vmatprep.subr.bf16.mxu0 0
  %1395 = vmatpush1.bf16.msra.mxu0 0
  %1396 = vmatprep.subr.bf16.mxu0 0
  %1397 = vmatpush1.bf16.msra.mxu0 0
  %1398 = vmatprep.subr.bf16.mxu0 0
  %1399 = vmatpush1.bf16.msra.mxu0 0
  %1400 = vmatprep.subr.bf16.mxu0 0
  %1401 = vmatpush1.bf16.msra.mxu0 0
  %1402 = vmatprep.subr.bf16.mxu0 0
  %1403 = vmatpush1.bf16.msra.mxu0 0
  %1404 = vmatprep.subr.bf16.mxu0 0
  %1405 = vmatpush1.bf16.msra.mxu0 0
  %1406 = vmatprep.subr.bf16.mxu0 0
  %1407 = vmatpush1.bf16.msra.mxu0 0
  %1408 = vmatprep.mubr.bf16.mxu0 0
  %1409 = vmatmul.mubr.bf16.gmra.mrb[0].mxu0 %v1371
  %v1410 = vpop.f32.mrb[0].mxu0
  %v1411 = vadd.f32 0.0, %v1410
  %v1412 = vpop.f32.mrb[0].mxu0
  %v1413 = vpop.f32.mrb[0].mxu0
  %v1414 = vpop.f32.mrb[0].mxu0
  %1415 = vdwg.mxu0
  %1416 = vrot.lane.b32.xlu0 %v169, 64
  %v1417 = vpop.permute.xlu0 %1416
  %v1419 = vsel %vm1176, %v1163, 0
  %v1422 = vsel %vm1180, %v1417, 0
  %1424 = vmatprep.subr.bf16.mxu0 0
  %1425 = vmatpush1.bf16.msra.mxu0 %v1422
  %1426 = vmatprep.subr.bf16.mxu0 0
  %1427 = vmatpush1.bf16.msra.mxu0 0
  %1428 = vmatprep.subr.bf16.mxu0 0
  %1429 = vmatpush1.bf16.msra.mxu0 0
  %1430 = vmatprep.subr.bf16.mxu0 0
  %1431 = vmatpush1.bf16.msra.mxu0 0
  %1432 = vmatprep.subr.bf16.mxu0 0
  %1433 = vmatpush1.bf16.msra.mxu0 0
  %1434 = vmatprep.subr.bf16.mxu0 0
  %1435 = vmatpush1.bf16.msra.mxu0 0
  %1436 = vmatprep.subr.bf16.mxu0 0
  %1437 = vmatpush1.bf16.msra.mxu0 0
  %1438 = vmatprep.subr.bf16.mxu0 0
  %1439 = vmatpush1.bf16.msra.mxu0 0
  %1440 = vmatprep.subr.bf16.mxu0 0
  %1441 = vmatpush1.bf16.msra.mxu0 0
  %1442 = vmatprep.subr.bf16.mxu0 0
  %1443 = vmatpush1.bf16.msra.mxu0 0
  %1444 = vmatprep.subr.bf16.mxu0 0
  %1445 = vmatpush1.bf16.msra.mxu0 0
  %1446 = vmatprep.subr.bf16.mxu0 0
  %1447 = vmatpush1.bf16.msra.mxu0 0
  %1448 = vmatprep.subr.bf16.mxu0 0
  %1449 = vmatpush1.bf16.msra.mxu0 0
  %1450 = vmatprep.subr.bf16.mxu0 0
  %1451 = vmatpush1.bf16.msra.mxu0 0
  %1452 = vmatprep.subr.bf16.mxu0 0
  %1453 = vmatpush1.bf16.msra.mxu0 0
  %1454 = vmatprep.subr.bf16.mxu0 0
  %1455 = vmatpush1.bf16.msra.mxu0 0
  %1456 = vmatprep.mubr.bf16.mxu0 0
  %1457 = vmatmul.mubr.bf16.gmra.mrb[0].mxu0 %v1419
  %v1458 = vpop.f32.mrb[0].mxu0
  %v1459 = vadd.f32 0.0, %v1458
  %v1460 = vpop.f32.mrb[0].mxu0
  %v1461 = vpop.f32.mrb[0].mxu0
  %v1462 = vpop.f32.mrb[0].mxu0
  %1463 = vdwg.mxu0
  %1464 = vrot.lane.b32.xlu0 %v170, 64
  %v1465 = vpop.permute.xlu0 %1464
  %v1467 = vsel %vm1176, %v1164, 0
  %v1470 = vsel %vm1180, %v1465, 0
  %1472 = vmatprep.subr.bf16.mxu0 0
  %1473 = vmatpush1.bf16.msra.mxu0 %v1470
  %1474 = vmatprep.subr.bf16.mxu0 0
  %1475 = vmatpush1.bf16.msra.mxu0 0
  %1476 = vmatprep.subr.bf16.mxu0 0
  %1477 = vmatpush1.bf16.msra.mxu0 0
  %1478 = vmatprep.subr.bf16.mxu0 0
  %1479 = vmatpush1.bf16.msra.mxu0 0
  %1480 = vmatprep.subr.bf16.mxu0 0
  %1481 = vmatpush1.bf16.msra.mxu0 0
  %1482 = vmatprep.subr.bf16.mxu0 0
  %1483 = vmatpush1.bf16.msra.mxu0 0
  %1484 = vmatprep.subr.bf16.mxu0 0
  %1485 = vmatpush1.bf16.msra.mxu0 0
  %1486 = vmatprep.subr.bf16.mxu0 0
  %1487 = vmatpush1.bf16.msra.mxu0 0
  %1488 = vmatprep.subr.bf16.mxu0 0
  %1489 = vmatpush1.bf16.msra.mxu0 0
  %1490 = vmatprep.subr.bf16.mxu0 0
  %1491 = vmatpush1.bf16.msra.mxu0 0
  %1492 = vmatprep.subr.bf16.mxu0 0
  %1493 = vmatpush1.bf16.msra.mxu0 0
  %1494 = vmatprep.subr.bf16.mxu0 0
  %1495 = vmatpush1.bf16.msra.mxu0 0
  %1496 = vmatprep.subr.bf16.mxu0 0
  %1497 = vmatpush1.bf16.msra.mxu0 0
  %1498 = vmatprep.subr.bf16.mxu0 0
  %1499 = vmatpush1.bf16.msra.mxu0 0
  %1500 = vmatprep.subr.bf16.mxu0 0
  %1501 = vmatpush1.bf16.msra.mxu0 0
  %1502 = vmatprep.subr.bf16.mxu0 0
  %1503 = vmatpush1.bf16.msra.mxu0 0
  %1504 = vmatprep.mubr.bf16.mxu0 0
  %1505 = vmatmul.mubr.bf16.gmra.mrb[0].mxu0 %v1467
  %v1506 = vpop.f32.mrb[0].mxu0
  %v1507 = vadd.f32 0.0, %v1506
  %v1508 = vpop.f32.mrb[0].mxu0
  %v1509 = vpop.f32.mrb[0].mxu0
  %v1510 = vpop.f32.mrb[0].mxu0
  %1511 = vdwg.mxu0
  %1512 = vrot.lane.b32.xlu0 %v171, 64
  %v1513 = vpop.permute.xlu0 %1512
  %v1515 = vsel %vm1176, %v1165, 0
  %v1518 = vsel %vm1180, %v1513, 0
  %1520 = vmatprep.subr.bf16.mxu0 0
  %1521 = vmatpush1.bf16.msra.mxu0 %v1518
  %1522 = vmatprep.subr.bf16.mxu0 0
  %1523 = vmatpush1.bf16.msra.mxu0 0
  %1524 = vmatprep.subr.bf16.mxu0 0
  %1525 = vmatpush1.bf16.msra.mxu0 0
  %1526 = vmatprep.subr.bf16.mxu0 0
  %1527 = vmatpush1.bf16.msra.mxu0 0
  %1528 = vmatprep.subr.bf16.mxu0 0
  %1529 = vmatpush1.bf16.msra.mxu0 0
  %1530 = vmatprep.subr.bf16.mxu0 0
  %1531 = vmatpush1.bf16.msra.mxu0 0
  %1532 = vmatprep.subr.bf16.mxu0 0
  %1533 = vmatpush1.bf16.msra.mxu0 0
  %1534 = vmatprep.subr.bf16.mxu0 0
  %1535 = vmatpush1.bf16.msra.mxu0 0
  %1536 = vmatprep.subr.bf16.mxu0 0
  %1537 = vmatpush1.bf16.msra.mxu0 0
  %1538 = vmatprep.subr.bf16.mxu0 0
  %1539 = vmatpush1.bf16.msra.mxu0 0
  %1540 = vmatprep.subr.bf16.mxu0 0
  %1541 = vmatpush1.bf16.msra.mxu0 0
  %1542 = vmatprep.subr.bf16.mxu0 0
  %1543 = vmatpush1.bf16.msra.mxu0 0
  %1544 = vmatprep.subr.bf16.mxu0 0
  %1545 = vmatpush1.bf16.msra.mxu0 0
  %1546 = vmatprep.subr.bf16.mxu0 0
  %1547 = vmatpush1.bf16.msra.mxu0 0
  %1548 = vmatprep.subr.bf16.mxu0 0
  %1549 = vmatpush1.bf16.msra.mxu0 0
  %1550 = vmatprep.subr.bf16.mxu0 0
  %1551 = vmatpush1.bf16.msra.mxu0 0
  %1552 = vmatprep.mubr.bf16.mxu0 0
  %1553 = vmatmul.mubr.bf16.gmra.mrb[0].mxu0 %v1515
  %v1554 = vpop.f32.mrb[0].mxu0
  %v1555 = vadd.f32 0.0, %v1554
  %v1556 = vpop.f32.mrb[0].mxu0
  %v1557 = vpop.f32.mrb[0].mxu0
  %v1558 = vpop.f32.mrb[0].mxu0
  %1559 = vdwg.mxu0
  %1560 = vrot.lane.b32.xlu0 %v172, 64
  %v1561 = vpop.permute.xlu0 %1560
  %v1563 = vsel %vm1176, %v1166, 0
  %v1566 = vsel %vm1180, %v1561, 0
  %1568 = vmatprep.subr.bf16.mxu0 0
  %1569 = vmatpush1.bf16.msra.mxu0 %v1566
  %1570 = vmatprep.subr.bf16.mxu0 0
  %1571 = vmatpush1.bf16.msra.mxu0 0
  %1572 = vmatprep.subr.bf16.mxu0 0
  %1573 = vmatpush1.bf16.msra.mxu0 0
  %1574 = vmatprep.subr.bf16.mxu0 0
  %1575 = vmatpush1.bf16.msra.mxu0 0
  %1576 = vmatprep.subr.bf16.mxu0 0
  %1577 = vmatpush1.bf16.msra.mxu0 0
  %1578 = vmatprep.subr.bf16.mxu0 0
  %1579 = vmatpush1.bf16.msra.mxu0 0
  %1580 = vmatprep.subr.bf16.mxu0 0
  %1581 = vmatpush1.bf16.msra.mxu0 0
  %1582 = vmatprep.subr.bf16.mxu0 0
  %1583 = vmatpush1.bf16.msra.mxu0 0
  %1584 = vmatprep.subr.bf16.mxu0 0
  %1585 = vmatpush1.bf16.msra.mxu0 0
  %1586 = vmatprep.subr.bf16.mxu0 0
  %1587 = vmatpush1.bf16.msra.mxu0 0
  %1588 = vmatprep.subr.bf16.mxu0 0
  %1589 = vmatpush1.bf16.msra.mxu0 0
  %1590 = vmatprep.subr.bf16.mxu0 0
  %1591 = vmatpush1.bf16.msra.mxu0 0
  %1592 = vmatprep.subr.bf16.mxu0 0
  %1593 = vmatpush1.bf16.msra.mxu0 0
  %1594 = vmatprep.subr.bf16.mxu0 0
  %1595 = vmatpush1.bf16.msra.mxu0 0
  %1596 = vmatprep.subr.bf16.mxu0 0
  %1597 = vmatpush1.bf16.msra.mxu0 0
  %1598 = vmatprep.subr.bf16.mxu0 0
  %1599 = vmatpush1.bf16.msra.mxu0 0
  %1600 = vmatprep.mubr.bf16.mxu0 0
  %1601 = vmatmul.mubr.bf16.gmra.mrb[0].mxu0 %v1563
  %v1602 = vpop.f32.mrb[0].mxu0
  %v1603 = vadd.f32 0.0, %v1602
  %v1604 = vpop.f32.mrb[0].mxu0
  %v1605 = vpop.f32.mrb[0].mxu0
  %v1606 = vpop.f32.mrb[0].mxu0
  %1607 = vdwg.mxu0
  %1608 = vrot.lane.b32.xlu0 %v173, 64
  %v1609 = vpop.permute.xlu0 %1608
  %v1611 = vsel %vm1176, %v1167, 0
  %v1614 = vsel %vm1180, %v1609, 0
  %1616 = vmatprep.subr.bf16.mxu0 0
  %1617 = vmatpush1.bf16.msra.mxu0 %v1614
  %1618 = vmatprep.subr.bf16.mxu0 0
  %1619 = vmatpush1.bf16.msra.mxu0 0
  %1620 = vmatprep.subr.bf16.mxu0 0
  %1621 = vmatpush1.bf16.msra.mxu0 0
  %1622 = vmatprep.subr.bf16.mxu0 0
  %1623 = vmatpush1.bf16.msra.mxu0 0
  %1624 = vmatprep.subr.bf16.mxu0 0
  %1625 = vmatpush1.bf16.msra.mxu0 0
  %1626 = vmatprep.subr.bf16.mxu0 0
  %1627 = vmatpush1.bf16.msra.mxu0 0
  %1628 = vmatprep.subr.bf16.mxu0 0
  %1629 = vmatpush1.bf16.msra.mxu0 0
  %1630 = vmatprep.subr.bf16.mxu0 0
  %1631 = vmatpush1.bf16.msra.mxu0 0
  %1632 = vmatprep.subr.bf16.mxu0 0
  %1633 = vmatpush1.bf16.msra.mxu0 0
  %1634 = vmatprep.subr.bf16.mxu0 0
  %1635 = vmatpush1.bf16.msra.mxu0 0
  %1636 = vmatprep.subr.bf16.mxu0 0
  %1637 = vmatpush1.bf16.msra.mxu0 0
  %1638 = vmatprep.subr.bf16.mxu0 0
  %1639 = vmatpush1.bf16.msra.mxu0 0
  %1640 = vmatprep.subr.bf16.mxu0 0
  %1641 = vmatpush1.bf16.msra.mxu0 0
  %1642 = vmatprep.subr.bf16.mxu0 0
  %1643 = vmatpush1.bf16.msra.mxu0 0
  %1644 = vmatprep.subr.bf16.mxu0 0
  %1645 = vmatpush1.bf16.msra.mxu0 0
  %1646 = vmatprep.subr.bf16.mxu0 0
  %1647 = vmatpush1.bf16.msra.mxu0 0
  %1648 = vmatprep.mubr.bf16.mxu0 0
  %1649 = vmatmul.mubr.bf16.gmra.mrb[0].mxu0 %v1611
  %v1650 = vpop.f32.mrb[0].mxu0
  %v1651 = vadd.f32 0.0, %v1650
  %v1652 = vpop.f32.mrb[0].mxu0
  %v1653 = vpop.f32.mrb[0].mxu0
  %v1654 = vpop.f32.mrb[0].mxu0
  %1655 = vdwg.mxu0
  %1656 = vrot.lane.b32.xlu0 %v174, 64
  %v1657 = vpop.permute.xlu0 %1656
  %v1659 = vsel %vm1176, %v1168, 0
  %v1662 = vsel %vm1180, %v1657, 0
  %1664 = vmatprep.subr.bf16.mxu0 0
  %1665 = vmatpush1.bf16.msra.mxu0 %v1662
  %1666 = vmatprep.subr.bf16.mxu0 0
  %1667 = vmatpush1.bf16.msra.mxu0 0
  %1668 = vmatprep.subr.bf16.mxu0 0
  %1669 = vmatpush1.bf16.msra.mxu0 0
  %1670 = vmatprep.subr.bf16.mxu0 0
  %1671 = vmatpush1.bf16.msra.mxu0 0
  %1672 = vmatprep.subr.bf16.mxu0 0
  %1673 = vmatpush1.bf16.msra.mxu0 0
  %1674 = vmatprep.subr.bf16.mxu0 0
  %1675 = vmatpush1.bf16.msra.mxu0 0
  %1676 = vmatprep.subr.bf16.mxu0 0
  %1677 = vmatpush1.bf16.msra.mxu0 0
  %1678 = vmatprep.subr.bf16.mxu0 0
  %1679 = vmatpush1.bf16.msra.mxu0 0
  %1680 = vmatprep.subr.bf16.mxu0 0
  %1681 = vmatpush1.bf16.msra.mxu0 0
  %1682 = vmatprep.subr.bf16.mxu0 0
  %1683 = vmatpush1.bf16.msra.mxu0 0
  %1684 = vmatprep.subr.bf16.mxu0 0
  %1685 = vmatpush1.bf16.msra.mxu0 0
  %1686 = vmatprep.subr.bf16.mxu0 0
  %1687 = vmatpush1.bf16.msra.mxu0 0
  %1688 = vmatprep.subr.bf16.mxu0 0
  %1689 = vmatpush1.bf16.msra.mxu0 0
  %1690 = vmatprep.subr.bf16.mxu0 0
  %1691 = vmatpush1.bf16.msra.mxu0 0
  %1692 = vmatprep.subr.bf16.mxu0 0
  %1693 = vmatpush1.bf16.msra.mxu0 0
  %1694 = vmatprep.subr.bf16.mxu0 0
  %1695 = vmatpush1.bf16.msra.mxu0 0
  %1696 = vmatprep.mubr.bf16.mxu0 0
  %1697 = vmatmul.mubr.bf16.gmra.mrb[0].mxu0 %v1659
  %v1698 = vpop.f32.mrb[0].mxu0
  %v1699 = vadd.f32 0.0, %v1698
  %v1700 = vpop.f32.mrb[0].mxu0
  %v1701 = vpop.f32.mrb[0].mxu0
  %v1702 = vpop.f32.mrb[0].mxu0
  %1703 = vdwg.mxu0
  %1704 = vrot.lane.b32.xlu0 %v175, 64
  %v1705 = vpop.permute.xlu0 %1704
  %v1707 = vsel %vm1176, %v1169, 0
  %v1710 = vsel %vm1180, %v1705, 0
  %1712 = vmatprep.subr.bf16.mxu0 0
  %1713 = vmatpush1.bf16.msra.mxu0 %v1710
  %1714 = vmatprep.subr.bf16.mxu0 0
  %1715 = vmatpush1.bf16.msra.mxu0 0
  %1716 = vmatprep.subr.bf16.mxu0 0
  %1717 = vmatpush1.bf16.msra.mxu0 0
  %1718 = vmatprep.subr.bf16.mxu0 0
  %1719 = vmatpush1.bf16.msra.mxu0 0
  %1720 = vmatprep.subr.bf16.mxu0 0
  %1721 = vmatpush1.bf16.msra.mxu0 0
  %1722 = vmatprep.subr.bf16.mxu0 0
  %1723 = vmatpush1.bf16.msra.mxu0 0
  %1724 = vmatprep.subr.bf16.mxu0 0
  %1725 = vmatpush1.bf16.msra.mxu0 0
  %1726 = vmatprep.subr.bf16.mxu0 0
  %1727 = vmatpush1.bf16.msra.mxu0 0
  %1728 = vmatprep.subr.bf16.mxu0 0
  %1729 = vmatpush1.bf16.msra.mxu0 0
  %1730 = vmatprep.subr.bf16.mxu0 0
  %1731 = vmatpush1.bf16.msra.mxu0 0
  %1732 = vmatprep.subr.bf16.mxu0 0
  %1733 = vmatpush1.bf16.msra.mxu0 0
  %1734 = vmatprep.subr.bf16.mxu0 0
  %1735 = vmatpush1.bf16.msra.mxu0 0
  %1736 = vmatprep.subr.bf16.mxu0 0
  %1737 = vmatpush1.bf16.msra.mxu0 0
  %1738 = vmatprep.subr.bf16.mxu0 0
  %1739 = vmatpush1.bf16.msra.mxu0 0
  %1740 = vmatprep.subr.bf16.mxu0 0
  %1741 = vmatpush1.bf16.msra.mxu0 0
  %1742 = vmatprep.subr.bf16.mxu0 0
  %1743 = vmatpush1.bf16.msra.mxu0 0
  %1744 = vmatprep.mubr.bf16.mxu0 0
  %1745 = vmatmul.mubr.bf16.gmra.mrb[0].mxu0 %v1707
  %v1746 = vpop.f32.mrb[0].mxu0
  %v1747 = vadd.f32 0.0, %v1746
  %v1748 = vpop.f32.mrb[0].mxu0
  %v1749 = vpop.f32.mrb[0].mxu0
  %v1750 = vpop.f32.mrb[0].mxu0
  %1751 = vdwg.mxu0
  %1752 = vrot.lane.b32.xlu0 %v176, 64
  %v1753 = vpop.permute.xlu0 %1752
  %v1755 = vsel %vm1176, %v1170, 0
  %v1758 = vsel %vm1180, %v1753, 0
  %1760 = vmatprep.subr.bf16.mxu0 0
  %1761 = vmatpush1.bf16.msra.mxu0 %v1758
  %1762 = vmatprep.subr.bf16.mxu0 0
  %1763 = vmatpush1.bf16.msra.mxu0 0
  %1764 = vmatprep.subr.bf16.mxu0 0
  %1765 = vmatpush1.bf16.msra.mxu0 0
  %1766 = vmatprep.subr.bf16.mxu0 0
  %1767 = vmatpush1.bf16.msra.mxu0 0
  %1768 = vmatprep.subr.bf16.mxu0 0
  %1769 = vmatpush1.bf16.msra.mxu0 0
  %1770 = vmatprep.subr.bf16.mxu0 0
  %1771 = vmatpush1.bf16.msra.mxu0 0
  %1772 = vmatprep.subr.bf16.mxu0 0
  %1773 = vmatpush1.bf16.msra.mxu0 0
  %1774 = vmatprep.subr.bf16.mxu0 0
  %1775 = vmatpush1.bf16.msra.mxu0 0
  %1776 = vmatprep.subr.bf16.mxu0 0
  %1777 = vmatpush1.bf16.msra.mxu0 0
  %1778 = vmatprep.subr.bf16.mxu0 0
  %1779 = vmatpush1.bf16.msra.mxu0 0
  %1780 = vmatprep.subr.bf16.mxu0 0
  %1781 = vmatpush1.bf16.msra.mxu0 0
  %1782 = vmatprep.subr.bf16.mxu0 0
  %1783 = vmatpush1.bf16.msra.mxu0 0
  %1784 = vmatprep.subr.bf16.mxu0 0
  %1785 = vmatpush1.bf16.msra.mxu0 0
  %1786 = vmatprep.subr.bf16.mxu0 0
  %1787 = vmatpush1.bf16.msra.mxu0 0
  %1788 = vmatprep.subr.bf16.mxu0 0
  %1789 = vmatpush1.bf16.msra.mxu0 0
  %1790 = vmatprep.subr.bf16.mxu0 0
  %1791 = vmatpush1.bf16.msra.mxu0 0
  %1792 = vmatprep.mubr.bf16.mxu0 0
  %1793 = vmatmul.mubr.bf16.gmra.mrb[0].mxu0 %v1755
  %v1794 = vpop.f32.mrb[0].mxu0
  %v1795 = vadd.f32 0.0, %v1794
  %v1796 = vpop.f32.mrb[0].mxu0
  %v1797 = vpop.f32.mrb[0].mxu0
  %v1798 = vpop.f32.mrb[0].mxu0
  %1799 = vdwg.mxu0
  %1800 = vrot.lane.b32.xlu0 %v177, 64
  %v1801 = vpop.permute.xlu0 %1800
  %v1803 = vsel %vm1176, %v1171, 0
  %v1806 = vsel %vm1180, %v1801, 0
  %1808 = vmatprep.subr.bf16.mxu0 0
  %1809 = vmatpush1.bf16.msra.mxu0 %v1806
  %1810 = vmatprep.subr.bf16.mxu0 0
  %1811 = vmatpush1.bf16.msra.mxu0 0
  %1812 = vmatprep.subr.bf16.mxu0 0
  %1813 = vmatpush1.bf16.msra.mxu0 0
  %1814 = vmatprep.subr.bf16.mxu0 0
  %1815 = vmatpush1.bf16.msra.mxu0 0
  %1816 = vmatprep.subr.bf16.mxu0 0
  %1817 = vmatpush1.bf16.msra.mxu0 0
  %1818 = vmatprep.subr.bf16.mxu0 0
  %1819 = vmatpush1.bf16.msra.mxu0 0
  %1820 = vmatprep.subr.bf16.mxu0 0
  %1821 = vmatpush1.bf16.msra.mxu0 0
  %1822 = vmatprep.subr.bf16.mxu0 0
  %1823 = vmatpush1.bf16.msra.mxu0 0
  %1824 = vmatprep.subr.bf16.mxu0 0
  %1825 = vmatpush1.bf16.msra.mxu0 0
  %1826 = vmatprep.subr.bf16.mxu0 0
  %1827 = vmatpush1.bf16.msra.mxu0 0
  %1828 = vmatprep.subr.bf16.mxu0 0
  %1829 = vmatpush1.bf16.msra.mxu0 0
  %1830 = vmatprep.subr.bf16.mxu0 0
  %1831 = vmatpush1.bf16.msra.mxu0 0
  %1832 = vmatprep.subr.bf16.mxu0 0
  %1833 = vmatpush1.bf16.msra.mxu0 0
  %1834 = vmatprep.subr.bf16.mxu0 0
  %1835 = vmatpush1.bf16.msra.mxu0 0
  %1836 = vmatprep.subr.bf16.mxu0 0
  %1837 = vmatpush1.bf16.msra.mxu0 0
  %1838 = vmatprep.subr.bf16.mxu0 0
  %1839 = vmatpush1.bf16.msra.mxu0 0
  %1840 = vmatprep.mubr.bf16.mxu0 0
  %1841 = vmatmul.mubr.bf16.gmra.mrb[0].mxu0 %v1803
  %v1842 = vpop.f32.mrb[0].mxu0
  %v1843 = vadd.f32 0.0, %v1842
  %v1844 = vpop.f32.mrb[0].mxu0
  %v1845 = vpop.f32.mrb[0].mxu0
  %v1846 = vpop.f32.mrb[0].mxu0
  %1847 = vdwg.mxu0
  %1848 = vrot.lane.b32.xlu0 %v178, 64
  %v1849 = vpop.permute.xlu0 %1848
  %v1851 = vsel %vm1176, %v1172, 0
  %v1854 = vsel %vm1180, %v1849, 0
  %1856 = vmatprep.subr.bf16.mxu0 0
  %1857 = vmatpush1.bf16.msra.mxu0 %v1854
  %1858 = vmatprep.subr.bf16.mxu0 0
  %1859 = vmatpush1.bf16.msra.mxu0 0
  %1860 = vmatprep.subr.bf16.mxu0 0
  %1861 = vmatpush1.bf16.msra.mxu0 0
  %1862 = vmatprep.subr.bf16.mxu0 0
  %1863 = vmatpush1.bf16.msra.mxu0 0
  %1864 = vmatprep.subr.bf16.mxu0 0
  %1865 = vmatpush1.bf16.msra.mxu0 0
  %1866 = vmatprep.subr.bf16.mxu0 0
  %1867 = vmatpush1.bf16.msra.mxu0 0
  %1868 = vmatprep.subr.bf16.mxu0 0
  %1869 = vmatpush1.bf16.msra.mxu0 0
  %1870 = vmatprep.subr.bf16.mxu0 0
  %1871 = vmatpush1.bf16.msra.mxu0 0
  %1872 = vmatprep.subr.bf16.mxu0 0
  %1873 = vmatpush1.bf16.msra.mxu0 0
  %1874 = vmatprep.subr.bf16.mxu0 0
  %1875 = vmatpush1.bf16.msra.mxu0 0
  %1876 = vmatprep.subr.bf16.mxu0 0
  %1877 = vmatpush1.bf16.msra.mxu0 0
  %1878 = vmatprep.subr.bf16.mxu0 0
  %1879 = vmatpush1.bf16.msra.mxu0 0
  %1880 = vmatprep.subr.bf16.mxu0 0
  %1881 = vmatpush1.bf16.msra.mxu0 0
  %1882 = vmatprep.subr.bf16.mxu0 0
  %1883 = vmatpush1.bf16.msra.mxu0 0
  %1884 = vmatprep.subr.bf16.mxu0 0
  %1885 = vmatpush1.bf16.msra.mxu0 0
  %1886 = vmatprep.subr.bf16.mxu0 0
  %1887 = vmatpush1.bf16.msra.mxu0 0
  %1888 = vmatprep.mubr.bf16.mxu0 0
  %1889 = vmatmul.mubr.bf16.gmra.mrb[0].mxu0 %v1851
  %v1890 = vpop.f32.mrb[0].mxu0
  %v1891 = vadd.f32 0.0, %v1890
  %v1892 = vpop.f32.mrb[0].mxu0
  %v1893 = vpop.f32.mrb[0].mxu0
  %v1894 = vpop.f32.mrb[0].mxu0
  %1895 = vdwg.mxu0
  %1896 = vrot.lane.b32.xlu0 %v179, 64
  %v1897 = vpop.permute.xlu0 %1896
  %v1899 = vsel %vm1176, %v1173, 0
  %v1902 = vsel %vm1180, %v1897, 0
  %1904 = vmatprep.subr.bf16.mxu0 0
  %1905 = vmatpush1.bf16.msra.mxu0 %v1902
  %1906 = vmatprep.subr.bf16.mxu0 0
  %1907 = vmatpush1.bf16.msra.mxu0 0
  %1908 = vmatprep.subr.bf16.mxu0 0
  %1909 = vmatpush1.bf16.msra.mxu0 0
  %1910 = vmatprep.subr.bf16.mxu0 0
  %1911 = vmatpush1.bf16.msra.mxu0 0
  %1912 = vmatprep.subr.bf16.mxu0 0
  %1913 = vmatpush1.bf16.msra.mxu0 0
  %1914 = vmatprep.subr.bf16.mxu0 0
  %1915 = vmatpush1.bf16.msra.mxu0 0
  %1916 = vmatprep.subr.bf16.mxu0 0
  %1917 = vmatpush1.bf16.msra.mxu0 0
  %1918 = vmatprep.subr.bf16.mxu0 0
  %1919 = vmatpush1.bf16.msra.mxu0 0
  %1920 = vmatprep.subr.bf16.mxu0 0
  %1921 = vmatpush1.bf16.msra.mxu0 0
  %1922 = vmatprep.subr.bf16.mxu0 0
  %1923 = vmatpush1.bf16.msra.mxu0 0
  %1924 = vmatprep.subr.bf16.mxu0 0
  %1925 = vmatpush1.bf16.msra.mxu0 0
  %1926 = vmatprep.subr.bf16.mxu0 0
  %1927 = vmatpush1.bf16.msra.mxu0 0
  %1928 = vmatprep.subr.bf16.mxu0 0
  %1929 = vmatpush1.bf16.msra.mxu0 0
  %1930 = vmatprep.subr.bf16.mxu0 0
  %1931 = vmatpush1.bf16.msra.mxu0 0
  %1932 = vmatprep.subr.bf16.mxu0 0
  %1933 = vmatpush1.bf16.msra.mxu0 0
  %1934 = vmatprep.subr.bf16.mxu0 0
  %1935 = vmatpush1.bf16.msra.mxu0 0
  %1936 = vmatprep.mubr.bf16.mxu0 0
  %1937 = vmatmul.mubr.bf16.gmra.mrb[0].mxu0 %v1899
  %v1938 = vpop.f32.mrb[0].mxu0
  %v1939 = vadd.f32 0.0, %v1938
  %v1940 = vpop.f32.mrb[0].mxu0
  %v1941 = vpop.f32.mrb[0].mxu0
  %v1942 = vpop.f32.mrb[0].mxu0
  %1943 = vdwg.mxu0
  %1944 = vrot.lane.b32.xlu0 %v164, 120
  %v1945 = vpop.permute.xlu0 %1944
  %1946 = vrot.lane.b32.xlu0 %v164, 88
  %v1947 = vpop.permute.xlu0 %1946
  %v1949 = vsel %vm183, %v1945, 0
  %v1952 = vsel %vm183, %v1947, 0
  %1954 = vmatprep.subr.bf16.mxu0 0
  %1955 = vmatpush1.bf16.xpose.msra.mxu0 %v1952
  %1956 = vmatprep.subr.bf16.mxu0 0
  %1957 = vmatpush1.bf16.xpose.msra.mxu0 0
  %1958 = vmatprep.subr.bf16.mxu0 0
  %1959 = vmatpush1.bf16.xpose.msra.mxu0 0
  %1960 = vmatprep.subr.bf16.mxu0 0
  %1961 = vmatpush1.bf16.xpose.msra.mxu0 0
  %1962 = vmatprep.subr.bf16.mxu0 0
  %1963 = vmatpush1.bf16.xpose.msra.mxu0 0
  %1964 = vmatprep.subr.bf16.mxu0 0
  %1965 = vmatpush1.bf16.xpose.msra.mxu0 0
  %1966 = vmatprep.subr.bf16.mxu0 0
  %1967 = vmatpush1.bf16.xpose.msra.mxu0 0
  %1968 = vmatprep.subr.bf16.mxu0 0
  %1969 = vmatpush1.bf16.xpose.msra.mxu0 0
  %1970 = vmatprep.subr.bf16.mxu0 0
  %1971 = vmatpush1.bf16.xpose.msra.mxu0 0
  %1972 = vmatprep.subr.bf16.mxu0 0
  %1973 = vmatpush1.bf16.xpose.msra.mxu0 0
  %1974 = vmatprep.subr.bf16.mxu0 0
  %1975 = vmatpush1.bf16.xpose.msra.mxu0 0
  %1976 = vmatprep.subr.bf16.mxu0 0
  %1977 = vmatpush1.bf16.xpose.msra.mxu0 0
  %1978 = vmatprep.subr.bf16.mxu0 0
  %1979 = vmatpush1.bf16.xpose.msra.mxu0 0
  %1980 = vmatprep.subr.bf16.mxu0 0
  %1981 = vmatpush1.bf16.xpose.msra.mxu0 0
  %1982 = vmatprep.subr.bf16.mxu0 0
  %1983 = vmatpush1.bf16.xpose.msra.mxu0 0
  %1984 = vmatprep.subr.bf16.mxu0 0
  %1985 = vmatpush1.bf16.xpose.msra.mxu0 0
  %1986 = vmatprep.mubr.bf16.mxu0 0
  %1987 = vmatmul.mubr.bf16.gmra.mrb[0].mxu0 %v1949
  %v1988 = vpop.f32.mrb[0].mxu0
  %v1989 = vadd.f32 0.0, %v1988
  %v1990 = vpop.f32.mrb[0].mxu0
  %v1991 = vpop.f32.mrb[0].mxu0
  %v1992 = vpop.f32.mrb[0].mxu0
  %1993 = vdwg.mxu0
  %1994 = vrot.lane.b32.xlu0 %v165, 120
  %v1995 = vpop.permute.xlu0 %1994
  %1996 = vrot.lane.b32.xlu0 %v165, 88
  %v1997 = vpop.permute.xlu0 %1996
  %v1999 = vsel %vm183, %v1995, 0
  %v2002 = vsel %vm183, %v1997, 0
  %2004 = vmatprep.subr.bf16.mxu0 0
  %2005 = vmatpush1.bf16.xpose.msra.mxu0 %v2002
  %2006 = vmatprep.subr.bf16.mxu0 0
  %2007 = vmatpush1.bf16.xpose.msra.mxu0 0
  %2008 = vmatprep.subr.bf16.mxu0 0
  %2009 = vmatpush1.bf16.xpose.msra.mxu0 0
  %2010 = vmatprep.subr.bf16.mxu0 0
  %2011 = vmatpush1.bf16.xpose.msra.mxu0 0
  %2012 = vmatprep.subr.bf16.mxu0 0
  %2013 = vmatpush1.bf16.xpose.msra.mxu0 0
  %2014 = vmatprep.subr.bf16.mxu0 0
  %2015 = vmatpush1.bf16.xpose.msra.mxu0 0
  %2016 = vmatprep.subr.bf16.mxu0 0
  %2017 = vmatpush1.bf16.xpose.msra.mxu0 0
  %2018 = vmatprep.subr.bf16.mxu0 0
  %2019 = vmatpush1.bf16.xpose.msra.mxu0 0
  %2020 = vmatprep.subr.bf16.mxu0 0
  %2021 = vmatpush1.bf16.xpose.msra.mxu0 0
  %2022 = vmatprep.subr.bf16.mxu0 0
  %2023 = vmatpush1.bf16.xpose.msra.mxu0 0
  %2024 = vmatprep.subr.bf16.mxu0 0
  %2025 = vmatpush1.bf16.xpose.msra.mxu0 0
  %2026 = vmatprep.subr.bf16.mxu0 0
  %2027 = vmatpush1.bf16.xpose.msra.mxu0 0
  %2028 = vmatprep.subr.bf16.mxu0 0
  %2029 = vmatpush1.bf16.xpose.msra.mxu0 0
  %2030 = vmatprep.subr.bf16.mxu0 0
  %2031 = vmatpush1.bf16.xpose.msra.mxu0 0
  %2032 = vmatprep.subr.bf16.mxu0 0
  %2033 = vmatpush1.bf16.xpose.msra.mxu0 0
  %2034 = vmatprep.subr.bf16.mxu0 0
  %2035 = vmatpush1.bf16.xpose.msra.mxu0 0
  %2036 = vmatprep.mubr.bf16.mxu0 0
  %2037 = vmatmul.mubr.bf16.gmra.mrb[0].mxu0 %v1999
  %v2038 = vpop.f32.mrb[0].mxu0
  %v2039 = vadd.f32 0.0, %v2038
  %v2040 = vpop.f32.mrb[0].mxu0
  %v2041 = vpop.f32.mrb[0].mxu0
  %v2042 = vpop.f32.mrb[0].mxu0
  %2043 = vdwg.mxu0
  %2044 = vrot.lane.b32.xlu0 %v166, 120
  %v2045 = vpop.permute.xlu0 %2044
  %2046 = vrot.lane.b32.xlu0 %v166, 88
  %v2047 = vpop.permute.xlu0 %2046
  %v2049 = vsel %vm183, %v2045, 0
  %v2052 = vsel %vm183, %v2047, 0
  %2054 = vmatprep.subr.bf16.mxu0 0
  %2055 = vmatpush1.bf16.xpose.msra.mxu0 %v2052
  %2056 = vmatprep.subr.bf16.mxu0 0
  %2057 = vmatpush1.bf16.xpose.msra.mxu0 0
  %2058 = vmatprep.subr.bf16.mxu0 0
  %2059 = vmatpush1.bf16.xpose.msra.mxu0 0
  %2060 = vmatprep.subr.bf16.mxu0 0
  %2061 = vmatpush1.bf16.xpose.msra.mxu0 0
  %2062 = vmatprep.subr.bf16.mxu0 0
  %2063 = vmatpush1.bf16.xpose.msra.mxu0 0
  %2064 = vmatprep.subr.bf16.mxu0 0
  %2065 = vmatpush1.bf16.xpose.msra.mxu0 0
  %2066 = vmatprep.subr.bf16.mxu0 0
  %2067 = vmatpush1.bf16.xpose.msra.mxu0 0
  %2068 = vmatprep.subr.bf16.mxu0 0
  %2069 = vmatpush1.bf16.xpose.msra.mxu0 0
  %2070 = vmatprep.subr.bf16.mxu0 0
  %2071 = vmatpush1.bf16.xpose.msra.mxu0 0
  %2072 = vmatprep.subr.bf16.mxu0 0
  %2073 = vmatpush1.bf16.xpose.msra.mxu0 0
  %2074 = vmatprep.subr.bf16.mxu0 0
  %2075 = vmatpush1.bf16.xpose.msra.mxu0 0
  %2076 = vmatprep.subr.bf16.mxu0 0
  %2077 = vmatpush1.bf16.xpose.msra.mxu0 0
  %2078 = vmatprep.subr.bf16.mxu0 0
  %2079 = vmatpush1.bf16.xpose.msra.mxu0 0
  %2080 = vmatprep.subr.bf16.mxu0 0
  %2081 = vmatpush1.bf16.xpose.msra.mxu0 0
  %2082 = vmatprep.subr.bf16.mxu0 0
  %2083 = vmatpush1.bf16.xpose.msra.mxu0 0
  %2084 = vmatprep.subr.bf16.mxu0 0
  %2085 = vmatpush1.bf16.xpose.msra.mxu0 0
  %2086 = vmatprep.mubr.bf16.mxu0 0
  %2087 = vmatmul.mubr.bf16.gmra.mrb[0].mxu0 %v2049
  %v2088 = vpop.f32.mrb[0].mxu0
  %v2089 = vadd.f32 0.0, %v2088
  %v2090 = vpop.f32.mrb[0].mxu0
  %v2091 = vpop.f32.mrb[0].mxu0
  %v2092 = vpop.f32.mrb[0].mxu0
  %2093 = vdwg.mxu0
  %2094 = vrot.lane.b32.xlu0 %v167, 120
  %v2095 = vpop.permute.xlu0 %2094
  %2096 = vrot.lane.b32.xlu0 %v167, 88
  %v2097 = vpop.permute.xlu0 %2096
  %v2099 = vsel %vm183, %v2095, 0
  %v2102 = vsel %vm183, %v2097, 0
  %2104 = vmatprep.subr.bf16.mxu0 0
  %2105 = vmatpush1.bf16.xpose.msra.mxu0 %v2102
  %2106 = vmatprep.subr.bf16.mxu0 0
  %2107 = vmatpush1.bf16.xpose.msra.mxu0 0
  %2108 = vmatprep.subr.bf16.mxu0 0
  %2109 = vmatpush1.bf16.xpose.msra.mxu0 0
  %2110 = vmatprep.subr.bf16.mxu0 0
  %2111 = vmatpush1.bf16.xpose.msra.mxu0 0
  %2112 = vmatprep.subr.bf16.mxu0 0
  %2113 = vmatpush1.bf16.xpose.msra.mxu0 0
  %2114 = vmatprep.subr.bf16.mxu0 0
  %2115 = vmatpush1.bf16.xpose.msra.mxu0 0
  %2116 = vmatprep.subr.bf16.mxu0 0
  %2117 = vmatpush1.bf16.xpose.msra.mxu0 0
  %2118 = vmatprep.subr.bf16.mxu0 0
  %2119 = vmatpush1.bf16.xpose.msra.mxu0 0
  %2120 = vmatprep.subr.bf16.mxu0 0
  %2121 = vmatpush1.bf16.xpose.msra.mxu0 0
  %2122 = vmatprep.subr.bf16.mxu0 0
  %2123 = vmatpush1.bf16.xpose.msra.mxu0 0
  %2124 = vmatprep.subr.bf16.mxu0 0
  %2125 = vmatpush1.bf16.xpose.msra.mxu0 0
  %2126 = vmatprep.subr.bf16.mxu0 0
  %2127 = vmatpush1.bf16.xpose.msra.mxu0 0
  %2128 = vmatprep.subr.bf16.mxu0 0
  %2129 = vmatpush1.bf16.xpose.msra.mxu0 0
  %2130 = vmatprep.subr.bf16.mxu0 0
  %2131 = vmatpush1.bf16.xpose.msra.mxu0 0
  %2132 = vmatprep.subr.bf16.mxu0 0
  %2133 = vmatpush1.bf16.xpose.msra.mxu0 0
  %2134 = vmatprep.subr.bf16.mxu0 0
  %2135 = vmatpush1.bf16.xpose.msra.mxu0 0
  %2136 = vmatprep.mubr.bf16.mxu0 0
  %2137 = vmatmul.mubr.bf16.gmra.mrb[0].mxu0 %v2099
  %v2138 = vpop.f32.mrb[0].mxu0
  %v2139 = vadd.f32 0.0, %v2138
  %v2140 = vpop.f32.mrb[0].mxu0
  %v2141 = vpop.f32.mrb[0].mxu0
  %v2142 = vpop.f32.mrb[0].mxu0
  %2143 = vdwg.mxu0
  %2144 = vrot.lane.b32.xlu0 %v168, 120
  %v2145 = vpop.permute.xlu0 %2144
  %2146 = vrot.lane.b32.xlu0 %v168, 88
  %v2147 = vpop.permute.xlu0 %2146
  %v2149 = vsel %vm183, %v2145, 0
  %v2152 = vsel %vm183, %v2147, 0
  %2154 = vmatprep.subr.bf16.mxu0 0
  %2155 = vmatpush1.bf16.xpose.msra.mxu0 %v2152
  %2156 = vmatprep.subr.bf16.mxu0 0
  %2157 = vmatpush1.bf16.xpose.msra.mxu0 0
  %2158 = vmatprep.subr.bf16.mxu0 0
  %2159 = vmatpush1.bf16.xpose.msra.mxu0 0
  %2160 = vmatprep.subr.bf16.mxu0 0
  %2161 = vmatpush1.bf16.xpose.msra.mxu0 0
  %2162 = vmatprep.subr.bf16.mxu0 0
  %2163 = vmatpush1.bf16.xpose.msra.mxu0 0
  %2164 = vmatprep.subr.bf16.mxu0 0
  %2165 = vmatpush1.bf16.xpose.msra.mxu0 0
  %2166 = vmatprep.subr.bf16.mxu0 0
  %2167 = vmatpush1.bf16.xpose.msra.mxu0 0
  %2168 = vmatprep.subr.bf16.mxu0 0
  %2169 = vmatpush1.bf16.xpose.msra.mxu0 0
  %2170 = vmatprep.subr.bf16.mxu0 0
  %2171 = vmatpush1.bf16.xpose.msra.mxu0 0
  %2172 = vmatprep.subr.bf16.mxu0 0
  %2173 = vmatpush1.bf16.xpose.msra.mxu0 0
  %2174 = vmatprep.subr.bf16.mxu0 0
  %2175 = vmatpush1.bf16.xpose.msra.mxu0 0
  %2176 = vmatprep.subr.bf16.mxu0 0
  %2177 = vmatpush1.bf16.xpose.msra.mxu0 0
  %2178 = vmatprep.subr.bf16.mxu0 0
  %2179 = vmatpush1.bf16.xpose.msra.mxu0 0
  %2180 = vmatprep.subr.bf16.mxu0 0
  %2181 = vmatpush1.bf16.xpose.msra.mxu0 0
  %2182 = vmatprep.subr.bf16.mxu0 0
  %2183 = vmatpush1.bf16.xpose.msra.mxu0 0
  %2184 = vmatprep.subr.bf16.mxu0 0
  %2185 = vmatpush1.bf16.xpose.msra.mxu0 0
  %2186 = vmatprep.mubr.bf16.mxu0 0
  %2187 = vmatmul.mubr.bf16.gmra.mrb[0].mxu0 %v2149
  %v2188 = vpop.f32.mrb[0].mxu0
  %v2189 = vadd.f32 0.0, %v2188
  %v2190 = vpop.f32.mrb[0].mxu0
  %v2191 = vpop.f32.mrb[0].mxu0
  %v2192 = vpop.f32.mrb[0].mxu0
  %2193 = vdwg.mxu0
  %2194 = vrot.lane.b32.xlu0 %v169, 120
  %v2195 = vpop.permute.xlu0 %2194
  %2196 = vrot.lane.b32.xlu0 %v169, 88
  %v2197 = vpop.permute.xlu0 %2196
  %v2199 = vsel %vm183, %v2195, 0
  %v2202 = vsel %vm183, %v2197, 0
  %2204 = vmatprep.subr.bf16.mxu0 0
  %2205 = vmatpush1.bf16.xpose.msra.mxu0 %v2202
  %2206 = vmatprep.subr.bf16.mxu0 0
  %2207 = vmatpush1.bf16.xpose.msra.mxu0 0
  %2208 = vmatprep.subr.bf16.mxu0 0
  %2209 = vmatpush1.bf16.xpose.msra.mxu0 0
  %2210 = vmatprep.subr.bf16.mxu0 0
  %2211 = vmatpush1.bf16.xpose.msra.mxu0 0
  %2212 = vmatprep.subr.bf16.mxu0 0
  %2213 = vmatpush1.bf16.xpose.msra.mxu0 0
  %2214 = vmatprep.subr.bf16.mxu0 0
  %2215 = vmatpush1.bf16.xpose.msra.mxu0 0
  %2216 = vmatprep.subr.bf16.mxu0 0
  %2217 = vmatpush1.bf16.xpose.msra.mxu0 0
  %2218 = vmatprep.subr.bf16.mxu0 0
  %2219 = vmatpush1.bf16.xpose.msra.mxu0 0
  %2220 = vmatprep.subr.bf16.mxu0 0
  %2221 = vmatpush1.bf16.xpose.msra.mxu0 0
  %2222 = vmatprep.subr.bf16.mxu0 0
  %2223 = vmatpush1.bf16.xpose.msra.mxu0 0
  %2224 = vmatprep.subr.bf16.mxu0 0
  %2225 = vmatpush1.bf16.xpose.msra.mxu0 0
  %2226 = vmatprep.subr.bf16.mxu0 0
  %2227 = vmatpush1.bf16.xpose.msra.mxu0 0
  %2228 = vmatprep.subr.bf16.mxu0 0
  %2229 = vmatpush1.bf16.xpose.msra.mxu0 0
  %2230 = vmatprep.subr.bf16.mxu0 0
  %2231 = vmatpush1.bf16.xpose.msra.mxu0 0
  %2232 = vmatprep.subr.bf16.mxu0 0
  %2233 = vmatpush1.bf16.xpose.msra.mxu0 0
  %2234 = vmatprep.subr.bf16.mxu0 0
  %2235 = vmatpush1.bf16.xpose.msra.mxu0 0
  %2236 = vmatprep.mubr.bf16.mxu0 0
  %2237 = vmatmul.mubr.bf16.gmra.mrb[0].mxu0 %v2199
  %v2238 = vpop.f32.mrb[0].mxu0
  %v2239 = vadd.f32 0.0, %v2238
  %v2240 = vpop.f32.mrb[0].mxu0
  %v2241 = vpop.f32.mrb[0].mxu0
  %v2242 = vpop.f32.mrb[0].mxu0
  %2243 = vdwg.mxu0
  %2244 = vrot.lane.b32.xlu0 %v170, 120
  %v2245 = vpop.permute.xlu0 %2244
  %2246 = vrot.lane.b32.xlu0 %v170, 88
  %v2247 = vpop.permute.xlu0 %2246
  %v2249 = vsel %vm183, %v2245, 0
  %v2252 = vsel %vm183, %v2247, 0
  %2254 = vmatprep.subr.bf16.mxu0 0
  %2255 = vmatpush1.bf16.xpose.msra.mxu0 %v2252
  %2256 = vmatprep.subr.bf16.mxu0 0
  %2257 = vmatpush1.bf16.xpose.msra.mxu0 0
  %2258 = vmatprep.subr.bf16.mxu0 0
  %2259 = vmatpush1.bf16.xpose.msra.mxu0 0
  %2260 = vmatprep.subr.bf16.mxu0 0
  %2261 = vmatpush1.bf16.xpose.msra.mxu0 0
  %2262 = vmatprep.subr.bf16.mxu0 0
  %2263 = vmatpush1.bf16.xpose.msra.mxu0 0
  %2264 = vmatprep.subr.bf16.mxu0 0
  %2265 = vmatpush1.bf16.xpose.msra.mxu0 0
  %2266 = vmatprep.subr.bf16.mxu0 0
  %2267 = vmatpush1.bf16.xpose.msra.mxu0 0
  %2268 = vmatprep.subr.bf16.mxu0 0
  %2269 = vmatpush1.bf16.xpose.msra.mxu0 0
  %2270 = vmatprep.subr.bf16.mxu0 0
  %2271 = vmatpush1.bf16.xpose.msra.mxu0 0
  %2272 = vmatprep.subr.bf16.mxu0 0
  %2273 = vmatpush1.bf16.xpose.msra.mxu0 0
  %2274 = vmatprep.subr.bf16.mxu0 0
  %2275 = vmatpush1.bf16.xpose.msra.mxu0 0
  %2276 = vmatprep.subr.bf16.mxu0 0
  %2277 = vmatpush1.bf16.xpose.msra.mxu0 0
  %2278 = vmatprep.subr.bf16.mxu0 0
  %2279 = vmatpush1.bf16.xpose.msra.mxu0 0
  %2280 = vmatprep.subr.bf16.mxu0 0
  %2281 = vmatpush1.bf16.xpose.msra.mxu0 0
  %2282 = vmatprep.subr.bf16.mxu0 0
  %2283 = vmatpush1.bf16.xpose.msra.mxu0 0
  %2284 = vmatprep.subr.bf16.mxu0 0
  %2285 = vmatpush1.bf16.xpose.msra.mxu0 0
  %2286 = vmatprep.mubr.bf16.mxu0 0
  %2287 = vmatmul.mubr.bf16.gmra.mrb[0].mxu0 %v2249
  %v2288 = vpop.f32.mrb[0].mxu0
  %v2289 = vadd.f32 0.0, %v2288
  %v2290 = vpop.f32.mrb[0].mxu0
  %v2291 = vpop.f32.mrb[0].mxu0
  %v2292 = vpop.f32.mrb[0].mxu0
  %2293 = vdwg.mxu0
  %2294 = vrot.lane.b32.xlu0 %v171, 120
  %v2295 = vpop.permute.xlu0 %2294
  %2296 = vrot.lane.b32.xlu0 %v171, 88
  %v2297 = vpop.permute.xlu0 %2296
  %v2299 = vsel %vm183, %v2295, 0
  %v2302 = vsel %vm183, %v2297, 0
  %2304 = vmatprep.subr.bf16.mxu0 0
  %2305 = vmatpush1.bf16.xpose.msra.mxu0 %v2302
  %2306 = vmatprep.subr.bf16.mxu0 0
  %2307 = vmatpush1.bf16.xpose.msra.mxu0 0
  %2308 = vmatprep.subr.bf16.mxu0 0
  %2309 = vmatpush1.bf16.xpose.msra.mxu0 0
  %2310 = vmatprep.subr.bf16.mxu0 0
  %2311 = vmatpush1.bf16.xpose.msra.mxu0 0
  %2312 = vmatprep.subr.bf16.mxu0 0
  %2313 = vmatpush1.bf16.xpose.msra.mxu0 0
  %2314 = vmatprep.subr.bf16.mxu0 0
  %2315 = vmatpush1.bf16.xpose.msra.mxu0 0
  %2316 = vmatprep.subr.bf16.mxu0 0
  %2317 = vmatpush1.bf16.xpose.msra.mxu0 0
  %2318 = vmatprep.subr.bf16.mxu0 0
  %2319 = vmatpush1.bf16.xpose.msra.mxu0 0
  %2320 = vmatprep.subr.bf16.mxu0 0
  %2321 = vmatpush1.bf16.xpose.msra.mxu0 0
  %2322 = vmatprep.subr.bf16.mxu0 0
  %2323 = vmatpush1.bf16.xpose.msra.mxu0 0
  %2324 = vmatprep.subr.bf16.mxu0 0
  %2325 = vmatpush1.bf16.xpose.msra.mxu0 0
  %2326 = vmatprep.subr.bf16.mxu0 0
  %2327 = vmatpush1.bf16.xpose.msra.mxu0 0
  %2328 = vmatprep.subr.bf16.mxu0 0
  %2329 = vmatpush1.bf16.xpose.msra.mxu0 0
  %2330 = vmatprep.subr.bf16.mxu0 0
  %2331 = vmatpush1.bf16.xpose.msra.mxu0 0
  %2332 = vmatprep.subr.bf16.mxu0 0
  %2333 = vmatpush1.bf16.xpose.msra.mxu0 0
  %2334 = vmatprep.subr.bf16.mxu0 0
  %2335 = vmatpush1.bf16.xpose.msra.mxu0 0
  %2336 = vmatprep.mubr.bf16.mxu0 0
  %2337 = vmatmul.mubr.bf16.gmra.mrb[0].mxu0 %v2299
  %v2338 = vpop.f32.mrb[0].mxu0
  %v2339 = vadd.f32 0.0, %v2338
  %v2340 = vpop.f32.mrb[0].mxu0
  %v2341 = vpop.f32.mrb[0].mxu0
  %v2342 = vpop.f32.mrb[0].mxu0
  %2343 = vdwg.mxu0
  %2344 = vrot.lane.b32.xlu0 %v172, 120
  %v2345 = vpop.permute.xlu0 %2344
  %2346 = vrot.lane.b32.xlu0 %v172, 88
  %v2347 = vpop.permute.xlu0 %2346
  %v2349 = vsel %vm183, %v2345, 0
  %v2352 = vsel %vm183, %v2347, 0
  %2354 = vmatprep.subr.bf16.mxu0 0
  %2355 = vmatpush1.bf16.xpose.msra.mxu0 %v2352
  %2356 = vmatprep.subr.bf16.mxu0 0
  %2357 = vmatpush1.bf16.xpose.msra.mxu0 0
  %2358 = vmatprep.subr.bf16.mxu0 0
  %2359 = vmatpush1.bf16.xpose.msra.mxu0 0
  %2360 = vmatprep.subr.bf16.mxu0 0
  %2361 = vmatpush1.bf16.xpose.msra.mxu0 0
  %2362 = vmatprep.subr.bf16.mxu0 0
  %2363 = vmatpush1.bf16.xpose.msra.mxu0 0
  %2364 = vmatprep.subr.bf16.mxu0 0
  %2365 = vmatpush1.bf16.xpose.msra.mxu0 0
  %2366 = vmatprep.subr.bf16.mxu0 0
  %2367 = vmatpush1.bf16.xpose.msra.mxu0 0
  %2368 = vmatprep.subr.bf16.mxu0 0
  %2369 = vmatpush1.bf16.xpose.msra.mxu0 0
  %2370 = vmatprep.subr.bf16.mxu0 0
  %2371 = vmatpush1.bf16.xpose.msra.mxu0 0
  %2372 = vmatprep.subr.bf16.mxu0 0
  %2373 = vmatpush1.bf16.xpose.msra.mxu0 0
  %2374 = vmatprep.subr.bf16.mxu0 0
  %2375 = vmatpush1.bf16.xpose.msra.mxu0 0
  %2376 = vmatprep.subr.bf16.mxu0 0
  %2377 = vmatpush1.bf16.xpose.msra.mxu0 0
  %2378 = vmatprep.subr.bf16.mxu0 0
  %2379 = vmatpush1.bf16.xpose.msra.mxu0 0
  %2380 = vmatprep.subr.bf16.mxu0 0
  %2381 = vmatpush1.bf16.xpose.msra.mxu0 0
  %2382 = vmatprep.subr.bf16.mxu0 0
  %2383 = vmatpush1.bf16.xpose.msra.mxu0 0
  %2384 = vmatprep.subr.bf16.mxu0 0
  %2385 = vmatpush1.bf16.xpose.msra.mxu0 0
  %2386 = vmatprep.mubr.bf16.mxu0 0
  %2387 = vmatmul.mubr.bf16.gmra.mrb[0].mxu0 %v2349
  %v2388 = vpop.f32.mrb[0].mxu0
  %v2389 = vadd.f32 0.0, %v2388
  %v2390 = vpop.f32.mrb[0].mxu0
  %v2391 = vpop.f32.mrb[0].mxu0
  %v2392 = vpop.f32.mrb[0].mxu0
  %2393 = vdwg.mxu0
  %2394 = vrot.lane.b32.xlu0 %v173, 120
  %v2395 = vpop.permute.xlu0 %2394
  %2396 = vrot.lane.b32.xlu0 %v173, 88
  %v2397 = vpop.permute.xlu0 %2396
  %v2399 = vsel %vm183, %v2395, 0
  %v2402 = vsel %vm183, %v2397, 0
  %2404 = vmatprep.subr.bf16.mxu0 0
  %2405 = vmatpush1.bf16.xpose.msra.mxu0 %v2402
  %2406 = vmatprep.subr.bf16.mxu0 0
  %2407 = vmatpush1.bf16.xpose.msra.mxu0 0
  %2408 = vmatprep.subr.bf16.mxu0 0
  %2409 = vmatpush1.bf16.xpose.msra.mxu0 0
  %2410 = vmatprep.subr.bf16.mxu0 0
  %2411 = vmatpush1.bf16.xpose.msra.mxu0 0
  %2412 = vmatprep.subr.bf16.mxu0 0
  %2413 = vmatpush1.bf16.xpose.msra.mxu0 0
  %2414 = vmatprep.subr.bf16.mxu0 0
  %2415 = vmatpush1.bf16.xpose.msra.mxu0 0
  %2416 = vmatprep.subr.bf16.mxu0 0
  %2417 = vmatpush1.bf16.xpose.msra.mxu0 0
  %2418 = vmatprep.subr.bf16.mxu0 0
  %2419 = vmatpush1.bf16.xpose.msra.mxu0 0
  %2420 = vmatprep.subr.bf16.mxu0 0
  %2421 = vmatpush1.bf16.xpose.msra.mxu0 0
  %2422 = vmatprep.subr.bf16.mxu0 0
  %2423 = vmatpush1.bf16.xpose.msra.mxu0 0
  %2424 = vmatprep.subr.bf16.mxu0 0
  %2425 = vmatpush1.bf16.xpose.msra.mxu0 0
  %2426 = vmatprep.subr.bf16.mxu0 0
  %2427 = vmatpush1.bf16.xpose.msra.mxu0 0
  %2428 = vmatprep.subr.bf16.mxu0 0
  %2429 = vmatpush1.bf16.xpose.msra.mxu0 0
  %2430 = vmatprep.subr.bf16.mxu0 0
  %2431 = vmatpush1.bf16.xpose.msra.mxu0 0
  %2432 = vmatprep.subr.bf16.mxu0 0
  %2433 = vmatpush1.bf16.xpose.msra.mxu0 0
  %2434 = vmatprep.subr.bf16.mxu0 0
  %2435 = vmatpush1.bf16.xpose.msra.mxu0 0
  %2436 = vmatprep.mubr.bf16.mxu0 0
  %2437 = vmatmul.mubr.bf16.gmra.mrb[0].mxu0 %v2399
  %v2438 = vpop.f32.mrb[0].mxu0
  %v2439 = vadd.f32 0.0, %v2438
  %v2440 = vpop.f32.mrb[0].mxu0
  %v2441 = vpop.f32.mrb[0].mxu0
  %v2442 = vpop.f32.mrb[0].mxu0
  %2443 = vdwg.mxu0
  %2444 = vrot.lane.b32.xlu0 %v174, 120
  %v2445 = vpop.permute.xlu0 %2444
  %2446 = vrot.lane.b32.xlu0 %v174, 88
  %v2447 = vpop.permute.xlu0 %2446
  %v2449 = vsel %vm183, %v2445, 0
  %v2452 = vsel %vm183, %v2447, 0
  %2454 = vmatprep.subr.bf16.mxu0 0
  %2455 = vmatpush1.bf16.xpose.msra.mxu0 %v2452
  %2456 = vmatprep.subr.bf16.mxu0 0
  %2457 = vmatpush1.bf16.xpose.msra.mxu0 0
  %2458 = vmatprep.subr.bf16.mxu0 0
  %2459 = vmatpush1.bf16.xpose.msra.mxu0 0
  %2460 = vmatprep.subr.bf16.mxu0 0
  %2461 = vmatpush1.bf16.xpose.msra.mxu0 0
  %2462 = vmatprep.subr.bf16.mxu0 0
  %2463 = vmatpush1.bf16.xpose.msra.mxu0 0
  %2464 = vmatprep.subr.bf16.mxu0 0
  %2465 = vmatpush1.bf16.xpose.msra.mxu0 0
  %2466 = vmatprep.subr.bf16.mxu0 0
  %2467 = vmatpush1.bf16.xpose.msra.mxu0 0
  %2468 = vmatprep.subr.bf16.mxu0 0
  %2469 = vmatpush1.bf16.xpose.msra.mxu0 0
  %2470 = vmatprep.subr.bf16.mxu0 0
  %2471 = vmatpush1.bf16.xpose.msra.mxu0 0
  %2472 = vmatprep.subr.bf16.mxu0 0
  %2473 = vmatpush1.bf16.xpose.msra.mxu0 0
  %2474 = vmatprep.subr.bf16.mxu0 0
  %2475 = vmatpush1.bf16.xpose.msra.mxu0 0
  %2476 = vmatprep.subr.bf16.mxu0 0
  %2477 = vmatpush1.bf16.xpose.msra.mxu0 0
  %2478 = vmatprep.subr.bf16.mxu0 0
  %2479 = vmatpush1.bf16.xpose.msra.mxu0 0
  %2480 = vmatprep.subr.bf16.mxu0 0
  %2481 = vmatpush1.bf16.xpose.msra.mxu0 0
  %2482 = vmatprep.subr.bf16.mxu0 0
  %2483 = vmatpush1.bf16.xpose.msra.mxu0 0
  %2484 = vmatprep.subr.bf16.mxu0 0
  %2485 = vmatpush1.bf16.xpose.msra.mxu0 0
  %2486 = vmatprep.mubr.bf16.mxu0 0
  %2487 = vmatmul.mubr.bf16.gmra.mrb[0].mxu0 %v2449
  %v2488 = vpop.f32.mrb[0].mxu0
  %v2489 = vadd.f32 0.0, %v2488
  %v2490 = vpop.f32.mrb[0].mxu0
  %v2491 = vpop.f32.mrb[0].mxu0
  %v2492 = vpop.f32.mrb[0].mxu0
  %2493 = vdwg.mxu0
  %2494 = vrot.lane.b32.xlu0 %v175, 120
  %v2495 = vpop.permute.xlu0 %2494
  %2496 = vrot.lane.b32.xlu0 %v175, 88
  %v2497 = vpop.permute.xlu0 %2496
  %v2499 = vsel %vm183, %v2495, 0
  %v2502 = vsel %vm183, %v2497, 0
  %2504 = vmatprep.subr.bf16.mxu0 0
  %2505 = vmatpush1.bf16.xpose.msra.mxu0 %v2502
  %2506 = vmatprep.subr.bf16.mxu0 0
  %2507 = vmatpush1.bf16.xpose.msra.mxu0 0
  %2508 = vmatprep.subr.bf16.mxu0 0
  %2509 = vmatpush1.bf16.xpose.msra.mxu0 0
  %2510 = vmatprep.subr.bf16.mxu0 0
  %2511 = vmatpush1.bf16.xpose.msra.mxu0 0
  %2512 = vmatprep.subr.bf16.mxu0 0
  %2513 = vmatpush1.bf16.xpose.msra.mxu0 0
  %2514 = vmatprep.subr.bf16.mxu0 0
  %2515 = vmatpush1.bf16.xpose.msra.mxu0 0
  %2516 = vmatprep.subr.bf16.mxu0 0
  %2517 = vmatpush1.bf16.xpose.msra.mxu0 0
  %2518 = vmatprep.subr.bf16.mxu0 0
  %2519 = vmatpush1.bf16.xpose.msra.mxu0 0
  %2520 = vmatprep.subr.bf16.mxu0 0
  %2521 = vmatpush1.bf16.xpose.msra.mxu0 0
  %2522 = vmatprep.subr.bf16.mxu0 0
  %2523 = vmatpush1.bf16.xpose.msra.mxu0 0
  %2524 = vmatprep.subr.bf16.mxu0 0
  %2525 = vmatpush1.bf16.xpose.msra.mxu0 0
  %2526 = vmatprep.subr.bf16.mxu0 0
  %2527 = vmatpush1.bf16.xpose.msra.mxu0 0
  %2528 = vmatprep.subr.bf16.mxu0 0
  %2529 = vmatpush1.bf16.xpose.msra.mxu0 0
  %2530 = vmatprep.subr.bf16.mxu0 0
  %2531 = vmatpush1.bf16.xpose.msra.mxu0 0
  %2532 = vmatprep.subr.bf16.mxu0 0
  %2533 = vmatpush1.bf16.xpose.msra.mxu0 0
  %2534 = vmatprep.subr.bf16.mxu0 0
  %2535 = vmatpush1.bf16.xpose.msra.mxu0 0
  %2536 = vmatprep.mubr.bf16.mxu0 0
  %2537 = vmatmul.mubr.bf16.gmra.mrb[0].mxu0 %v2499
  %v2538 = vpop.f32.mrb[0].mxu0
  %v2539 = vadd.f32 0.0, %v2538
  %v2540 = vpop.f32.mrb[0].mxu0
  %v2541 = vpop.f32.mrb[0].mxu0
  %v2542 = vpop.f32.mrb[0].mxu0
  %2543 = vdwg.mxu0
  %2544 = vrot.lane.b32.xlu0 %v176, 120
  %v2545 = vpop.permute.xlu0 %2544
  %2546 = vrot.lane.b32.xlu0 %v176, 88
  %v2547 = vpop.permute.xlu0 %2546
  %v2549 = vsel %vm183, %v2545, 0
  %v2552 = vsel %vm183, %v2547, 0
  %2554 = vmatprep.subr.bf16.mxu0 0
  %2555 = vmatpush1.bf16.xpose.msra.mxu0 %v2552
  %2556 = vmatprep.subr.bf16.mxu0 0
  %2557 = vmatpush1.bf16.xpose.msra.mxu0 0
  %2558 = vmatprep.subr.bf16.mxu0 0
  %2559 = vmatpush1.bf16.xpose.msra.mxu0 0
  %2560 = vmatprep.subr.bf16.mxu0 0
  %2561 = vmatpush1.bf16.xpose.msra.mxu0 0
  %2562 = vmatprep.subr.bf16.mxu0 0
  %2563 = vmatpush1.bf16.xpose.msra.mxu0 0
  %2564 = vmatprep.subr.bf16.mxu0 0
  %2565 = vmatpush1.bf16.xpose.msra.mxu0 0
  %2566 = vmatprep.subr.bf16.mxu0 0
  %2567 = vmatpush1.bf16.xpose.msra.mxu0 0
  %2568 = vmatprep.subr.bf16.mxu0 0
  %2569 = vmatpush1.bf16.xpose.msra.mxu0 0
  %2570 = vmatprep.subr.bf16.mxu0 0
  %2571 = vmatpush1.bf16.xpose.msra.mxu0 0
  %2572 = vmatprep.subr.bf16.mxu0 0
  %2573 = vmatpush1.bf16.xpose.msra.mxu0 0
  %2574 = vmatprep.subr.bf16.mxu0 0
  %2575 = vmatpush1.bf16.xpose.msra.mxu0 0
  %2576 = vmatprep.subr.bf16.mxu0 0
  %2577 = vmatpush1.bf16.xpose.msra.mxu0 0
  %2578 = vmatprep.subr.bf16.mxu0 0
  %2579 = vmatpush1.bf16.xpose.msra.mxu0 0
  %2580 = vmatprep.subr.bf16.mxu0 0
  %2581 = vmatpush1.bf16.xpose.msra.mxu0 0
  %2582 = vmatprep.subr.bf16.mxu0 0
  %2583 = vmatpush1.bf16.xpose.msra.mxu0 0
  %2584 = vmatprep.subr.bf16.mxu0 0
  %2585 = vmatpush1.bf16.xpose.msra.mxu0 0
  %2586 = vmatprep.mubr.bf16.mxu0 0
  %2587 = vmatmul.mubr.bf16.gmra.mrb[0].mxu0 %v2549
  %v2588 = vpop.f32.mrb[0].mxu0
  %v2589 = vadd.f32 0.0, %v2588
  %v2590 = vpop.f32.mrb[0].mxu0
  %v2591 = vpop.f32.mrb[0].mxu0
  %v2592 = vpop.f32.mrb[0].mxu0
  %2593 = vdwg.mxu0
  %2594 = vrot.lane.b32.xlu0 %v177, 120
  %v2595 = vpop.permute.xlu0 %2594
  %2596 = vrot.lane.b32.xlu0 %v177, 88
  %v2597 = vpop.permute.xlu0 %2596
  %v2599 = vsel %vm183, %v2595, 0
  %v2602 = vsel %vm183, %v2597, 0
  %2604 = vmatprep.subr.bf16.mxu0 0
  %2605 = vmatpush1.bf16.xpose.msra.mxu0 %v2602
  %2606 = vmatprep.subr.bf16.mxu0 0
  %2607 = vmatpush1.bf16.xpose.msra.mxu0 0
  %2608 = vmatprep.subr.bf16.mxu0 0
  %2609 = vmatpush1.bf16.xpose.msra.mxu0 0
  %2610 = vmatprep.subr.bf16.mxu0 0
  %2611 = vmatpush1.bf16.xpose.msra.mxu0 0
  %2612 = vmatprep.subr.bf16.mxu0 0
  %2613 = vmatpush1.bf16.xpose.msra.mxu0 0
  %2614 = vmatprep.subr.bf16.mxu0 0
  %2615 = vmatpush1.bf16.xpose.msra.mxu0 0
  %2616 = vmatprep.subr.bf16.mxu0 0
  %2617 = vmatpush1.bf16.xpose.msra.mxu0 0
  %2618 = vmatprep.subr.bf16.mxu0 0
  %2619 = vmatpush1.bf16.xpose.msra.mxu0 0
  %2620 = vmatprep.subr.bf16.mxu0 0
  %2621 = vmatpush1.bf16.xpose.msra.mxu0 0
  %2622 = vmatprep.subr.bf16.mxu0 0
  %2623 = vmatpush1.bf16.xpose.msra.mxu0 0
  %2624 = vmatprep.subr.bf16.mxu0 0
  %2625 = vmatpush1.bf16.xpose.msra.mxu0 0
  %2626 = vmatprep.subr.bf16.mxu0 0
  %2627 = vmatpush1.bf16.xpose.msra.mxu0 0
  %2628 = vmatprep.subr.bf16.mxu0 0
  %2629 = vmatpush1.bf16.xpose.msra.mxu0 0
  %2630 = vmatprep.subr.bf16.mxu0 0
  %2631 = vmatpush1.bf16.xpose.msra.mxu0 0
  %2632 = vmatprep.subr.bf16.mxu0 0
  %2633 = vmatpush1.bf16.xpose.msra.mxu0 0
  %2634 = vmatprep.subr.bf16.mxu0 0
  %2635 = vmatpush1.bf16.xpose.msra.mxu0 0
  %2636 = vmatprep.mubr.bf16.mxu0 0
  %2637 = vmatmul.mubr.bf16.gmra.mrb[0].mxu0 %v2599
  %v2638 = vpop.f32.mrb[0].mxu0
  %v2639 = vadd.f32 0.0, %v2638
  %v2640 = vpop.f32.mrb[0].mxu0
  %v2641 = vpop.f32.mrb[0].mxu0
  %v2642 = vpop.f32.mrb[0].mxu0
  %2643 = vdwg.mxu0
  %2644 = vrot.lane.b32.xlu0 %v178, 120
  %v2645 = vpop.permute.xlu0 %2644
  %2646 = vrot.lane.b32.xlu0 %v178, 88
  %v2647 = vpop.permute.xlu0 %2646
  %v2649 = vsel %vm183, %v2645, 0
  %v2652 = vsel %vm183, %v2647, 0
  %2654 = vmatprep.subr.bf16.mxu0 0
  %2655 = vmatpush1.bf16.xpose.msra.mxu0 %v2652
  %2656 = vmatprep.subr.bf16.mxu0 0
  %2657 = vmatpush1.bf16.xpose.msra.mxu0 0
  %2658 = vmatprep.subr.bf16.mxu0 0
  %2659 = vmatpush1.bf16.xpose.msra.mxu0 0
  %2660 = vmatprep.subr.bf16.mxu0 0
  %2661 = vmatpush1.bf16.xpose.msra.mxu0 0
  %2662 = vmatprep.subr.bf16.mxu0 0
  %2663 = vmatpush1.bf16.xpose.msra.mxu0 0
  %2664 = vmatprep.subr.bf16.mxu0 0
  %2665 = vmatpush1.bf16.xpose.msra.mxu0 0
  %2666 = vmatprep.subr.bf16.mxu0 0
  %2667 = vmatpush1.bf16.xpose.msra.mxu0 0
  %2668 = vmatprep.subr.bf16.mxu0 0
  %2669 = vmatpush1.bf16.xpose.msra.mxu0 0
  %2670 = vmatprep.subr.bf16.mxu0 0
  %2671 = vmatpush1.bf16.xpose.msra.mxu0 0
  %2672 = vmatprep.subr.bf16.mxu0 0
  %2673 = vmatpush1.bf16.xpose.msra.mxu0 0
  %2674 = vmatprep.subr.bf16.mxu0 0
  %2675 = vmatpush1.bf16.xpose.msra.mxu0 0
  %2676 = vmatprep.subr.bf16.mxu0 0
  %2677 = vmatpush1.bf16.xpose.msra.mxu0 0
  %2678 = vmatprep.subr.bf16.mxu0 0
  %2679 = vmatpush1.bf16.xpose.msra.mxu0 0
  %2680 = vmatprep.subr.bf16.mxu0 0
  %2681 = vmatpush1.bf16.xpose.msra.mxu0 0
  %2682 = vmatprep.subr.bf16.mxu0 0
  %2683 = vmatpush1.bf16.xpose.msra.mxu0 0
  %2684 = vmatprep.subr.bf16.mxu0 0
  %2685 = vmatpush1.bf16.xpose.msra.mxu0 0
  %2686 = vmatprep.mubr.bf16.mxu0 0
  %2687 = vmatmul.mubr.bf16.gmra.mrb[0].mxu0 %v2649
  %v2688 = vpop.f32.mrb[0].mxu0
  %v2689 = vadd.f32 0.0, %v2688
  %v2690 = vpop.f32.mrb[0].mxu0
  %v2691 = vpop.f32.mrb[0].mxu0
  %v2692 = vpop.f32.mrb[0].mxu0
  %2693 = vdwg.mxu0
  %2694 = vrot.lane.b32.xlu0 %v179, 120
  %v2695 = vpop.permute.xlu0 %2694
  %2696 = vrot.lane.b32.xlu0 %v179, 88
  %v2697 = vpop.permute.xlu0 %2696
  %v2699 = vsel %vm183, %v2695, 0
  %v2702 = vsel %vm183, %v2697, 0
  %2704 = vmatprep.subr.bf16.mxu0 0
  %2705 = vmatpush1.bf16.xpose.msra.mxu0 %v2702
  %2706 = vmatprep.subr.bf16.mxu0 0
  %2707 = vmatpush1.bf16.xpose.msra.mxu0 0
  %2708 = vmatprep.subr.bf16.mxu0 0
  %2709 = vmatpush1.bf16.xpose.msra.mxu0 0
  %2710 = vmatprep.subr.bf16.mxu0 0
  %2711 = vmatpush1.bf16.xpose.msra.mxu0 0
  %2712 = vmatprep.subr.bf16.mxu0 0
  %2713 = vmatpush1.bf16.xpose.msra.mxu0 0
  %2714 = vmatprep.subr.bf16.mxu0 0
  %2715 = vmatpush1.bf16.xpose.msra.mxu0 0
  %2716 = vmatprep.subr.bf16.mxu0 0
  %2717 = vmatpush1.bf16.xpose.msra.mxu0 0
  %2718 = vmatprep.subr.bf16.mxu0 0
  %2719 = vmatpush1.bf16.xpose.msra.mxu0 0
  %2720 = vmatprep.subr.bf16.mxu0 0
  %2721 = vmatpush1.bf16.xpose.msra.mxu0 0
  %2722 = vmatprep.subr.bf16.mxu0 0
  %2723 = vmatpush1.bf16.xpose.msra.mxu0 0
  %2724 = vmatprep.subr.bf16.mxu0 0
  %2725 = vmatpush1.bf16.xpose.msra.mxu0 0
  %2726 = vmatprep.subr.bf16.mxu0 0
  %2727 = vmatpush1.bf16.xpose.msra.mxu0 0
  %2728 = vmatprep.subr.bf16.mxu0 0
  %2729 = vmatpush1.bf16.xpose.msra.mxu0 0
  %2730 = vmatprep.subr.bf16.mxu0 0
  %2731 = vmatpush1.bf16.xpose.msra.mxu0 0
  %2732 = vmatprep.subr.bf16.mxu0 0
  %2733 = vmatpush1.bf16.xpose.msra.mxu0 0
  %2734 = vmatprep.subr.bf16.mxu0 0
  %2735 = vmatpush1.bf16.xpose.msra.mxu0 0
  %2736 = vmatprep.mubr.bf16.mxu0 0
  %2737 = vmatmul.mubr.bf16.gmra.mrb[0].mxu0 %v2699
  %v2738 = vpop.f32.mrb[0].mxu0
  %v2739 = vadd.f32 0.0, %v2738
  %v2740 = vpop.f32.mrb[0].mxu0
  %v2741 = vpop.f32.mrb[0].mxu0
  %v2742 = vpop.f32.mrb[0].mxu0
  %2743 = vdwg.mxu0
  %v2744 = vmul.f32 %v1989, 0.35355338
  %v2745 = vmul.f32 %v2039, 0.35355338
  %v2746 = vmul.f32 %v2089, 0.35355338
  %v2747 = vmul.f32 %v2139, 0.35355338
  %v2748 = vmul.f32 %v2189, 0.35355338
  %v2749 = vmul.f32 %v2239, 0.35355338
  %v2750 = vmul.f32 %v2289, 0.35355338
  %v2751 = vmul.f32 %v2339, 0.35355338
  %v2752 = vmul.f32 %v2389, 0.35355338
  %v2753 = vmul.f32 %v2439, 0.35355338
  %v2754 = vmul.f32 %v2489, 0.35355338
  %v2755 = vmul.f32 %v2539, 0.35355338
  %v2756 = vmul.f32 %v2589, 0.35355338
  %v2757 = vmul.f32 %v2639, 0.35355338
  %v2758 = vmul.f32 %v2689, 0.35355338
  %v2759 = vmul.f32 %v2739, 0.35355338
  %v2760 = vsel %vm981, %v2744, -inf
  %2761 = vmax.xlane.f32.xlu0 %v2760
  %v2762 = vpop.xlane.xlu0 %2761
  %v2763 = vsel %vm981, %v2745, -inf
  %2764 = vmax.xlane.f32.xlu0 %v2763
  %v2765 = vpop.xlane.xlu0 %2764
  %v2766 = vsel %vm981, %v2746, -inf
  %2767 = vmax.xlane.f32.xlu0 %v2766
  %v2768 = vpop.xlane.xlu0 %2767
  %v2769 = vsel %vm981, %v2747, -inf
  %2770 = vmax.xlane.f32.xlu0 %v2769
  %v2771 = vpop.xlane.xlu0 %2770
  %v2772 = vsel %vm981, %v2748, -inf
  %2773 = vmax.xlane.f32.xlu0 %v2772
  %v2774 = vpop.xlane.xlu0 %2773
  %v2775 = vsel %vm981, %v2749, -inf
  %2776 = vmax.xlane.f32.xlu0 %v2775
  %v2777 = vpop.xlane.xlu0 %2776
  %v2778 = vsel %vm981, %v2750, -inf
  %2779 = vmax.xlane.f32.xlu0 %v2778
  %v2780 = vpop.xlane.xlu0 %2779
  %v2781 = vsel %vm981, %v2751, -inf
  %2782 = vmax.xlane.f32.xlu0 %v2781
  %v2783 = vpop.xlane.xlu0 %2782
  %v2784 = vsel %vm981, %v2752, -inf
  %2785 = vmax.xlane.f32.xlu0 %v2784
  %v2786 = vpop.xlane.xlu0 %2785
  %v2787 = vsel %vm981, %v2753, -inf
  %2788 = vmax.xlane.f32.xlu0 %v2787
  %v2789 = vpop.xlane.xlu0 %2788
  %v2790 = vsel %vm981, %v2754, -inf
  %2791 = vmax.xlane.f32.xlu0 %v2790
  %v2792 = vpop.xlane.xlu0 %2791
  %v2793 = vsel %vm981, %v2755, -inf
  %2794 = vmax.xlane.f32.xlu0 %v2793
  %v2795 = vpop.xlane.xlu0 %2794
  %v2796 = vsel %vm981, %v2756, -inf
  %2797 = vmax.xlane.f32.xlu0 %v2796
  %v2798 = vpop.xlane.xlu0 %2797
  %v2799 = vsel %vm981, %v2757, -inf
  %2800 = vmax.xlane.f32.xlu0 %v2799
  %v2801 = vpop.xlane.xlu0 %2800
  %v2802 = vsel %vm981, %v2758, -inf
  %2803 = vmax.xlane.f32.xlu0 %v2802
  %v2804 = vpop.xlane.xlu0 %2803
  %v2805 = vsel %vm981, %v2759, -inf
  %2806 = vmax.xlane.f32.xlu0 %v2805
  %v2807 = vpop.xlane.xlu0 %2806
  %v2808 = vsub.f32 %v2744, %v2762
  %v2809 = vsub.f32 %v2745, %v2765
  %v2810 = vsub.f32 %v2746, %v2768
  %v2811 = vsub.f32 %v2747, %v2771
  %v2812 = vsub.f32 %v2748, %v2774
  %v2813 = vsub.f32 %v2749, %v2777
  %v2814 = vsub.f32 %v2750, %v2780
  %v2815 = vsub.f32 %v2751, %v2783
  %v2816 = vsub.f32 %v2752, %v2786
  %v2817 = vsub.f32 %v2753, %v2789
  %v2818 = vsub.f32 %v2754, %v2792
  %v2819 = vsub.f32 %v2755, %v2795
  %v2820 = vsub.f32 %v2756, %v2798
  %v2821 = vsub.f32 %v2757, %v2801
  %v2822 = vsub.f32 %v2758, %v2804
  %v2823 = vsub.f32 %v2759, %v2807
  %v2824 = vmul.f32 %v2808, 1.442695
  %v2825 = vpow.pop %v2824
  %v2826 = vmul.f32 %v2809, 1.442695
  %v2827 = vpow.pop %v2826
  %v2828 = vmul.f32 %v2810, 1.442695
  %v2829 = vpow.pop %v2828
  %v2830 = vmul.f32 %v2811, 1.442695
  %v2831 = vpow.pop %v2830
  %v2832 = vmul.f32 %v2812, 1.442695
  %v2833 = vpow.pop %v2832
  %v2834 = vmul.f32 %v2813, 1.442695
  %v2835 = vpow.pop %v2834
  %v2836 = vmul.f32 %v2814, 1.442695
  %v2837 = vpow.pop %v2836
  %v2838 = vmul.f32 %v2815, 1.442695
  %v2839 = vpow.pop %v2838
  %v2840 = vmul.f32 %v2816, 1.442695
  %v2841 = vpow.pop %v2840
  %v2842 = vmul.f32 %v2817, 1.442695
  %v2843 = vpow.pop %v2842
  %v2844 = vmul.f32 %v2818, 1.442695
  %v2845 = vpow.pop %v2844
  %v2846 = vmul.f32 %v2819, 1.442695
  %v2847 = vpow.pop %v2846
  %v2848 = vmul.f32 %v2820, 1.442695
  %v2849 = vpow.pop %v2848
  %v2850 = vmul.f32 %v2821, 1.442695
  %v2851 = vpow.pop %v2850
  %v2852 = vmul.f32 %v2822, 1.442695
  %v2853 = vpow.pop %v2852
  %v2854 = vmul.f32 %v2823, 1.442695
  %v2855 = vpow.pop %v2854
  %v2856 = vsel %vm981, %v2825, 0.0
  %2857 = vadd.xlane.f32.xlu0 %v2856
  %v2858 = vpop.xlane.xlu0 %2857
  %v2859 = vsel %vm981, %v2827, 0.0
  %2860 = vadd.xlane.f32.xlu0 %v2859
  %v2861 = vpop.xlane.xlu0 %2860
  %v2862 = vsel %vm981, %v2829, 0.0
  %2863 = vadd.xlane.f32.xlu0 %v2862
  %v2864 = vpop.xlane.xlu0 %2863
  %v2865 = vsel %vm981, %v2831, 0.0
  %2866 = vadd.xlane.f32.xlu0 %v2865
  %v2867 = vpop.xlane.xlu0 %2866
  %v2868 = vsel %vm981, %v2833, 0.0
  %2869 = vadd.xlane.f32.xlu0 %v2868
  %v2870 = vpop.xlane.xlu0 %2869
  %v2871 = vsel %vm981, %v2835, 0.0
  %2872 = vadd.xlane.f32.xlu0 %v2871
  %v2873 = vpop.xlane.xlu0 %2872
  %v2874 = vsel %vm981, %v2837, 0.0
  %2875 = vadd.xlane.f32.xlu0 %v2874
  %v2876 = vpop.xlane.xlu0 %2875
  %v2877 = vsel %vm981, %v2839, 0.0
  %2878 = vadd.xlane.f32.xlu0 %v2877
  %v2879 = vpop.xlane.xlu0 %2878
  %v2880 = vsel %vm981, %v2841, 0.0
  %2881 = vadd.xlane.f32.xlu0 %v2880
  %v2882 = vpop.xlane.xlu0 %2881
  %v2883 = vsel %vm981, %v2843, 0.0
  %2884 = vadd.xlane.f32.xlu0 %v2883
  %v2885 = vpop.xlane.xlu0 %2884
  %v2886 = vsel %vm981, %v2845, 0.0
  %2887 = vadd.xlane.f32.xlu0 %v2886
  %v2888 = vpop.xlane.xlu0 %2887
  %v2889 = vsel %vm981, %v2847, 0.0
  %2890 = vadd.xlane.f32.xlu0 %v2889
  %v2891 = vpop.xlane.xlu0 %2890
  %v2892 = vsel %vm981, %v2849, 0.0
  %2893 = vadd.xlane.f32.xlu0 %v2892
  %v2894 = vpop.xlane.xlu0 %2893
  %v2895 = vsel %vm981, %v2851, 0.0
  %2896 = vadd.xlane.f32.xlu0 %v2895
  %v2897 = vpop.xlane.xlu0 %2896
  %v2898 = vsel %vm981, %v2853, 0.0
  %2899 = vadd.xlane.f32.xlu0 %v2898
  %v2900 = vpop.xlane.xlu0 %2899
  %v2901 = vsel %vm981, %v2855, 0.0
  %2902 = vadd.xlane.f32.xlu0 %v2901
  %v2903 = vpop.xlane.xlu0 %2902
  %v2904 = vrcp.pop %v2858
  %v2905 = vrcp.pop %v2861
  %v2906 = vrcp.pop %v2864
  %v2907 = vrcp.pop %v2867
  %v2908 = vrcp.pop %v2870
  %v2909 = vrcp.pop %v2873
  %v2910 = vrcp.pop %v2876
  %v2911 = vrcp.pop %v2879
  %v2912 = vrcp.pop %v2882
  %v2913 = vrcp.pop %v2885
  %v2914 = vrcp.pop %v2888
  %v2915 = vrcp.pop %v2891
  %v2916 = vrcp.pop %v2894
  %v2917 = vrcp.pop %v2897
  %v2918 = vrcp.pop %v2900
  %v2919 = vrcp.pop %v2903
  %v2920 = vmul.f32 %v2825, %v2904
  %v2921 = vmul.f32 %v2827, %v2905
  %v2922 = vmul.f32 %v2829, %v2906
  %v2923 = vmul.f32 %v2831, %v2907
  %v2924 = vmul.f32 %v2833, %v2908
  %v2925 = vmul.f32 %v2835, %v2909
  %v2926 = vmul.f32 %v2837, %v2910
  %v2927 = vmul.f32 %v2839, %v2911
  %v2928 = vmul.f32 %v2841, %v2912
  %v2929 = vmul.f32 %v2843, %v2913
  %v2930 = vmul.f32 %v2845, %v2914
  %v2931 = vmul.f32 %v2847, %v2915
  %v2932 = vmul.f32 %v2849, %v2916
  %v2933 = vmul.f32 %v2851, %v2917
  %v2934 = vmul.f32 %v2853, %v2918
  %v2935 = vmul.f32 %v2855, %v2919
  %v2936 = vpack.c.bf16 %v2920, %v2920
  %v2937 = vpack.c.bf16 %v2921, %v2921
  %v2938 = vpack.c.bf16 %v2922, %v2922
  %v2939 = vpack.c.bf16 %v2923, %v2923
  %v2940 = vpack.c.bf16 %v2924, %v2924
  %v2941 = vpack.c.bf16 %v2925, %v2925
  %v2942 = vpack.c.bf16 %v2926, %v2926
  %v2943 = vpack.c.bf16 %v2927, %v2927
  %v2944 = vpack.c.bf16 %v2928, %v2928
  %v2945 = vpack.c.bf16 %v2929, %v2929
  %v2946 = vpack.c.bf16 %v2930, %v2930
  %v2947 = vpack.c.bf16 %v2931, %v2931
  %v2948 = vpack.c.bf16 %v2932, %v2932
  %v2949 = vpack.c.bf16 %v2933, %v2933
  %v2950 = vpack.c.bf16 %v2934, %v2934
  %v2951 = vpack.c.bf16 %v2935, %v2935
  %2952 = vrot.lane.b32.xlu0 %v164, 56
  %v2953 = vpop.permute.xlu0 %2952
  %v2955 = vsel %vm1176, %v2936, 0
  %v2958 = vsel %vm1180, %v2953, 0
  %2960 = vmatprep.subr.bf16.mxu0 0
  %2961 = vmatpush1.bf16.msra.mxu0 %v2958
  %2962 = vmatprep.subr.bf16.mxu0 0
  %2963 = vmatpush1.bf16.msra.mxu0 0
  %2964 = vmatprep.subr.bf16.mxu0 0
  %2965 = vmatpush1.bf16.msra.mxu0 0
  %2966 = vmatprep.subr.bf16.mxu0 0
  %2967 = vmatpush1.bf16.msra.mxu0 0
  %2968 = vmatprep.subr.bf16.mxu0 0
  %2969 = vmatpush1.bf16.msra.mxu0 0
  %2970 = vmatprep.subr.bf16.mxu0 0
  %2971 = vmatpush1.bf16.msra.mxu0 0
  %2972 = vmatprep.subr.bf16.mxu0 0
  %2973 = vmatpush1.bf16.msra.mxu0 0
  %2974 = vmatprep.subr.bf16.mxu0 0
  %2975 = vmatpush1.bf16.msra.mxu0 0
  %2976 = vmatprep.subr.bf16.mxu0 0
  %2977 = vmatpush1.bf16.msra.mxu0 0
  %2978 = vmatprep.subr.bf16.mxu0 0
  %2979 = vmatpush1.bf16.msra.mxu0 0
  %2980 = vmatprep.subr.bf16.mxu0 0
  %2981 = vmatpush1.bf16.msra.mxu0 0
  %2982 = vmatprep.subr.bf16.mxu0 0
  %2983 = vmatpush1.bf16.msra.mxu0 0
  %2984 = vmatprep.subr.bf16.mxu0 0
  %2985 = vmatpush1.bf16.msra.mxu0 0
  %2986 = vmatprep.subr.bf16.mxu0 0
  %2987 = vmatpush1.bf16.msra.mxu0 0
  %2988 = vmatprep.subr.bf16.mxu0 0
  %2989 = vmatpush1.bf16.msra.mxu0 0
  %2990 = vmatprep.subr.bf16.mxu0 0
  %2991 = vmatpush1.bf16.msra.mxu0 0
  %2992 = vmatprep.mubr.bf16.mxu0 0
  %2993 = vmatmul.mubr.bf16.gmra.mrb[0].mxu0 %v2955
  %v2994 = vpop.f32.mrb[0].mxu0
  %v2995 = vadd.f32 0.0, %v2994
  %v2996 = vpop.f32.mrb[0].mxu0
  %v2997 = vpop.f32.mrb[0].mxu0
  %v2998 = vpop.f32.mrb[0].mxu0
  %2999 = vdwg.mxu0
  %3000 = vrot.lane.b32.xlu0 %v165, 56
  %v3001 = vpop.permute.xlu0 %3000
  %v3003 = vsel %vm1176, %v2937, 0
  %v3006 = vsel %vm1180, %v3001, 0
  %3008 = vmatprep.subr.bf16.mxu0 0
  %3009 = vmatpush1.bf16.msra.mxu0 %v3006
  %3010 = vmatprep.subr.bf16.mxu0 0
  %3011 = vmatpush1.bf16.msra.mxu0 0
  %3012 = vmatprep.subr.bf16.mxu0 0
  %3013 = vmatpush1.bf16.msra.mxu0 0
  %3014 = vmatprep.subr.bf16.mxu0 0
  %3015 = vmatpush1.bf16.msra.mxu0 0
  %3016 = vmatprep.subr.bf16.mxu0 0
  %3017 = vmatpush1.bf16.msra.mxu0 0
  %3018 = vmatprep.subr.bf16.mxu0 0
  %3019 = vmatpush1.bf16.msra.mxu0 0
  %3020 = vmatprep.subr.bf16.mxu0 0
  %3021 = vmatpush1.bf16.msra.mxu0 0
  %3022 = vmatprep.subr.bf16.mxu0 0
  %3023 = vmatpush1.bf16.msra.mxu0 0
  %3024 = vmatprep.subr.bf16.mxu0 0
  %3025 = vmatpush1.bf16.msra.mxu0 0
  %3026 = vmatprep.subr.bf16.mxu0 0
  %3027 = vmatpush1.bf16.msra.mxu0 0
  %3028 = vmatprep.subr.bf16.mxu0 0
  %3029 = vmatpush1.bf16.msra.mxu0 0
  %3030 = vmatprep.subr.bf16.mxu0 0
  %3031 = vmatpush1.bf16.msra.mxu0 0
  %3032 = vmatprep.subr.bf16.mxu0 0
  %3033 = vmatpush1.bf16.msra.mxu0 0
  %3034 = vmatprep.subr.bf16.mxu0 0
  %3035 = vmatpush1.bf16.msra.mxu0 0
  %3036 = vmatprep.subr.bf16.mxu0 0
  %3037 = vmatpush1.bf16.msra.mxu0 0
  %3038 = vmatprep.subr.bf16.mxu0 0
  %3039 = vmatpush1.bf16.msra.mxu0 0
  %3040 = vmatprep.mubr.bf16.mxu0 0
  %3041 = vmatmul.mubr.bf16.gmra.mrb[0].mxu0 %v3003
  %v3042 = vpop.f32.mrb[0].mxu0
  %v3043 = vadd.f32 0.0, %v3042
  %v3044 = vpop.f32.mrb[0].mxu0
  %v3045 = vpop.f32.mrb[0].mxu0
  %v3046 = vpop.f32.mrb[0].mxu0
  %3047 = vdwg.mxu0
  %3048 = vrot.lane.b32.xlu0 %v166, 56
  %v3049 = vpop.permute.xlu0 %3048
  %v3051 = vsel %vm1176, %v2938, 0
  %v3054 = vsel %vm1180, %v3049, 0
  %3056 = vmatprep.subr.bf16.mxu0 0
  %3057 = vmatpush1.bf16.msra.mxu0 %v3054
  %3058 = vmatprep.subr.bf16.mxu0 0
  %3059 = vmatpush1.bf16.msra.mxu0 0
  %3060 = vmatprep.subr.bf16.mxu0 0
  %3061 = vmatpush1.bf16.msra.mxu0 0
  %3062 = vmatprep.subr.bf16.mxu0 0
  %3063 = vmatpush1.bf16.msra.mxu0 0
  %3064 = vmatprep.subr.bf16.mxu0 0
  %3065 = vmatpush1.bf16.msra.mxu0 0
  %3066 = vmatprep.subr.bf16.mxu0 0
  %3067 = vmatpush1.bf16.msra.mxu0 0
  %3068 = vmatprep.subr.bf16.mxu0 0
  %3069 = vmatpush1.bf16.msra.mxu0 0
  %3070 = vmatprep.subr.bf16.mxu0 0
  %3071 = vmatpush1.bf16.msra.mxu0 0
  %3072 = vmatprep.subr.bf16.mxu0 0
  %3073 = vmatpush1.bf16.msra.mxu0 0
  %3074 = vmatprep.subr.bf16.mxu0 0
  %3075 = vmatpush1.bf16.msra.mxu0 0
  %3076 = vmatprep.subr.bf16.mxu0 0
  %3077 = vmatpush1.bf16.msra.mxu0 0
  %3078 = vmatprep.subr.bf16.mxu0 0
  %3079 = vmatpush1.bf16.msra.mxu0 0
  %3080 = vmatprep.subr.bf16.mxu0 0
  %3081 = vmatpush1.bf16.msra.mxu0 0
  %3082 = vmatprep.subr.bf16.mxu0 0
  %3083 = vmatpush1.bf16.msra.mxu0 0
  %3084 = vmatprep.subr.bf16.mxu0 0
  %3085 = vmatpush1.bf16.msra.mxu0 0
  %3086 = vmatprep.subr.bf16.mxu0 0
  %3087 = vmatpush1.bf16.msra.mxu0 0
  %3088 = vmatprep.mubr.bf16.mxu0 0
  %3089 = vmatmul.mubr.bf16.gmra.mrb[0].mxu0 %v3051
  %v3090 = vpop.f32.mrb[0].mxu0
  %v3091 = vadd.f32 0.0, %v3090
  %v3092 = vpop.f32.mrb[0].mxu0
  %v3093 = vpop.f32.mrb[0].mxu0
  %v3094 = vpop.f32.mrb[0].mxu0
  %3095 = vdwg.mxu0
  %3096 = vrot.lane.b32.xlu0 %v167, 56
  %v3097 = vpop.permute.xlu0 %3096
  %v3099 = vsel %vm1176, %v2939, 0
  %v3102 = vsel %vm1180, %v3097, 0
  %3104 = vmatprep.subr.bf16.mxu0 0
  %3105 = vmatpush1.bf16.msra.mxu0 %v3102
  %3106 = vmatprep.subr.bf16.mxu0 0
  %3107 = vmatpush1.bf16.msra.mxu0 0
  %3108 = vmatprep.subr.bf16.mxu0 0
  %3109 = vmatpush1.bf16.msra.mxu0 0
  %3110 = vmatprep.subr.bf16.mxu0 0
  %3111 = vmatpush1.bf16.msra.mxu0 0
  %3112 = vmatprep.subr.bf16.mxu0 0
  %3113 = vmatpush1.bf16.msra.mxu0 0
  %3114 = vmatprep.subr.bf16.mxu0 0
  %3115 = vmatpush1.bf16.msra.mxu0 0
  %3116 = vmatprep.subr.bf16.mxu0 0
  %3117 = vmatpush1.bf16.msra.mxu0 0
  %3118 = vmatprep.subr.bf16.mxu0 0
  %3119 = vmatpush1.bf16.msra.mxu0 0
  %3120 = vmatprep.subr.bf16.mxu0 0
  %3121 = vmatpush1.bf16.msra.mxu0 0
  %3122 = vmatprep.subr.bf16.mxu0 0
  %3123 = vmatpush1.bf16.msra.mxu0 0
  %3124 = vmatprep.subr.bf16.mxu0 0
  %3125 = vmatpush1.bf16.msra.mxu0 0
  %3126 = vmatprep.subr.bf16.mxu0 0
  %3127 = vmatpush1.bf16.msra.mxu0 0
  %3128 = vmatprep.subr.bf16.mxu0 0
  %3129 = vmatpush1.bf16.msra.mxu0 0
  %3130 = vmatprep.subr.bf16.mxu0 0
  %3131 = vmatpush1.bf16.msra.mxu0 0
  %3132 = vmatprep.subr.bf16.mxu0 0
  %3133 = vmatpush1.bf16.msra.mxu0 0
  %3134 = vmatprep.subr.bf16.mxu0 0
  %3135 = vmatpush1.bf16.msra.mxu0 0
  %3136 = vmatprep.mubr.bf16.mxu0 0
  %3137 = vmatmul.mubr.bf16.gmra.mrb[0].mxu0 %v3099
  %v3138 = vpop.f32.mrb[0].mxu0
  %v3139 = vadd.f32 0.0, %v3138
  %v3140 = vpop.f32.mrb[0].mxu0
  %v3141 = vpop.f32.mrb[0].mxu0
  %v3142 = vpop.f32.mrb[0].mxu0
  %3143 = vdwg.mxu0
  %3144 = vrot.lane.b32.xlu0 %v168, 56
  %v3145 = vpop.permute.xlu0 %3144
  %v3147 = vsel %vm1176, %v2940, 0
  %v3150 = vsel %vm1180, %v3145, 0
  %3152 = vmatprep.subr.bf16.mxu0 0
  %3153 = vmatpush1.bf16.msra.mxu0 %v3150
  %3154 = vmatprep.subr.bf16.mxu0 0
  %3155 = vmatpush1.bf16.msra.mxu0 0
  %3156 = vmatprep.subr.bf16.mxu0 0
  %3157 = vmatpush1.bf16.msra.mxu0 0
  %3158 = vmatprep.subr.bf16.mxu0 0
  %3159 = vmatpush1.bf16.msra.mxu0 0
  %3160 = vmatprep.subr.bf16.mxu0 0
  %3161 = vmatpush1.bf16.msra.mxu0 0
  %3162 = vmatprep.subr.bf16.mxu0 0
  %3163 = vmatpush1.bf16.msra.mxu0 0
  %3164 = vmatprep.subr.bf16.mxu0 0
  %3165 = vmatpush1.bf16.msra.mxu0 0
  %3166 = vmatprep.subr.bf16.mxu0 0
  %3167 = vmatpush1.bf16.msra.mxu0 0
  %3168 = vmatprep.subr.bf16.mxu0 0
  %3169 = vmatpush1.bf16.msra.mxu0 0
  %3170 = vmatprep.subr.bf16.mxu0 0
  %3171 = vmatpush1.bf16.msra.mxu0 0
  %3172 = vmatprep.subr.bf16.mxu0 0
  %3173 = vmatpush1.bf16.msra.mxu0 0
  %3174 = vmatprep.subr.bf16.mxu0 0
  %3175 = vmatpush1.bf16.msra.mxu0 0
  %3176 = vmatprep.subr.bf16.mxu0 0
  %3177 = vmatpush1.bf16.msra.mxu0 0
  %3178 = vmatprep.subr.bf16.mxu0 0
  %3179 = vmatpush1.bf16.msra.mxu0 0
  %3180 = vmatprep.subr.bf16.mxu0 0
  %3181 = vmatpush1.bf16.msra.mxu0 0
  %3182 = vmatprep.subr.bf16.mxu0 0
  %3183 = vmatpush1.bf16.msra.mxu0 0
  %3184 = vmatprep.mubr.bf16.mxu0 0
  %3185 = vmatmul.mubr.bf16.gmra.mrb[0].mxu0 %v3147
  %v3186 = vpop.f32.mrb[0].mxu0
  %v3187 = vadd.f32 0.0, %v3186
  %v3188 = vpop.f32.mrb[0].mxu0
  %v3189 = vpop.f32.mrb[0].mxu0
  %v3190 = vpop.f32.mrb[0].mxu0
  %3191 = vdwg.mxu0
  %3192 = vrot.lane.b32.xlu0 %v169, 56
  %v3193 = vpop.permute.xlu0 %3192
  %v3195 = vsel %vm1176, %v2941, 0
  %v3198 = vsel %vm1180, %v3193, 0
  %3200 = vmatprep.subr.bf16.mxu0 0
  %3201 = vmatpush1.bf16.msra.mxu0 %v3198
  %3202 = vmatprep.subr.bf16.mxu0 0
  %3203 = vmatpush1.bf16.msra.mxu0 0
  %3204 = vmatprep.subr.bf16.mxu0 0
  %3205 = vmatpush1.bf16.msra.mxu0 0
  %3206 = vmatprep.subr.bf16.mxu0 0
  %3207 = vmatpush1.bf16.msra.mxu0 0
  %3208 = vmatprep.subr.bf16.mxu0 0
  %3209 = vmatpush1.bf16.msra.mxu0 0
  %3210 = vmatprep.subr.bf16.mxu0 0
  %3211 = vmatpush1.bf16.msra.mxu0 0
  %3212 = vmatprep.subr.bf16.mxu0 0
  %3213 = vmatpush1.bf16.msra.mxu0 0
  %3214 = vmatprep.subr.bf16.mxu0 0
  %3215 = vmatpush1.bf16.msra.mxu0 0
  %3216 = vmatprep.subr.bf16.mxu0 0
  %3217 = vmatpush1.bf16.msra.mxu0 0
  %3218 = vmatprep.subr.bf16.mxu0 0
  %3219 = vmatpush1.bf16.msra.mxu0 0
  %3220 = vmatprep.subr.bf16.mxu0 0
  %3221 = vmatpush1.bf16.msra.mxu0 0
  %3222 = vmatprep.subr.bf16.mxu0 0
  %3223 = vmatpush1.bf16.msra.mxu0 0
  %3224 = vmatprep.subr.bf16.mxu0 0
  %3225 = vmatpush1.bf16.msra.mxu0 0
  %3226 = vmatprep.subr.bf16.mxu0 0
  %3227 = vmatpush1.bf16.msra.mxu0 0
  %3228 = vmatprep.subr.bf16.mxu0 0
  %3229 = vmatpush1.bf16.msra.mxu0 0
  %3230 = vmatprep.subr.bf16.mxu0 0
  %3231 = vmatpush1.bf16.msra.mxu0 0
  %3232 = vmatprep.mubr.bf16.mxu0 0
  %3233 = vmatmul.mubr.bf16.gmra.mrb[0].mxu0 %v3195
  %v3234 = vpop.f32.mrb[0].mxu0
  %v3235 = vadd.f32 0.0, %v3234
  %v3236 = vpop.f32.mrb[0].mxu0
  %v3237 = vpop.f32.mrb[0].mxu0
  %v3238 = vpop.f32.mrb[0].mxu0
  %3239 = vdwg.mxu0
  %3240 = vrot.lane.b32.xlu0 %v170, 56
  %v3241 = vpop.permute.xlu0 %3240
  %v3243 = vsel %vm1176, %v2942, 0
  %v3246 = vsel %vm1180, %v3241, 0
  %3248 = vmatprep.subr.bf16.mxu0 0
  %3249 = vmatpush1.bf16.msra.mxu0 %v3246
  %3250 = vmatprep.subr.bf16.mxu0 0
  %3251 = vmatpush1.bf16.msra.mxu0 0
  %3252 = vmatprep.subr.bf16.mxu0 0
  %3253 = vmatpush1.bf16.msra.mxu0 0
  %3254 = vmatprep.subr.bf16.mxu0 0
  %3255 = vmatpush1.bf16.msra.mxu0 0
  %3256 = vmatprep.subr.bf16.mxu0 0
  %3257 = vmatpush1.bf16.msra.mxu0 0
  %3258 = vmatprep.subr.bf16.mxu0 0
  %3259 = vmatpush1.bf16.msra.mxu0 0
  %3260 = vmatprep.subr.bf16.mxu0 0
  %3261 = vmatpush1.bf16.msra.mxu0 0
  %3262 = vmatprep.subr.bf16.mxu0 0
  %3263 = vmatpush1.bf16.msra.mxu0 0
  %3264 = vmatprep.subr.bf16.mxu0 0
  %3265 = vmatpush1.bf16.msra.mxu0 0
  %3266 = vmatprep.subr.bf16.mxu0 0
  %3267 = vmatpush1.bf16.msra.mxu0 0
  %3268 = vmatprep.subr.bf16.mxu0 0
  %3269 = vmatpush1.bf16.msra.mxu0 0
  %3270 = vmatprep.subr.bf16.mxu0 0
  %3271 = vmatpush1.bf16.msra.mxu0 0
  %3272 = vmatprep.subr.bf16.mxu0 0
  %3273 = vmatpush1.bf16.msra.mxu0 0
  %3274 = vmatprep.subr.bf16.mxu0 0
  %3275 = vmatpush1.bf16.msra.mxu0 0
  %3276 = vmatprep.subr.bf16.mxu0 0
  %3277 = vmatpush1.bf16.msra.mxu0 0
  %3278 = vmatprep.subr.bf16.mxu0 0
  %3279 = vmatpush1.bf16.msra.mxu0 0
  %3280 = vmatprep.mubr.bf16.mxu0 0
  %3281 = vmatmul.mubr.bf16.gmra.mrb[0].mxu0 %v3243
  %v3282 = vpop.f32.mrb[0].mxu0
  %v3283 = vadd.f32 0.0, %v3282
  %v3284 = vpop.f32.mrb[0].mxu0
  %v3285 = vpop.f32.mrb[0].mxu0
  %v3286 = vpop.f32.mrb[0].mxu0
  %3287 = vdwg.mxu0
  %3288 = vrot.lane.b32.xlu0 %v171, 56
  %v3289 = vpop.permute.xlu0 %3288
  %v3291 = vsel %vm1176, %v2943, 0
  %v3294 = vsel %vm1180, %v3289, 0
  %3296 = vmatprep.subr.bf16.mxu0 0
  %3297 = vmatpush1.bf16.msra.mxu0 %v3294
  %3298 = vmatprep.subr.bf16.mxu0 0
  %3299 = vmatpush1.bf16.msra.mxu0 0
  %3300 = vmatprep.subr.bf16.mxu0 0
  %3301 = vmatpush1.bf16.msra.mxu0 0
  %3302 = vmatprep.subr.bf16.mxu0 0
  %3303 = vmatpush1.bf16.msra.mxu0 0
  %3304 = vmatprep.subr.bf16.mxu0 0
  %3305 = vmatpush1.bf16.msra.mxu0 0
  %3306 = vmatprep.subr.bf16.mxu0 0
  %3307 = vmatpush1.bf16.msra.mxu0 0
  %3308 = vmatprep.subr.bf16.mxu0 0
  %3309 = vmatpush1.bf16.msra.mxu0 0
  %3310 = vmatprep.subr.bf16.mxu0 0
  %3311 = vmatpush1.bf16.msra.mxu0 0
  %3312 = vmatprep.subr.bf16.mxu0 0
  %3313 = vmatpush1.bf16.msra.mxu0 0
  %3314 = vmatprep.subr.bf16.mxu0 0
  %3315 = vmatpush1.bf16.msra.mxu0 0
  %3316 = vmatprep.subr.bf16.mxu0 0
  %3317 = vmatpush1.bf16.msra.mxu0 0
  %3318 = vmatprep.subr.bf16.mxu0 0
  %3319 = vmatpush1.bf16.msra.mxu0 0
  %3320 = vmatprep.subr.bf16.mxu0 0
  %3321 = vmatpush1.bf16.msra.mxu0 0
  %3322 = vmatprep.subr.bf16.mxu0 0
  %3323 = vmatpush1.bf16.msra.mxu0 0
  %3324 = vmatprep.subr.bf16.mxu0 0
  %3325 = vmatpush1.bf16.msra.mxu0 0
  %3326 = vmatprep.subr.bf16.mxu0 0
  %3327 = vmatpush1.bf16.msra.mxu0 0
  %3328 = vmatprep.mubr.bf16.mxu0 0
  %3329 = vmatmul.mubr.bf16.gmra.mrb[0].mxu0 %v3291
  %v3330 = vpop.f32.mrb[0].mxu0
  %v3331 = vadd.f32 0.0, %v3330
  %v3332 = vpop.f32.mrb[0].mxu0
  %v3333 = vpop.f32.mrb[0].mxu0
  %v3334 = vpop.f32.mrb[0].mxu0
  %3335 = vdwg.mxu0
  %3336 = vrot.lane.b32.xlu0 %v172, 56
  %v3337 = vpop.permute.xlu0 %3336
  %v3339 = vsel %vm1176, %v2944, 0
  %v3342 = vsel %vm1180, %v3337, 0
  %3344 = vmatprep.subr.bf16.mxu0 0
  %3345 = vmatpush1.bf16.msra.mxu0 %v3342
  %3346 = vmatprep.subr.bf16.mxu0 0
  %3347 = vmatpush1.bf16.msra.mxu0 0
  %3348 = vmatprep.subr.bf16.mxu0 0
  %3349 = vmatpush1.bf16.msra.mxu0 0
  %3350 = vmatprep.subr.bf16.mxu0 0
  %3351 = vmatpush1.bf16.msra.mxu0 0
  %3352 = vmatprep.subr.bf16.mxu0 0
  %3353 = vmatpush1.bf16.msra.mxu0 0
  %3354 = vmatprep.subr.bf16.mxu0 0
  %3355 = vmatpush1.bf16.msra.mxu0 0
  %3356 = vmatprep.subr.bf16.mxu0 0
  %3357 = vmatpush1.bf16.msra.mxu0 0
  %3358 = vmatprep.subr.bf16.mxu0 0
  %3359 = vmatpush1.bf16.msra.mxu0 0
  %3360 = vmatprep.subr.bf16.mxu0 0
  %3361 = vmatpush1.bf16.msra.mxu0 0
  %3362 = vmatprep.subr.bf16.mxu0 0
  %3363 = vmatpush1.bf16.msra.mxu0 0
  %3364 = vmatprep.subr.bf16.mxu0 0
  %3365 = vmatpush1.bf16.msra.mxu0 0
  %3366 = vmatprep.subr.bf16.mxu0 0
  %3367 = vmatpush1.bf16.msra.mxu0 0
  %3368 = vmatprep.subr.bf16.mxu0 0
  %3369 = vmatpush1.bf16.msra.mxu0 0
  %3370 = vmatprep.subr.bf16.mxu0 0
  %3371 = vmatpush1.bf16.msra.mxu0 0
  %3372 = vmatprep.subr.bf16.mxu0 0
  %3373 = vmatpush1.bf16.msra.mxu0 0
  %3374 = vmatprep.subr.bf16.mxu0 0
  %3375 = vmatpush1.bf16.msra.mxu0 0
  %3376 = vmatprep.mubr.bf16.mxu0 0
  %3377 = vmatmul.mubr.bf16.gmra.mrb[0].mxu0 %v3339
  %v3378 = vpop.f32.mrb[0].mxu0
  %v3379 = vadd.f32 0.0, %v3378
  %v3380 = vpop.f32.mrb[0].mxu0
  %v3381 = vpop.f32.mrb[0].mxu0
  %v3382 = vpop.f32.mrb[0].mxu0
  %3383 = vdwg.mxu0
  %3384 = vrot.lane.b32.xlu0 %v173, 56
  %v3385 = vpop.permute.xlu0 %3384
  %v3387 = vsel %vm1176, %v2945, 0
  %v3390 = vsel %vm1180, %v3385, 0
  %3392 = vmatprep.subr.bf16.mxu0 0
  %3393 = vmatpush1.bf16.msra.mxu0 %v3390
  %3394 = vmatprep.subr.bf16.mxu0 0
  %3395 = vmatpush1.bf16.msra.mxu0 0
  %3396 = vmatprep.subr.bf16.mxu0 0
  %3397 = vmatpush1.bf16.msra.mxu0 0
  %3398 = vmatprep.subr.bf16.mxu0 0
  %3399 = vmatpush1.bf16.msra.mxu0 0
  %3400 = vmatprep.subr.bf16.mxu0 0
  %3401 = vmatpush1.bf16.msra.mxu0 0
  %3402 = vmatprep.subr.bf16.mxu0 0
  %3403 = vmatpush1.bf16.msra.mxu0 0
  %3404 = vmatprep.subr.bf16.mxu0 0
  %3405 = vmatpush1.bf16.msra.mxu0 0
  %3406 = vmatprep.subr.bf16.mxu0 0
  %3407 = vmatpush1.bf16.msra.mxu0 0
  %3408 = vmatprep.subr.bf16.mxu0 0
  %3409 = vmatpush1.bf16.msra.mxu0 0
  %3410 = vmatprep.subr.bf16.mxu0 0
  %3411 = vmatpush1.bf16.msra.mxu0 0
  %3412 = vmatprep.subr.bf16.mxu0 0
  %3413 = vmatpush1.bf16.msra.mxu0 0
  %3414 = vmatprep.subr.bf16.mxu0 0
  %3415 = vmatpush1.bf16.msra.mxu0 0
  %3416 = vmatprep.subr.bf16.mxu0 0
  %3417 = vmatpush1.bf16.msra.mxu0 0
  %3418 = vmatprep.subr.bf16.mxu0 0
  %3419 = vmatpush1.bf16.msra.mxu0 0
  %3420 = vmatprep.subr.bf16.mxu0 0
  %3421 = vmatpush1.bf16.msra.mxu0 0
  %3422 = vmatprep.subr.bf16.mxu0 0
  %3423 = vmatpush1.bf16.msra.mxu0 0
  %3424 = vmatprep.mubr.bf16.mxu0 0
  %3425 = vmatmul.mubr.bf16.gmra.mrb[0].mxu0 %v3387
  %v3426 = vpop.f32.mrb[0].mxu0
  %v3427 = vadd.f32 0.0, %v3426
  %v3428 = vpop.f32.mrb[0].mxu0
  %v3429 = vpop.f32.mrb[0].mxu0
  %v3430 = vpop.f32.mrb[0].mxu0
  %3431 = vdwg.mxu0
  %3432 = vrot.lane.b32.xlu0 %v174, 56
  %v3433 = vpop.permute.xlu0 %3432
  %v3435 = vsel %vm1176, %v2946, 0
  %v3438 = vsel %vm1180, %v3433, 0
  %3440 = vmatprep.subr.bf16.mxu0 0
  %3441 = vmatpush1.bf16.msra.mxu0 %v3438
  %3442 = vmatprep.subr.bf16.mxu0 0
  %3443 = vmatpush1.bf16.msra.mxu0 0
  %3444 = vmatprep.subr.bf16.mxu0 0
  %3445 = vmatpush1.bf16.msra.mxu0 0
  %3446 = vmatprep.subr.bf16.mxu0 0
  %3447 = vmatpush1.bf16.msra.mxu0 0
  %3448 = vmatprep.subr.bf16.mxu0 0
  %3449 = vmatpush1.bf16.msra.mxu0 0
  %3450 = vmatprep.subr.bf16.mxu0 0
  %3451 = vmatpush1.bf16.msra.mxu0 0
  %3452 = vmatprep.subr.bf16.mxu0 0
  %3453 = vmatpush1.bf16.msra.mxu0 0
  %3454 = vmatprep.subr.bf16.mxu0 0
  %3455 = vmatpush1.bf16.msra.mxu0 0
  %3456 = vmatprep.subr.bf16.mxu0 0
  %3457 = vmatpush1.bf16.msra.mxu0 0
  %3458 = vmatprep.subr.bf16.mxu0 0
  %3459 = vmatpush1.bf16.msra.mxu0 0
  %3460 = vmatprep.subr.bf16.mxu0 0
  %3461 = vmatpush1.bf16.msra.mxu0 0
  %3462 = vmatprep.subr.bf16.mxu0 0
  %3463 = vmatpush1.bf16.msra.mxu0 0
  %3464 = vmatprep.subr.bf16.mxu0 0
  %3465 = vmatpush1.bf16.msra.mxu0 0
  %3466 = vmatprep.subr.bf16.mxu0 0
  %3467 = vmatpush1.bf16.msra.mxu0 0
  %3468 = vmatprep.subr.bf16.mxu0 0
  %3469 = vmatpush1.bf16.msra.mxu0 0
  %3470 = vmatprep.subr.bf16.mxu0 0
  %3471 = vmatpush1.bf16.msra.mxu0 0
  %3472 = vmatprep.mubr.bf16.mxu0 0
  %3473 = vmatmul.mubr.bf16.gmra.mrb[0].mxu0 %v3435
  %v3474 = vpop.f32.mrb[0].mxu0
  %v3475 = vadd.f32 0.0, %v3474
  %v3476 = vpop.f32.mrb[0].mxu0
  %v3477 = vpop.f32.mrb[0].mxu0
  %v3478 = vpop.f32.mrb[0].mxu0
  %3479 = vdwg.mxu0
  %3480 = vrot.lane.b32.xlu0 %v175, 56
  %v3481 = vpop.permute.xlu0 %3480
  %v3483 = vsel %vm1176, %v2947, 0
  %v3486 = vsel %vm1180, %v3481, 0
  %3488 = vmatprep.subr.bf16.mxu0 0
  %3489 = vmatpush1.bf16.msra.mxu0 %v3486
  %3490 = vmatprep.subr.bf16.mxu0 0
  %3491 = vmatpush1.bf16.msra.mxu0 0
  %3492 = vmatprep.subr.bf16.mxu0 0
  %3493 = vmatpush1.bf16.msra.mxu0 0
  %3494 = vmatprep.subr.bf16.mxu0 0
  %3495 = vmatpush1.bf16.msra.mxu0 0
  %3496 = vmatprep.subr.bf16.mxu0 0
  %3497 = vmatpush1.bf16.msra.mxu0 0
  %3498 = vmatprep.subr.bf16.mxu0 0
  %3499 = vmatpush1.bf16.msra.mxu0 0
  %3500 = vmatprep.subr.bf16.mxu0 0
  %3501 = vmatpush1.bf16.msra.mxu0 0
  %3502 = vmatprep.subr.bf16.mxu0 0
  %3503 = vmatpush1.bf16.msra.mxu0 0
  %3504 = vmatprep.subr.bf16.mxu0 0
  %3505 = vmatpush1.bf16.msra.mxu0 0
  %3506 = vmatprep.subr.bf16.mxu0 0
  %3507 = vmatpush1.bf16.msra.mxu0 0
  %3508 = vmatprep.subr.bf16.mxu0 0
  %3509 = vmatpush1.bf16.msra.mxu0 0
  %3510 = vmatprep.subr.bf16.mxu0 0
  %3511 = vmatpush1.bf16.msra.mxu0 0
  %3512 = vmatprep.subr.bf16.mxu0 0
  %3513 = vmatpush1.bf16.msra.mxu0 0
  %3514 = vmatprep.subr.bf16.mxu0 0
  %3515 = vmatpush1.bf16.msra.mxu0 0
  %3516 = vmatprep.subr.bf16.mxu0 0
  %3517 = vmatpush1.bf16.msra.mxu0 0
  %3518 = vmatprep.subr.bf16.mxu0 0
  %3519 = vmatpush1.bf16.msra.mxu0 0
  %3520 = vmatprep.mubr.bf16.mxu0 0
  %3521 = vmatmul.mubr.bf16.gmra.mrb[0].mxu0 %v3483
  %v3522 = vpop.f32.mrb[0].mxu0
  %v3523 = vadd.f32 0.0, %v3522
  %v3524 = vpop.f32.mrb[0].mxu0
  %v3525 = vpop.f32.mrb[0].mxu0
  %v3526 = vpop.f32.mrb[0].mxu0
  %3527 = vdwg.mxu0
  %3528 = vrot.lane.b32.xlu0 %v176, 56
  %v3529 = vpop.permute.xlu0 %3528
  %v3531 = vsel %vm1176, %v2948, 0
  %v3534 = vsel %vm1180, %v3529, 0
  %3536 = vmatprep.subr.bf16.mxu0 0
  %3537 = vmatpush1.bf16.msra.mxu0 %v3534
  %3538 = vmatprep.subr.bf16.mxu0 0
  %3539 = vmatpush1.bf16.msra.mxu0 0
  %3540 = vmatprep.subr.bf16.mxu0 0
  %3541 = vmatpush1.bf16.msra.mxu0 0
  %3542 = vmatprep.subr.bf16.mxu0 0
  %3543 = vmatpush1.bf16.msra.mxu0 0
  %3544 = vmatprep.subr.bf16.mxu0 0
  %3545 = vmatpush1.bf16.msra.mxu0 0
  %3546 = vmatprep.subr.bf16.mxu0 0
  %3547 = vmatpush1.bf16.msra.mxu0 0
  %3548 = vmatprep.subr.bf16.mxu0 0
  %3549 = vmatpush1.bf16.msra.mxu0 0
  %3550 = vmatprep.subr.bf16.mxu0 0
  %3551 = vmatpush1.bf16.msra.mxu0 0
  %3552 = vmatprep.subr.bf16.mxu0 0
  %3553 = vmatpush1.bf16.msra.mxu0 0
  %3554 = vmatprep.subr.bf16.mxu0 0
  %3555 = vmatpush1.bf16.msra.mxu0 0
  %3556 = vmatprep.subr.bf16.mxu0 0
  %3557 = vmatpush1.bf16.msra.mxu0 0
  %3558 = vmatprep.subr.bf16.mxu0 0
  %3559 = vmatpush1.bf16.msra.mxu0 0
  %3560 = vmatprep.subr.bf16.mxu0 0
  %3561 = vmatpush1.bf16.msra.mxu0 0
  %3562 = vmatprep.subr.bf16.mxu0 0
  %3563 = vmatpush1.bf16.msra.mxu0 0
  %3564 = vmatprep.subr.bf16.mxu0 0
  %3565 = vmatpush1.bf16.msra.mxu0 0
  %3566 = vmatprep.subr.bf16.mxu0 0
  %3567 = vmatpush1.bf16.msra.mxu0 0
  %3568 = vmatprep.mubr.bf16.mxu0 0
  %3569 = vmatmul.mubr.bf16.gmra.mrb[0].mxu0 %v3531
  %v3570 = vpop.f32.mrb[0].mxu0
  %v3571 = vadd.f32 0.0, %v3570
  %v3572 = vpop.f32.mrb[0].mxu0
  %v3573 = vpop.f32.mrb[0].mxu0
  %v3574 = vpop.f32.mrb[0].mxu0
  %3575 = vdwg.mxu0
  %3576 = vrot.lane.b32.xlu0 %v177, 56
  %v3577 = vpop.permute.xlu0 %3576
  %v3579 = vsel %vm1176, %v2949, 0
  %v3582 = vsel %vm1180, %v3577, 0
  %3584 = vmatprep.subr.bf16.mxu0 0
  %3585 = vmatpush1.bf16.msra.mxu0 %v3582
  %3586 = vmatprep.subr.bf16.mxu0 0
  %3587 = vmatpush1.bf16.msra.mxu0 0
  %3588 = vmatprep.subr.bf16.mxu0 0
  %3589 = vmatpush1.bf16.msra.mxu0 0
  %3590 = vmatprep.subr.bf16.mxu0 0
  %3591 = vmatpush1.bf16.msra.mxu0 0
  %3592 = vmatprep.subr.bf16.mxu0 0
  %3593 = vmatpush1.bf16.msra.mxu0 0
  %3594 = vmatprep.subr.bf16.mxu0 0
  %3595 = vmatpush1.bf16.msra.mxu0 0
  %3596 = vmatprep.subr.bf16.mxu0 0
  %3597 = vmatpush1.bf16.msra.mxu0 0
  %3598 = vmatprep.subr.bf16.mxu0 0
  %3599 = vmatpush1.bf16.msra.mxu0 0
  %3600 = vmatprep.subr.bf16.mxu0 0
  %3601 = vmatpush1.bf16.msra.mxu0 0
  %3602 = vmatprep.subr.bf16.mxu0 0
  %3603 = vmatpush1.bf16.msra.mxu0 0
  %3604 = vmatprep.subr.bf16.mxu0 0
  %3605 = vmatpush1.bf16.msra.mxu0 0
  %3606 = vmatprep.subr.bf16.mxu0 0
  %3607 = vmatpush1.bf16.msra.mxu0 0
  %3608 = vmatprep.subr.bf16.mxu0 0
  %3609 = vmatpush1.bf16.msra.mxu0 0
  %3610 = vmatprep.subr.bf16.mxu0 0
  %3611 = vmatpush1.bf16.msra.mxu0 0
  %3612 = vmatprep.subr.bf16.mxu0 0
  %3613 = vmatpush1.bf16.msra.mxu0 0
  %3614 = vmatprep.subr.bf16.mxu0 0
  %3615 = vmatpush1.bf16.msra.mxu0 0
  %3616 = vmatprep.mubr.bf16.mxu0 0
  %3617 = vmatmul.mubr.bf16.gmra.mrb[0].mxu0 %v3579
  %v3618 = vpop.f32.mrb[0].mxu0
  %v3619 = vadd.f32 0.0, %v3618
  %v3620 = vpop.f32.mrb[0].mxu0
  %v3621 = vpop.f32.mrb[0].mxu0
  %v3622 = vpop.f32.mrb[0].mxu0
  %3623 = vdwg.mxu0
  %3624 = vrot.lane.b32.xlu0 %v178, 56
  %v3625 = vpop.permute.xlu0 %3624
  %v3627 = vsel %vm1176, %v2950, 0
  %v3630 = vsel %vm1180, %v3625, 0
  %3632 = vmatprep.subr.bf16.mxu0 0
  %3633 = vmatpush1.bf16.msra.mxu0 %v3630
  %3634 = vmatprep.subr.bf16.mxu0 0
  %3635 = vmatpush1.bf16.msra.mxu0 0
  %3636 = vmatprep.subr.bf16.mxu0 0
  %3637 = vmatpush1.bf16.msra.mxu0 0
  %3638 = vmatprep.subr.bf16.mxu0 0
  %3639 = vmatpush1.bf16.msra.mxu0 0
  %3640 = vmatprep.subr.bf16.mxu0 0
  %3641 = vmatpush1.bf16.msra.mxu0 0
  %3642 = vmatprep.subr.bf16.mxu0 0
  %3643 = vmatpush1.bf16.msra.mxu0 0
  %3644 = vmatprep.subr.bf16.mxu0 0
  %3645 = vmatpush1.bf16.msra.mxu0 0
  %3646 = vmatprep.subr.bf16.mxu0 0
  %3647 = vmatpush1.bf16.msra.mxu0 0
  %3648 = vmatprep.subr.bf16.mxu0 0
  %3649 = vmatpush1.bf16.msra.mxu0 0
  %3650 = vmatprep.subr.bf16.mxu0 0
  %3651 = vmatpush1.bf16.msra.mxu0 0
  %3652 = vmatprep.subr.bf16.mxu0 0
  %3653 = vmatpush1.bf16.msra.mxu0 0
  %3654 = vmatprep.subr.bf16.mxu0 0
  %3655 = vmatpush1.bf16.msra.mxu0 0
  %3656 = vmatprep.subr.bf16.mxu0 0
  %3657 = vmatpush1.bf16.msra.mxu0 0
  %3658 = vmatprep.subr.bf16.mxu0 0
  %3659 = vmatpush1.bf16.msra.mxu0 0
  %3660 = vmatprep.subr.bf16.mxu0 0
  %3661 = vmatpush1.bf16.msra.mxu0 0
  %3662 = vmatprep.subr.bf16.mxu0 0
  %3663 = vmatpush1.bf16.msra.mxu0 0
  %3664 = vmatprep.mubr.bf16.mxu0 0
  %3665 = vmatmul.mubr.bf16.gmra.mrb[0].mxu0 %v3627
  %v3666 = vpop.f32.mrb[0].mxu0
  %v3667 = vadd.f32 0.0, %v3666
  %v3668 = vpop.f32.mrb[0].mxu0
  %v3669 = vpop.f32.mrb[0].mxu0
  %v3670 = vpop.f32.mrb[0].mxu0
  %3671 = vdwg.mxu0
  %3672 = vrot.lane.b32.xlu0 %v179, 56
  %v3673 = vpop.permute.xlu0 %3672
  %v3675 = vsel %vm1176, %v2951, 0
  %v3678 = vsel %vm1180, %v3673, 0
  %3680 = vmatprep.subr.bf16.mxu0 0
  %3681 = vmatpush1.bf16.msra.mxu0 %v3678
  %3682 = vmatprep.subr.bf16.mxu0 0
  %3683 = vmatpush1.bf16.msra.mxu0 0
  %3684 = vmatprep.subr.bf16.mxu0 0
  %3685 = vmatpush1.bf16.msra.mxu0 0
  %3686 = vmatprep.subr.bf16.mxu0 0
  %3687 = vmatpush1.bf16.msra.mxu0 0
  %3688 = vmatprep.subr.bf16.mxu0 0
  %3689 = vmatpush1.bf16.msra.mxu0 0
  %3690 = vmatprep.subr.bf16.mxu0 0
  %3691 = vmatpush1.bf16.msra.mxu0 0
  %3692 = vmatprep.subr.bf16.mxu0 0
  %3693 = vmatpush1.bf16.msra.mxu0 0
  %3694 = vmatprep.subr.bf16.mxu0 0
  %3695 = vmatpush1.bf16.msra.mxu0 0
  %3696 = vmatprep.subr.bf16.mxu0 0
  %3697 = vmatpush1.bf16.msra.mxu0 0
  %3698 = vmatprep.subr.bf16.mxu0 0
  %3699 = vmatpush1.bf16.msra.mxu0 0
  %3700 = vmatprep.subr.bf16.mxu0 0
  %3701 = vmatpush1.bf16.msra.mxu0 0
  %3702 = vmatprep.subr.bf16.mxu0 0
  %3703 = vmatpush1.bf16.msra.mxu0 0
  %3704 = vmatprep.subr.bf16.mxu0 0
  %3705 = vmatpush1.bf16.msra.mxu0 0
  %3706 = vmatprep.subr.bf16.mxu0 0
  %3707 = vmatpush1.bf16.msra.mxu0 0
  %3708 = vmatprep.subr.bf16.mxu0 0
  %3709 = vmatpush1.bf16.msra.mxu0 0
  %3710 = vmatprep.subr.bf16.mxu0 0
  %3711 = vmatpush1.bf16.msra.mxu0 0
  %3712 = vmatprep.mubr.bf16.mxu0 0
  %3713 = vmatmul.mubr.bf16.gmra.mrb[0].mxu0 %v3675
  %v3714 = vpop.f32.mrb[0].mxu0
  %v3715 = vadd.f32 0.0, %v3714
  %v3716 = vpop.f32.mrb[0].mxu0
  %v3717 = vpop.f32.mrb[0].mxu0
  %v3718 = vpop.f32.mrb[0].mxu0
  %3719 = vdwg.mxu0
  %3720 = vrot.lane.b32.xlu0 %v164, 112
  %v3721 = vpop.permute.xlu0 %3720
  %3722 = vrot.lane.b32.xlu0 %v164, 80
  %v3723 = vpop.permute.xlu0 %3722
  %v3725 = vsel %vm183, %v3721, 0
  %v3728 = vsel %vm183, %v3723, 0
  %3730 = vmatprep.subr.bf16.mxu0 0
  %3731 = vmatpush1.bf16.xpose.msra.mxu0 %v3728
  %3732 = vmatprep.subr.bf16.mxu0 0
  %3733 = vmatpush1.bf16.xpose.msra.mxu0 0
  %3734 = vmatprep.subr.bf16.mxu0 0
  %3735 = vmatpush1.bf16.xpose.msra.mxu0 0
  %3736 = vmatprep.subr.bf16.mxu0 0
  %3737 = vmatpush1.bf16.xpose.msra.mxu0 0
  %3738 = vmatprep.subr.bf16.mxu0 0
  %3739 = vmatpush1.bf16.xpose.msra.mxu0 0
  %3740 = vmatprep.subr.bf16.mxu0 0
  %3741 = vmatpush1.bf16.xpose.msra.mxu0 0
  %3742 = vmatprep.subr.bf16.mxu0 0
  %3743 = vmatpush1.bf16.xpose.msra.mxu0 0
  %3744 = vmatprep.subr.bf16.mxu0 0
  %3745 = vmatpush1.bf16.xpose.msra.mxu0 0
  %3746 = vmatprep.subr.bf16.mxu0 0
  %3747 = vmatpush1.bf16.xpose.msra.mxu0 0
  %3748 = vmatprep.subr.bf16.mxu0 0
  %3749 = vmatpush1.bf16.xpose.msra.mxu0 0
  %3750 = vmatprep.subr.bf16.mxu0 0
  %3751 = vmatpush1.bf16.xpose.msra.mxu0 0
  %3752 = vmatprep.subr.bf16.mxu0 0
  %3753 = vmatpush1.bf16.xpose.msra.mxu0 0
  %3754 = vmatprep.subr.bf16.mxu0 0
  %3755 = vmatpush1.bf16.xpose.msra.mxu0 0
  %3756 = vmatprep.subr.bf16.mxu0 0
  %3757 = vmatpush1.bf16.xpose.msra.mxu0 0
  %3758 = vmatprep.subr.bf16.mxu0 0
  %3759 = vmatpush1.bf16.xpose.msra.mxu0 0
  %3760 = vmatprep.subr.bf16.mxu0 0
  %3761 = vmatpush1.bf16.xpose.msra.mxu0 0
  %3762 = vmatprep.mubr.bf16.mxu0 0
  %3763 = vmatmul.mubr.bf16.gmra.mrb[0].mxu0 %v3725
  %v3764 = vpop.f32.mrb[0].mxu0
  %v3765 = vadd.f32 0.0, %v3764
  %v3766 = vpop.f32.mrb[0].mxu0
  %v3767 = vpop.f32.mrb[0].mxu0
  %v3768 = vpop.f32.mrb[0].mxu0
  %3769 = vdwg.mxu0
  %3770 = vrot.lane.b32.xlu0 %v165, 112
  %v3771 = vpop.permute.xlu0 %3770
  %3772 = vrot.lane.b32.xlu0 %v165, 80
  %v3773 = vpop.permute.xlu0 %3772
  %v3775 = vsel %vm183, %v3771, 0
  %v3778 = vsel %vm183, %v3773, 0
  %3780 = vmatprep.subr.bf16.mxu0 0
  %3781 = vmatpush1.bf16.xpose.msra.mxu0 %v3778
  %3782 = vmatprep.subr.bf16.mxu0 0
  %3783 = vmatpush1.bf16.xpose.msra.mxu0 0
  %3784 = vmatprep.subr.bf16.mxu0 0
  %3785 = vmatpush1.bf16.xpose.msra.mxu0 0
  %3786 = vmatprep.subr.bf16.mxu0 0
  %3787 = vmatpush1.bf16.xpose.msra.mxu0 0
  %3788 = vmatprep.subr.bf16.mxu0 0
  %3789 = vmatpush1.bf16.xpose.msra.mxu0 0
  %3790 = vmatprep.subr.bf16.mxu0 0
  %3791 = vmatpush1.bf16.xpose.msra.mxu0 0
  %3792 = vmatprep.subr.bf16.mxu0 0
  %3793 = vmatpush1.bf16.xpose.msra.mxu0 0
  %3794 = vmatprep.subr.bf16.mxu0 0
  %3795 = vmatpush1.bf16.xpose.msra.mxu0 0
  %3796 = vmatprep.subr.bf16.mxu0 0
  %3797 = vmatpush1.bf16.xpose.msra.mxu0 0
  %3798 = vmatprep.subr.bf16.mxu0 0
  %3799 = vmatpush1.bf16.xpose.msra.mxu0 0
  %3800 = vmatprep.subr.bf16.mxu0 0
  %3801 = vmatpush1.bf16.xpose.msra.mxu0 0
  %3802 = vmatprep.subr.bf16.mxu0 0
  %3803 = vmatpush1.bf16.xpose.msra.mxu0 0
  %3804 = vmatprep.subr.bf16.mxu0 0
  %3805 = vmatpush1.bf16.xpose.msra.mxu0 0
  %3806 = vmatprep.subr.bf16.mxu0 0
  %3807 = vmatpush1.bf16.xpose.msra.mxu0 0
  %3808 = vmatprep.subr.bf16.mxu0 0
  %3809 = vmatpush1.bf16.xpose.msra.mxu0 0
  %3810 = vmatprep.subr.bf16.mxu0 0
  %3811 = vmatpush1.bf16.xpose.msra.mxu0 0
  %3812 = vmatprep.mubr.bf16.mxu0 0
  %3813 = vmatmul.mubr.bf16.gmra.mrb[0].mxu0 %v3775
  %v3814 = vpop.f32.mrb[0].mxu0
  %v3815 = vadd.f32 0.0, %v3814
  %v3816 = vpop.f32.mrb[0].mxu0
  %v3817 = vpop.f32.mrb[0].mxu0
  %v3818 = vpop.f32.mrb[0].mxu0
  %3819 = vdwg.mxu0
  %3820 = vrot.lane.b32.xlu0 %v166, 112
  %v3821 = vpop.permute.xlu0 %3820
  %3822 = vrot.lane.b32.xlu0 %v166, 80
  %v3823 = vpop.permute.xlu0 %3822
  %v3825 = vsel %vm183, %v3821, 0
  %v3828 = vsel %vm183, %v3823, 0
  %3830 = vmatprep.subr.bf16.mxu0 0
  %3831 = vmatpush1.bf16.xpose.msra.mxu0 %v3828
  %3832 = vmatprep.subr.bf16.mxu0 0
  %3833 = vmatpush1.bf16.xpose.msra.mxu0 0
  %3834 = vmatprep.subr.bf16.mxu0 0
  %3835 = vmatpush1.bf16.xpose.msra.mxu0 0
  %3836 = vmatprep.subr.bf16.mxu0 0
  %3837 = vmatpush1.bf16.xpose.msra.mxu0 0
  %3838 = vmatprep.subr.bf16.mxu0 0
  %3839 = vmatpush1.bf16.xpose.msra.mxu0 0
  %3840 = vmatprep.subr.bf16.mxu0 0
  %3841 = vmatpush1.bf16.xpose.msra.mxu0 0
  %3842 = vmatprep.subr.bf16.mxu0 0
  %3843 = vmatpush1.bf16.xpose.msra.mxu0 0
  %3844 = vmatprep.subr.bf16.mxu0 0
  %3845 = vmatpush1.bf16.xpose.msra.mxu0 0
  %3846 = vmatprep.subr.bf16.mxu0 0
  %3847 = vmatpush1.bf16.xpose.msra.mxu0 0
  %3848 = vmatprep.subr.bf16.mxu0 0
  %3849 = vmatpush1.bf16.xpose.msra.mxu0 0
  %3850 = vmatprep.subr.bf16.mxu0 0
  %3851 = vmatpush1.bf16.xpose.msra.mxu0 0
  %3852 = vmatprep.subr.bf16.mxu0 0
  %3853 = vmatpush1.bf16.xpose.msra.mxu0 0
  %3854 = vmatprep.subr.bf16.mxu0 0
  %3855 = vmatpush1.bf16.xpose.msra.mxu0 0
  %3856 = vmatprep.subr.bf16.mxu0 0
  %3857 = vmatpush1.bf16.xpose.msra.mxu0 0
  %3858 = vmatprep.subr.bf16.mxu0 0
  %3859 = vmatpush1.bf16.xpose.msra.mxu0 0
  %3860 = vmatprep.subr.bf16.mxu0 0
  %3861 = vmatpush1.bf16.xpose.msra.mxu0 0
  %3862 = vmatprep.mubr.bf16.mxu0 0
  %3863 = vmatmul.mubr.bf16.gmra.mrb[0].mxu0 %v3825
  %v3864 = vpop.f32.mrb[0].mxu0
  %v3865 = vadd.f32 0.0, %v3864
  %v3866 = vpop.f32.mrb[0].mxu0
  %v3867 = vpop.f32.mrb[0].mxu0
  %v3868 = vpop.f32.mrb[0].mxu0
  %3869 = vdwg.mxu0
  %3870 = vrot.lane.b32.xlu0 %v167, 112
  %v3871 = vpop.permute.xlu0 %3870
  %3872 = vrot.lane.b32.xlu0 %v167, 80
  %v3873 = vpop.permute.xlu0 %3872
  %v3875 = vsel %vm183, %v3871, 0
  %v3878 = vsel %vm183, %v3873, 0
  %3880 = vmatprep.subr.bf16.mxu0 0
  %3881 = vmatpush1.bf16.xpose.msra.mxu0 %v3878
  %3882 = vmatprep.subr.bf16.mxu0 0
  %3883 = vmatpush1.bf16.xpose.msra.mxu0 0
  %3884 = vmatprep.subr.bf16.mxu0 0
  %3885 = vmatpush1.bf16.xpose.msra.mxu0 0
  %3886 = vmatprep.subr.bf16.mxu0 0
  %3887 = vmatpush1.bf16.xpose.msra.mxu0 0
  %3888 = vmatprep.subr.bf16.mxu0 0
  %3889 = vmatpush1.bf16.xpose.msra.mxu0 0
  %3890 = vmatprep.subr.bf16.mxu0 0
  %3891 = vmatpush1.bf16.xpose.msra.mxu0 0
  %3892 = vmatprep.subr.bf16.mxu0 0
  %3893 = vmatpush1.bf16.xpose.msra.mxu0 0
  %3894 = vmatprep.subr.bf16.mxu0 0
  %3895 = vmatpush1.bf16.xpose.msra.mxu0 0
  %3896 = vmatprep.subr.bf16.mxu0 0
  %3897 = vmatpush1.bf16.xpose.msra.mxu0 0
  %3898 = vmatprep.subr.bf16.mxu0 0
  %3899 = vmatpush1.bf16.xpose.msra.mxu0 0
  %3900 = vmatprep.subr.bf16.mxu0 0
  %3901 = vmatpush1.bf16.xpose.msra.mxu0 0
  %3902 = vmatprep.subr.bf16.mxu0 0
  %3903 = vmatpush1.bf16.xpose.msra.mxu0 0
  %3904 = vmatprep.subr.bf16.mxu0 0
  %3905 = vmatpush1.bf16.xpose.msra.mxu0 0
  %3906 = vmatprep.subr.bf16.mxu0 0
  %3907 = vmatpush1.bf16.xpose.msra.mxu0 0
  %3908 = vmatprep.subr.bf16.mxu0 0
  %3909 = vmatpush1.bf16.xpose.msra.mxu0 0
  %3910 = vmatprep.subr.bf16.mxu0 0
  %3911 = vmatpush1.bf16.xpose.msra.mxu0 0
  %3912 = vmatprep.mubr.bf16.mxu0 0
  %3913 = vmatmul.mubr.bf16.gmra.mrb[0].mxu0 %v3875
  %v3914 = vpop.f32.mrb[0].mxu0
  %v3915 = vadd.f32 0.0, %v3914
  %v3916 = vpop.f32.mrb[0].mxu0
  %v3917 = vpop.f32.mrb[0].mxu0
  %v3918 = vpop.f32.mrb[0].mxu0
  %3919 = vdwg.mxu0
  %3920 = vrot.lane.b32.xlu0 %v168, 112
  %v3921 = vpop.permute.xlu0 %3920
  %3922 = vrot.lane.b32.xlu0 %v168, 80
  %v3923 = vpop.permute.xlu0 %3922
  %v3925 = vsel %vm183, %v3921, 0
  %v3928 = vsel %vm183, %v3923, 0
  %3930 = vmatprep.subr.bf16.mxu0 0
  %3931 = vmatpush1.bf16.xpose.msra.mxu0 %v3928
  %3932 = vmatprep.subr.bf16.mxu0 0
  %3933 = vmatpush1.bf16.xpose.msra.mxu0 0
  %3934 = vmatprep.subr.bf16.mxu0 0
  %3935 = vmatpush1.bf16.xpose.msra.mxu0 0
  %3936 = vmatprep.subr.bf16.mxu0 0
  %3937 = vmatpush1.bf16.xpose.msra.mxu0 0
  %3938 = vmatprep.subr.bf16.mxu0 0
  %3939 = vmatpush1.bf16.xpose.msra.mxu0 0
  %3940 = vmatprep.subr.bf16.mxu0 0
  %3941 = vmatpush1.bf16.xpose.msra.mxu0 0
  %3942 = vmatprep.subr.bf16.mxu0 0
  %3943 = vmatpush1.bf16.xpose.msra.mxu0 0
  %3944 = vmatprep.subr.bf16.mxu0 0
  %3945 = vmatpush1.bf16.xpose.msra.mxu0 0
  %3946 = vmatprep.subr.bf16.mxu0 0
  %3947 = vmatpush1.bf16.xpose.msra.mxu0 0
  %3948 = vmatprep.subr.bf16.mxu0 0
  %3949 = vmatpush1.bf16.xpose.msra.mxu0 0
  %3950 = vmatprep.subr.bf16.mxu0 0
  %3951 = vmatpush1.bf16.xpose.msra.mxu0 0
  %3952 = vmatprep.subr.bf16.mxu0 0
  %3953 = vmatpush1.bf16.xpose.msra.mxu0 0
  %3954 = vmatprep.subr.bf16.mxu0 0
  %3955 = vmatpush1.bf16.xpose.msra.mxu0 0
  %3956 = vmatprep.subr.bf16.mxu0 0
  %3957 = vmatpush1.bf16.xpose.msra.mxu0 0
  %3958 = vmatprep.subr.bf16.mxu0 0
  %3959 = vmatpush1.bf16.xpose.msra.mxu0 0
  %3960 = vmatprep.subr.bf16.mxu0 0
  %3961 = vmatpush1.bf16.xpose.msra.mxu0 0
  %3962 = vmatprep.mubr.bf16.mxu0 0
  %3963 = vmatmul.mubr.bf16.gmra.mrb[0].mxu0 %v3925
  %v3964 = vpop.f32.mrb[0].mxu0
  %v3965 = vadd.f32 0.0, %v3964
  %v3966 = vpop.f32.mrb[0].mxu0
  %v3967 = vpop.f32.mrb[0].mxu0
  %v3968 = vpop.f32.mrb[0].mxu0
  %3969 = vdwg.mxu0
  %3970 = vrot.lane.b32.xlu0 %v169, 112
  %v3971 = vpop.permute.xlu0 %3970
  %3972 = vrot.lane.b32.xlu0 %v169, 80
  %v3973 = vpop.permute.xlu0 %3972
  %v3975 = vsel %vm183, %v3971, 0
  %v3978 = vsel %vm183, %v3973, 0
  %3980 = vmatprep.subr.bf16.mxu0 0
  %3981 = vmatpush1.bf16.xpose.msra.mxu0 %v3978
  %3982 = vmatprep.subr.bf16.mxu0 0
  %3983 = vmatpush1.bf16.xpose.msra.mxu0 0
  %3984 = vmatprep.subr.bf16.mxu0 0
  %3985 = vmatpush1.bf16.xpose.msra.mxu0 0
  %3986 = vmatprep.subr.bf16.mxu0 0
  %3987 = vmatpush1.bf16.xpose.msra.mxu0 0
  %3988 = vmatprep.subr.bf16.mxu0 0
  %3989 = vmatpush1.bf16.xpose.msra.mxu0 0
  %3990 = vmatprep.subr.bf16.mxu0 0
  %3991 = vmatpush1.bf16.xpose.msra.mxu0 0
  %3992 = vmatprep.subr.bf16.mxu0 0
  %3993 = vmatpush1.bf16.xpose.msra.mxu0 0
  %3994 = vmatprep.subr.bf16.mxu0 0
  %3995 = vmatpush1.bf16.xpose.msra.mxu0 0
  %3996 = vmatprep.subr.bf16.mxu0 0
  %3997 = vmatpush1.bf16.xpose.msra.mxu0 0
  %3998 = vmatprep.subr.bf16.mxu0 0
  %3999 = vmatpush1.bf16.xpose.msra.mxu0 0
  %4000 = vmatprep.subr.bf16.mxu0 0
  %4001 = vmatpush1.bf16.xpose.msra.mxu0 0
  %4002 = vmatprep.subr.bf16.mxu0 0
  %4003 = vmatpush1.bf16.xpose.msra.mxu0 0
  %4004 = vmatprep.subr.bf16.mxu0 0
  %4005 = vmatpush1.bf16.xpose.msra.mxu0 0
  %4006 = vmatprep.subr.bf16.mxu0 0
  %4007 = vmatpush1.bf16.xpose.msra.mxu0 0
  %4008 = vmatprep.subr.bf16.mxu0 0
  %4009 = vmatpush1.bf16.xpose.msra.mxu0 0
  %4010 = vmatprep.subr.bf16.mxu0 0
  %4011 = vmatpush1.bf16.xpose.msra.mxu0 0
  %4012 = vmatprep.mubr.bf16.mxu0 0
  %4013 = vmatmul.mubr.bf16.gmra.mrb[0].mxu0 %v3975
  %v4014 = vpop.f32.mrb[0].mxu0
  %v4015 = vadd.f32 0.0, %v4014
  %v4016 = vpop.f32.mrb[0].mxu0
  %v4017 = vpop.f32.mrb[0].mxu0
  %v4018 = vpop.f32.mrb[0].mxu0
  %4019 = vdwg.mxu0
  %4020 = vrot.lane.b32.xlu0 %v170, 112
  %v4021 = vpop.permute.xlu0 %4020
  %4022 = vrot.lane.b32.xlu0 %v170, 80
  %v4023 = vpop.permute.xlu0 %4022
  %v4025 = vsel %vm183, %v4021, 0
  %v4028 = vsel %vm183, %v4023, 0
  %4030 = vmatprep.subr.bf16.mxu0 0
  %4031 = vmatpush1.bf16.xpose.msra.mxu0 %v4028
  %4032 = vmatprep.subr.bf16.mxu0 0
  %4033 = vmatpush1.bf16.xpose.msra.mxu0 0
  %4034 = vmatprep.subr.bf16.mxu0 0
  %4035 = vmatpush1.bf16.xpose.msra.mxu0 0
  %4036 = vmatprep.subr.bf16.mxu0 0
  %4037 = vmatpush1.bf16.xpose.msra.mxu0 0
  %4038 = vmatprep.subr.bf16.mxu0 0
  %4039 = vmatpush1.bf16.xpose.msra.mxu0 0
  %4040 = vmatprep.subr.bf16.mxu0 0
  %4041 = vmatpush1.bf16.xpose.msra.mxu0 0
  %4042 = vmatprep.subr.bf16.mxu0 0
  %4043 = vmatpush1.bf16.xpose.msra.mxu0 0
  %4044 = vmatprep.subr.bf16.mxu0 0
  %4045 = vmatpush1.bf16.xpose.msra.mxu0 0
  %4046 = vmatprep.subr.bf16.mxu0 0
  %4047 = vmatpush1.bf16.xpose.msra.mxu0 0
  %4048 = vmatprep.subr.bf16.mxu0 0
  %4049 = vmatpush1.bf16.xpose.msra.mxu0 0
  %4050 = vmatprep.subr.bf16.mxu0 0
  %4051 = vmatpush1.bf16.xpose.msra.mxu0 0
  %4052 = vmatprep.subr.bf16.mxu0 0
  %4053 = vmatpush1.bf16.xpose.msra.mxu0 0
  %4054 = vmatprep.subr.bf16.mxu0 0
  %4055 = vmatpush1.bf16.xpose.msra.mxu0 0
  %4056 = vmatprep.subr.bf16.mxu0 0
  %4057 = vmatpush1.bf16.xpose.msra.mxu0 0
  %4058 = vmatprep.subr.bf16.mxu0 0
  %4059 = vmatpush1.bf16.xpose.msra.mxu0 0
  %4060 = vmatprep.subr.bf16.mxu0 0
  %4061 = vmatpush1.bf16.xpose.msra.mxu0 0
  %4062 = vmatprep.mubr.bf16.mxu0 0
  %4063 = vmatmul.mubr.bf16.gmra.mrb[0].mxu0 %v4025
  %v4064 = vpop.f32.mrb[0].mxu0
  %v4065 = vadd.f32 0.0, %v4064
  %v4066 = vpop.f32.mrb[0].mxu0
  %v4067 = vpop.f32.mrb[0].mxu0
  %v4068 = vpop.f32.mrb[0].mxu0
  %4069 = vdwg.mxu0
  %4070 = vrot.lane.b32.xlu0 %v171, 112
  %v4071 = vpop.permute.xlu0 %4070
  %4072 = vrot.lane.b32.xlu0 %v171, 80
  %v4073 = vpop.permute.xlu0 %4072
  %v4075 = vsel %vm183, %v4071, 0
  %v4078 = vsel %vm183, %v4073, 0
  %4080 = vmatprep.subr.bf16.mxu0 0
  %4081 = vmatpush1.bf16.xpose.msra.mxu0 %v4078
  %4082 = vmatprep.subr.bf16.mxu0 0
  %4083 = vmatpush1.bf16.xpose.msra.mxu0 0
  %4084 = vmatprep.subr.bf16.mxu0 0
  %4085 = vmatpush1.bf16.xpose.msra.mxu0 0
  %4086 = vmatprep.subr.bf16.mxu0 0
  %4087 = vmatpush1.bf16.xpose.msra.mxu0 0
  %4088 = vmatprep.subr.bf16.mxu0 0
  %4089 = vmatpush1.bf16.xpose.msra.mxu0 0
  %4090 = vmatprep.subr.bf16.mxu0 0
  %4091 = vmatpush1.bf16.xpose.msra.mxu0 0
  %4092 = vmatprep.subr.bf16.mxu0 0
  %4093 = vmatpush1.bf16.xpose.msra.mxu0 0
  %4094 = vmatprep.subr.bf16.mxu0 0
  %4095 = vmatpush1.bf16.xpose.msra.mxu0 0
  %4096 = vmatprep.subr.bf16.mxu0 0
  %4097 = vmatpush1.bf16.xpose.msra.mxu0 0
  %4098 = vmatprep.subr.bf16.mxu0 0
  %4099 = vmatpush1.bf16.xpose.msra.mxu0 0
  %4100 = vmatprep.subr.bf16.mxu0 0
  %4101 = vmatpush1.bf16.xpose.msra.mxu0 0
  %4102 = vmatprep.subr.bf16.mxu0 0
  %4103 = vmatpush1.bf16.xpose.msra.mxu0 0
  %4104 = vmatprep.subr.bf16.mxu0 0
  %4105 = vmatpush1.bf16.xpose.msra.mxu0 0
  %4106 = vmatprep.subr.bf16.mxu0 0
  %4107 = vmatpush1.bf16.xpose.msra.mxu0 0
  %4108 = vmatprep.subr.bf16.mxu0 0
  %4109 = vmatpush1.bf16.xpose.msra.mxu0 0
  %4110 = vmatprep.subr.bf16.mxu0 0
  %4111 = vmatpush1.bf16.xpose.msra.mxu0 0
  %4112 = vmatprep.mubr.bf16.mxu0 0
  %4113 = vmatmul.mubr.bf16.gmra.mrb[0].mxu0 %v4075
  %v4114 = vpop.f32.mrb[0].mxu0
  %v4115 = vadd.f32 0.0, %v4114
  %v4116 = vpop.f32.mrb[0].mxu0
  %v4117 = vpop.f32.mrb[0].mxu0
  %v4118 = vpop.f32.mrb[0].mxu0
  %4119 = vdwg.mxu0
  %4120 = vrot.lane.b32.xlu0 %v172, 112
  %v4121 = vpop.permute.xlu0 %4120
  %4122 = vrot.lane.b32.xlu0 %v172, 80
  %v4123 = vpop.permute.xlu0 %4122
  %v4125 = vsel %vm183, %v4121, 0
  %v4128 = vsel %vm183, %v4123, 0
  %4130 = vmatprep.subr.bf16.mxu0 0
  %4131 = vmatpush1.bf16.xpose.msra.mxu0 %v4128
  %4132 = vmatprep.subr.bf16.mxu0 0
  %4133 = vmatpush1.bf16.xpose.msra.mxu0 0
  %4134 = vmatprep.subr.bf16.mxu0 0
  %4135 = vmatpush1.bf16.xpose.msra.mxu0 0
  %4136 = vmatprep.subr.bf16.mxu0 0
  %4137 = vmatpush1.bf16.xpose.msra.mxu0 0
  %4138 = vmatprep.subr.bf16.mxu0 0
  %4139 = vmatpush1.bf16.xpose.msra.mxu0 0
  %4140 = vmatprep.subr.bf16.mxu0 0
  %4141 = vmatpush1.bf16.xpose.msra.mxu0 0
  %4142 = vmatprep.subr.bf16.mxu0 0
  %4143 = vmatpush1.bf16.xpose.msra.mxu0 0
  %4144 = vmatprep.subr.bf16.mxu0 0
  %4145 = vmatpush1.bf16.xpose.msra.mxu0 0
  %4146 = vmatprep.subr.bf16.mxu0 0
  %4147 = vmatpush1.bf16.xpose.msra.mxu0 0
  %4148 = vmatprep.subr.bf16.mxu0 0
  %4149 = vmatpush1.bf16.xpose.msra.mxu0 0
  %4150 = vmatprep.subr.bf16.mxu0 0
  %4151 = vmatpush1.bf16.xpose.msra.mxu0 0
  %4152 = vmatprep.subr.bf16.mxu0 0
  %4153 = vmatpush1.bf16.xpose.msra.mxu0 0
  %4154 = vmatprep.subr.bf16.mxu0 0
  %4155 = vmatpush1.bf16.xpose.msra.mxu0 0
  %4156 = vmatprep.subr.bf16.mxu0 0
  %4157 = vmatpush1.bf16.xpose.msra.mxu0 0
  %4158 = vmatprep.subr.bf16.mxu0 0
  %4159 = vmatpush1.bf16.xpose.msra.mxu0 0
  %4160 = vmatprep.subr.bf16.mxu0 0
  %4161 = vmatpush1.bf16.xpose.msra.mxu0 0
  %4162 = vmatprep.mubr.bf16.mxu0 0
  %4163 = vmatmul.mubr.bf16.gmra.mrb[0].mxu0 %v4125
  %v4164 = vpop.f32.mrb[0].mxu0
  %v4165 = vadd.f32 0.0, %v4164
  %v4166 = vpop.f32.mrb[0].mxu0
  %v4167 = vpop.f32.mrb[0].mxu0
  %v4168 = vpop.f32.mrb[0].mxu0
  %4169 = vdwg.mxu0
  %4170 = vrot.lane.b32.xlu0 %v173, 112
  %v4171 = vpop.permute.xlu0 %4170
  %4172 = vrot.lane.b32.xlu0 %v173, 80
  %v4173 = vpop.permute.xlu0 %4172
  %v4175 = vsel %vm183, %v4171, 0
  %v4178 = vsel %vm183, %v4173, 0
  %4180 = vmatprep.subr.bf16.mxu0 0
  %4181 = vmatpush1.bf16.xpose.msra.mxu0 %v4178
  %4182 = vmatprep.subr.bf16.mxu0 0
  %4183 = vmatpush1.bf16.xpose.msra.mxu0 0
  %4184 = vmatprep.subr.bf16.mxu0 0
  %4185 = vmatpush1.bf16.xpose.msra.mxu0 0
  %4186 = vmatprep.subr.bf16.mxu0 0
  %4187 = vmatpush1.bf16.xpose.msra.mxu0 0
  %4188 = vmatprep.subr.bf16.mxu0 0
  %4189 = vmatpush1.bf16.xpose.msra.mxu0 0
  %4190 = vmatprep.subr.bf16.mxu0 0
  %4191 = vmatpush1.bf16.xpose.msra.mxu0 0
  %4192 = vmatprep.subr.bf16.mxu0 0
  %4193 = vmatpush1.bf16.xpose.msra.mxu0 0
  %4194 = vmatprep.subr.bf16.mxu0 0
  %4195 = vmatpush1.bf16.xpose.msra.mxu0 0
  %4196 = vmatprep.subr.bf16.mxu0 0
  %4197 = vmatpush1.bf16.xpose.msra.mxu0 0
  %4198 = vmatprep.subr.bf16.mxu0 0
  %4199 = vmatpush1.bf16.xpose.msra.mxu0 0
  %4200 = vmatprep.subr.bf16.mxu0 0
  %4201 = vmatpush1.bf16.xpose.msra.mxu0 0
  %4202 = vmatprep.subr.bf16.mxu0 0
  %4203 = vmatpush1.bf16.xpose.msra.mxu0 0
  %4204 = vmatprep.subr.bf16.mxu0 0
  %4205 = vmatpush1.bf16.xpose.msra.mxu0 0
  %4206 = vmatprep.subr.bf16.mxu0 0
  %4207 = vmatpush1.bf16.xpose.msra.mxu0 0
  %4208 = vmatprep.subr.bf16.mxu0 0
  %4209 = vmatpush1.bf16.xpose.msra.mxu0 0
  %4210 = vmatprep.subr.bf16.mxu0 0
  %4211 = vmatpush1.bf16.xpose.msra.mxu0 0
  %4212 = vmatprep.mubr.bf16.mxu0 0
  %4213 = vmatmul.mubr.bf16.gmra.mrb[0].mxu0 %v4175
  %v4214 = vpop.f32.mrb[0].mxu0
  %v4215 = vadd.f32 0.0, %v4214
  %v4216 = vpop.f32.mrb[0].mxu0
  %v4217 = vpop.f32.mrb[0].mxu0
  %v4218 = vpop.f32.mrb[0].mxu0
  %4219 = vdwg.mxu0
  %4220 = vrot.lane.b32.xlu0 %v174, 112
  %v4221 = vpop.permute.xlu0 %4220
  %4222 = vrot.lane.b32.xlu0 %v174, 80
  %v4223 = vpop.permute.xlu0 %4222
  %v4225 = vsel %vm183, %v4221, 0
  %v4228 = vsel %vm183, %v4223, 0
  %4230 = vmatprep.subr.bf16.mxu0 0
  %4231 = vmatpush1.bf16.xpose.msra.mxu0 %v4228
  %4232 = vmatprep.subr.bf16.mxu0 0
  %4233 = vmatpush1.bf16.xpose.msra.mxu0 0
  %4234 = vmatprep.subr.bf16.mxu0 0
  %4235 = vmatpush1.bf16.xpose.msra.mxu0 0
  %4236 = vmatprep.subr.bf16.mxu0 0
  %4237 = vmatpush1.bf16.xpose.msra.mxu0 0
  %4238 = vmatprep.subr.bf16.mxu0 0
  %4239 = vmatpush1.bf16.xpose.msra.mxu0 0
  %4240 = vmatprep.subr.bf16.mxu0 0
  %4241 = vmatpush1.bf16.xpose.msra.mxu0 0
  %4242 = vmatprep.subr.bf16.mxu0 0
  %4243 = vmatpush1.bf16.xpose.msra.mxu0 0
  %4244 = vmatprep.subr.bf16.mxu0 0
  %4245 = vmatpush1.bf16.xpose.msra.mxu0 0
  %4246 = vmatprep.subr.bf16.mxu0 0
  %4247 = vmatpush1.bf16.xpose.msra.mxu0 0
  %4248 = vmatprep.subr.bf16.mxu0 0
  %4249 = vmatpush1.bf16.xpose.msra.mxu0 0
  %4250 = vmatprep.subr.bf16.mxu0 0
  %4251 = vmatpush1.bf16.xpose.msra.mxu0 0
  %4252 = vmatprep.subr.bf16.mxu0 0
  %4253 = vmatpush1.bf16.xpose.msra.mxu0 0
  %4254 = vmatprep.subr.bf16.mxu0 0
  %4255 = vmatpush1.bf16.xpose.msra.mxu0 0
  %4256 = vmatprep.subr.bf16.mxu0 0
  %4257 = vmatpush1.bf16.xpose.msra.mxu0 0
  %4258 = vmatprep.subr.bf16.mxu0 0
  %4259 = vmatpush1.bf16.xpose.msra.mxu0 0
  %4260 = vmatprep.subr.bf16.mxu0 0
  %4261 = vmatpush1.bf16.xpose.msra.mxu0 0
  %4262 = vmatprep.mubr.bf16.mxu0 0
  %4263 = vmatmul.mubr.bf16.gmra.mrb[0].mxu0 %v4225
  %v4264 = vpop.f32.mrb[0].mxu0
  %v4265 = vadd.f32 0.0, %v4264
  %v4266 = vpop.f32.mrb[0].mxu0
  %v4267 = vpop.f32.mrb[0].mxu0
  %v4268 = vpop.f32.mrb[0].mxu0
  %4269 = vdwg.mxu0
  %4270 = vrot.lane.b32.xlu0 %v175, 112
  %v4271 = vpop.permute.xlu0 %4270
  %4272 = vrot.lane.b32.xlu0 %v175, 80
  %v4273 = vpop.permute.xlu0 %4272
  %v4275 = vsel %vm183, %v4271, 0
  %v4278 = vsel %vm183, %v4273, 0
  %4280 = vmatprep.subr.bf16.mxu0 0
  %4281 = vmatpush1.bf16.xpose.msra.mxu0 %v4278
  %4282 = vmatprep.subr.bf16.mxu0 0
  %4283 = vmatpush1.bf16.xpose.msra.mxu0 0
  %4284 = vmatprep.subr.bf16.mxu0 0
  %4285 = vmatpush1.bf16.xpose.msra.mxu0 0
  %4286 = vmatprep.subr.bf16.mxu0 0
  %4287 = vmatpush1.bf16.xpose.msra.mxu0 0
  %4288 = vmatprep.subr.bf16.mxu0 0
  %4289 = vmatpush1.bf16.xpose.msra.mxu0 0
  %4290 = vmatprep.subr.bf16.mxu0 0
  %4291 = vmatpush1.bf16.xpose.msra.mxu0 0
  %4292 = vmatprep.subr.bf16.mxu0 0
  %4293 = vmatpush1.bf16.xpose.msra.mxu0 0
  %4294 = vmatprep.subr.bf16.mxu0 0
  %4295 = vmatpush1.bf16.xpose.msra.mxu0 0
  %4296 = vmatprep.subr.bf16.mxu0 0
  %4297 = vmatpush1.bf16.xpose.msra.mxu0 0
  %4298 = vmatprep.subr.bf16.mxu0 0
  %4299 = vmatpush1.bf16.xpose.msra.mxu0 0
  %4300 = vmatprep.subr.bf16.mxu0 0
  %4301 = vmatpush1.bf16.xpose.msra.mxu0 0
  %4302 = vmatprep.subr.bf16.mxu0 0
  %4303 = vmatpush1.bf16.xpose.msra.mxu0 0
  %4304 = vmatprep.subr.bf16.mxu0 0
  %4305 = vmatpush1.bf16.xpose.msra.mxu0 0
  %4306 = vmatprep.subr.bf16.mxu0 0
  %4307 = vmatpush1.bf16.xpose.msra.mxu0 0
  %4308 = vmatprep.subr.bf16.mxu0 0
  %4309 = vmatpush1.bf16.xpose.msra.mxu0 0
  %4310 = vmatprep.subr.bf16.mxu0 0
  %4311 = vmatpush1.bf16.xpose.msra.mxu0 0
  %4312 = vmatprep.mubr.bf16.mxu0 0
  %4313 = vmatmul.mubr.bf16.gmra.mrb[0].mxu0 %v4275
  %v4314 = vpop.f32.mrb[0].mxu0
  %v4315 = vadd.f32 0.0, %v4314
  %v4316 = vpop.f32.mrb[0].mxu0
  %v4317 = vpop.f32.mrb[0].mxu0
  %v4318 = vpop.f32.mrb[0].mxu0
  %4319 = vdwg.mxu0
  %4320 = vrot.lane.b32.xlu0 %v176, 112
  %v4321 = vpop.permute.xlu0 %4320
  %4322 = vrot.lane.b32.xlu0 %v176, 80
  %v4323 = vpop.permute.xlu0 %4322
  %v4325 = vsel %vm183, %v4321, 0
  %v4328 = vsel %vm183, %v4323, 0
  %4330 = vmatprep.subr.bf16.mxu0 0
  %4331 = vmatpush1.bf16.xpose.msra.mxu0 %v4328
  %4332 = vmatprep.subr.bf16.mxu0 0
  %4333 = vmatpush1.bf16.xpose.msra.mxu0 0
  %4334 = vmatprep.subr.bf16.mxu0 0
  %4335 = vmatpush1.bf16.xpose.msra.mxu0 0
  %4336 = vmatprep.subr.bf16.mxu0 0
  %4337 = vmatpush1.bf16.xpose.msra.mxu0 0
  %4338 = vmatprep.subr.bf16.mxu0 0
  %4339 = vmatpush1.bf16.xpose.msra.mxu0 0
  %4340 = vmatprep.subr.bf16.mxu0 0
  %4341 = vmatpush1.bf16.xpose.msra.mxu0 0
  %4342 = vmatprep.subr.bf16.mxu0 0
  %4343 = vmatpush1.bf16.xpose.msra.mxu0 0
  %4344 = vmatprep.subr.bf16.mxu0 0
  %4345 = vmatpush1.bf16.xpose.msra.mxu0 0
  %4346 = vmatprep.subr.bf16.mxu0 0
  %4347 = vmatpush1.bf16.xpose.msra.mxu0 0
  %4348 = vmatprep.subr.bf16.mxu0 0
  %4349 = vmatpush1.bf16.xpose.msra.mxu0 0
  %4350 = vmatprep.subr.bf16.mxu0 0
  %4351 = vmatpush1.bf16.xpose.msra.mxu0 0
  %4352 = vmatprep.subr.bf16.mxu0 0
  %4353 = vmatpush1.bf16.xpose.msra.mxu0 0
  %4354 = vmatprep.subr.bf16.mxu0 0
  %4355 = vmatpush1.bf16.xpose.msra.mxu0 0
  %4356 = vmatprep.subr.bf16.mxu0 0
  %4357 = vmatpush1.bf16.xpose.msra.mxu0 0
  %4358 = vmatprep.subr.bf16.mxu0 0
  %4359 = vmatpush1.bf16.xpose.msra.mxu0 0
  %4360 = vmatprep.subr.bf16.mxu0 0
  %4361 = vmatpush1.bf16.xpose.msra.mxu0 0
  %4362 = vmatprep.mubr.bf16.mxu0 0
  %4363 = vmatmul.mubr.bf16.gmra.mrb[0].mxu0 %v4325
  %v4364 = vpop.f32.mrb[0].mxu0
  %v4365 = vadd.f32 0.0, %v4364
  %v4366 = vpop.f32.mrb[0].mxu0
  %v4367 = vpop.f32.mrb[0].mxu0
  %v4368 = vpop.f32.mrb[0].mxu0
  %4369 = vdwg.mxu0
  %4370 = vrot.lane.b32.xlu0 %v177, 112
  %v4371 = vpop.permute.xlu0 %4370
  %4372 = vrot.lane.b32.xlu0 %v177, 80
  %v4373 = vpop.permute.xlu0 %4372
  %v4375 = vsel %vm183, %v4371, 0
  %v4378 = vsel %vm183, %v4373, 0
  %4380 = vmatprep.subr.bf16.mxu0 0
  %4381 = vmatpush1.bf16.xpose.msra.mxu0 %v4378
  %4382 = vmatprep.subr.bf16.mxu0 0
  %4383 = vmatpush1.bf16.xpose.msra.mxu0 0
  %4384 = vmatprep.subr.bf16.mxu0 0
  %4385 = vmatpush1.bf16.xpose.msra.mxu0 0
  %4386 = vmatprep.subr.bf16.mxu0 0
  %4387 = vmatpush1.bf16.xpose.msra.mxu0 0
  %4388 = vmatprep.subr.bf16.mxu0 0
  %4389 = vmatpush1.bf16.xpose.msra.mxu0 0
  %4390 = vmatprep.subr.bf16.mxu0 0
  %4391 = vmatpush1.bf16.xpose.msra.mxu0 0
  %4392 = vmatprep.subr.bf16.mxu0 0
  %4393 = vmatpush1.bf16.xpose.msra.mxu0 0
  %4394 = vmatprep.subr.bf16.mxu0 0
  %4395 = vmatpush1.bf16.xpose.msra.mxu0 0
  %4396 = vmatprep.subr.bf16.mxu0 0
  %4397 = vmatpush1.bf16.xpose.msra.mxu0 0
  %4398 = vmatprep.subr.bf16.mxu0 0
  %4399 = vmatpush1.bf16.xpose.msra.mxu0 0
  %4400 = vmatprep.subr.bf16.mxu0 0
  %4401 = vmatpush1.bf16.xpose.msra.mxu0 0
  %4402 = vmatprep.subr.bf16.mxu0 0
  %4403 = vmatpush1.bf16.xpose.msra.mxu0 0
  %4404 = vmatprep.subr.bf16.mxu0 0
  %4405 = vmatpush1.bf16.xpose.msra.mxu0 0
  %4406 = vmatprep.subr.bf16.mxu0 0
  %4407 = vmatpush1.bf16.xpose.msra.mxu0 0
  %4408 = vmatprep.subr.bf16.mxu0 0
  %4409 = vmatpush1.bf16.xpose.msra.mxu0 0
  %4410 = vmatprep.subr.bf16.mxu0 0
  %4411 = vmatpush1.bf16.xpose.msra.mxu0 0
  %4412 = vmatprep.mubr.bf16.mxu0 0
  %4413 = vmatmul.mubr.bf16.gmra.mrb[0].mxu0 %v4375
  %v4414 = vpop.f32.mrb[0].mxu0
  %v4415 = vadd.f32 0.0, %v4414
  %v4416 = vpop.f32.mrb[0].mxu0
  %v4417 = vpop.f32.mrb[0].mxu0
  %v4418 = vpop.f32.mrb[0].mxu0
  %4419 = vdwg.mxu0
  %4420 = vrot.lane.b32.xlu0 %v178, 112
  %v4421 = vpop.permute.xlu0 %4420
  %4422 = vrot.lane.b32.xlu0 %v178, 80
  %v4423 = vpop.permute.xlu0 %4422
  %v4425 = vsel %vm183, %v4421, 0
  %v4428 = vsel %vm183, %v4423, 0
  %4430 = vmatprep.subr.bf16.mxu0 0
  %4431 = vmatpush1.bf16.xpose.msra.mxu0 %v4428
  %4432 = vmatprep.subr.bf16.mxu0 0
  %4433 = vmatpush1.bf16.xpose.msra.mxu0 0
  %4434 = vmatprep.subr.bf16.mxu0 0
  %4435 = vmatpush1.bf16.xpose.msra.mxu0 0
  %4436 = vmatprep.subr.bf16.mxu0 0
  %4437 = vmatpush1.bf16.xpose.msra.mxu0 0
  %4438 = vmatprep.subr.bf16.mxu0 0
  %4439 = vmatpush1.bf16.xpose.msra.mxu0 0
  %4440 = vmatprep.subr.bf16.mxu0 0
  %4441 = vmatpush1.bf16.xpose.msra.mxu0 0
  %4442 = vmatprep.subr.bf16.mxu0 0
  %4443 = vmatpush1.bf16.xpose.msra.mxu0 0
  %4444 = vmatprep.subr.bf16.mxu0 0
  %4445 = vmatpush1.bf16.xpose.msra.mxu0 0
  %4446 = vmatprep.subr.bf16.mxu0 0
  %4447 = vmatpush1.bf16.xpose.msra.mxu0 0
  %4448 = vmatprep.subr.bf16.mxu0 0
  %4449 = vmatpush1.bf16.xpose.msra.mxu0 0
  %4450 = vmatprep.subr.bf16.mxu0 0
  %4451 = vmatpush1.bf16.xpose.msra.mxu0 0
  %4452 = vmatprep.subr.bf16.mxu0 0
  %4453 = vmatpush1.bf16.xpose.msra.mxu0 0
  %4454 = vmatprep.subr.bf16.mxu0 0
  %4455 = vmatpush1.bf16.xpose.msra.mxu0 0
  %4456 = vmatprep.subr.bf16.mxu0 0
  %4457 = vmatpush1.bf16.xpose.msra.mxu0 0
  %4458 = vmatprep.subr.bf16.mxu0 0
  %4459 = vmatpush1.bf16.xpose.msra.mxu0 0
  %4460 = vmatprep.subr.bf16.mxu0 0
  %4461 = vmatpush1.bf16.xpose.msra.mxu0 0
  %4462 = vmatprep.mubr.bf16.mxu0 0
  %4463 = vmatmul.mubr.bf16.gmra.mrb[0].mxu0 %v4425
  %v4464 = vpop.f32.mrb[0].mxu0
  %v4465 = vadd.f32 0.0, %v4464
  %v4466 = vpop.f32.mrb[0].mxu0
  %v4467 = vpop.f32.mrb[0].mxu0
  %v4468 = vpop.f32.mrb[0].mxu0
  %4469 = vdwg.mxu0
  %4470 = vrot.lane.b32.xlu0 %v179, 112
  %v4471 = vpop.permute.xlu0 %4470
  %4472 = vrot.lane.b32.xlu0 %v179, 80
  %v4473 = vpop.permute.xlu0 %4472
  %v4475 = vsel %vm183, %v4471, 0
  %v4478 = vsel %vm183, %v4473, 0
  %4480 = vmatprep.subr.bf16.mxu0 0
  %4481 = vmatpush1.bf16.xpose.msra.mxu0 %v4478
  %4482 = vmatprep.subr.bf16.mxu0 0
  %4483 = vmatpush1.bf16.xpose.msra.mxu0 0
  %4484 = vmatprep.subr.bf16.mxu0 0
  %4485 = vmatpush1.bf16.xpose.msra.mxu0 0
  %4486 = vmatprep.subr.bf16.mxu0 0
  %4487 = vmatpush1.bf16.xpose.msra.mxu0 0
  %4488 = vmatprep.subr.bf16.mxu0 0
  %4489 = vmatpush1.bf16.xpose.msra.mxu0 0
  %4490 = vmatprep.subr.bf16.mxu0 0
  %4491 = vmatpush1.bf16.xpose.msra.mxu0 0
  %4492 = vmatprep.subr.bf16.mxu0 0
  %4493 = vmatpush1.bf16.xpose.msra.mxu0 0
  %4494 = vmatprep.subr.bf16.mxu0 0
  %4495 = vmatpush1.bf16.xpose.msra.mxu0 0
  %4496 = vmatprep.subr.bf16.mxu0 0
  %4497 = vmatpush1.bf16.xpose.msra.mxu0 0
  %4498 = vmatprep.subr.bf16.mxu0 0
  %4499 = vmatpush1.bf16.xpose.msra.mxu0 0
  %4500 = vmatprep.subr.bf16.mxu0 0
  %4501 = vmatpush1.bf16.xpose.msra.mxu0 0
  %4502 = vmatprep.subr.bf16.mxu0 0
  %4503 = vmatpush1.bf16.xpose.msra.mxu0 0
  %4504 = vmatprep.subr.bf16.mxu0 0
  %4505 = vmatpush1.bf16.xpose.msra.mxu0 0
  %4506 = vmatprep.subr.bf16.mxu0 0
  %4507 = vmatpush1.bf16.xpose.msra.mxu0 0
  %4508 = vmatprep.subr.bf16.mxu0 0
  %4509 = vmatpush1.bf16.xpose.msra.mxu0 0
  %4510 = vmatprep.subr.bf16.mxu0 0
  %4511 = vmatpush1.bf16.xpose.msra.mxu0 0
  %4512 = vmatprep.mubr.bf16.mxu0 0
  %4513 = vmatmul.mubr.bf16.gmra.mrb[0].mxu0 %v4475
  %v4514 = vpop.f32.mrb[0].mxu0
  %v4515 = vadd.f32 0.0, %v4514
  %v4516 = vpop.f32.mrb[0].mxu0
  %v4517 = vpop.f32.mrb[0].mxu0
  %v4518 = vpop.f32.mrb[0].mxu0
  %4519 = vdwg.mxu0
  %v4520 = vmul.f32 %v3765, 0.35355338
  %v4521 = vmul.f32 %v3815, 0.35355338
  %v4522 = vmul.f32 %v3865, 0.35355338
  %v4523 = vmul.f32 %v3915, 0.35355338
  %v4524 = vmul.f32 %v3965, 0.35355338
  %v4525 = vmul.f32 %v4015, 0.35355338
  %v4526 = vmul.f32 %v4065, 0.35355338
  %v4527 = vmul.f32 %v4115, 0.35355338
  %v4528 = vmul.f32 %v4165, 0.35355338
  %v4529 = vmul.f32 %v4215, 0.35355338
  %v4530 = vmul.f32 %v4265, 0.35355338
  %v4531 = vmul.f32 %v4315, 0.35355338
  %v4532 = vmul.f32 %v4365, 0.35355338
  %v4533 = vmul.f32 %v4415, 0.35355338
  %v4534 = vmul.f32 %v4465, 0.35355338
  %v4535 = vmul.f32 %v4515, 0.35355338
  %v4536 = vsel %vm981, %v4520, -inf
  %4537 = vmax.xlane.f32.xlu0 %v4536
  %v4538 = vpop.xlane.xlu0 %4537
  %v4539 = vsel %vm981, %v4521, -inf
  %4540 = vmax.xlane.f32.xlu0 %v4539
  %v4541 = vpop.xlane.xlu0 %4540
  %v4542 = vsel %vm981, %v4522, -inf
  %4543 = vmax.xlane.f32.xlu0 %v4542
  %v4544 = vpop.xlane.xlu0 %4543
  %v4545 = vsel %vm981, %v4523, -inf
  %4546 = vmax.xlane.f32.xlu0 %v4545
  %v4547 = vpop.xlane.xlu0 %4546
  %v4548 = vsel %vm981, %v4524, -inf
  %4549 = vmax.xlane.f32.xlu0 %v4548
  %v4550 = vpop.xlane.xlu0 %4549
  %v4551 = vsel %vm981, %v4525, -inf
  %4552 = vmax.xlane.f32.xlu0 %v4551
  %v4553 = vpop.xlane.xlu0 %4552
  %v4554 = vsel %vm981, %v4526, -inf
  %4555 = vmax.xlane.f32.xlu0 %v4554
  %v4556 = vpop.xlane.xlu0 %4555
  %v4557 = vsel %vm981, %v4527, -inf
  %4558 = vmax.xlane.f32.xlu0 %v4557
  %v4559 = vpop.xlane.xlu0 %4558
  %v4560 = vsel %vm981, %v4528, -inf
  %4561 = vmax.xlane.f32.xlu0 %v4560
  %v4562 = vpop.xlane.xlu0 %4561
  %v4563 = vsel %vm981, %v4529, -inf
  %4564 = vmax.xlane.f32.xlu0 %v4563
  %v4565 = vpop.xlane.xlu0 %4564
  %v4566 = vsel %vm981, %v4530, -inf
  %4567 = vmax.xlane.f32.xlu0 %v4566
  %v4568 = vpop.xlane.xlu0 %4567
  %v4569 = vsel %vm981, %v4531, -inf
  %4570 = vmax.xlane.f32.xlu0 %v4569
  %v4571 = vpop.xlane.xlu0 %4570
  %v4572 = vsel %vm981, %v4532, -inf
  %4573 = vmax.xlane.f32.xlu0 %v4572
  %v4574 = vpop.xlane.xlu0 %4573
  %v4575 = vsel %vm981, %v4533, -inf
  %4576 = vmax.xlane.f32.xlu0 %v4575
  %v4577 = vpop.xlane.xlu0 %4576
  %v4578 = vsel %vm981, %v4534, -inf
  %4579 = vmax.xlane.f32.xlu0 %v4578
  %v4580 = vpop.xlane.xlu0 %4579
  %v4581 = vsel %vm981, %v4535, -inf
  %4582 = vmax.xlane.f32.xlu0 %v4581
  %v4583 = vpop.xlane.xlu0 %4582
  %v4584 = vsub.f32 %v4520, %v4538
  %v4585 = vsub.f32 %v4521, %v4541
  %v4586 = vsub.f32 %v4522, %v4544
  %v4587 = vsub.f32 %v4523, %v4547
  %v4588 = vsub.f32 %v4524, %v4550
  %v4589 = vsub.f32 %v4525, %v4553
  %v4590 = vsub.f32 %v4526, %v4556
  %v4591 = vsub.f32 %v4527, %v4559
  %v4592 = vsub.f32 %v4528, %v4562
  %v4593 = vsub.f32 %v4529, %v4565
  %v4594 = vsub.f32 %v4530, %v4568
  %v4595 = vsub.f32 %v4531, %v4571
  %v4596 = vsub.f32 %v4532, %v4574
  %v4597 = vsub.f32 %v4533, %v4577
  %v4598 = vsub.f32 %v4534, %v4580
  %v4599 = vsub.f32 %v4535, %v4583
  %v4600 = vmul.f32 %v4584, 1.442695
  %v4601 = vpow.pop %v4600
  %v4602 = vmul.f32 %v4585, 1.442695
  %v4603 = vpow.pop %v4602
  %v4604 = vmul.f32 %v4586, 1.442695
  %v4605 = vpow.pop %v4604
  %v4606 = vmul.f32 %v4587, 1.442695
  %v4607 = vpow.pop %v4606
  %v4608 = vmul.f32 %v4588, 1.442695
  %v4609 = vpow.pop %v4608
  %v4610 = vmul.f32 %v4589, 1.442695
  %v4611 = vpow.pop %v4610
  %v4612 = vmul.f32 %v4590, 1.442695
  %v4613 = vpow.pop %v4612
  %v4614 = vmul.f32 %v4591, 1.442695
  %v4615 = vpow.pop %v4614
  %v4616 = vmul.f32 %v4592, 1.442695
  %v4617 = vpow.pop %v4616
  %v4618 = vmul.f32 %v4593, 1.442695
  %v4619 = vpow.pop %v4618
  %v4620 = vmul.f32 %v4594, 1.442695
  %v4621 = vpow.pop %v4620
  %v4622 = vmul.f32 %v4595, 1.442695
  %v4623 = vpow.pop %v4622
  %v4624 = vmul.f32 %v4596, 1.442695
  %v4625 = vpow.pop %v4624
  %v4626 = vmul.f32 %v4597, 1.442695
  %v4627 = vpow.pop %v4626
  %v4628 = vmul.f32 %v4598, 1.442695
  %v4629 = vpow.pop %v4628
  %v4630 = vmul.f32 %v4599, 1.442695
  %v4631 = vpow.pop %v4630
  %v4632 = vsel %vm981, %v4601, 0.0
  %4633 = vadd.xlane.f32.xlu0 %v4632
  %v4634 = vpop.xlane.xlu0 %4633
  %v4635 = vsel %vm981, %v4603, 0.0
  %4636 = vadd.xlane.f32.xlu0 %v4635
  %v4637 = vpop.xlane.xlu0 %4636
  %v4638 = vsel %vm981, %v4605, 0.0
  %4639 = vadd.xlane.f32.xlu0 %v4638
  %v4640 = vpop.xlane.xlu0 %4639
  %v4641 = vsel %vm981, %v4607, 0.0
  %4642 = vadd.xlane.f32.xlu0 %v4641
  %v4643 = vpop.xlane.xlu0 %4642
  %v4644 = vsel %vm981, %v4609, 0.0
  %4645 = vadd.xlane.f32.xlu0 %v4644
  %v4646 = vpop.xlane.xlu0 %4645
  %v4647 = vsel %vm981, %v4611, 0.0
  %4648 = vadd.xlane.f32.xlu0 %v4647
  %v4649 = vpop.xlane.xlu0 %4648
  %v4650 = vsel %vm981, %v4613, 0.0
  %4651 = vadd.xlane.f32.xlu0 %v4650
  %v4652 = vpop.xlane.xlu0 %4651
  %v4653 = vsel %vm981, %v4615, 0.0
  %4654 = vadd.xlane.f32.xlu0 %v4653
  %v4655 = vpop.xlane.xlu0 %4654
  %v4656 = vsel %vm981, %v4617, 0.0
  %4657 = vadd.xlane.f32.xlu0 %v4656
  %v4658 = vpop.xlane.xlu0 %4657
  %v4659 = vsel %vm981, %v4619, 0.0
  %4660 = vadd.xlane.f32.xlu0 %v4659
  %v4661 = vpop.xlane.xlu0 %4660
  %v4662 = vsel %vm981, %v4621, 0.0
  %4663 = vadd.xlane.f32.xlu0 %v4662
  %v4664 = vpop.xlane.xlu0 %4663
  %v4665 = vsel %vm981, %v4623, 0.0
  %4666 = vadd.xlane.f32.xlu0 %v4665
  %v4667 = vpop.xlane.xlu0 %4666
  %v4668 = vsel %vm981, %v4625, 0.0
  %4669 = vadd.xlane.f32.xlu0 %v4668
  %v4670 = vpop.xlane.xlu0 %4669
  %v4671 = vsel %vm981, %v4627, 0.0
  %4672 = vadd.xlane.f32.xlu0 %v4671
  %v4673 = vpop.xlane.xlu0 %4672
  %v4674 = vsel %vm981, %v4629, 0.0
  %4675 = vadd.xlane.f32.xlu0 %v4674
  %v4676 = vpop.xlane.xlu0 %4675
  %v4677 = vsel %vm981, %v4631, 0.0
  %4678 = vadd.xlane.f32.xlu0 %v4677
  %v4679 = vpop.xlane.xlu0 %4678
  %v4680 = vrcp.pop %v4634
  %v4681 = vrcp.pop %v4637
  %v4682 = vrcp.pop %v4640
  %v4683 = vrcp.pop %v4643
  %v4684 = vrcp.pop %v4646
  %v4685 = vrcp.pop %v4649
  %v4686 = vrcp.pop %v4652
  %v4687 = vrcp.pop %v4655
  %v4688 = vrcp.pop %v4658
  %v4689 = vrcp.pop %v4661
  %v4690 = vrcp.pop %v4664
  %v4691 = vrcp.pop %v4667
  %v4692 = vrcp.pop %v4670
  %v4693 = vrcp.pop %v4673
  %v4694 = vrcp.pop %v4676
  %v4695 = vrcp.pop %v4679
  %v4696 = vmul.f32 %v4601, %v4680
  %v4697 = vmul.f32 %v4603, %v4681
  %v4698 = vmul.f32 %v4605, %v4682
  %v4699 = vmul.f32 %v4607, %v4683
  %v4700 = vmul.f32 %v4609, %v4684
  %v4701 = vmul.f32 %v4611, %v4685
  %v4702 = vmul.f32 %v4613, %v4686
  %v4703 = vmul.f32 %v4615, %v4687
  %v4704 = vmul.f32 %v4617, %v4688
  %v4705 = vmul.f32 %v4619, %v4689
  %v4706 = vmul.f32 %v4621, %v4690
  %v4707 = vmul.f32 %v4623, %v4691
  %v4708 = vmul.f32 %v4625, %v4692
  %v4709 = vmul.f32 %v4627, %v4693
  %v4710 = vmul.f32 %v4629, %v4694
  %v4711 = vmul.f32 %v4631, %v4695
  %v4712 = vpack.c.bf16 %v4696, %v4696
  %v4713 = vpack.c.bf16 %v4697, %v4697
  %v4714 = vpack.c.bf16 %v4698, %v4698
  %v4715 = vpack.c.bf16 %v4699, %v4699
  %v4716 = vpack.c.bf16 %v4700, %v4700
  %v4717 = vpack.c.bf16 %v4701, %v4701
  %v4718 = vpack.c.bf16 %v4702, %v4702
  %v4719 = vpack.c.bf16 %v4703, %v4703
  %v4720 = vpack.c.bf16 %v4704, %v4704
  %v4721 = vpack.c.bf16 %v4705, %v4705
  %v4722 = vpack.c.bf16 %v4706, %v4706
  %v4723 = vpack.c.bf16 %v4707, %v4707
  %v4724 = vpack.c.bf16 %v4708, %v4708
  %v4725 = vpack.c.bf16 %v4709, %v4709
  %v4726 = vpack.c.bf16 %v4710, %v4710
  %v4727 = vpack.c.bf16 %v4711, %v4711
  %4728 = vrot.lane.b32.xlu0 %v164, 48
  %v4729 = vpop.permute.xlu0 %4728
  %v4731 = vsel %vm1176, %v4712, 0
  %v4734 = vsel %vm1180, %v4729, 0
  %4736 = vmatprep.subr.bf16.mxu0 0
  %4737 = vmatpush1.bf16.msra.mxu0 %v4734
  %4738 = vmatprep.subr.bf16.mxu0 0
  %4739 = vmatpush1.bf16.msra.mxu0 0
  %4740 = vmatprep.subr.bf16.mxu0 0
  %4741 = vmatpush1.bf16.msra.mxu0 0
  %4742 = vmatprep.subr.bf16.mxu0 0
  %4743 = vmatpush1.bf16.msra.mxu0 0
  %4744 = vmatprep.subr.bf16.mxu0 0
  %4745 = vmatpush1.bf16.msra.mxu0 0
  %4746 = vmatprep.subr.bf16.mxu0 0
  %4747 = vmatpush1.bf16.msra.mxu0 0
  %4748 = vmatprep.subr.bf16.mxu0 0
  %4749 = vmatpush1.bf16.msra.mxu0 0
  %4750 = vmatprep.subr.bf16.mxu0 0
  %4751 = vmatpush1.bf16.msra.mxu0 0
  %4752 = vmatprep.subr.bf16.mxu0 0
  %4753 = vmatpush1.bf16.msra.mxu0 0
  %4754 = vmatprep.subr.bf16.mxu0 0
  %4755 = vmatpush1.bf16.msra.mxu0 0
  %4756 = vmatprep.subr.bf16.mxu0 0
  %4757 = vmatpush1.bf16.msra.mxu0 0
  %4758 = vmatprep.subr.bf16.mxu0 0
  %4759 = vmatpush1.bf16.msra.mxu0 0
  %4760 = vmatprep.subr.bf16.mxu0 0
  %4761 = vmatpush1.bf16.msra.mxu0 0
  %4762 = vmatprep.subr.bf16.mxu0 0
  %4763 = vmatpush1.bf16.msra.mxu0 0
  %4764 = vmatprep.subr.bf16.mxu0 0
  %4765 = vmatpush1.bf16.msra.mxu0 0
  %4766 = vmatprep.subr.bf16.mxu0 0
  %4767 = vmatpush1.bf16.msra.mxu0 0
  %4768 = vmatprep.mubr.bf16.mxu0 0
  %4769 = vmatmul.mubr.bf16.gmra.mrb[0].mxu0 %v4731
  %v4770 = vpop.f32.mrb[0].mxu0
  %v4771 = vadd.f32 0.0, %v4770
  %v4772 = vpop.f32.mrb[0].mxu0
  %v4773 = vpop.f32.mrb[0].mxu0
  %v4774 = vpop.f32.mrb[0].mxu0
  %4775 = vdwg.mxu0
  %4776 = vrot.lane.b32.xlu0 %v165, 48
  %v4777 = vpop.permute.xlu0 %4776
  %v4779 = vsel %vm1176, %v4713, 0
  %v4782 = vsel %vm1180, %v4777, 0
  %4784 = vmatprep.subr.bf16.mxu0 0
  %4785 = vmatpush1.bf16.msra.mxu0 %v4782
  %4786 = vmatprep.subr.bf16.mxu0 0
  %4787 = vmatpush1.bf16.msra.mxu0 0
  %4788 = vmatprep.subr.bf16.mxu0 0
  %4789 = vmatpush1.bf16.msra.mxu0 0
  %4790 = vmatprep.subr.bf16.mxu0 0
  %4791 = vmatpush1.bf16.msra.mxu0 0
  %4792 = vmatprep.subr.bf16.mxu0 0
  %4793 = vmatpush1.bf16.msra.mxu0 0
  %4794 = vmatprep.subr.bf16.mxu0 0
  %4795 = vmatpush1.bf16.msra.mxu0 0
  %4796 = vmatprep.subr.bf16.mxu0 0
  %4797 = vmatpush1.bf16.msra.mxu0 0
  %4798 = vmatprep.subr.bf16.mxu0 0
  %4799 = vmatpush1.bf16.msra.mxu0 0
  %4800 = vmatprep.subr.bf16.mxu0 0
  %4801 = vmatpush1.bf16.msra.mxu0 0
  %4802 = vmatprep.subr.bf16.mxu0 0
  %4803 = vmatpush1.bf16.msra.mxu0 0
  %4804 = vmatprep.subr.bf16.mxu0 0
  %4805 = vmatpush1.bf16.msra.mxu0 0
  %4806 = vmatprep.subr.bf16.mxu0 0
  %4807 = vmatpush1.bf16.msra.mxu0 0
  %4808 = vmatprep.subr.bf16.mxu0 0
  %4809 = vmatpush1.bf16.msra.mxu0 0
  %4810 = vmatprep.subr.bf16.mxu0 0
  %4811 = vmatpush1.bf16.msra.mxu0 0
  %4812 = vmatprep.subr.bf16.mxu0 0
  %4813 = vmatpush1.bf16.msra.mxu0 0
  %4814 = vmatprep.subr.bf16.mxu0 0
  %4815 = vmatpush1.bf16.msra.mxu0 0
  %4816 = vmatprep.mubr.bf16.mxu0 0
  %4817 = vmatmul.mubr.bf16.gmra.mrb[0].mxu0 %v4779
  %v4818 = vpop.f32.mrb[0].mxu0
  %v4819 = vadd.f32 0.0, %v4818
  %v4820 = vpop.f32.mrb[0].mxu0
  %v4821 = vpop.f32.mrb[0].mxu0
  %v4822 = vpop.f32.mrb[0].mxu0
  %4823 = vdwg.mxu0
  %4824 = vrot.lane.b32.xlu0 %v166, 48
  %v4825 = vpop.permute.xlu0 %4824
  %v4827 = vsel %vm1176, %v4714, 0
  %v4830 = vsel %vm1180, %v4825, 0
  %4832 = vmatprep.subr.bf16.mxu0 0
  %4833 = vmatpush1.bf16.msra.mxu0 %v4830
  %4834 = vmatprep.subr.bf16.mxu0 0
  %4835 = vmatpush1.bf16.msra.mxu0 0
  %4836 = vmatprep.subr.bf16.mxu0 0
  %4837 = vmatpush1.bf16.msra.mxu0 0
  %4838 = vmatprep.subr.bf16.mxu0 0
  %4839 = vmatpush1.bf16.msra.mxu0 0
  %4840 = vmatprep.subr.bf16.mxu0 0
  %4841 = vmatpush1.bf16.msra.mxu0 0
  %4842 = vmatprep.subr.bf16.mxu0 0
  %4843 = vmatpush1.bf16.msra.mxu0 0
  %4844 = vmatprep.subr.bf16.mxu0 0
  %4845 = vmatpush1.bf16.msra.mxu0 0
  %4846 = vmatprep.subr.bf16.mxu0 0
  %4847 = vmatpush1.bf16.msra.mxu0 0
  %4848 = vmatprep.subr.bf16.mxu0 0
  %4849 = vmatpush1.bf16.msra.mxu0 0
  %4850 = vmatprep.subr.bf16.mxu0 0
  %4851 = vmatpush1.bf16.msra.mxu0 0
  %4852 = vmatprep.subr.bf16.mxu0 0
  %4853 = vmatpush1.bf16.msra.mxu0 0
  %4854 = vmatprep.subr.bf16.mxu0 0
  %4855 = vmatpush1.bf16.msra.mxu0 0
  %4856 = vmatprep.subr.bf16.mxu0 0
  %4857 = vmatpush1.bf16.msra.mxu0 0
  %4858 = vmatprep.subr.bf16.mxu0 0
  %4859 = vmatpush1.bf16.msra.mxu0 0
  %4860 = vmatprep.subr.bf16.mxu0 0
  %4861 = vmatpush1.bf16.msra.mxu0 0
  %4862 = vmatprep.subr.bf16.mxu0 0
  %4863 = vmatpush1.bf16.msra.mxu0 0
  %4864 = vmatprep.mubr.bf16.mxu0 0
  %4865 = vmatmul.mubr.bf16.gmra.mrb[0].mxu0 %v4827
  %v4866 = vpop.f32.mrb[0].mxu0
  %v4867 = vadd.f32 0.0, %v4866
  %v4868 = vpop.f32.mrb[0].mxu0
  %v4869 = vpop.f32.mrb[0].mxu0
  %v4870 = vpop.f32.mrb[0].mxu0
  %4871 = vdwg.mxu0
  %4872 = vrot.lane.b32.xlu0 %v167, 48
  %v4873 = vpop.permute.xlu0 %4872
  %v4875 = vsel %vm1176, %v4715, 0
  %v4878 = vsel %vm1180, %v4873, 0
  %4880 = vmatprep.subr.bf16.mxu0 0
  %4881 = vmatpush1.bf16.msra.mxu0 %v4878
  %4882 = vmatprep.subr.bf16.mxu0 0
  %4883 = vmatpush1.bf16.msra.mxu0 0
  %4884 = vmatprep.subr.bf16.mxu0 0
  %4885 = vmatpush1.bf16.msra.mxu0 0
  %4886 = vmatprep.subr.bf16.mxu0 0
  %4887 = vmatpush1.bf16.msra.mxu0 0
  %4888 = vmatprep.subr.bf16.mxu0 0
  %4889 = vmatpush1.bf16.msra.mxu0 0
  %4890 = vmatprep.subr.bf16.mxu0 0
  %4891 = vmatpush1.bf16.msra.mxu0 0
  %4892 = vmatprep.subr.bf16.mxu0 0
  %4893 = vmatpush1.bf16.msra.mxu0 0
  %4894 = vmatprep.subr.bf16.mxu0 0
  %4895 = vmatpush1.bf16.msra.mxu0 0
  %4896 = vmatprep.subr.bf16.mxu0 0
  %4897 = vmatpush1.bf16.msra.mxu0 0
  %4898 = vmatprep.subr.bf16.mxu0 0
  %4899 = vmatpush1.bf16.msra.mxu0 0
  %4900 = vmatprep.subr.bf16.mxu0 0
  %4901 = vmatpush1.bf16.msra.mxu0 0
  %4902 = vmatprep.subr.bf16.mxu0 0
  %4903 = vmatpush1.bf16.msra.mxu0 0
  %4904 = vmatprep.subr.bf16.mxu0 0
  %4905 = vmatpush1.bf16.msra.mxu0 0
  %4906 = vmatprep.subr.bf16.mxu0 0
  %4907 = vmatpush1.bf16.msra.mxu0 0
  %4908 = vmatprep.subr.bf16.mxu0 0
  %4909 = vmatpush1.bf16.msra.mxu0 0
  %4910 = vmatprep.subr.bf16.mxu0 0
  %4911 = vmatpush1.bf16.msra.mxu0 0
  %4912 = vmatprep.mubr.bf16.mxu0 0
  %4913 = vmatmul.mubr.bf16.gmra.mrb[0].mxu0 %v4875
  %v4914 = vpop.f32.mrb[0].mxu0
  %v4915 = vadd.f32 0.0, %v4914
  %v4916 = vpop.f32.mrb[0].mxu0
  %v4917 = vpop.f32.mrb[0].mxu0
  %v4918 = vpop.f32.mrb[0].mxu0
  %4919 = vdwg.mxu0
  %4920 = vrot.lane.b32.xlu0 %v168, 48
  %v4921 = vpop.permute.xlu0 %4920
  %v4923 = vsel %vm1176, %v4716, 0
  %v4926 = vsel %vm1180, %v4921, 0
  %4928 = vmatprep.subr.bf16.mxu0 0
  %4929 = vmatpush1.bf16.msra.mxu0 %v4926
  %4930 = vmatprep.subr.bf16.mxu0 0
  %4931 = vmatpush1.bf16.msra.mxu0 0
  %4932 = vmatprep.subr.bf16.mxu0 0
  %4933 = vmatpush1.bf16.msra.mxu0 0
  %4934 = vmatprep.subr.bf16.mxu0 0
  %4935 = vmatpush1.bf16.msra.mxu0 0
  %4936 = vmatprep.subr.bf16.mxu0 0
  %4937 = vmatpush1.bf16.msra.mxu0 0
  %4938 = vmatprep.subr.bf16.mxu0 0
  %4939 = vmatpush1.bf16.msra.mxu0 0
  %4940 = vmatprep.subr.bf16.mxu0 0
  %4941 = vmatpush1.bf16.msra.mxu0 0
  %4942 = vmatprep.subr.bf16.mxu0 0
  %4943 = vmatpush1.bf16.msra.mxu0 0
  %4944 = vmatprep.subr.bf16.mxu0 0
  %4945 = vmatpush1.bf16.msra.mxu0 0
  %4946 = vmatprep.subr.bf16.mxu0 0
  %4947 = vmatpush1.bf16.msra.mxu0 0
  %4948 = vmatprep.subr.bf16.mxu0 0
  %4949 = vmatpush1.bf16.msra.mxu0 0
  %4950 = vmatprep.subr.bf16.mxu0 0
  %4951 = vmatpush1.bf16.msra.mxu0 0
  %4952 = vmatprep.subr.bf16.mxu0 0
  %4953 = vmatpush1.bf16.msra.mxu0 0
  %4954 = vmatprep.subr.bf16.mxu0 0
  %4955 = vmatpush1.bf16.msra.mxu0 0
  %4956 = vmatprep.subr.bf16.mxu0 0
  %4957 = vmatpush1.bf16.msra.mxu0 0
  %4958 = vmatprep.subr.bf16.mxu0 0
  %4959 = vmatpush1.bf16.msra.mxu0 0
  %4960 = vmatprep.mubr.bf16.mxu0 0
  %4961 = vmatmul.mubr.bf16.gmra.mrb[0].mxu0 %v4923
  %v4962 = vpop.f32.mrb[0].mxu0
  %v4963 = vadd.f32 0.0, %v4962
  %v4964 = vpop.f32.mrb[0].mxu0
  %v4965 = vpop.f32.mrb[0].mxu0
  %v4966 = vpop.f32.mrb[0].mxu0
  %4967 = vdwg.mxu0
  %4968 = vrot.lane.b32.xlu0 %v169, 48
  %v4969 = vpop.permute.xlu0 %4968
  %v4971 = vsel %vm1176, %v4717, 0
  %v4974 = vsel %vm1180, %v4969, 0
  %4976 = vmatprep.subr.bf16.mxu0 0
  %4977 = vmatpush1.bf16.msra.mxu0 %v4974
  %4978 = vmatprep.subr.bf16.mxu0 0
  %4979 = vmatpush1.bf16.msra.mxu0 0
  %4980 = vmatprep.subr.bf16.mxu0 0
  %4981 = vmatpush1.bf16.msra.mxu0 0
  %4982 = vmatprep.subr.bf16.mxu0 0
  %4983 = vmatpush1.bf16.msra.mxu0 0
  %4984 = vmatprep.subr.bf16.mxu0 0
  %4985 = vmatpush1.bf16.msra.mxu0 0
  %4986 = vmatprep.subr.bf16.mxu0 0
  %4987 = vmatpush1.bf16.msra.mxu0 0
  %4988 = vmatprep.subr.bf16.mxu0 0
  %4989 = vmatpush1.bf16.msra.mxu0 0
  %4990 = vmatprep.subr.bf16.mxu0 0
  %4991 = vmatpush1.bf16.msra.mxu0 0
  %4992 = vmatprep.subr.bf16.mxu0 0
  %4993 = vmatpush1.bf16.msra.mxu0 0
  %4994 = vmatprep.subr.bf16.mxu0 0
  %4995 = vmatpush1.bf16.msra.mxu0 0
  %4996 = vmatprep.subr.bf16.mxu0 0
  %4997 = vmatpush1.bf16.msra.mxu0 0
  %4998 = vmatprep.subr.bf16.mxu0 0
  %4999 = vmatpush1.bf16.msra.mxu0 0
  %5000 = vmatprep.subr.bf16.mxu0 0
  %5001 = vmatpush1.bf16.msra.mxu0 0
  %5002 = vmatprep.subr.bf16.mxu0 0
  %5003 = vmatpush1.bf16.msra.mxu0 0
  %5004 = vmatprep.subr.bf16.mxu0 0
  %5005 = vmatpush1.bf16.msra.mxu0 0
  %5006 = vmatprep.subr.bf16.mxu0 0
  %5007 = vmatpush1.bf16.msra.mxu0 0
  %5008 = vmatprep.mubr.bf16.mxu0 0
  %5009 = vmatmul.mubr.bf16.gmra.mrb[0].mxu0 %v4971
  %v5010 = vpop.f32.mrb[0].mxu0
  %v5011 = vadd.f32 0.0, %v5010
  %v5012 = vpop.f32.mrb[0].mxu0
  %v5013 = vpop.f32.mrb[0].mxu0
  %v5014 = vpop.f32.mrb[0].mxu0
  %5015 = vdwg.mxu0
  %5016 = vrot.lane.b32.xlu0 %v170, 48
  %v5017 = vpop.permute.xlu0 %5016
  %v5019 = vsel %vm1176, %v4718, 0
  %v5022 = vsel %vm1180, %v5017, 0
  %5024 = vmatprep.subr.bf16.mxu0 0
  %5025 = vmatpush1.bf16.msra.mxu0 %v5022
  %5026 = vmatprep.subr.bf16.mxu0 0
  %5027 = vmatpush1.bf16.msra.mxu0 0
  %5028 = vmatprep.subr.bf16.mxu0 0
  %5029 = vmatpush1.bf16.msra.mxu0 0
  %5030 = vmatprep.subr.bf16.mxu0 0
  %5031 = vmatpush1.bf16.msra.mxu0 0
  %5032 = vmatprep.subr.bf16.mxu0 0
  %5033 = vmatpush1.bf16.msra.mxu0 0
  %5034 = vmatprep.subr.bf16.mxu0 0
  %5035 = vmatpush1.bf16.msra.mxu0 0
  %5036 = vmatprep.subr.bf16.mxu0 0
  %5037 = vmatpush1.bf16.msra.mxu0 0
  %5038 = vmatprep.subr.bf16.mxu0 0
  %5039 = vmatpush1.bf16.msra.mxu0 0
  %5040 = vmatprep.subr.bf16.mxu0 0
  %5041 = vmatpush1.bf16.msra.mxu0 0
  %5042 = vmatprep.subr.bf16.mxu0 0
  %5043 = vmatpush1.bf16.msra.mxu0 0
  %5044 = vmatprep.subr.bf16.mxu0 0
  %5045 = vmatpush1.bf16.msra.mxu0 0
  %5046 = vmatprep.subr.bf16.mxu0 0
  %5047 = vmatpush1.bf16.msra.mxu0 0
  %5048 = vmatprep.subr.bf16.mxu0 0
  %5049 = vmatpush1.bf16.msra.mxu0 0
  %5050 = vmatprep.subr.bf16.mxu0 0
  %5051 = vmatpush1.bf16.msra.mxu0 0
  %5052 = vmatprep.subr.bf16.mxu0 0
  %5053 = vmatpush1.bf16.msra.mxu0 0
  %5054 = vmatprep.subr.bf16.mxu0 0
  %5055 = vmatpush1.bf16.msra.mxu0 0
  %5056 = vmatprep.mubr.bf16.mxu0 0
  %5057 = vmatmul.mubr.bf16.gmra.mrb[0].mxu0 %v5019
  %v5058 = vpop.f32.mrb[0].mxu0
  %v5059 = vadd.f32 0.0, %v5058
  %v5060 = vpop.f32.mrb[0].mxu0
  %v5061 = vpop.f32.mrb[0].mxu0
  %v5062 = vpop.f32.mrb[0].mxu0
  %5063 = vdwg.mxu0
  %5064 = vrot.lane.b32.xlu0 %v171, 48
  %v5065 = vpop.permute.xlu0 %5064
  %v5067 = vsel %vm1176, %v4719, 0
  %v5070 = vsel %vm1180, %v5065, 0
  %5072 = vmatprep.subr.bf16.mxu0 0
  %5073 = vmatpush1.bf16.msra.mxu0 %v5070
  %5074 = vmatprep.subr.bf16.mxu0 0
  %5075 = vmatpush1.bf16.msra.mxu0 0
  %5076 = vmatprep.subr.bf16.mxu0 0
  %5077 = vmatpush1.bf16.msra.mxu0 0
  %5078 = vmatprep.subr.bf16.mxu0 0
  %5079 = vmatpush1.bf16.msra.mxu0 0
  %5080 = vmatprep.subr.bf16.mxu0 0
  %5081 = vmatpush1.bf16.msra.mxu0 0
  %5082 = vmatprep.subr.bf16.mxu0 0
  %5083 = vmatpush1.bf16.msra.mxu0 0
  %5084 = vmatprep.subr.bf16.mxu0 0
  %5085 = vmatpush1.bf16.msra.mxu0 0
  %5086 = vmatprep.subr.bf16.mxu0 0
  %5087 = vmatpush1.bf16.msra.mxu0 0
  %5088 = vmatprep.subr.bf16.mxu0 0
  %5089 = vmatpush1.bf16.msra.mxu0 0
  %5090 = vmatprep.subr.bf16.mxu0 0
  %5091 = vmatpush1.bf16.msra.mxu0 0
  %5092 = vmatprep.subr.bf16.mxu0 0
  %5093 = vmatpush1.bf16.msra.mxu0 0
  %5094 = vmatprep.subr.bf16.mxu0 0
  %5095 = vmatpush1.bf16.msra.mxu0 0
  %5096 = vmatprep.subr.bf16.mxu0 0
  %5097 = vmatpush1.bf16.msra.mxu0 0
  %5098 = vmatprep.subr.bf16.mxu0 0
  %5099 = vmatpush1.bf16.msra.mxu0 0
  %5100 = vmatprep.subr.bf16.mxu0 0
  %5101 = vmatpush1.bf16.msra.mxu0 0
  %5102 = vmatprep.subr.bf16.mxu0 0
  %5103 = vmatpush1.bf16.msra.mxu0 0
  %5104 = vmatprep.mubr.bf16.mxu0 0
  %5105 = vmatmul.mubr.bf16.gmra.mrb[0].mxu0 %v5067
  %v5106 = vpop.f32.mrb[0].mxu0
  %v5107 = vadd.f32 0.0, %v5106
  %v5108 = vpop.f32.mrb[0].mxu0
  %v5109 = vpop.f32.mrb[0].mxu0
  %v5110 = vpop.f32.mrb[0].mxu0
  %5111 = vdwg.mxu0
  %5112 = vrot.lane.b32.xlu0 %v172, 48
  %v5113 = vpop.permute.xlu0 %5112
  %v5115 = vsel %vm1176, %v4720, 0
  %v5118 = vsel %vm1180, %v5113, 0
  %5120 = vmatprep.subr.bf16.mxu0 0
  %5121 = vmatpush1.bf16.msra.mxu0 %v5118
  %5122 = vmatprep.subr.bf16.mxu0 0
  %5123 = vmatpush1.bf16.msra.mxu0 0
  %5124 = vmatprep.subr.bf16.mxu0 0
  %5125 = vmatpush1.bf16.msra.mxu0 0
  %5126 = vmatprep.subr.bf16.mxu0 0
  %5127 = vmatpush1.bf16.msra.mxu0 0
  %5128 = vmatprep.subr.bf16.mxu0 0
  %5129 = vmatpush1.bf16.msra.mxu0 0
  %5130 = vmatprep.subr.bf16.mxu0 0
  %5131 = vmatpush1.bf16.msra.mxu0 0
  %5132 = vmatprep.subr.bf16.mxu0 0
  %5133 = vmatpush1.bf16.msra.mxu0 0
  %5134 = vmatprep.subr.bf16.mxu0 0
  %5135 = vmatpush1.bf16.msra.mxu0 0
  %5136 = vmatprep.subr.bf16.mxu0 0
  %5137 = vmatpush1.bf16.msra.mxu0 0
  %5138 = vmatprep.subr.bf16.mxu0 0
  %5139 = vmatpush1.bf16.msra.mxu0 0
  %5140 = vmatprep.subr.bf16.mxu0 0
  %5141 = vmatpush1.bf16.msra.mxu0 0
  %5142 = vmatprep.subr.bf16.mxu0 0
  %5143 = vmatpush1.bf16.msra.mxu0 0
  %5144 = vmatprep.subr.bf16.mxu0 0
  %5145 = vmatpush1.bf16.msra.mxu0 0
  %5146 = vmatprep.subr.bf16.mxu0 0
  %5147 = vmatpush1.bf16.msra.mxu0 0
  %5148 = vmatprep.subr.bf16.mxu0 0
  %5149 = vmatpush1.bf16.msra.mxu0 0
  %5150 = vmatprep.subr.bf16.mxu0 0
  %5151 = vmatpush1.bf16.msra.mxu0 0
  %5152 = vmatprep.mubr.bf16.mxu0 0
  %5153 = vmatmul.mubr.bf16.gmra.mrb[0].mxu0 %v5115
  %v5154 = vpop.f32.mrb[0].mxu0
  %v5155 = vadd.f32 0.0, %v5154
  %v5156 = vpop.f32.mrb[0].mxu0
  %v5157 = vpop.f32.mrb[0].mxu0
  %v5158 = vpop.f32.mrb[0].mxu0
  %5159 = vdwg.mxu0
  %5160 = vrot.lane.b32.xlu0 %v173, 48
  %v5161 = vpop.permute.xlu0 %5160
  %v5163 = vsel %vm1176, %v4721, 0
  %v5166 = vsel %vm1180, %v5161, 0
  %5168 = vmatprep.subr.bf16.mxu0 0
  %5169 = vmatpush1.bf16.msra.mxu0 %v5166
  %5170 = vmatprep.subr.bf16.mxu0 0
  %5171 = vmatpush1.bf16.msra.mxu0 0
  %5172 = vmatprep.subr.bf16.mxu0 0
  %5173 = vmatpush1.bf16.msra.mxu0 0
  %5174 = vmatprep.subr.bf16.mxu0 0
  %5175 = vmatpush1.bf16.msra.mxu0 0
  %5176 = vmatprep.subr.bf16.mxu0 0
  %5177 = vmatpush1.bf16.msra.mxu0 0
  %5178 = vmatprep.subr.bf16.mxu0 0
  %5179 = vmatpush1.bf16.msra.mxu0 0
  %5180 = vmatprep.subr.bf16.mxu0 0
  %5181 = vmatpush1.bf16.msra.mxu0 0
  %5182 = vmatprep.subr.bf16.mxu0 0
  %5183 = vmatpush1.bf16.msra.mxu0 0
  %5184 = vmatprep.subr.bf16.mxu0 0
  %5185 = vmatpush1.bf16.msra.mxu0 0
  %5186 = vmatprep.subr.bf16.mxu0 0
  %5187 = vmatpush1.bf16.msra.mxu0 0
  %5188 = vmatprep.subr.bf16.mxu0 0
  %5189 = vmatpush1.bf16.msra.mxu0 0
  %5190 = vmatprep.subr.bf16.mxu0 0
  %5191 = vmatpush1.bf16.msra.mxu0 0
  %5192 = vmatprep.subr.bf16.mxu0 0
  %5193 = vmatpush1.bf16.msra.mxu0 0
  %5194 = vmatprep.subr.bf16.mxu0 0
  %5195 = vmatpush1.bf16.msra.mxu0 0
  %5196 = vmatprep.subr.bf16.mxu0 0
  %5197 = vmatpush1.bf16.msra.mxu0 0
  %5198 = vmatprep.subr.bf16.mxu0 0
  %5199 = vmatpush1.bf16.msra.mxu0 0
  %5200 = vmatprep.mubr.bf16.mxu0 0
  %5201 = vmatmul.mubr.bf16.gmra.mrb[0].mxu0 %v5163
  %v5202 = vpop.f32.mrb[0].mxu0
  %v5203 = vadd.f32 0.0, %v5202
  %v5204 = vpop.f32.mrb[0].mxu0
  %v5205 = vpop.f32.mrb[0].mxu0
  %v5206 = vpop.f32.mrb[0].mxu0
  %5207 = vdwg.mxu0
  %5208 = vrot.lane.b32.xlu0 %v174, 48
  %v5209 = vpop.permute.xlu0 %5208
  %v5211 = vsel %vm1176, %v4722, 0
  %v5214 = vsel %vm1180, %v5209, 0
  %5216 = vmatprep.subr.bf16.mxu0 0
  %5217 = vmatpush1.bf16.msra.mxu0 %v5214
  %5218 = vmatprep.subr.bf16.mxu0 0
  %5219 = vmatpush1.bf16.msra.mxu0 0
  %5220 = vmatprep.subr.bf16.mxu0 0
  %5221 = vmatpush1.bf16.msra.mxu0 0
  %5222 = vmatprep.subr.bf16.mxu0 0
  %5223 = vmatpush1.bf16.msra.mxu0 0
  %5224 = vmatprep.subr.bf16.mxu0 0
  %5225 = vmatpush1.bf16.msra.mxu0 0
  %5226 = vmatprep.subr.bf16.mxu0 0
  %5227 = vmatpush1.bf16.msra.mxu0 0
  %5228 = vmatprep.subr.bf16.mxu0 0
  %5229 = vmatpush1.bf16.msra.mxu0 0
  %5230 = vmatprep.subr.bf16.mxu0 0
  %5231 = vmatpush1.bf16.msra.mxu0 0
  %5232 = vmatprep.subr.bf16.mxu0 0
  %5233 = vmatpush1.bf16.msra.mxu0 0
  %5234 = vmatprep.subr.bf16.mxu0 0
  %5235 = vmatpush1.bf16.msra.mxu0 0
  %5236 = vmatprep.subr.bf16.mxu0 0
  %5237 = vmatpush1.bf16.msra.mxu0 0
  %5238 = vmatprep.subr.bf16.mxu0 0
  %5239 = vmatpush1.bf16.msra.mxu0 0
  %5240 = vmatprep.subr.bf16.mxu0 0
  %5241 = vmatpush1.bf16.msra.mxu0 0
  %5242 = vmatprep.subr.bf16.mxu0 0
  %5243 = vmatpush1.bf16.msra.mxu0 0
  %5244 = vmatprep.subr.bf16.mxu0 0
  %5245 = vmatpush1.bf16.msra.mxu0 0
  %5246 = vmatprep.subr.bf16.mxu0 0
  %5247 = vmatpush1.bf16.msra.mxu0 0
  %5248 = vmatprep.mubr.bf16.mxu0 0
  %5249 = vmatmul.mubr.bf16.gmra.mrb[0].mxu0 %v5211
  %v5250 = vpop.f32.mrb[0].mxu0
  %v5251 = vadd.f32 0.0, %v5250
  %v5252 = vpop.f32.mrb[0].mxu0
  %v5253 = vpop.f32.mrb[0].mxu0
  %v5254 = vpop.f32.mrb[0].mxu0
  %5255 = vdwg.mxu0
  %5256 = vrot.lane.b32.xlu0 %v175, 48
  %v5257 = vpop.permute.xlu0 %5256
  %v5259 = vsel %vm1176, %v4723, 0
  %v5262 = vsel %vm1180, %v5257, 0
  %5264 = vmatprep.subr.bf16.mxu0 0
  %5265 = vmatpush1.bf16.msra.mxu0 %v5262
  %5266 = vmatprep.subr.bf16.mxu0 0
  %5267 = vmatpush1.bf16.msra.mxu0 0
  %5268 = vmatprep.subr.bf16.mxu0 0
  %5269 = vmatpush1.bf16.msra.mxu0 0
  %5270 = vmatprep.subr.bf16.mxu0 0
  %5271 = vmatpush1.bf16.msra.mxu0 0
  %5272 = vmatprep.subr.bf16.mxu0 0
  %5273 = vmatpush1.bf16.msra.mxu0 0
  %5274 = vmatprep.subr.bf16.mxu0 0
  %5275 = vmatpush1.bf16.msra.mxu0 0
  %5276 = vmatprep.subr.bf16.mxu0 0
  %5277 = vmatpush1.bf16.msra.mxu0 0
  %5278 = vmatprep.subr.bf16.mxu0 0
  %5279 = vmatpush1.bf16.msra.mxu0 0
  %5280 = vmatprep.subr.bf16.mxu0 0
  %5281 = vmatpush1.bf16.msra.mxu0 0
  %5282 = vmatprep.subr.bf16.mxu0 0
  %5283 = vmatpush1.bf16.msra.mxu0 0
  %5284 = vmatprep.subr.bf16.mxu0 0
  %5285 = vmatpush1.bf16.msra.mxu0 0
  %5286 = vmatprep.subr.bf16.mxu0 0
  %5287 = vmatpush1.bf16.msra.mxu0 0
  %5288 = vmatprep.subr.bf16.mxu0 0
  %5289 = vmatpush1.bf16.msra.mxu0 0
  %5290 = vmatprep.subr.bf16.mxu0 0
  %5291 = vmatpush1.bf16.msra.mxu0 0
  %5292 = vmatprep.subr.bf16.mxu0 0
  %5293 = vmatpush1.bf16.msra.mxu0 0
  %5294 = vmatprep.subr.bf16.mxu0 0
  %5295 = vmatpush1.bf16.msra.mxu0 0
  %5296 = vmatprep.mubr.bf16.mxu0 0
  %5297 = vmatmul.mubr.bf16.gmra.mrb[0].mxu0 %v5259
  %v5298 = vpop.f32.mrb[0].mxu0
  %v5299 = vadd.f32 0.0, %v5298
  %v5300 = vpop.f32.mrb[0].mxu0
  %v5301 = vpop.f32.mrb[0].mxu0
  %v5302 = vpop.f32.mrb[0].mxu0
  %5303 = vdwg.mxu0
  %5304 = vrot.lane.b32.xlu0 %v176, 48
  %v5305 = vpop.permute.xlu0 %5304
  %v5307 = vsel %vm1176, %v4724, 0
  %v5310 = vsel %vm1180, %v5305, 0
  %5312 = vmatprep.subr.bf16.mxu0 0
  %5313 = vmatpush1.bf16.msra.mxu0 %v5310
  %5314 = vmatprep.subr.bf16.mxu0 0
  %5315 = vmatpush1.bf16.msra.mxu0 0
  %5316 = vmatprep.subr.bf16.mxu0 0
  %5317 = vmatpush1.bf16.msra.mxu0 0
  %5318 = vmatprep.subr.bf16.mxu0 0
  %5319 = vmatpush1.bf16.msra.mxu0 0
  %5320 = vmatprep.subr.bf16.mxu0 0
  %5321 = vmatpush1.bf16.msra.mxu0 0
  %5322 = vmatprep.subr.bf16.mxu0 0
  %5323 = vmatpush1.bf16.msra.mxu0 0
  %5324 = vmatprep.subr.bf16.mxu0 0
  %5325 = vmatpush1.bf16.msra.mxu0 0
  %5326 = vmatprep.subr.bf16.mxu0 0
  %5327 = vmatpush1.bf16.msra.mxu0 0
  %5328 = vmatprep.subr.bf16.mxu0 0
  %5329 = vmatpush1.bf16.msra.mxu0 0
  %5330 = vmatprep.subr.bf16.mxu0 0
  %5331 = vmatpush1.bf16.msra.mxu0 0
  %5332 = vmatprep.subr.bf16.mxu0 0
  %5333 = vmatpush1.bf16.msra.mxu0 0
  %5334 = vmatprep.subr.bf16.mxu0 0
  %5335 = vmatpush1.bf16.msra.mxu0 0
  %5336 = vmatprep.subr.bf16.mxu0 0
  %5337 = vmatpush1.bf16.msra.mxu0 0
  %5338 = vmatprep.subr.bf16.mxu0 0
  %5339 = vmatpush1.bf16.msra.mxu0 0
  %5340 = vmatprep.subr.bf16.mxu0 0
  %5341 = vmatpush1.bf16.msra.mxu0 0
  %5342 = vmatprep.subr.bf16.mxu0 0
  %5343 = vmatpush1.bf16.msra.mxu0 0
  %5344 = vmatprep.mubr.bf16.mxu0 0
  %5345 = vmatmul.mubr.bf16.gmra.mrb[0].mxu0 %v5307
  %v5346 = vpop.f32.mrb[0].mxu0
  %v5347 = vadd.f32 0.0, %v5346
  %v5348 = vpop.f32.mrb[0].mxu0
  %v5349 = vpop.f32.mrb[0].mxu0
  %v5350 = vpop.f32.mrb[0].mxu0
  %5351 = vdwg.mxu0
  %5352 = vrot.lane.b32.xlu0 %v177, 48
  %v5353 = vpop.permute.xlu0 %5352
  %v5355 = vsel %vm1176, %v4725, 0
  %v5358 = vsel %vm1180, %v5353, 0
  %5360 = vmatprep.subr.bf16.mxu0 0
  %5361 = vmatpush1.bf16.msra.mxu0 %v5358
  %5362 = vmatprep.subr.bf16.mxu0 0
  %5363 = vmatpush1.bf16.msra.mxu0 0
  %5364 = vmatprep.subr.bf16.mxu0 0
  %5365 = vmatpush1.bf16.msra.mxu0 0
  %5366 = vmatprep.subr.bf16.mxu0 0
  %5367 = vmatpush1.bf16.msra.mxu0 0
  %5368 = vmatprep.subr.bf16.mxu0 0
  %5369 = vmatpush1.bf16.msra.mxu0 0
  %5370 = vmatprep.subr.bf16.mxu0 0
  %5371 = vmatpush1.bf16.msra.mxu0 0
  %5372 = vmatprep.subr.bf16.mxu0 0
  %5373 = vmatpush1.bf16.msra.mxu0 0
  %5374 = vmatprep.subr.bf16.mxu0 0
  %5375 = vmatpush1.bf16.msra.mxu0 0
  %5376 = vmatprep.subr.bf16.mxu0 0
  %5377 = vmatpush1.bf16.msra.mxu0 0
  %5378 = vmatprep.subr.bf16.mxu0 0
  %5379 = vmatpush1.bf16.msra.mxu0 0
  %5380 = vmatprep.subr.bf16.mxu0 0
  %5381 = vmatpush1.bf16.msra.mxu0 0
  %5382 = vmatprep.subr.bf16.mxu0 0
  %5383 = vmatpush1.bf16.msra.mxu0 0
  %5384 = vmatprep.subr.bf16.mxu0 0
  %5385 = vmatpush1.bf16.msra.mxu0 0
  %5386 = vmatprep.subr.bf16.mxu0 0
  %5387 = vmatpush1.bf16.msra.mxu0 0
  %5388 = vmatprep.subr.bf16.mxu0 0
  %5389 = vmatpush1.bf16.msra.mxu0 0
  %5390 = vmatprep.subr.bf16.mxu0 0
  %5391 = vmatpush1.bf16.msra.mxu0 0
  %5392 = vmatprep.mubr.bf16.mxu0 0
  %5393 = vmatmul.mubr.bf16.gmra.mrb[0].mxu0 %v5355
  %v5394 = vpop.f32.mrb[0].mxu0
  %v5395 = vadd.f32 0.0, %v5394
  %v5396 = vpop.f32.mrb[0].mxu0
  %v5397 = vpop.f32.mrb[0].mxu0
  %v5398 = vpop.f32.mrb[0].mxu0
  %5399 = vdwg.mxu0
  %5400 = vrot.lane.b32.xlu0 %v178, 48
  %v5401 = vpop.permute.xlu0 %5400
  %v5403 = vsel %vm1176, %v4726, 0
  %v5406 = vsel %vm1180, %v5401, 0
  %5408 = vmatprep.subr.bf16.mxu0 0
  %5409 = vmatpush1.bf16.msra.mxu0 %v5406
  %5410 = vmatprep.subr.bf16.mxu0 0
  %5411 = vmatpush1.bf16.msra.mxu0 0
  %5412 = vmatprep.subr.bf16.mxu0 0
  %5413 = vmatpush1.bf16.msra.mxu0 0
  %5414 = vmatprep.subr.bf16.mxu0 0
  %5415 = vmatpush1.bf16.msra.mxu0 0
  %5416 = vmatprep.subr.bf16.mxu0 0
  %5417 = vmatpush1.bf16.msra.mxu0 0
  %5418 = vmatprep.subr.bf16.mxu0 0
  %5419 = vmatpush1.bf16.msra.mxu0 0
  %5420 = vmatprep.subr.bf16.mxu0 0
  %5421 = vmatpush1.bf16.msra.mxu0 0
  %5422 = vmatprep.subr.bf16.mxu0 0
  %5423 = vmatpush1.bf16.msra.mxu0 0
  %5424 = vmatprep.subr.bf16.mxu0 0
  %5425 = vmatpush1.bf16.msra.mxu0 0
  %5426 = vmatprep.subr.bf16.mxu0 0
  %5427 = vmatpush1.bf16.msra.mxu0 0
  %5428 = vmatprep.subr.bf16.mxu0 0
  %5429 = vmatpush1.bf16.msra.mxu0 0
  %5430 = vmatprep.subr.bf16.mxu0 0
  %5431 = vmatpush1.bf16.msra.mxu0 0
  %5432 = vmatprep.subr.bf16.mxu0 0
  %5433 = vmatpush1.bf16.msra.mxu0 0
  %5434 = vmatprep.subr.bf16.mxu0 0
  %5435 = vmatpush1.bf16.msra.mxu0 0
  %5436 = vmatprep.subr.bf16.mxu0 0
  %5437 = vmatpush1.bf16.msra.mxu0 0
  %5438 = vmatprep.subr.bf16.mxu0 0
  %5439 = vmatpush1.bf16.msra.mxu0 0
  %5440 = vmatprep.mubr.bf16.mxu0 0
  %5441 = vmatmul.mubr.bf16.gmra.mrb[0].mxu0 %v5403
  %v5442 = vpop.f32.mrb[0].mxu0
  %v5443 = vadd.f32 0.0, %v5442
  %v5444 = vpop.f32.mrb[0].mxu0
  %v5445 = vpop.f32.mrb[0].mxu0
  %v5446 = vpop.f32.mrb[0].mxu0
  %5447 = vdwg.mxu0
  %5448 = vrot.lane.b32.xlu0 %v179, 48
  %v5449 = vpop.permute.xlu0 %5448
  %v5451 = vsel %vm1176, %v4727, 0
  %v5454 = vsel %vm1180, %v5449, 0
  %5456 = vmatprep.subr.bf16.mxu0 0
  %5457 = vmatpush1.bf16.msra.mxu0 %v5454
  %5458 = vmatprep.subr.bf16.mxu0 0
  %5459 = vmatpush1.bf16.msra.mxu0 0
  %5460 = vmatprep.subr.bf16.mxu0 0
  %5461 = vmatpush1.bf16.msra.mxu0 0
  %5462 = vmatprep.subr.bf16.mxu0 0
  %5463 = vmatpush1.bf16.msra.mxu0 0
  %5464 = vmatprep.subr.bf16.mxu0 0
  %5465 = vmatpush1.bf16.msra.mxu0 0
  %5466 = vmatprep.subr.bf16.mxu0 0
  %5467 = vmatpush1.bf16.msra.mxu0 0
  %5468 = vmatprep.subr.bf16.mxu0 0
  %5469 = vmatpush1.bf16.msra.mxu0 0
  %5470 = vmatprep.subr.bf16.mxu0 0
  %5471 = vmatpush1.bf16.msra.mxu0 0
  %5472 = vmatprep.subr.bf16.mxu0 0
  %5473 = vmatpush1.bf16.msra.mxu0 0
  %5474 = vmatprep.subr.bf16.mxu0 0
  %5475 = vmatpush1.bf16.msra.mxu0 0
  %5476 = vmatprep.subr.bf16.mxu0 0
  %5477 = vmatpush1.bf16.msra.mxu0 0
  %5478 = vmatprep.subr.bf16.mxu0 0
  %5479 = vmatpush1.bf16.msra.mxu0 0
  %5480 = vmatprep.subr.bf16.mxu0 0
  %5481 = vmatpush1.bf16.msra.mxu0 0
  %5482 = vmatprep.subr.bf16.mxu0 0
  %5483 = vmatpush1.bf16.msra.mxu0 0
  %5484 = vmatprep.subr.bf16.mxu0 0
  %5485 = vmatpush1.bf16.msra.mxu0 0
  %5486 = vmatprep.subr.bf16.mxu0 0
  %5487 = vmatpush1.bf16.msra.mxu0 0
  %5488 = vmatprep.mubr.bf16.mxu0 0
  %5489 = vmatmul.mubr.bf16.gmra.mrb[0].mxu0 %v5451
  %v5490 = vpop.f32.mrb[0].mxu0
  %v5491 = vadd.f32 0.0, %v5490
  %v5492 = vpop.f32.mrb[0].mxu0
  %v5493 = vpop.f32.mrb[0].mxu0
  %v5494 = vpop.f32.mrb[0].mxu0
  %5495 = vdwg.mxu0
  %5496 = vrot.lane.b32.xlu0 %v164, 104
  %v5497 = vpop.permute.xlu0 %5496
  %5498 = vrot.lane.b32.xlu0 %v164, 72
  %v5499 = vpop.permute.xlu0 %5498
  %v5501 = vsel %vm183, %v5497, 0
  %v5504 = vsel %vm183, %v5499, 0
  %5506 = vmatprep.subr.bf16.mxu0 0
  %5507 = vmatpush1.bf16.xpose.msra.mxu0 %v5504
  %5508 = vmatprep.subr.bf16.mxu0 0
  %5509 = vmatpush1.bf16.xpose.msra.mxu0 0
  %5510 = vmatprep.subr.bf16.mxu0 0
  %5511 = vmatpush1.bf16.xpose.msra.mxu0 0
  %5512 = vmatprep.subr.bf16.mxu0 0
  %5513 = vmatpush1.bf16.xpose.msra.mxu0 0
  %5514 = vmatprep.subr.bf16.mxu0 0
  %5515 = vmatpush1.bf16.xpose.msra.mxu0 0
  %5516 = vmatprep.subr.bf16.mxu0 0
  %5517 = vmatpush1.bf16.xpose.msra.mxu0 0
  %5518 = vmatprep.subr.bf16.mxu0 0
  %5519 = vmatpush1.bf16.xpose.msra.mxu0 0
  %5520 = vmatprep.subr.bf16.mxu0 0
  %5521 = vmatpush1.bf16.xpose.msra.mxu0 0
  %5522 = vmatprep.subr.bf16.mxu0 0
  %5523 = vmatpush1.bf16.xpose.msra.mxu0 0
  %5524 = vmatprep.subr.bf16.mxu0 0
  %5525 = vmatpush1.bf16.xpose.msra.mxu0 0
  %5526 = vmatprep.subr.bf16.mxu0 0
  %5527 = vmatpush1.bf16.xpose.msra.mxu0 0
  %5528 = vmatprep.subr.bf16.mxu0 0
  %5529 = vmatpush1.bf16.xpose.msra.mxu0 0
  %5530 = vmatprep.subr.bf16.mxu0 0
  %5531 = vmatpush1.bf16.xpose.msra.mxu0 0
  %5532 = vmatprep.subr.bf16.mxu0 0
  %5533 = vmatpush1.bf16.xpose.msra.mxu0 0
  %5534 = vmatprep.subr.bf16.mxu0 0
  %5535 = vmatpush1.bf16.xpose.msra.mxu0 0
  %5536 = vmatprep.subr.bf16.mxu0 0
  %5537 = vmatpush1.bf16.xpose.msra.mxu0 0
  %5538 = vmatprep.mubr.bf16.mxu0 0
  %5539 = vmatmul.mubr.bf16.gmra.mrb[0].mxu0 %v5501
  %v5540 = vpop.f32.mrb[0].mxu0
  %v5541 = vadd.f32 0.0, %v5540
  %v5542 = vpop.f32.mrb[0].mxu0
  %v5543 = vpop.f32.mrb[0].mxu0
  %v5544 = vpop.f32.mrb[0].mxu0
  %5545 = vdwg.mxu0
  %5546 = vrot.lane.b32.xlu0 %v165, 104
  %v5547 = vpop.permute.xlu0 %5546
  %5548 = vrot.lane.b32.xlu0 %v165, 72
  %v5549 = vpop.permute.xlu0 %5548
  %v5551 = vsel %vm183, %v5547, 0
  %v5554 = vsel %vm183, %v5549, 0
  %5556 = vmatprep.subr.bf16.mxu0 0
  %5557 = vmatpush1.bf16.xpose.msra.mxu0 %v5554
  %5558 = vmatprep.subr.bf16.mxu0 0
  %5559 = vmatpush1.bf16.xpose.msra.mxu0 0
  %5560 = vmatprep.subr.bf16.mxu0 0
  %5561 = vmatpush1.bf16.xpose.msra.mxu0 0
  %5562 = vmatprep.subr.bf16.mxu0 0
  %5563 = vmatpush1.bf16.xpose.msra.mxu0 0
  %5564 = vmatprep.subr.bf16.mxu0 0
  %5565 = vmatpush1.bf16.xpose.msra.mxu0 0
  %5566 = vmatprep.subr.bf16.mxu0 0
  %5567 = vmatpush1.bf16.xpose.msra.mxu0 0
  %5568 = vmatprep.subr.bf16.mxu0 0
  %5569 = vmatpush1.bf16.xpose.msra.mxu0 0
  %5570 = vmatprep.subr.bf16.mxu0 0
  %5571 = vmatpush1.bf16.xpose.msra.mxu0 0
  %5572 = vmatprep.subr.bf16.mxu0 0
  %5573 = vmatpush1.bf16.xpose.msra.mxu0 0
  %5574 = vmatprep.subr.bf16.mxu0 0
  %5575 = vmatpush1.bf16.xpose.msra.mxu0 0
  %5576 = vmatprep.subr.bf16.mxu0 0
  %5577 = vmatpush1.bf16.xpose.msra.mxu0 0
  %5578 = vmatprep.subr.bf16.mxu0 0
  %5579 = vmatpush1.bf16.xpose.msra.mxu0 0
  %5580 = vmatprep.subr.bf16.mxu0 0
  %5581 = vmatpush1.bf16.xpose.msra.mxu0 0
  %5582 = vmatprep.subr.bf16.mxu0 0
  %5583 = vmatpush1.bf16.xpose.msra.mxu0 0
  %5584 = vmatprep.subr.bf16.mxu0 0
  %5585 = vmatpush1.bf16.xpose.msra.mxu0 0
  %5586 = vmatprep.subr.bf16.mxu0 0
  %5587 = vmatpush1.bf16.xpose.msra.mxu0 0
  %5588 = vmatprep.mubr.bf16.mxu0 0
  %5589 = vmatmul.mubr.bf16.gmra.mrb[0].mxu0 %v5551
  %v5590 = vpop.f32.mrb[0].mxu0
  %v5591 = vadd.f32 0.0, %v5590
  %v5592 = vpop.f32.mrb[0].mxu0
  %v5593 = vpop.f32.mrb[0].mxu0
  %v5594 = vpop.f32.mrb[0].mxu0
  %5595 = vdwg.mxu0
  %5596 = vrot.lane.b32.xlu0 %v166, 104
  %v5597 = vpop.permute.xlu0 %5596
  %5598 = vrot.lane.b32.xlu0 %v166, 72
  %v5599 = vpop.permute.xlu0 %5598
  %v5601 = vsel %vm183, %v5597, 0
  %v5604 = vsel %vm183, %v5599, 0
  %5606 = vmatprep.subr.bf16.mxu0 0
  %5607 = vmatpush1.bf16.xpose.msra.mxu0 %v5604
  %5608 = vmatprep.subr.bf16.mxu0 0
  %5609 = vmatpush1.bf16.xpose.msra.mxu0 0
  %5610 = vmatprep.subr.bf16.mxu0 0
  %5611 = vmatpush1.bf16.xpose.msra.mxu0 0
  %5612 = vmatprep.subr.bf16.mxu0 0
  %5613 = vmatpush1.bf16.xpose.msra.mxu0 0
  %5614 = vmatprep.subr.bf16.mxu0 0
  %5615 = vmatpush1.bf16.xpose.msra.mxu0 0
  %5616 = vmatprep.subr.bf16.mxu0 0
  %5617 = vmatpush1.bf16.xpose.msra.mxu0 0
  %5618 = vmatprep.subr.bf16.mxu0 0
  %5619 = vmatpush1.bf16.xpose.msra.mxu0 0
  %5620 = vmatprep.subr.bf16.mxu0 0
  %5621 = vmatpush1.bf16.xpose.msra.mxu0 0
  %5622 = vmatprep.subr.bf16.mxu0 0
  %5623 = vmatpush1.bf16.xpose.msra.mxu0 0
  %5624 = vmatprep.subr.bf16.mxu0 0
  %5625 = vmatpush1.bf16.xpose.msra.mxu0 0
  %5626 = vmatprep.subr.bf16.mxu0 0
  %5627 = vmatpush1.bf16.xpose.msra.mxu0 0
  %5628 = vmatprep.subr.bf16.mxu0 0
  %5629 = vmatpush1.bf16.xpose.msra.mxu0 0
  %5630 = vmatprep.subr.bf16.mxu0 0
  %5631 = vmatpush1.bf16.xpose.msra.mxu0 0
  %5632 = vmatprep.subr.bf16.mxu0 0
  %5633 = vmatpush1.bf16.xpose.msra.mxu0 0
  %5634 = vmatprep.subr.bf16.mxu0 0
  %5635 = vmatpush1.bf16.xpose.msra.mxu0 0
  %5636 = vmatprep.subr.bf16.mxu0 0
  %5637 = vmatpush1.bf16.xpose.msra.mxu0 0
  %5638 = vmatprep.mubr.bf16.mxu0 0
  %5639 = vmatmul.mubr.bf16.gmra.mrb[0].mxu0 %v5601
  %v5640 = vpop.f32.mrb[0].mxu0
  %v5641 = vadd.f32 0.0, %v5640
  %v5642 = vpop.f32.mrb[0].mxu0
  %v5643 = vpop.f32.mrb[0].mxu0
  %v5644 = vpop.f32.mrb[0].mxu0
  %5645 = vdwg.mxu0
  %5646 = vrot.lane.b32.xlu0 %v167, 104
  %v5647 = vpop.permute.xlu0 %5646
  %5648 = vrot.lane.b32.xlu0 %v167, 72
  %v5649 = vpop.permute.xlu0 %5648
  %v5651 = vsel %vm183, %v5647, 0
  %v5654 = vsel %vm183, %v5649, 0
  %5656 = vmatprep.subr.bf16.mxu0 0
  %5657 = vmatpush1.bf16.xpose.msra.mxu0 %v5654
  %5658 = vmatprep.subr.bf16.mxu0 0
  %5659 = vmatpush1.bf16.xpose.msra.mxu0 0
  %5660 = vmatprep.subr.bf16.mxu0 0
  %5661 = vmatpush1.bf16.xpose.msra.mxu0 0
  %5662 = vmatprep.subr.bf16.mxu0 0
  %5663 = vmatpush1.bf16.xpose.msra.mxu0 0
  %5664 = vmatprep.subr.bf16.mxu0 0
  %5665 = vmatpush1.bf16.xpose.msra.mxu0 0
  %5666 = vmatprep.subr.bf16.mxu0 0
  %5667 = vmatpush1.bf16.xpose.msra.mxu0 0
  %5668 = vmatprep.subr.bf16.mxu0 0
  %5669 = vmatpush1.bf16.xpose.msra.mxu0 0
  %5670 = vmatprep.subr.bf16.mxu0 0
  %5671 = vmatpush1.bf16.xpose.msra.mxu0 0
  %5672 = vmatprep.subr.bf16.mxu0 0
  %5673 = vmatpush1.bf16.xpose.msra.mxu0 0
  %5674 = vmatprep.subr.bf16.mxu0 0
  %5675 = vmatpush1.bf16.xpose.msra.mxu0 0
  %5676 = vmatprep.subr.bf16.mxu0 0
  %5677 = vmatpush1.bf16.xpose.msra.mxu0 0
  %5678 = vmatprep.subr.bf16.mxu0 0
  %5679 = vmatpush1.bf16.xpose.msra.mxu0 0
  %5680 = vmatprep.subr.bf16.mxu0 0
  %5681 = vmatpush1.bf16.xpose.msra.mxu0 0
  %5682 = vmatprep.subr.bf16.mxu0 0
  %5683 = vmatpush1.bf16.xpose.msra.mxu0 0
  %5684 = vmatprep.subr.bf16.mxu0 0
  %5685 = vmatpush1.bf16.xpose.msra.mxu0 0
  %5686 = vmatprep.subr.bf16.mxu0 0
  %5687 = vmatpush1.bf16.xpose.msra.mxu0 0
  %5688 = vmatprep.mubr.bf16.mxu0 0
  %5689 = vmatmul.mubr.bf16.gmra.mrb[0].mxu0 %v5651
  %v5690 = vpop.f32.mrb[0].mxu0
  %v5691 = vadd.f32 0.0, %v5690
  %v5692 = vpop.f32.mrb[0].mxu0
  %v5693 = vpop.f32.mrb[0].mxu0
  %v5694 = vpop.f32.mrb[0].mxu0
  %5695 = vdwg.mxu0
  %5696 = vrot.lane.b32.xlu0 %v168, 104
  %v5697 = vpop.permute.xlu0 %5696
  %5698 = vrot.lane.b32.xlu0 %v168, 72
  %v5699 = vpop.permute.xlu0 %5698
  %v5701 = vsel %vm183, %v5697, 0
  %v5704 = vsel %vm183, %v5699, 0
  %5706 = vmatprep.subr.bf16.mxu0 0
  %5707 = vmatpush1.bf16.xpose.msra.mxu0 %v5704
  %5708 = vmatprep.subr.bf16.mxu0 0
  %5709 = vmatpush1.bf16.xpose.msra.mxu0 0
  %5710 = vmatprep.subr.bf16.mxu0 0
  %5711 = vmatpush1.bf16.xpose.msra.mxu0 0
  %5712 = vmatprep.subr.bf16.mxu0 0
  %5713 = vmatpush1.bf16.xpose.msra.mxu0 0
  %5714 = vmatprep.subr.bf16.mxu0 0
  %5715 = vmatpush1.bf16.xpose.msra.mxu0 0
  %5716 = vmatprep.subr.bf16.mxu0 0
  %5717 = vmatpush1.bf16.xpose.msra.mxu0 0
  %5718 = vmatprep.subr.bf16.mxu0 0
  %5719 = vmatpush1.bf16.xpose.msra.mxu0 0
  %5720 = vmatprep.subr.bf16.mxu0 0
  %5721 = vmatpush1.bf16.xpose.msra.mxu0 0
  %5722 = vmatprep.subr.bf16.mxu0 0
  %5723 = vmatpush1.bf16.xpose.msra.mxu0 0
  %5724 = vmatprep.subr.bf16.mxu0 0
  %5725 = vmatpush1.bf16.xpose.msra.mxu0 0
  %5726 = vmatprep.subr.bf16.mxu0 0
  %5727 = vmatpush1.bf16.xpose.msra.mxu0 0
  %5728 = vmatprep.subr.bf16.mxu0 0
  %5729 = vmatpush1.bf16.xpose.msra.mxu0 0
  %5730 = vmatprep.subr.bf16.mxu0 0
  %5731 = vmatpush1.bf16.xpose.msra.mxu0 0
  %5732 = vmatprep.subr.bf16.mxu0 0
  %5733 = vmatpush1.bf16.xpose.msra.mxu0 0
  %5734 = vmatprep.subr.bf16.mxu0 0
  %5735 = vmatpush1.bf16.xpose.msra.mxu0 0
  %5736 = vmatprep.subr.bf16.mxu0 0
  %5737 = vmatpush1.bf16.xpose.msra.mxu0 0
  %5738 = vmatprep.mubr.bf16.mxu0 0
  %5739 = vmatmul.mubr.bf16.gmra.mrb[0].mxu0 %v5701
  %v5740 = vpop.f32.mrb[0].mxu0
  %v5741 = vadd.f32 0.0, %v5740
  %v5742 = vpop.f32.mrb[0].mxu0
  %v5743 = vpop.f32.mrb[0].mxu0
  %v5744 = vpop.f32.mrb[0].mxu0
  %5745 = vdwg.mxu0
  %5746 = vrot.lane.b32.xlu0 %v169, 104
  %v5747 = vpop.permute.xlu0 %5746
  %5748 = vrot.lane.b32.xlu0 %v169, 72
  %v5749 = vpop.permute.xlu0 %5748
  %v5751 = vsel %vm183, %v5747, 0
  %v5754 = vsel %vm183, %v5749, 0
  %5756 = vmatprep.subr.bf16.mxu0 0
  %5757 = vmatpush1.bf16.xpose.msra.mxu0 %v5754
  %5758 = vmatprep.subr.bf16.mxu0 0
  %5759 = vmatpush1.bf16.xpose.msra.mxu0 0
  %5760 = vmatprep.subr.bf16.mxu0 0
  %5761 = vmatpush1.bf16.xpose.msra.mxu0 0
  %5762 = vmatprep.subr.bf16.mxu0 0
  %5763 = vmatpush1.bf16.xpose.msra.mxu0 0
  %5764 = vmatprep.subr.bf16.mxu0 0
  %5765 = vmatpush1.bf16.xpose.msra.mxu0 0
  %5766 = vmatprep.subr.bf16.mxu0 0
  %5767 = vmatpush1.bf16.xpose.msra.mxu0 0
  %5768 = vmatprep.subr.bf16.mxu0 0
  %5769 = vmatpush1.bf16.xpose.msra.mxu0 0
  %5770 = vmatprep.subr.bf16.mxu0 0
  %5771 = vmatpush1.bf16.xpose.msra.mxu0 0
  %5772 = vmatprep.subr.bf16.mxu0 0
  %5773 = vmatpush1.bf16.xpose.msra.mxu0 0
  %5774 = vmatprep.subr.bf16.mxu0 0
  %5775 = vmatpush1.bf16.xpose.msra.mxu0 0
  %5776 = vmatprep.subr.bf16.mxu0 0
  %5777 = vmatpush1.bf16.xpose.msra.mxu0 0
  %5778 = vmatprep.subr.bf16.mxu0 0
  %5779 = vmatpush1.bf16.xpose.msra.mxu0 0
  %5780 = vmatprep.subr.bf16.mxu0 0
  %5781 = vmatpush1.bf16.xpose.msra.mxu0 0
  %5782 = vmatprep.subr.bf16.mxu0 0
  %5783 = vmatpush1.bf16.xpose.msra.mxu0 0
  %5784 = vmatprep.subr.bf16.mxu0 0
  %5785 = vmatpush1.bf16.xpose.msra.mxu0 0
  %5786 = vmatprep.subr.bf16.mxu0 0
  %5787 = vmatpush1.bf16.xpose.msra.mxu0 0
  %5788 = vmatprep.mubr.bf16.mxu0 0
  %5789 = vmatmul.mubr.bf16.gmra.mrb[0].mxu0 %v5751
  %v5790 = vpop.f32.mrb[0].mxu0
  %v5791 = vadd.f32 0.0, %v5790
  %v5792 = vpop.f32.mrb[0].mxu0
  %v5793 = vpop.f32.mrb[0].mxu0
  %v5794 = vpop.f32.mrb[0].mxu0
  %5795 = vdwg.mxu0
  %5796 = vrot.lane.b32.xlu0 %v170, 104
  %v5797 = vpop.permute.xlu0 %5796
  %5798 = vrot.lane.b32.xlu0 %v170, 72
  %v5799 = vpop.permute.xlu0 %5798
  %v5801 = vsel %vm183, %v5797, 0
  %v5804 = vsel %vm183, %v5799, 0
  %5806 = vmatprep.subr.bf16.mxu0 0
  %5807 = vmatpush1.bf16.xpose.msra.mxu0 %v5804
  %5808 = vmatprep.subr.bf16.mxu0 0
  %5809 = vmatpush1.bf16.xpose.msra.mxu0 0
  %5810 = vmatprep.subr.bf16.mxu0 0
  %5811 = vmatpush1.bf16.xpose.msra.mxu0 0
  %5812 = vmatprep.subr.bf16.mxu0 0
  %5813 = vmatpush1.bf16.xpose.msra.mxu0 0
  %5814 = vmatprep.subr.bf16.mxu0 0
  %5815 = vmatpush1.bf16.xpose.msra.mxu0 0
  %5816 = vmatprep.subr.bf16.mxu0 0
  %5817 = vmatpush1.bf16.xpose.msra.mxu0 0
  %5818 = vmatprep.subr.bf16.mxu0 0
  %5819 = vmatpush1.bf16.xpose.msra.mxu0 0
  %5820 = vmatprep.subr.bf16.mxu0 0
  %5821 = vmatpush1.bf16.xpose.msra.mxu0 0
  %5822 = vmatprep.subr.bf16.mxu0 0
  %5823 = vmatpush1.bf16.xpose.msra.mxu0 0
  %5824 = vmatprep.subr.bf16.mxu0 0
  %5825 = vmatpush1.bf16.xpose.msra.mxu0 0
  %5826 = vmatprep.subr.bf16.mxu0 0
  %5827 = vmatpush1.bf16.xpose.msra.mxu0 0
  %5828 = vmatprep.subr.bf16.mxu0 0
  %5829 = vmatpush1.bf16.xpose.msra.mxu0 0
  %5830 = vmatprep.subr.bf16.mxu0 0
  %5831 = vmatpush1.bf16.xpose.msra.mxu0 0
  %5832 = vmatprep.subr.bf16.mxu0 0
  %5833 = vmatpush1.bf16.xpose.msra.mxu0 0
  %5834 = vmatprep.subr.bf16.mxu0 0
  %5835 = vmatpush1.bf16.xpose.msra.mxu0 0
  %5836 = vmatprep.subr.bf16.mxu0 0
  %5837 = vmatpush1.bf16.xpose.msra.mxu0 0
  %5838 = vmatprep.mubr.bf16.mxu0 0
  %5839 = vmatmul.mubr.bf16.gmra.mrb[0].mxu0 %v5801
  %v5840 = vpop.f32.mrb[0].mxu0
  %v5841 = vadd.f32 0.0, %v5840
  %v5842 = vpop.f32.mrb[0].mxu0
  %v5843 = vpop.f32.mrb[0].mxu0
  %v5844 = vpop.f32.mrb[0].mxu0
  %5845 = vdwg.mxu0
  %5846 = vrot.lane.b32.xlu0 %v171, 104
  %v5847 = vpop.permute.xlu0 %5846
  %5848 = vrot.lane.b32.xlu0 %v171, 72
  %v5849 = vpop.permute.xlu0 %5848
  %v5851 = vsel %vm183, %v5847, 0
  %v5854 = vsel %vm183, %v5849, 0
  %5856 = vmatprep.subr.bf16.mxu0 0
  %5857 = vmatpush1.bf16.xpose.msra.mxu0 %v5854
  %5858 = vmatprep.subr.bf16.mxu0 0
  %5859 = vmatpush1.bf16.xpose.msra.mxu0 0
  %5860 = vmatprep.subr.bf16.mxu0 0
  %5861 = vmatpush1.bf16.xpose.msra.mxu0 0
  %5862 = vmatprep.subr.bf16.mxu0 0
  %5863 = vmatpush1.bf16.xpose.msra.mxu0 0
  %5864 = vmatprep.subr.bf16.mxu0 0
  %5865 = vmatpush1.bf16.xpose.msra.mxu0 0
  %5866 = vmatprep.subr.bf16.mxu0 0
  %5867 = vmatpush1.bf16.xpose.msra.mxu0 0
  %5868 = vmatprep.subr.bf16.mxu0 0
  %5869 = vmatpush1.bf16.xpose.msra.mxu0 0
  %5870 = vmatprep.subr.bf16.mxu0 0
  %5871 = vmatpush1.bf16.xpose.msra.mxu0 0
  %5872 = vmatprep.subr.bf16.mxu0 0
  %5873 = vmatpush1.bf16.xpose.msra.mxu0 0
  %5874 = vmatprep.subr.bf16.mxu0 0
  %5875 = vmatpush1.bf16.xpose.msra.mxu0 0
  %5876 = vmatprep.subr.bf16.mxu0 0
  %5877 = vmatpush1.bf16.xpose.msra.mxu0 0
  %5878 = vmatprep.subr.bf16.mxu0 0
  %5879 = vmatpush1.bf16.xpose.msra.mxu0 0
  %5880 = vmatprep.subr.bf16.mxu0 0
  %5881 = vmatpush1.bf16.xpose.msra.mxu0 0
  %5882 = vmatprep.subr.bf16.mxu0 0
  %5883 = vmatpush1.bf16.xpose.msra.mxu0 0
  %5884 = vmatprep.subr.bf16.mxu0 0
  %5885 = vmatpush1.bf16.xpose.msra.mxu0 0
  %5886 = vmatprep.subr.bf16.mxu0 0
  %5887 = vmatpush1.bf16.xpose.msra.mxu0 0
  %5888 = vmatprep.mubr.bf16.mxu0 0
  %5889 = vmatmul.mubr.bf16.gmra.mrb[0].mxu0 %v5851
  %v5890 = vpop.f32.mrb[0].mxu0
  %v5891 = vadd.f32 0.0, %v5890
  %v5892 = vpop.f32.mrb[0].mxu0
  %v5893 = vpop.f32.mrb[0].mxu0
  %v5894 = vpop.f32.mrb[0].mxu0
  %5895 = vdwg.mxu0
  %5896 = vrot.lane.b32.xlu0 %v172, 104
  %v5897 = vpop.permute.xlu0 %5896
  %5898 = vrot.lane.b32.xlu0 %v172, 72
  %v5899 = vpop.permute.xlu0 %5898
  %v5901 = vsel %vm183, %v5897, 0
  %v5904 = vsel %vm183, %v5899, 0
  %5906 = vmatprep.subr.bf16.mxu0 0
  %5907 = vmatpush1.bf16.xpose.msra.mxu0 %v5904
  %5908 = vmatprep.subr.bf16.mxu0 0
  %5909 = vmatpush1.bf16.xpose.msra.mxu0 0
  %5910 = vmatprep.subr.bf16.mxu0 0
  %5911 = vmatpush1.bf16.xpose.msra.mxu0 0
  %5912 = vmatprep.subr.bf16.mxu0 0
  %5913 = vmatpush1.bf16.xpose.msra.mxu0 0
  %5914 = vmatprep.subr.bf16.mxu0 0
  %5915 = vmatpush1.bf16.xpose.msra.mxu0 0
  %5916 = vmatprep.subr.bf16.mxu0 0
  %5917 = vmatpush1.bf16.xpose.msra.mxu0 0
  %5918 = vmatprep.subr.bf16.mxu0 0
  %5919 = vmatpush1.bf16.xpose.msra.mxu0 0
  %5920 = vmatprep.subr.bf16.mxu0 0
  %5921 = vmatpush1.bf16.xpose.msra.mxu0 0
  %5922 = vmatprep.subr.bf16.mxu0 0
  %5923 = vmatpush1.bf16.xpose.msra.mxu0 0
  %5924 = vmatprep.subr.bf16.mxu0 0
  %5925 = vmatpush1.bf16.xpose.msra.mxu0 0
  %5926 = vmatprep.subr.bf16.mxu0 0
  %5927 = vmatpush1.bf16.xpose.msra.mxu0 0
  %5928 = vmatprep.subr.bf16.mxu0 0
  %5929 = vmatpush1.bf16.xpose.msra.mxu0 0
  %5930 = vmatprep.subr.bf16.mxu0 0
  %5931 = vmatpush1.bf16.xpose.msra.mxu0 0
  %5932 = vmatprep.subr.bf16.mxu0 0
  %5933 = vmatpush1.bf16.xpose.msra.mxu0 0
  %5934 = vmatprep.subr.bf16.mxu0 0
  %5935 = vmatpush1.bf16.xpose.msra.mxu0 0
  %5936 = vmatprep.subr.bf16.mxu0 0
  %5937 = vmatpush1.bf16.xpose.msra.mxu0 0
  %5938 = vmatprep.mubr.bf16.mxu0 0
  %5939 = vmatmul.mubr.bf16.gmra.mrb[0].mxu0 %v5901
  %v5940 = vpop.f32.mrb[0].mxu0
  %v5941 = vadd.f32 0.0, %v5940
  %v5942 = vpop.f32.mrb[0].mxu0
  %v5943 = vpop.f32.mrb[0].mxu0
  %v5944 = vpop.f32.mrb[0].mxu0
  %5945 = vdwg.mxu0
  %5946 = vrot.lane.b32.xlu0 %v173, 104
  %v5947 = vpop.permute.xlu0 %5946
  %5948 = vrot.lane.b32.xlu0 %v173, 72
  %v5949 = vpop.permute.xlu0 %5948
  %v5951 = vsel %vm183, %v5947, 0
  %v5954 = vsel %vm183, %v5949, 0
  %5956 = vmatprep.subr.bf16.mxu0 0
  %5957 = vmatpush1.bf16.xpose.msra.mxu0 %v5954
  %5958 = vmatprep.subr.bf16.mxu0 0
  %5959 = vmatpush1.bf16.xpose.msra.mxu0 0
  %5960 = vmatprep.subr.bf16.mxu0 0
  %5961 = vmatpush1.bf16.xpose.msra.mxu0 0
  %5962 = vmatprep.subr.bf16.mxu0 0
  %5963 = vmatpush1.bf16.xpose.msra.mxu0 0
  %5964 = vmatprep.subr.bf16.mxu0 0
  %5965 = vmatpush1.bf16.xpose.msra.mxu0 0
  %5966 = vmatprep.subr.bf16.mxu0 0
  %5967 = vmatpush1.bf16.xpose.msra.mxu0 0
  %5968 = vmatprep.subr.bf16.mxu0 0
  %5969 = vmatpush1.bf16.xpose.msra.mxu0 0
  %5970 = vmatprep.subr.bf16.mxu0 0
  %5971 = vmatpush1.bf16.xpose.msra.mxu0 0
  %5972 = vmatprep.subr.bf16.mxu0 0
  %5973 = vmatpush1.bf16.xpose.msra.mxu0 0
  %5974 = vmatprep.subr.bf16.mxu0 0
  %5975 = vmatpush1.bf16.xpose.msra.mxu0 0
  %5976 = vmatprep.subr.bf16.mxu0 0
  %5977 = vmatpush1.bf16.xpose.msra.mxu0 0
  %5978 = vmatprep.subr.bf16.mxu0 0
  %5979 = vmatpush1.bf16.xpose.msra.mxu0 0
  %5980 = vmatprep.subr.bf16.mxu0 0
  %5981 = vmatpush1.bf16.xpose.msra.mxu0 0
  %5982 = vmatprep.subr.bf16.mxu0 0
  %5983 = vmatpush1.bf16.xpose.msra.mxu0 0
  %5984 = vmatprep.subr.bf16.mxu0 0
  %5985 = vmatpush1.bf16.xpose.msra.mxu0 0
  %5986 = vmatprep.subr.bf16.mxu0 0
  %5987 = vmatpush1.bf16.xpose.msra.mxu0 0
  %5988 = vmatprep.mubr.bf16.mxu0 0
  %5989 = vmatmul.mubr.bf16.gmra.mrb[0].mxu0 %v5951
  %v5990 = vpop.f32.mrb[0].mxu0
  %v5991 = vadd.f32 0.0, %v5990
  %v5992 = vpop.f32.mrb[0].mxu0
  %v5993 = vpop.f32.mrb[0].mxu0
  %v5994 = vpop.f32.mrb[0].mxu0
  %5995 = vdwg.mxu0
  %5996 = vrot.lane.b32.xlu0 %v174, 104
  %v5997 = vpop.permute.xlu0 %5996
  %5998 = vrot.lane.b32.xlu0 %v174, 72
  %v5999 = vpop.permute.xlu0 %5998
  %v6001 = vsel %vm183, %v5997, 0
  %v6004 = vsel %vm183, %v5999, 0
  %6006 = vmatprep.subr.bf16.mxu0 0
  %6007 = vmatpush1.bf16.xpose.msra.mxu0 %v6004
  %6008 = vmatprep.subr.bf16.mxu0 0
  %6009 = vmatpush1.bf16.xpose.msra.mxu0 0
  %6010 = vmatprep.subr.bf16.mxu0 0
  %6011 = vmatpush1.bf16.xpose.msra.mxu0 0
  %6012 = vmatprep.subr.bf16.mxu0 0
  %6013 = vmatpush1.bf16.xpose.msra.mxu0 0
  %6014 = vmatprep.subr.bf16.mxu0 0
  %6015 = vmatpush1.bf16.xpose.msra.mxu0 0
  %6016 = vmatprep.subr.bf16.mxu0 0
  %6017 = vmatpush1.bf16.xpose.msra.mxu0 0
  %6018 = vmatprep.subr.bf16.mxu0 0
  %6019 = vmatpush1.bf16.xpose.msra.mxu0 0
  %6020 = vmatprep.subr.bf16.mxu0 0
  %6021 = vmatpush1.bf16.xpose.msra.mxu0 0
  %6022 = vmatprep.subr.bf16.mxu0 0
  %6023 = vmatpush1.bf16.xpose.msra.mxu0 0
  %6024 = vmatprep.subr.bf16.mxu0 0
  %6025 = vmatpush1.bf16.xpose.msra.mxu0 0
  %6026 = vmatprep.subr.bf16.mxu0 0
  %6027 = vmatpush1.bf16.xpose.msra.mxu0 0
  %6028 = vmatprep.subr.bf16.mxu0 0
  %6029 = vmatpush1.bf16.xpose.msra.mxu0 0
  %6030 = vmatprep.subr.bf16.mxu0 0
  %6031 = vmatpush1.bf16.xpose.msra.mxu0 0
  %6032 = vmatprep.subr.bf16.mxu0 0
  %6033 = vmatpush1.bf16.xpose.msra.mxu0 0
  %6034 = vmatprep.subr.bf16.mxu0 0
  %6035 = vmatpush1.bf16.xpose.msra.mxu0 0
  %6036 = vmatprep.subr.bf16.mxu0 0
  %6037 = vmatpush1.bf16.xpose.msra.mxu0 0
  %6038 = vmatprep.mubr.bf16.mxu0 0
  %6039 = vmatmul.mubr.bf16.gmra.mrb[0].mxu0 %v6001
  %v6040 = vpop.f32.mrb[0].mxu0
  %v6041 = vadd.f32 0.0, %v6040
  %v6042 = vpop.f32.mrb[0].mxu0
  %v6043 = vpop.f32.mrb[0].mxu0
  %v6044 = vpop.f32.mrb[0].mxu0
  %6045 = vdwg.mxu0
  %6046 = vrot.lane.b32.xlu0 %v175, 104
  %v6047 = vpop.permute.xlu0 %6046
  %6048 = vrot.lane.b32.xlu0 %v175, 72
  %v6049 = vpop.permute.xlu0 %6048
  %v6051 = vsel %vm183, %v6047, 0
  %v6054 = vsel %vm183, %v6049, 0
  %6056 = vmatprep.subr.bf16.mxu0 0
  %6057 = vmatpush1.bf16.xpose.msra.mxu0 %v6054
  %6058 = vmatprep.subr.bf16.mxu0 0
  %6059 = vmatpush1.bf16.xpose.msra.mxu0 0
  %6060 = vmatprep.subr.bf16.mxu0 0
  %6061 = vmatpush1.bf16.xpose.msra.mxu0 0
  %6062 = vmatprep.subr.bf16.mxu0 0
  %6063 = vmatpush1.bf16.xpose.msra.mxu0 0
  %6064 = vmatprep.subr.bf16.mxu0 0
  %6065 = vmatpush1.bf16.xpose.msra.mxu0 0
  %6066 = vmatprep.subr.bf16.mxu0 0
  %6067 = vmatpush1.bf16.xpose.msra.mxu0 0
  %6068 = vmatprep.subr.bf16.mxu0 0
  %6069 = vmatpush1.bf16.xpose.msra.mxu0 0
  %6070 = vmatprep.subr.bf16.mxu0 0
  %6071 = vmatpush1.bf16.xpose.msra.mxu0 0
  %6072 = vmatprep.subr.bf16.mxu0 0
  %6073 = vmatpush1.bf16.xpose.msra.mxu0 0
  %6074 = vmatprep.subr.bf16.mxu0 0
  %6075 = vmatpush1.bf16.xpose.msra.mxu0 0
  %6076 = vmatprep.subr.bf16.mxu0 0
  %6077 = vmatpush1.bf16.xpose.msra.mxu0 0
  %6078 = vmatprep.subr.bf16.mxu0 0
  %6079 = vmatpush1.bf16.xpose.msra.mxu0 0
  %6080 = vmatprep.subr.bf16.mxu0 0
  %6081 = vmatpush1.bf16.xpose.msra.mxu0 0
  %6082 = vmatprep.subr.bf16.mxu0 0
  %6083 = vmatpush1.bf16.xpose.msra.mxu0 0
  %6084 = vmatprep.subr.bf16.mxu0 0
  %6085 = vmatpush1.bf16.xpose.msra.mxu0 0
  %6086 = vmatprep.subr.bf16.mxu0 0
  %6087 = vmatpush1.bf16.xpose.msra.mxu0 0
  %6088 = vmatprep.mubr.bf16.mxu0 0
  %6089 = vmatmul.mubr.bf16.gmra.mrb[0].mxu0 %v6051
  %v6090 = vpop.f32.mrb[0].mxu0
  %v6091 = vadd.f32 0.0, %v6090
  %v6092 = vpop.f32.mrb[0].mxu0
  %v6093 = vpop.f32.mrb[0].mxu0
  %v6094 = vpop.f32.mrb[0].mxu0
  %6095 = vdwg.mxu0
  %6096 = vrot.lane.b32.xlu0 %v176, 104
  %v6097 = vpop.permute.xlu0 %6096
  %6098 = vrot.lane.b32.xlu0 %v176, 72
  %v6099 = vpop.permute.xlu0 %6098
  %v6101 = vsel %vm183, %v6097, 0
  %v6104 = vsel %vm183, %v6099, 0
  %6106 = vmatprep.subr.bf16.mxu0 0
  %6107 = vmatpush1.bf16.xpose.msra.mxu0 %v6104
  %6108 = vmatprep.subr.bf16.mxu0 0
  %6109 = vmatpush1.bf16.xpose.msra.mxu0 0
  %6110 = vmatprep.subr.bf16.mxu0 0
  %6111 = vmatpush1.bf16.xpose.msra.mxu0 0
  %6112 = vmatprep.subr.bf16.mxu0 0
  %6113 = vmatpush1.bf16.xpose.msra.mxu0 0
  %6114 = vmatprep.subr.bf16.mxu0 0
  %6115 = vmatpush1.bf16.xpose.msra.mxu0 0
  %6116 = vmatprep.subr.bf16.mxu0 0
  %6117 = vmatpush1.bf16.xpose.msra.mxu0 0
  %6118 = vmatprep.subr.bf16.mxu0 0
  %6119 = vmatpush1.bf16.xpose.msra.mxu0 0
  %6120 = vmatprep.subr.bf16.mxu0 0
  %6121 = vmatpush1.bf16.xpose.msra.mxu0 0
  %6122 = vmatprep.subr.bf16.mxu0 0
  %6123 = vmatpush1.bf16.xpose.msra.mxu0 0
  %6124 = vmatprep.subr.bf16.mxu0 0
  %6125 = vmatpush1.bf16.xpose.msra.mxu0 0
  %6126 = vmatprep.subr.bf16.mxu0 0
  %6127 = vmatpush1.bf16.xpose.msra.mxu0 0
  %6128 = vmatprep.subr.bf16.mxu0 0
  %6129 = vmatpush1.bf16.xpose.msra.mxu0 0
  %6130 = vmatprep.subr.bf16.mxu0 0
  %6131 = vmatpush1.bf16.xpose.msra.mxu0 0
  %6132 = vmatprep.subr.bf16.mxu0 0
  %6133 = vmatpush1.bf16.xpose.msra.mxu0 0
  %6134 = vmatprep.subr.bf16.mxu0 0
  %6135 = vmatpush1.bf16.xpose.msra.mxu0 0
  %6136 = vmatprep.subr.bf16.mxu0 0
  %6137 = vmatpush1.bf16.xpose.msra.mxu0 0
  %6138 = vmatprep.mubr.bf16.mxu0 0
  %6139 = vmatmul.mubr.bf16.gmra.mrb[0].mxu0 %v6101
  %v6140 = vpop.f32.mrb[0].mxu0
  %v6141 = vadd.f32 0.0, %v6140
  %v6142 = vpop.f32.mrb[0].mxu0
  %v6143 = vpop.f32.mrb[0].mxu0
  %v6144 = vpop.f32.mrb[0].mxu0
  %6145 = vdwg.mxu0
  %6146 = vrot.lane.b32.xlu0 %v177, 104
  %v6147 = vpop.permute.xlu0 %6146
  %6148 = vrot.lane.b32.xlu0 %v177, 72
  %v6149 = vpop.permute.xlu0 %6148
  %v6151 = vsel %vm183, %v6147, 0
  %v6154 = vsel %vm183, %v6149, 0
  %6156 = vmatprep.subr.bf16.mxu0 0
  %6157 = vmatpush1.bf16.xpose.msra.mxu0 %v6154
  %6158 = vmatprep.subr.bf16.mxu0 0
  %6159 = vmatpush1.bf16.xpose.msra.mxu0 0
  %6160 = vmatprep.subr.bf16.mxu0 0
  %6161 = vmatpush1.bf16.xpose.msra.mxu0 0
  %6162 = vmatprep.subr.bf16.mxu0 0
  %6163 = vmatpush1.bf16.xpose.msra.mxu0 0
  %6164 = vmatprep.subr.bf16.mxu0 0
  %6165 = vmatpush1.bf16.xpose.msra.mxu0 0
  %6166 = vmatprep.subr.bf16.mxu0 0
  %6167 = vmatpush1.bf16.xpose.msra.mxu0 0
  %6168 = vmatprep.subr.bf16.mxu0 0
  %6169 = vmatpush1.bf16.xpose.msra.mxu0 0
  %6170 = vmatprep.subr.bf16.mxu0 0
  %6171 = vmatpush1.bf16.xpose.msra.mxu0 0
  %6172 = vmatprep.subr.bf16.mxu0 0
  %6173 = vmatpush1.bf16.xpose.msra.mxu0 0
  %6174 = vmatprep.subr.bf16.mxu0 0
  %6175 = vmatpush1.bf16.xpose.msra.mxu0 0
  %6176 = vmatprep.subr.bf16.mxu0 0
  %6177 = vmatpush1.bf16.xpose.msra.mxu0 0
  %6178 = vmatprep.subr.bf16.mxu0 0
  %6179 = vmatpush1.bf16.xpose.msra.mxu0 0
  %6180 = vmatprep.subr.bf16.mxu0 0
  %6181 = vmatpush1.bf16.xpose.msra.mxu0 0
  %6182 = vmatprep.subr.bf16.mxu0 0
  %6183 = vmatpush1.bf16.xpose.msra.mxu0 0
  %6184 = vmatprep.subr.bf16.mxu0 0
  %6185 = vmatpush1.bf16.xpose.msra.mxu0 0
  %6186 = vmatprep.subr.bf16.mxu0 0
  %6187 = vmatpush1.bf16.xpose.msra.mxu0 0
  %6188 = vmatprep.mubr.bf16.mxu0 0
  %6189 = vmatmul.mubr.bf16.gmra.mrb[0].mxu0 %v6151
  %v6190 = vpop.f32.mrb[0].mxu0
  %v6191 = vadd.f32 0.0, %v6190
  %v6192 = vpop.f32.mrb[0].mxu0
  %v6193 = vpop.f32.mrb[0].mxu0
  %v6194 = vpop.f32.mrb[0].mxu0
  %6195 = vdwg.mxu0
  %6196 = vrot.lane.b32.xlu0 %v178, 104
  %v6197 = vpop.permute.xlu0 %6196
  %6198 = vrot.lane.b32.xlu0 %v178, 72
  %v6199 = vpop.permute.xlu0 %6198
  %v6201 = vsel %vm183, %v6197, 0
  %v6204 = vsel %vm183, %v6199, 0
  %6206 = vmatprep.subr.bf16.mxu0 0
  %6207 = vmatpush1.bf16.xpose.msra.mxu0 %v6204
  %6208 = vmatprep.subr.bf16.mxu0 0
  %6209 = vmatpush1.bf16.xpose.msra.mxu0 0
  %6210 = vmatprep.subr.bf16.mxu0 0
  %6211 = vmatpush1.bf16.xpose.msra.mxu0 0
  %6212 = vmatprep.subr.bf16.mxu0 0
  %6213 = vmatpush1.bf16.xpose.msra.mxu0 0
  %6214 = vmatprep.subr.bf16.mxu0 0
  %6215 = vmatpush1.bf16.xpose.msra.mxu0 0
  %6216 = vmatprep.subr.bf16.mxu0 0
  %6217 = vmatpush1.bf16.xpose.msra.mxu0 0
  %6218 = vmatprep.subr.bf16.mxu0 0
  %6219 = vmatpush1.bf16.xpose.msra.mxu0 0
  %6220 = vmatprep.subr.bf16.mxu0 0
  %6221 = vmatpush1.bf16.xpose.msra.mxu0 0
  %6222 = vmatprep.subr.bf16.mxu0 0
  %6223 = vmatpush1.bf16.xpose.msra.mxu0 0
  %6224 = vmatprep.subr.bf16.mxu0 0
  %6225 = vmatpush1.bf16.xpose.msra.mxu0 0
  %6226 = vmatprep.subr.bf16.mxu0 0
  %6227 = vmatpush1.bf16.xpose.msra.mxu0 0
  %6228 = vmatprep.subr.bf16.mxu0 0
  %6229 = vmatpush1.bf16.xpose.msra.mxu0 0
  %6230 = vmatprep.subr.bf16.mxu0 0
  %6231 = vmatpush1.bf16.xpose.msra.mxu0 0
  %6232 = vmatprep.subr.bf16.mxu0 0
  %6233 = vmatpush1.bf16.xpose.msra.mxu0 0
  %6234 = vmatprep.subr.bf16.mxu0 0
  %6235 = vmatpush1.bf16.xpose.msra.mxu0 0
  %6236 = vmatprep.subr.bf16.mxu0 0
  %6237 = vmatpush1.bf16.xpose.msra.mxu0 0
  %6238 = vmatprep.mubr.bf16.mxu0 0
  %6239 = vmatmul.mubr.bf16.gmra.mrb[0].mxu0 %v6201
  %v6240 = vpop.f32.mrb[0].mxu0
  %v6241 = vadd.f32 0.0, %v6240
  %v6242 = vpop.f32.mrb[0].mxu0
  %v6243 = vpop.f32.mrb[0].mxu0
  %v6244 = vpop.f32.mrb[0].mxu0
  %6245 = vdwg.mxu0
  %6246 = vrot.lane.b32.xlu0 %v179, 104
  %v6247 = vpop.permute.xlu0 %6246
  %6248 = vrot.lane.b32.xlu0 %v179, 72
  %v6249 = vpop.permute.xlu0 %6248
  %v6251 = vsel %vm183, %v6247, 0
  %v6254 = vsel %vm183, %v6249, 0
  %6256 = vmatprep.subr.bf16.mxu0 0
  %6257 = vmatpush1.bf16.xpose.msra.mxu0 %v6254
  %6258 = vmatprep.subr.bf16.mxu0 0
  %6259 = vmatpush1.bf16.xpose.msra.mxu0 0
  %6260 = vmatprep.subr.bf16.mxu0 0
  %6261 = vmatpush1.bf16.xpose.msra.mxu0 0
  %6262 = vmatprep.subr.bf16.mxu0 0
  %6263 = vmatpush1.bf16.xpose.msra.mxu0 0
  %6264 = vmatprep.subr.bf16.mxu0 0
  %6265 = vmatpush1.bf16.xpose.msra.mxu0 0
  %6266 = vmatprep.subr.bf16.mxu0 0
  %6267 = vmatpush1.bf16.xpose.msra.mxu0 0
  %6268 = vmatprep.subr.bf16.mxu0 0
  %6269 = vmatpush1.bf16.xpose.msra.mxu0 0
  %6270 = vmatprep.subr.bf16.mxu0 0
  %6271 = vmatpush1.bf16.xpose.msra.mxu0 0
  %6272 = vmatprep.subr.bf16.mxu0 0
  %6273 = vmatpush1.bf16.xpose.msra.mxu0 0
  %6274 = vmatprep.subr.bf16.mxu0 0
  %6275 = vmatpush1.bf16.xpose.msra.mxu0 0
  %6276 = vmatprep.subr.bf16.mxu0 0
  %6277 = vmatpush1.bf16.xpose.msra.mxu0 0
  %6278 = vmatprep.subr.bf16.mxu0 0
  %6279 = vmatpush1.bf16.xpose.msra.mxu0 0
  %6280 = vmatprep.subr.bf16.mxu0 0
  %6281 = vmatpush1.bf16.xpose.msra.mxu0 0
  %6282 = vmatprep.subr.bf16.mxu0 0
  %6283 = vmatpush1.bf16.xpose.msra.mxu0 0
  %6284 = vmatprep.subr.bf16.mxu0 0
  %6285 = vmatpush1.bf16.xpose.msra.mxu0 0
  %6286 = vmatprep.subr.bf16.mxu0 0
  %6287 = vmatpush1.bf16.xpose.msra.mxu0 0
  %6288 = vmatprep.mubr.bf16.mxu0 0
  %6289 = vmatmul.mubr.bf16.gmra.mrb[0].mxu0 %v6251
  %v6290 = vpop.f32.mrb[0].mxu0
  %v6291 = vadd.f32 0.0, %v6290
  %v6292 = vpop.f32.mrb[0].mxu0
  %v6293 = vpop.f32.mrb[0].mxu0
  %v6294 = vpop.f32.mrb[0].mxu0
  %6295 = vdwg.mxu0
  %v6296 = vmul.f32 %v5541, 0.35355338
  %v6297 = vmul.f32 %v5591, 0.35355338
  %v6298 = vmul.f32 %v5641, 0.35355338
  %v6299 = vmul.f32 %v5691, 0.35355338
  %v6300 = vmul.f32 %v5741, 0.35355338
  %v6301 = vmul.f32 %v5791, 0.35355338
  %v6302 = vmul.f32 %v5841, 0.35355338
  %v6303 = vmul.f32 %v5891, 0.35355338
  %v6304 = vmul.f32 %v5941, 0.35355338
  %v6305 = vmul.f32 %v5991, 0.35355338
  %v6306 = vmul.f32 %v6041, 0.35355338
  %v6307 = vmul.f32 %v6091, 0.35355338
  %v6308 = vmul.f32 %v6141, 0.35355338
  %v6309 = vmul.f32 %v6191, 0.35355338
  %v6310 = vmul.f32 %v6241, 0.35355338
  %v6311 = vmul.f32 %v6291, 0.35355338
  %v6312 = vsel %vm981, %v6296, -inf
  %6313 = vmax.xlane.f32.xlu0 %v6312
  %v6314 = vpop.xlane.xlu0 %6313
  %v6315 = vsel %vm981, %v6297, -inf
  %6316 = vmax.xlane.f32.xlu0 %v6315
  %v6317 = vpop.xlane.xlu0 %6316
  %v6318 = vsel %vm981, %v6298, -inf
  %6319 = vmax.xlane.f32.xlu0 %v6318
  %v6320 = vpop.xlane.xlu0 %6319
  %v6321 = vsel %vm981, %v6299, -inf
  %6322 = vmax.xlane.f32.xlu0 %v6321
  %v6323 = vpop.xlane.xlu0 %6322
  %v6324 = vsel %vm981, %v6300, -inf
  %6325 = vmax.xlane.f32.xlu0 %v6324
  %v6326 = vpop.xlane.xlu0 %6325
  %v6327 = vsel %vm981, %v6301, -inf
  %6328 = vmax.xlane.f32.xlu0 %v6327
  %v6329 = vpop.xlane.xlu0 %6328
  %v6330 = vsel %vm981, %v6302, -inf
  %6331 = vmax.xlane.f32.xlu0 %v6330
  %v6332 = vpop.xlane.xlu0 %6331
  %v6333 = vsel %vm981, %v6303, -inf
  %6334 = vmax.xlane.f32.xlu0 %v6333
  %v6335 = vpop.xlane.xlu0 %6334
  %v6336 = vsel %vm981, %v6304, -inf
  %6337 = vmax.xlane.f32.xlu0 %v6336
  %v6338 = vpop.xlane.xlu0 %6337
  %v6339 = vsel %vm981, %v6305, -inf
  %6340 = vmax.xlane.f32.xlu0 %v6339
  %v6341 = vpop.xlane.xlu0 %6340
  %v6342 = vsel %vm981, %v6306, -inf
  %6343 = vmax.xlane.f32.xlu0 %v6342
  %v6344 = vpop.xlane.xlu0 %6343
  %v6345 = vsel %vm981, %v6307, -inf
  %6346 = vmax.xlane.f32.xlu0 %v6345
  %v6347 = vpop.xlane.xlu0 %6346
  %v6348 = vsel %vm981, %v6308, -inf
  %6349 = vmax.xlane.f32.xlu0 %v6348
  %v6350 = vpop.xlane.xlu0 %6349
  %v6351 = vsel %vm981, %v6309, -inf
  %6352 = vmax.xlane.f32.xlu0 %v6351
  %v6353 = vpop.xlane.xlu0 %6352
  %v6354 = vsel %vm981, %v6310, -inf
  %6355 = vmax.xlane.f32.xlu0 %v6354
  %v6356 = vpop.xlane.xlu0 %6355
  %v6357 = vsel %vm981, %v6311, -inf
  %6358 = vmax.xlane.f32.xlu0 %v6357
  %v6359 = vpop.xlane.xlu0 %6358
  %v6360 = vsub.f32 %v6296, %v6314
  %v6361 = vsub.f32 %v6297, %v6317
  %v6362 = vsub.f32 %v6298, %v6320
  %v6363 = vsub.f32 %v6299, %v6323
  %v6364 = vsub.f32 %v6300, %v6326
  %v6365 = vsub.f32 %v6301, %v6329
  %v6366 = vsub.f32 %v6302, %v6332
  %v6367 = vsub.f32 %v6303, %v6335
  %v6368 = vsub.f32 %v6304, %v6338
  %v6369 = vsub.f32 %v6305, %v6341
  %v6370 = vsub.f32 %v6306, %v6344
  %v6371 = vsub.f32 %v6307, %v6347
  %v6372 = vsub.f32 %v6308, %v6350
  %v6373 = vsub.f32 %v6309, %v6353
  %v6374 = vsub.f32 %v6310, %v6356
  %v6375 = vsub.f32 %v6311, %v6359
  %v6376 = vmul.f32 %v6360, 1.442695
  %v6377 = vpow.pop %v6376
  %v6378 = vmul.f32 %v6361, 1.442695
  %v6379 = vpow.pop %v6378
  %v6380 = vmul.f32 %v6362, 1.442695
  %v6381 = vpow.pop %v6380
  %v6382 = vmul.f32 %v6363, 1.442695
  %v6383 = vpow.pop %v6382
  %v6384 = vmul.f32 %v6364, 1.442695
  %v6385 = vpow.pop %v6384
  %v6386 = vmul.f32 %v6365, 1.442695
  %v6387 = vpow.pop %v6386
  %v6388 = vmul.f32 %v6366, 1.442695
  %v6389 = vpow.pop %v6388
  %v6390 = vmul.f32 %v6367, 1.442695
  %v6391 = vpow.pop %v6390
  %v6392 = vmul.f32 %v6368, 1.442695
  %v6393 = vpow.pop %v6392
  %v6394 = vmul.f32 %v6369, 1.442695
  %v6395 = vpow.pop %v6394
  %v6396 = vmul.f32 %v6370, 1.442695
  %v6397 = vpow.pop %v6396
  %v6398 = vmul.f32 %v6371, 1.442695
  %v6399 = vpow.pop %v6398
  %v6400 = vmul.f32 %v6372, 1.442695
  %v6401 = vpow.pop %v6400
  %v6402 = vmul.f32 %v6373, 1.442695
  %v6403 = vpow.pop %v6402
  %v6404 = vmul.f32 %v6374, 1.442695
  %v6405 = vpow.pop %v6404
  %v6406 = vmul.f32 %v6375, 1.442695
  %v6407 = vpow.pop %v6406
  %v6408 = vsel %vm981, %v6377, 0.0
  %6409 = vadd.xlane.f32.xlu0 %v6408
  %v6410 = vpop.xlane.xlu0 %6409
  %v6411 = vsel %vm981, %v6379, 0.0
  %6412 = vadd.xlane.f32.xlu0 %v6411
  %v6413 = vpop.xlane.xlu0 %6412
  %v6414 = vsel %vm981, %v6381, 0.0
  %6415 = vadd.xlane.f32.xlu0 %v6414
  %v6416 = vpop.xlane.xlu0 %6415
  %v6417 = vsel %vm981, %v6383, 0.0
  %6418 = vadd.xlane.f32.xlu0 %v6417
  %v6419 = vpop.xlane.xlu0 %6418
  %v6420 = vsel %vm981, %v6385, 0.0
  %6421 = vadd.xlane.f32.xlu0 %v6420
  %v6422 = vpop.xlane.xlu0 %6421
  %v6423 = vsel %vm981, %v6387, 0.0
  %6424 = vadd.xlane.f32.xlu0 %v6423
  %v6425 = vpop.xlane.xlu0 %6424
  %v6426 = vsel %vm981, %v6389, 0.0
  %6427 = vadd.xlane.f32.xlu0 %v6426
  %v6428 = vpop.xlane.xlu0 %6427
  %v6429 = vsel %vm981, %v6391, 0.0
  %6430 = vadd.xlane.f32.xlu0 %v6429
  %v6431 = vpop.xlane.xlu0 %6430
  %v6432 = vsel %vm981, %v6393, 0.0
  %6433 = vadd.xlane.f32.xlu0 %v6432
  %v6434 = vpop.xlane.xlu0 %6433
  %v6435 = vsel %vm981, %v6395, 0.0
  %6436 = vadd.xlane.f32.xlu0 %v6435
  %v6437 = vpop.xlane.xlu0 %6436
  %v6438 = vsel %vm981, %v6397, 0.0
  %6439 = vadd.xlane.f32.xlu0 %v6438
  %v6440 = vpop.xlane.xlu0 %6439
  %v6441 = vsel %vm981, %v6399, 0.0
  %6442 = vadd.xlane.f32.xlu0 %v6441
  %v6443 = vpop.xlane.xlu0 %6442
  %v6444 = vsel %vm981, %v6401, 0.0
  %6445 = vadd.xlane.f32.xlu0 %v6444
  %v6446 = vpop.xlane.xlu0 %6445
  %v6447 = vsel %vm981, %v6403, 0.0
  %6448 = vadd.xlane.f32.xlu0 %v6447
  %v6449 = vpop.xlane.xlu0 %6448
  %v6450 = vsel %vm981, %v6405, 0.0
  %6451 = vadd.xlane.f32.xlu0 %v6450
  %v6452 = vpop.xlane.xlu0 %6451
  %v6453 = vsel %vm981, %v6407, 0.0
  %6454 = vadd.xlane.f32.xlu0 %v6453
  %v6455 = vpop.xlane.xlu0 %6454
  %v6456 = vrcp.pop %v6410
  %v6457 = vrcp.pop %v6413
  %v6458 = vrcp.pop %v6416
  %v6459 = vrcp.pop %v6419
  %v6460 = vrcp.pop %v6422
  %v6461 = vrcp.pop %v6425
  %v6462 = vrcp.pop %v6428
  %v6463 = vrcp.pop %v6431
  %v6464 = vrcp.pop %v6434
  %v6465 = vrcp.pop %v6437
  %v6466 = vrcp.pop %v6440
  %v6467 = vrcp.pop %v6443
  %v6468 = vrcp.pop %v6446
  %v6469 = vrcp.pop %v6449
  %v6470 = vrcp.pop %v6452
  %v6471 = vrcp.pop %v6455
  %v6472 = vmul.f32 %v6377, %v6456
  %v6473 = vmul.f32 %v6379, %v6457
  %v6474 = vmul.f32 %v6381, %v6458
  %v6475 = vmul.f32 %v6383, %v6459
  %v6476 = vmul.f32 %v6385, %v6460
  %v6477 = vmul.f32 %v6387, %v6461
  %v6478 = vmul.f32 %v6389, %v6462
  %v6479 = vmul.f32 %v6391, %v6463
  %v6480 = vmul.f32 %v6393, %v6464
  %v6481 = vmul.f32 %v6395, %v6465
  %v6482 = vmul.f32 %v6397, %v6466
  %v6483 = vmul.f32 %v6399, %v6467
  %v6484 = vmul.f32 %v6401, %v6468
  %v6485 = vmul.f32 %v6403, %v6469
  %v6486 = vmul.f32 %v6405, %v6470
  %v6487 = vmul.f32 %v6407, %v6471
  %v6488 = vpack.c.bf16 %v6472, %v6472
  %v6489 = vpack.c.bf16 %v6473, %v6473
  %v6490 = vpack.c.bf16 %v6474, %v6474
  %v6491 = vpack.c.bf16 %v6475, %v6475
  %v6492 = vpack.c.bf16 %v6476, %v6476
  %v6493 = vpack.c.bf16 %v6477, %v6477
  %v6494 = vpack.c.bf16 %v6478, %v6478
  %v6495 = vpack.c.bf16 %v6479, %v6479
  %v6496 = vpack.c.bf16 %v6480, %v6480
  %v6497 = vpack.c.bf16 %v6481, %v6481
  %v6498 = vpack.c.bf16 %v6482, %v6482
  %v6499 = vpack.c.bf16 %v6483, %v6483
  %v6500 = vpack.c.bf16 %v6484, %v6484
  %v6501 = vpack.c.bf16 %v6485, %v6485
  %v6502 = vpack.c.bf16 %v6486, %v6486
  %v6503 = vpack.c.bf16 %v6487, %v6487
  %6504 = vrot.lane.b32.xlu0 %v164, 40
  %v6505 = vpop.permute.xlu0 %6504
  %v6507 = vsel %vm1176, %v6488, 0
  %v6510 = vsel %vm1180, %v6505, 0
  %6512 = vmatprep.subr.bf16.mxu0 0
  %6513 = vmatpush1.bf16.msra.mxu0 %v6510
  %6514 = vmatprep.subr.bf16.mxu0 0
  %6515 = vmatpush1.bf16.msra.mxu0 0
  %6516 = vmatprep.subr.bf16.mxu0 0
  %6517 = vmatpush1.bf16.msra.mxu0 0
  %6518 = vmatprep.subr.bf16.mxu0 0
  %6519 = vmatpush1.bf16.msra.mxu0 0
  %6520 = vmatprep.subr.bf16.mxu0 0
  %6521 = vmatpush1.bf16.msra.mxu0 0
  %6522 = vmatprep.subr.bf16.mxu0 0
  %6523 = vmatpush1.bf16.msra.mxu0 0
  %6524 = vmatprep.subr.bf16.mxu0 0
  %6525 = vmatpush1.bf16.msra.mxu0 0
  %6526 = vmatprep.subr.bf16.mxu0 0
  %6527 = vmatpush1.bf16.msra.mxu0 0
  %6528 = vmatprep.subr.bf16.mxu0 0
  %6529 = vmatpush1.bf16.msra.mxu0 0
  %6530 = vmatprep.subr.bf16.mxu0 0
  %6531 = vmatpush1.bf16.msra.mxu0 0
  %6532 = vmatprep.subr.bf16.mxu0 0
  %6533 = vmatpush1.bf16.msra.mxu0 0
  %6534 = vmatprep.subr.bf16.mxu0 0
  %6535 = vmatpush1.bf16.msra.mxu0 0
  %6536 = vmatprep.subr.bf16.mxu0 0
  %6537 = vmatpush1.bf16.msra.mxu0 0
  %6538 = vmatprep.subr.bf16.mxu0 0
  %6539 = vmatpush1.bf16.msra.mxu0 0
  %6540 = vmatprep.subr.bf16.mxu0 0
  %6541 = vmatpush1.bf16.msra.mxu0 0
  %6542 = vmatprep.subr.bf16.mxu0 0
  %6543 = vmatpush1.bf16.msra.mxu0 0
  %6544 = vmatprep.mubr.bf16.mxu0 0
  %6545 = vmatmul.mubr.bf16.gmra.mrb[0].mxu0 %v6507
  %v6546 = vpop.f32.mrb[0].mxu0
  %v6547 = vadd.f32 0.0, %v6546
  %v6548 = vpop.f32.mrb[0].mxu0
  %v6549 = vpop.f32.mrb[0].mxu0
  %v6550 = vpop.f32.mrb[0].mxu0
  %6551 = vdwg.mxu0
  %6552 = vrot.lane.b32.xlu0 %v165, 40
  %v6553 = vpop.permute.xlu0 %6552
  %v6555 = vsel %vm1176, %v6489, 0
  %v6558 = vsel %vm1180, %v6553, 0
  %6560 = vmatprep.subr.bf16.mxu0 0
  %6561 = vmatpush1.bf16.msra.mxu0 %v6558
  %6562 = vmatprep.subr.bf16.mxu0 0
  %6563 = vmatpush1.bf16.msra.mxu0 0
  %6564 = vmatprep.subr.bf16.mxu0 0
  %6565 = vmatpush1.bf16.msra.mxu0 0
  %6566 = vmatprep.subr.bf16.mxu0 0
  %6567 = vmatpush1.bf16.msra.mxu0 0
  %6568 = vmatprep.subr.bf16.mxu0 0
  %6569 = vmatpush1.bf16.msra.mxu0 0
  %6570 = vmatprep.subr.bf16.mxu0 0
  %6571 = vmatpush1.bf16.msra.mxu0 0
  %6572 = vmatprep.subr.bf16.mxu0 0
  %6573 = vmatpush1.bf16.msra.mxu0 0
  %6574 = vmatprep.subr.bf16.mxu0 0
  %6575 = vmatpush1.bf16.msra.mxu0 0
  %6576 = vmatprep.subr.bf16.mxu0 0
  %6577 = vmatpush1.bf16.msra.mxu0 0
  %6578 = vmatprep.subr.bf16.mxu0 0
  %6579 = vmatpush1.bf16.msra.mxu0 0
  %6580 = vmatprep.subr.bf16.mxu0 0
  %6581 = vmatpush1.bf16.msra.mxu0 0
  %6582 = vmatprep.subr.bf16.mxu0 0
  %6583 = vmatpush1.bf16.msra.mxu0 0
  %6584 = vmatprep.subr.bf16.mxu0 0
  %6585 = vmatpush1.bf16.msra.mxu0 0
  %6586 = vmatprep.subr.bf16.mxu0 0
  %6587 = vmatpush1.bf16.msra.mxu0 0
  %6588 = vmatprep.subr.bf16.mxu0 0
  %6589 = vmatpush1.bf16.msra.mxu0 0
  %6590 = vmatprep.subr.bf16.mxu0 0
  %6591 = vmatpush1.bf16.msra.mxu0 0
  %6592 = vmatprep.mubr.bf16.mxu0 0
  %6593 = vmatmul.mubr.bf16.gmra.mrb[0].mxu0 %v6555
  %v6594 = vpop.f32.mrb[0].mxu0
  %v6595 = vadd.f32 0.0, %v6594
  %v6596 = vpop.f32.mrb[0].mxu0
  %v6597 = vpop.f32.mrb[0].mxu0
  %v6598 = vpop.f32.mrb[0].mxu0
  %6599 = vdwg.mxu0
  %6600 = vrot.lane.b32.xlu0 %v166, 40
  %v6601 = vpop.permute.xlu0 %6600
  %v6603 = vsel %vm1176, %v6490, 0
  %v6606 = vsel %vm1180, %v6601, 0
  %6608 = vmatprep.subr.bf16.mxu0 0
  %6609 = vmatpush1.bf16.msra.mxu0 %v6606
  %6610 = vmatprep.subr.bf16.mxu0 0
  %6611 = vmatpush1.bf16.msra.mxu0 0
  %6612 = vmatprep.subr.bf16.mxu0 0
  %6613 = vmatpush1.bf16.msra.mxu0 0
  %6614 = vmatprep.subr.bf16.mxu0 0
  %6615 = vmatpush1.bf16.msra.mxu0 0
  %6616 = vmatprep.subr.bf16.mxu0 0
  %6617 = vmatpush1.bf16.msra.mxu0 0
  %6618 = vmatprep.subr.bf16.mxu0 0
  %6619 = vmatpush1.bf16.msra.mxu0 0
  %6620 = vmatprep.subr.bf16.mxu0 0
  %6621 = vmatpush1.bf16.msra.mxu0 0
  %6622 = vmatprep.subr.bf16.mxu0 0
  %6623 = vmatpush1.bf16.msra.mxu0 0
  %6624 = vmatprep.subr.bf16.mxu0 0
  %6625 = vmatpush1.bf16.msra.mxu0 0
  %6626 = vmatprep.subr.bf16.mxu0 0
  %6627 = vmatpush1.bf16.msra.mxu0 0
  %6628 = vmatprep.subr.bf16.mxu0 0
  %6629 = vmatpush1.bf16.msra.mxu0 0
  %6630 = vmatprep.subr.bf16.mxu0 0
  %6631 = vmatpush1.bf16.msra.mxu0 0
  %6632 = vmatprep.subr.bf16.mxu0 0
  %6633 = vmatpush1.bf16.msra.mxu0 0
  %6634 = vmatprep.subr.bf16.mxu0 0
  %6635 = vmatpush1.bf16.msra.mxu0 0
  %6636 = vmatprep.subr.bf16.mxu0 0
  %6637 = vmatpush1.bf16.msra.mxu0 0
  %6638 = vmatprep.subr.bf16.mxu0 0
  %6639 = vmatpush1.bf16.msra.mxu0 0
  %6640 = vmatprep.mubr.bf16.mxu0 0
  %6641 = vmatmul.mubr.bf16.gmra.mrb[0].mxu0 %v6603
  %v6642 = vpop.f32.mrb[0].mxu0
  %v6643 = vadd.f32 0.0, %v6642
  %v6644 = vpop.f32.mrb[0].mxu0
  %v6645 = vpop.f32.mrb[0].mxu0
  %v6646 = vpop.f32.mrb[0].mxu0
  %6647 = vdwg.mxu0
  %6648 = vrot.lane.b32.xlu0 %v167, 40
  %v6649 = vpop.permute.xlu0 %6648
  %v6651 = vsel %vm1176, %v6491, 0
  %v6654 = vsel %vm1180, %v6649, 0
  %6656 = vmatprep.subr.bf16.mxu0 0
  %6657 = vmatpush1.bf16.msra.mxu0 %v6654
  %6658 = vmatprep.subr.bf16.mxu0 0
  %6659 = vmatpush1.bf16.msra.mxu0 0
  %6660 = vmatprep.subr.bf16.mxu0 0
  %6661 = vmatpush1.bf16.msra.mxu0 0
  %6662 = vmatprep.subr.bf16.mxu0 0
  %6663 = vmatpush1.bf16.msra.mxu0 0
  %6664 = vmatprep.subr.bf16.mxu0 0
  %6665 = vmatpush1.bf16.msra.mxu0 0
  %6666 = vmatprep.subr.bf16.mxu0 0
  %6667 = vmatpush1.bf16.msra.mxu0 0
  %6668 = vmatprep.subr.bf16.mxu0 0
  %6669 = vmatpush1.bf16.msra.mxu0 0
  %6670 = vmatprep.subr.bf16.mxu0 0
  %6671 = vmatpush1.bf16.msra.mxu0 0
  %6672 = vmatprep.subr.bf16.mxu0 0
  %6673 = vmatpush1.bf16.msra.mxu0 0
  %6674 = vmatprep.subr.bf16.mxu0 0
  %6675 = vmatpush1.bf16.msra.mxu0 0
  %6676 = vmatprep.subr.bf16.mxu0 0
  %6677 = vmatpush1.bf16.msra.mxu0 0
  %6678 = vmatprep.subr.bf16.mxu0 0
  %6679 = vmatpush1.bf16.msra.mxu0 0
  %6680 = vmatprep.subr.bf16.mxu0 0
  %6681 = vmatpush1.bf16.msra.mxu0 0
  %6682 = vmatprep.subr.bf16.mxu0 0
  %6683 = vmatpush1.bf16.msra.mxu0 0
  %6684 = vmatprep.subr.bf16.mxu0 0
  %6685 = vmatpush1.bf16.msra.mxu0 0
  %6686 = vmatprep.subr.bf16.mxu0 0
  %6687 = vmatpush1.bf16.msra.mxu0 0
  %6688 = vmatprep.mubr.bf16.mxu0 0
  %6689 = vmatmul.mubr.bf16.gmra.mrb[0].mxu0 %v6651
  %v6690 = vpop.f32.mrb[0].mxu0
  %v6691 = vadd.f32 0.0, %v6690
  %v6692 = vpop.f32.mrb[0].mxu0
  %v6693 = vpop.f32.mrb[0].mxu0
  %v6694 = vpop.f32.mrb[0].mxu0
  %6695 = vdwg.mxu0
  %6696 = vrot.lane.b32.xlu0 %v168, 40
  %v6697 = vpop.permute.xlu0 %6696
  %v6699 = vsel %vm1176, %v6492, 0
  %v6702 = vsel %vm1180, %v6697, 0
  %6704 = vmatprep.subr.bf16.mxu0 0
  %6705 = vmatpush1.bf16.msra.mxu0 %v6702
  %6706 = vmatprep.subr.bf16.mxu0 0
  %6707 = vmatpush1.bf16.msra.mxu0 0
  %6708 = vmatprep.subr.bf16.mxu0 0
  %6709 = vmatpush1.bf16.msra.mxu0 0
  %6710 = vmatprep.subr.bf16.mxu0 0
  %6711 = vmatpush1.bf16.msra.mxu0 0
  %6712 = vmatprep.subr.bf16.mxu0 0
  %6713 = vmatpush1.bf16.msra.mxu0 0
  %6714 = vmatprep.subr.bf16.mxu0 0
  %6715 = vmatpush1.bf16.msra.mxu0 0
  %6716 = vmatprep.subr.bf16.mxu0 0
  %6717 = vmatpush1.bf16.msra.mxu0 0
  %6718 = vmatprep.subr.bf16.mxu0 0
  %6719 = vmatpush1.bf16.msra.mxu0 0
  %6720 = vmatprep.subr.bf16.mxu0 0
  %6721 = vmatpush1.bf16.msra.mxu0 0
  %6722 = vmatprep.subr.bf16.mxu0 0
  %6723 = vmatpush1.bf16.msra.mxu0 0
  %6724 = vmatprep.subr.bf16.mxu0 0
  %6725 = vmatpush1.bf16.msra.mxu0 0
  %6726 = vmatprep.subr.bf16.mxu0 0
  %6727 = vmatpush1.bf16.msra.mxu0 0
  %6728 = vmatprep.subr.bf16.mxu0 0
  %6729 = vmatpush1.bf16.msra.mxu0 0
  %6730 = vmatprep.subr.bf16.mxu0 0
  %6731 = vmatpush1.bf16.msra.mxu0 0
  %6732 = vmatprep.subr.bf16.mxu0 0
  %6733 = vmatpush1.bf16.msra.mxu0 0
  %6734 = vmatprep.subr.bf16.mxu0 0
  %6735 = vmatpush1.bf16.msra.mxu0 0
  %6736 = vmatprep.mubr.bf16.mxu0 0
  %6737 = vmatmul.mubr.bf16.gmra.mrb[0].mxu0 %v6699
  %v6738 = vpop.f32.mrb[0].mxu0
  %v6739 = vadd.f32 0.0, %v6738
  %v6740 = vpop.f32.mrb[0].mxu0
  %v6741 = vpop.f32.mrb[0].mxu0
  %v6742 = vpop.f32.mrb[0].mxu0
  %6743 = vdwg.mxu0
  %6744 = vrot.lane.b32.xlu0 %v169, 40
  %v6745 = vpop.permute.xlu0 %6744
  %v6747 = vsel %vm1176, %v6493, 0
  %v6750 = vsel %vm1180, %v6745, 0
  %6752 = vmatprep.subr.bf16.mxu0 0
  %6753 = vmatpush1.bf16.msra.mxu0 %v6750
  %6754 = vmatprep.subr.bf16.mxu0 0
  %6755 = vmatpush1.bf16.msra.mxu0 0
  %6756 = vmatprep.subr.bf16.mxu0 0
  %6757 = vmatpush1.bf16.msra.mxu0 0
  %6758 = vmatprep.subr.bf16.mxu0 0
  %6759 = vmatpush1.bf16.msra.mxu0 0
  %6760 = vmatprep.subr.bf16.mxu0 0
  %6761 = vmatpush1.bf16.msra.mxu0 0
  %6762 = vmatprep.subr.bf16.mxu0 0
  %6763 = vmatpush1.bf16.msra.mxu0 0
  %6764 = vmatprep.subr.bf16.mxu0 0
  %6765 = vmatpush1.bf16.msra.mxu0 0
  %6766 = vmatprep.subr.bf16.mxu0 0
  %6767 = vmatpush1.bf16.msra.mxu0 0
  %6768 = vmatprep.subr.bf16.mxu0 0
  %6769 = vmatpush1.bf16.msra.mxu0 0
  %6770 = vmatprep.subr.bf16.mxu0 0
  %6771 = vmatpush1.bf16.msra.mxu0 0
  %6772 = vmatprep.subr.bf16.mxu0 0
  %6773 = vmatpush1.bf16.msra.mxu0 0
  %6774 = vmatprep.subr.bf16.mxu0 0
  %6775 = vmatpush1.bf16.msra.mxu0 0
  %6776 = vmatprep.subr.bf16.mxu0 0
  %6777 = vmatpush1.bf16.msra.mxu0 0
  %6778 = vmatprep.subr.bf16.mxu0 0
  %6779 = vmatpush1.bf16.msra.mxu0 0
  %6780 = vmatprep.subr.bf16.mxu0 0
  %6781 = vmatpush1.bf16.msra.mxu0 0
  %6782 = vmatprep.subr.bf16.mxu0 0
  %6783 = vmatpush1.bf16.msra.mxu0 0
  %6784 = vmatprep.mubr.bf16.mxu0 0
  %6785 = vmatmul.mubr.bf16.gmra.mrb[0].mxu0 %v6747
  %v6786 = vpop.f32.mrb[0].mxu0
  %v6787 = vadd.f32 0.0, %v6786
  %v6788 = vpop.f32.mrb[0].mxu0
  %v6789 = vpop.f32.mrb[0].mxu0
  %v6790 = vpop.f32.mrb[0].mxu0
  %6791 = vdwg.mxu0
  %6792 = vrot.lane.b32.xlu0 %v170, 40
  %v6793 = vpop.permute.xlu0 %6792
  %v6795 = vsel %vm1176, %v6494, 0
  %v6798 = vsel %vm1180, %v6793, 0
  %6800 = vmatprep.subr.bf16.mxu0 0
  %6801 = vmatpush1.bf16.msra.mxu0 %v6798
  %6802 = vmatprep.subr.bf16.mxu0 0
  %6803 = vmatpush1.bf16.msra.mxu0 0
  %6804 = vmatprep.subr.bf16.mxu0 0
  %6805 = vmatpush1.bf16.msra.mxu0 0
  %6806 = vmatprep.subr.bf16.mxu0 0
  %6807 = vmatpush1.bf16.msra.mxu0 0
  %6808 = vmatprep.subr.bf16.mxu0 0
  %6809 = vmatpush1.bf16.msra.mxu0 0
  %6810 = vmatprep.subr.bf16.mxu0 0
  %6811 = vmatpush1.bf16.msra.mxu0 0
  %6812 = vmatprep.subr.bf16.mxu0 0
  %6813 = vmatpush1.bf16.msra.mxu0 0
  %6814 = vmatprep.subr.bf16.mxu0 0
  %6815 = vmatpush1.bf16.msra.mxu0 0
  %6816 = vmatprep.subr.bf16.mxu0 0
  %6817 = vmatpush1.bf16.msra.mxu0 0
  %6818 = vmatprep.subr.bf16.mxu0 0
  %6819 = vmatpush1.bf16.msra.mxu0 0
  %6820 = vmatprep.subr.bf16.mxu0 0
  %6821 = vmatpush1.bf16.msra.mxu0 0
  %6822 = vmatprep.subr.bf16.mxu0 0
  %6823 = vmatpush1.bf16.msra.mxu0 0
  %6824 = vmatprep.subr.bf16.mxu0 0
  %6825 = vmatpush1.bf16.msra.mxu0 0
  %6826 = vmatprep.subr.bf16.mxu0 0
  %6827 = vmatpush1.bf16.msra.mxu0 0
  %6828 = vmatprep.subr.bf16.mxu0 0
  %6829 = vmatpush1.bf16.msra.mxu0 0
  %6830 = vmatprep.subr.bf16.mxu0 0
  %6831 = vmatpush1.bf16.msra.mxu0 0
  %6832 = vmatprep.mubr.bf16.mxu0 0
  %6833 = vmatmul.mubr.bf16.gmra.mrb[0].mxu0 %v6795
  %v6834 = vpop.f32.mrb[0].mxu0
  %v6835 = vadd.f32 0.0, %v6834
  %v6836 = vpop.f32.mrb[0].mxu0
  %v6837 = vpop.f32.mrb[0].mxu0
  %v6838 = vpop.f32.mrb[0].mxu0
  %6839 = vdwg.mxu0
  %6840 = vrot.lane.b32.xlu0 %v171, 40
  %v6841 = vpop.permute.xlu0 %6840
  %v6843 = vsel %vm1176, %v6495, 0
  %v6846 = vsel %vm1180, %v6841, 0
  %6848 = vmatprep.subr.bf16.mxu0 0
  %6849 = vmatpush1.bf16.msra.mxu0 %v6846
  %6850 = vmatprep.subr.bf16.mxu0 0
  %6851 = vmatpush1.bf16.msra.mxu0 0
  %6852 = vmatprep.subr.bf16.mxu0 0
  %6853 = vmatpush1.bf16.msra.mxu0 0
  %6854 = vmatprep.subr.bf16.mxu0 0
  %6855 = vmatpush1.bf16.msra.mxu0 0
  %6856 = vmatprep.subr.bf16.mxu0 0
  %6857 = vmatpush1.bf16.msra.mxu0 0
  %6858 = vmatprep.subr.bf16.mxu0 0
  %6859 = vmatpush1.bf16.msra.mxu0 0
  %6860 = vmatprep.subr.bf16.mxu0 0
  %6861 = vmatpush1.bf16.msra.mxu0 0
  %6862 = vmatprep.subr.bf16.mxu0 0
  %6863 = vmatpush1.bf16.msra.mxu0 0
  %6864 = vmatprep.subr.bf16.mxu0 0
  %6865 = vmatpush1.bf16.msra.mxu0 0
  %6866 = vmatprep.subr.bf16.mxu0 0
  %6867 = vmatpush1.bf16.msra.mxu0 0
  %6868 = vmatprep.subr.bf16.mxu0 0
  %6869 = vmatpush1.bf16.msra.mxu0 0
  %6870 = vmatprep.subr.bf16.mxu0 0
  %6871 = vmatpush1.bf16.msra.mxu0 0
  %6872 = vmatprep.subr.bf16.mxu0 0
  %6873 = vmatpush1.bf16.msra.mxu0 0
  %6874 = vmatprep.subr.bf16.mxu0 0
  %6875 = vmatpush1.bf16.msra.mxu0 0
  %6876 = vmatprep.subr.bf16.mxu0 0
  %6877 = vmatpush1.bf16.msra.mxu0 0
  %6878 = vmatprep.subr.bf16.mxu0 0
  %6879 = vmatpush1.bf16.msra.mxu0 0
  %6880 = vmatprep.mubr.bf16.mxu0 0
  %6881 = vmatmul.mubr.bf16.gmra.mrb[0].mxu0 %v6843
  %v6882 = vpop.f32.mrb[0].mxu0
  %v6883 = vadd.f32 0.0, %v6882
  %v6884 = vpop.f32.mrb[0].mxu0
  %v6885 = vpop.f32.mrb[0].mxu0
  %v6886 = vpop.f32.mrb[0].mxu0
  %6887 = vdwg.mxu0
  %6888 = vrot.lane.b32.xlu0 %v172, 40
  %v6889 = vpop.permute.xlu0 %6888
  %v6891 = vsel %vm1176, %v6496, 0
  %v6894 = vsel %vm1180, %v6889, 0
  %6896 = vmatprep.subr.bf16.mxu0 0
  %6897 = vmatpush1.bf16.msra.mxu0 %v6894
  %6898 = vmatprep.subr.bf16.mxu0 0
  %6899 = vmatpush1.bf16.msra.mxu0 0
  %6900 = vmatprep.subr.bf16.mxu0 0
  %6901 = vmatpush1.bf16.msra.mxu0 0
  %6902 = vmatprep.subr.bf16.mxu0 0
  %6903 = vmatpush1.bf16.msra.mxu0 0
  %6904 = vmatprep.subr.bf16.mxu0 0
  %6905 = vmatpush1.bf16.msra.mxu0 0
  %6906 = vmatprep.subr.bf16.mxu0 0
  %6907 = vmatpush1.bf16.msra.mxu0 0
  %6908 = vmatprep.subr.bf16.mxu0 0
  %6909 = vmatpush1.bf16.msra.mxu0 0
  %6910 = vmatprep.subr.bf16.mxu0 0
  %6911 = vmatpush1.bf16.msra.mxu0 0
  %6912 = vmatprep.subr.bf16.mxu0 0
  %6913 = vmatpush1.bf16.msra.mxu0 0
  %6914 = vmatprep.subr.bf16.mxu0 0
  %6915 = vmatpush1.bf16.msra.mxu0 0
  %6916 = vmatprep.subr.bf16.mxu0 0
  %6917 = vmatpush1.bf16.msra.mxu0 0
  %6918 = vmatprep.subr.bf16.mxu0 0
  %6919 = vmatpush1.bf16.msra.mxu0 0
  %6920 = vmatprep.subr.bf16.mxu0 0
  %6921 = vmatpush1.bf16.msra.mxu0 0
  %6922 = vmatprep.subr.bf16.mxu0 0
  %6923 = vmatpush1.bf16.msra.mxu0 0
  %6924 = vmatprep.subr.bf16.mxu0 0
  %6925 = vmatpush1.bf16.msra.mxu0 0
  %6926 = vmatprep.subr.bf16.mxu0 0
  %6927 = vmatpush1.bf16.msra.mxu0 0
  %6928 = vmatprep.mubr.bf16.mxu0 0
  %6929 = vmatmul.mubr.bf16.gmra.mrb[0].mxu0 %v6891
  %v6930 = vpop.f32.mrb[0].mxu0
  %v6931 = vadd.f32 0.0, %v6930
  %v6932 = vpop.f32.mrb[0].mxu0
  %v6933 = vpop.f32.mrb[0].mxu0
  %v6934 = vpop.f32.mrb[0].mxu0
  %6935 = vdwg.mxu0
  %6936 = vrot.lane.b32.xlu0 %v173, 40
  %v6937 = vpop.permute.xlu0 %6936
  %v6939 = vsel %vm1176, %v6497, 0
  %v6942 = vsel %vm1180, %v6937, 0
  %6944 = vmatprep.subr.bf16.mxu0 0
  %6945 = vmatpush1.bf16.msra.mxu0 %v6942
  %6946 = vmatprep.subr.bf16.mxu0 0
  %6947 = vmatpush1.bf16.msra.mxu0 0
  %6948 = vmatprep.subr.bf16.mxu0 0
  %6949 = vmatpush1.bf16.msra.mxu0 0
  %6950 = vmatprep.subr.bf16.mxu0 0
  %6951 = vmatpush1.bf16.msra.mxu0 0
  %6952 = vmatprep.subr.bf16.mxu0 0
  %6953 = vmatpush1.bf16.msra.mxu0 0
  %6954 = vmatprep.subr.bf16.mxu0 0
  %6955 = vmatpush1.bf16.msra.mxu0 0
  %6956 = vmatprep.subr.bf16.mxu0 0
  %6957 = vmatpush1.bf16.msra.mxu0 0
  %6958 = vmatprep.subr.bf16.mxu0 0
  %6959 = vmatpush1.bf16.msra.mxu0 0
  %6960 = vmatprep.subr.bf16.mxu0 0
  %6961 = vmatpush1.bf16.msra.mxu0 0
  %6962 = vmatprep.subr.bf16.mxu0 0
  %6963 = vmatpush1.bf16.msra.mxu0 0
  %6964 = vmatprep.subr.bf16.mxu0 0
  %6965 = vmatpush1.bf16.msra.mxu0 0
  %6966 = vmatprep.subr.bf16.mxu0 0
  %6967 = vmatpush1.bf16.msra.mxu0 0
  %6968 = vmatprep.subr.bf16.mxu0 0
  %6969 = vmatpush1.bf16.msra.mxu0 0
  %6970 = vmatprep.subr.bf16.mxu0 0
  %6971 = vmatpush1.bf16.msra.mxu0 0
  %6972 = vmatprep.subr.bf16.mxu0 0
  %6973 = vmatpush1.bf16.msra.mxu0 0
  %6974 = vmatprep.subr.bf16.mxu0 0
  %6975 = vmatpush1.bf16.msra.mxu0 0
  %6976 = vmatprep.mubr.bf16.mxu0 0
  %6977 = vmatmul.mubr.bf16.gmra.mrb[0].mxu0 %v6939
  %v6978 = vpop.f32.mrb[0].mxu0
  %v6979 = vadd.f32 0.0, %v6978
  %v6980 = vpop.f32.mrb[0].mxu0
  %v6981 = vpop.f32.mrb[0].mxu0
  %v6982 = vpop.f32.mrb[0].mxu0
  %6983 = vdwg.mxu0
  %6984 = vrot.lane.b32.xlu0 %v174, 40
  %v6985 = vpop.permute.xlu0 %6984
  %v6987 = vsel %vm1176, %v6498, 0
  %v6990 = vsel %vm1180, %v6985, 0
  %6992 = vmatprep.subr.bf16.mxu0 0
  %6993 = vmatpush1.bf16.msra.mxu0 %v6990
  %6994 = vmatprep.subr.bf16.mxu0 0
  %6995 = vmatpush1.bf16.msra.mxu0 0
  %6996 = vmatprep.subr.bf16.mxu0 0
  %6997 = vmatpush1.bf16.msra.mxu0 0
  %6998 = vmatprep.subr.bf16.mxu0 0
  %6999 = vmatpush1.bf16.msra.mxu0 0
  %7000 = vmatprep.subr.bf16.mxu0 0
  %7001 = vmatpush1.bf16.msra.mxu0 0
  %7002 = vmatprep.subr.bf16.mxu0 0
  %7003 = vmatpush1.bf16.msra.mxu0 0
  %7004 = vmatprep.subr.bf16.mxu0 0
  %7005 = vmatpush1.bf16.msra.mxu0 0
  %7006 = vmatprep.subr.bf16.mxu0 0
  %7007 = vmatpush1.bf16.msra.mxu0 0
  %7008 = vmatprep.subr.bf16.mxu0 0
  %7009 = vmatpush1.bf16.msra.mxu0 0
  %7010 = vmatprep.subr.bf16.mxu0 0
  %7011 = vmatpush1.bf16.msra.mxu0 0
  %7012 = vmatprep.subr.bf16.mxu0 0
  %7013 = vmatpush1.bf16.msra.mxu0 0
  %7014 = vmatprep.subr.bf16.mxu0 0
  %7015 = vmatpush1.bf16.msra.mxu0 0
  %7016 = vmatprep.subr.bf16.mxu0 0
  %7017 = vmatpush1.bf16.msra.mxu0 0
  %7018 = vmatprep.subr.bf16.mxu0 0
  %7019 = vmatpush1.bf16.msra.mxu0 0
  %7020 = vmatprep.subr.bf16.mxu0 0
  %7021 = vmatpush1.bf16.msra.mxu0 0
  %7022 = vmatprep.subr.bf16.mxu0 0
  %7023 = vmatpush1.bf16.msra.mxu0 0
  %7024 = vmatprep.mubr.bf16.mxu0 0
  %7025 = vmatmul.mubr.bf16.gmra.mrb[0].mxu0 %v6987
  %v7026 = vpop.f32.mrb[0].mxu0
  %v7027 = vadd.f32 0.0, %v7026
  %v7028 = vpop.f32.mrb[0].mxu0
  %v7029 = vpop.f32.mrb[0].mxu0
  %v7030 = vpop.f32.mrb[0].mxu0
  %7031 = vdwg.mxu0
  %7032 = vrot.lane.b32.xlu0 %v175, 40
  %v7033 = vpop.permute.xlu0 %7032
  %v7035 = vsel %vm1176, %v6499, 0
  %v7038 = vsel %vm1180, %v7033, 0
  %7040 = vmatprep.subr.bf16.mxu0 0
  %7041 = vmatpush1.bf16.msra.mxu0 %v7038
  %7042 = vmatprep.subr.bf16.mxu0 0
  %7043 = vmatpush1.bf16.msra.mxu0 0
  %7044 = vmatprep.subr.bf16.mxu0 0
  %7045 = vmatpush1.bf16.msra.mxu0 0
  %7046 = vmatprep.subr.bf16.mxu0 0
  %7047 = vmatpush1.bf16.msra.mxu0 0
  %7048 = vmatprep.subr.bf16.mxu0 0
  %7049 = vmatpush1.bf16.msra.mxu0 0
  %7050 = vmatprep.subr.bf16.mxu0 0
  %7051 = vmatpush1.bf16.msra.mxu0 0
  %7052 = vmatprep.subr.bf16.mxu0 0
  %7053 = vmatpush1.bf16.msra.mxu0 0
  %7054 = vmatprep.subr.bf16.mxu0 0
  %7055 = vmatpush1.bf16.msra.mxu0 0
  %7056 = vmatprep.subr.bf16.mxu0 0
  %7057 = vmatpush1.bf16.msra.mxu0 0
  %7058 = vmatprep.subr.bf16.mxu0 0
  %7059 = vmatpush1.bf16.msra.mxu0 0
  %7060 = vmatprep.subr.bf16.mxu0 0
  %7061 = vmatpush1.bf16.msra.mxu0 0
  %7062 = vmatprep.subr.bf16.mxu0 0
  %7063 = vmatpush1.bf16.msra.mxu0 0
  %7064 = vmatprep.subr.bf16.mxu0 0
  %7065 = vmatpush1.bf16.msra.mxu0 0
  %7066 = vmatprep.subr.bf16.mxu0 0
  %7067 = vmatpush1.bf16.msra.mxu0 0
  %7068 = vmatprep.subr.bf16.mxu0 0
  %7069 = vmatpush1.bf16.msra.mxu0 0
  %7070 = vmatprep.subr.bf16.mxu0 0
  %7071 = vmatpush1.bf16.msra.mxu0 0
  %7072 = vmatprep.mubr.bf16.mxu0 0
  %7073 = vmatmul.mubr.bf16.gmra.mrb[0].mxu0 %v7035
  %v7074 = vpop.f32.mrb[0].mxu0
  %v7075 = vadd.f32 0.0, %v7074
  %v7076 = vpop.f32.mrb[0].mxu0
  %v7077 = vpop.f32.mrb[0].mxu0
  %v7078 = vpop.f32.mrb[0].mxu0
  %7079 = vdwg.mxu0
  %7080 = vrot.lane.b32.xlu0 %v176, 40
  %v7081 = vpop.permute.xlu0 %7080
  %v7083 = vsel %vm1176, %v6500, 0
  %v7086 = vsel %vm1180, %v7081, 0
  %7088 = vmatprep.subr.bf16.mxu0 0
  %7089 = vmatpush1.bf16.msra.mxu0 %v7086
  %7090 = vmatprep.subr.bf16.mxu0 0
  %7091 = vmatpush1.bf16.msra.mxu0 0
  %7092 = vmatprep.subr.bf16.mxu0 0
  %7093 = vmatpush1.bf16.msra.mxu0 0
  %7094 = vmatprep.subr.bf16.mxu0 0
  %7095 = vmatpush1.bf16.msra.mxu0 0
  %7096 = vmatprep.subr.bf16.mxu0 0
  %7097 = vmatpush1.bf16.msra.mxu0 0
  %7098 = vmatprep.subr.bf16.mxu0 0
  %7099 = vmatpush1.bf16.msra.mxu0 0
  %7100 = vmatprep.subr.bf16.mxu0 0
  %7101 = vmatpush1.bf16.msra.mxu0 0
  %7102 = vmatprep.subr.bf16.mxu0 0
  %7103 = vmatpush1.bf16.msra.mxu0 0
  %7104 = vmatprep.subr.bf16.mxu0 0
  %7105 = vmatpush1.bf16.msra.mxu0 0
  %7106 = vmatprep.subr.bf16.mxu0 0
  %7107 = vmatpush1.bf16.msra.mxu0 0
  %7108 = vmatprep.subr.bf16.mxu0 0
  %7109 = vmatpush1.bf16.msra.mxu0 0
  %7110 = vmatprep.subr.bf16.mxu0 0
  %7111 = vmatpush1.bf16.msra.mxu0 0
  %7112 = vmatprep.subr.bf16.mxu0 0
  %7113 = vmatpush1.bf16.msra.mxu0 0
  %7114 = vmatprep.subr.bf16.mxu0 0
  %7115 = vmatpush1.bf16.msra.mxu0 0
  %7116 = vmatprep.subr.bf16.mxu0 0
  %7117 = vmatpush1.bf16.msra.mxu0 0
  %7118 = vmatprep.subr.bf16.mxu0 0
  %7119 = vmatpush1.bf16.msra.mxu0 0
  %7120 = vmatprep.mubr.bf16.mxu0 0
  %7121 = vmatmul.mubr.bf16.gmra.mrb[0].mxu0 %v7083
  %v7122 = vpop.f32.mrb[0].mxu0
  %v7123 = vadd.f32 0.0, %v7122
  %v7124 = vpop.f32.mrb[0].mxu0
  %v7125 = vpop.f32.mrb[0].mxu0
  %v7126 = vpop.f32.mrb[0].mxu0
  %7127 = vdwg.mxu0
  %7128 = vrot.lane.b32.xlu0 %v177, 40
  %v7129 = vpop.permute.xlu0 %7128
  %v7131 = vsel %vm1176, %v6501, 0
  %v7134 = vsel %vm1180, %v7129, 0
  %7136 = vmatprep.subr.bf16.mxu0 0
  %7137 = vmatpush1.bf16.msra.mxu0 %v7134
  %7138 = vmatprep.subr.bf16.mxu0 0
  %7139 = vmatpush1.bf16.msra.mxu0 0
  %7140 = vmatprep.subr.bf16.mxu0 0
  %7141 = vmatpush1.bf16.msra.mxu0 0
  %7142 = vmatprep.subr.bf16.mxu0 0
  %7143 = vmatpush1.bf16.msra.mxu0 0
  %7144 = vmatprep.subr.bf16.mxu0 0
  %7145 = vmatpush1.bf16.msra.mxu0 0
  %7146 = vmatprep.subr.bf16.mxu0 0
  %7147 = vmatpush1.bf16.msra.mxu0 0
  %7148 = vmatprep.subr.bf16.mxu0 0
  %7149 = vmatpush1.bf16.msra.mxu0 0
  %7150 = vmatprep.subr.bf16.mxu0 0
  %7151 = vmatpush1.bf16.msra.mxu0 0
  %7152 = vmatprep.subr.bf16.mxu0 0
  %7153 = vmatpush1.bf16.msra.mxu0 0
  %7154 = vmatprep.subr.bf16.mxu0 0
  %7155 = vmatpush1.bf16.msra.mxu0 0
  %7156 = vmatprep.subr.bf16.mxu0 0
  %7157 = vmatpush1.bf16.msra.mxu0 0
  %7158 = vmatprep.subr.bf16.mxu0 0
  %7159 = vmatpush1.bf16.msra.mxu0 0
  %7160 = vmatprep.subr.bf16.mxu0 0
  %7161 = vmatpush1.bf16.msra.mxu0 0
  %7162 = vmatprep.subr.bf16.mxu0 0
  %7163 = vmatpush1.bf16.msra.mxu0 0
  %7164 = vmatprep.subr.bf16.mxu0 0
  %7165 = vmatpush1.bf16.msra.mxu0 0
  %7166 = vmatprep.subr.bf16.mxu0 0
  %7167 = vmatpush1.bf16.msra.mxu0 0
  %7168 = vmatprep.mubr.bf16.mxu0 0
  %7169 = vmatmul.mubr.bf16.gmra.mrb[0].mxu0 %v7131
  %v7170 = vpop.f32.mrb[0].mxu0
  %v7171 = vadd.f32 0.0, %v7170
  %v7172 = vpop.f32.mrb[0].mxu0
  %v7173 = vpop.f32.mrb[0].mxu0
  %v7174 = vpop.f32.mrb[0].mxu0
  %7175 = vdwg.mxu0
  %7176 = vrot.lane.b32.xlu0 %v178, 40
  %v7177 = vpop.permute.xlu0 %7176
  %v7179 = vsel %vm1176, %v6502, 0
  %v7182 = vsel %vm1180, %v7177, 0
  %7184 = vmatprep.subr.bf16.mxu0 0
  %7185 = vmatpush1.bf16.msra.mxu0 %v7182
  %7186 = vmatprep.subr.bf16.mxu0 0
  %7187 = vmatpush1.bf16.msra.mxu0 0
  %7188 = vmatprep.subr.bf16.mxu0 0
  %7189 = vmatpush1.bf16.msra.mxu0 0
  %7190 = vmatprep.subr.bf16.mxu0 0
  %7191 = vmatpush1.bf16.msra.mxu0 0
  %7192 = vmatprep.subr.bf16.mxu0 0
  %7193 = vmatpush1.bf16.msra.mxu0 0
  %7194 = vmatprep.subr.bf16.mxu0 0
  %7195 = vmatpush1.bf16.msra.mxu0 0
  %7196 = vmatprep.subr.bf16.mxu0 0
  %7197 = vmatpush1.bf16.msra.mxu0 0
  %7198 = vmatprep.subr.bf16.mxu0 0
  %7199 = vmatpush1.bf16.msra.mxu0 0
  %7200 = vmatprep.subr.bf16.mxu0 0
  %7201 = vmatpush1.bf16.msra.mxu0 0
  %7202 = vmatprep.subr.bf16.mxu0 0
  %7203 = vmatpush1.bf16.msra.mxu0 0
  %7204 = vmatprep.subr.bf16.mxu0 0
  %7205 = vmatpush1.bf16.msra.mxu0 0
  %7206 = vmatprep.subr.bf16.mxu0 0
  %7207 = vmatpush1.bf16.msra.mxu0 0
  %7208 = vmatprep.subr.bf16.mxu0 0
  %7209 = vmatpush1.bf16.msra.mxu0 0
  %7210 = vmatprep.subr.bf16.mxu0 0
  %7211 = vmatpush1.bf16.msra.mxu0 0
  %7212 = vmatprep.subr.bf16.mxu0 0
  %7213 = vmatpush1.bf16.msra.mxu0 0
  %7214 = vmatprep.subr.bf16.mxu0 0
  %7215 = vmatpush1.bf16.msra.mxu0 0
  %7216 = vmatprep.mubr.bf16.mxu0 0
  %7217 = vmatmul.mubr.bf16.gmra.mrb[0].mxu0 %v7179
  %v7218 = vpop.f32.mrb[0].mxu0
  %v7219 = vadd.f32 0.0, %v7218
  %v7220 = vpop.f32.mrb[0].mxu0
  %v7221 = vpop.f32.mrb[0].mxu0
  %v7222 = vpop.f32.mrb[0].mxu0
  %7223 = vdwg.mxu0
  %7224 = vrot.lane.b32.xlu0 %v179, 40
  %v7225 = vpop.permute.xlu0 %7224
  %v7227 = vsel %vm1176, %v6503, 0
  %v7230 = vsel %vm1180, %v7225, 0
  %7232 = vmatprep.subr.bf16.mxu0 0
  %7233 = vmatpush1.bf16.msra.mxu0 %v7230
  %7234 = vmatprep.subr.bf16.mxu0 0
  %7235 = vmatpush1.bf16.msra.mxu0 0
  %7236 = vmatprep.subr.bf16.mxu0 0
  %7237 = vmatpush1.bf16.msra.mxu0 0
  %7238 = vmatprep.subr.bf16.mxu0 0
  %7239 = vmatpush1.bf16.msra.mxu0 0
  %7240 = vmatprep.subr.bf16.mxu0 0
  %7241 = vmatpush1.bf16.msra.mxu0 0
  %7242 = vmatprep.subr.bf16.mxu0 0
  %7243 = vmatpush1.bf16.msra.mxu0 0
  %7244 = vmatprep.subr.bf16.mxu0 0
  %7245 = vmatpush1.bf16.msra.mxu0 0
  %7246 = vmatprep.subr.bf16.mxu0 0
  %7247 = vmatpush1.bf16.msra.mxu0 0
  %7248 = vmatprep.subr.bf16.mxu0 0
  %7249 = vmatpush1.bf16.msra.mxu0 0
  %7250 = vmatprep.subr.bf16.mxu0 0
  %7251 = vmatpush1.bf16.msra.mxu0 0
  %7252 = vmatprep.subr.bf16.mxu0 0
  %7253 = vmatpush1.bf16.msra.mxu0 0
  %7254 = vmatprep.subr.bf16.mxu0 0
  %7255 = vmatpush1.bf16.msra.mxu0 0
  %7256 = vmatprep.subr.bf16.mxu0 0
  %7257 = vmatpush1.bf16.msra.mxu0 0
  %7258 = vmatprep.subr.bf16.mxu0 0
  %7259 = vmatpush1.bf16.msra.mxu0 0
  %7260 = vmatprep.subr.bf16.mxu0 0
  %7261 = vmatpush1.bf16.msra.mxu0 0
  %7262 = vmatprep.subr.bf16.mxu0 0
  %7263 = vmatpush1.bf16.msra.mxu0 0
  %7264 = vmatprep.mubr.bf16.mxu0 0
  %7265 = vmatmul.mubr.bf16.gmra.mrb[0].mxu0 %v7227
  %v7266 = vpop.f32.mrb[0].mxu0
  %v7267 = vadd.f32 0.0, %v7266
  %v7268 = vpop.f32.mrb[0].mxu0
  %v7269 = vpop.f32.mrb[0].mxu0
  %v7270 = vpop.f32.mrb[0].mxu0
  %7271 = vdwg.mxu0
  %v7288 = vcombine.low %v1219, %v1267
  %v7289 = vcombine.low %v1315, %v1363
  %v7290 = vcombine.low %v1411, %v1459
  %v7291 = vcombine.low %v1507, %v1555
  %v7292 = vcombine.low %v1603, %v1651
  %v7293 = vcombine.low %v1699, %v1747
  %v7294 = vcombine.low %v1795, %v1843
  %v7295 = vcombine.low %v1891, %v1939
  %v7320 = vcombine.low %v2995, %v3043
  %v7321 = vcombine.low %v3091, %v3139
  %v7322 = vcombine.low %v3187, %v3235
  %v7323 = vcombine.low %v3283, %v3331
  %v7324 = vcombine.low %v3379, %v3427
  %v7325 = vcombine.low %v3475, %v3523
  %v7326 = vcombine.low %v3571, %v3619
  %v7327 = vcombine.low %v3667, %v3715
  %7328 = vrot.lane.b32.xlu0 %v7320, 8
  %v7329 = vpop.permute.xlu0 %7328
  %7330 = vrot.lane.b32.xlu0 %v7321, 8
  %v7331 = vpop.permute.xlu0 %7330
  %7332 = vrot.lane.b32.xlu0 %v7322, 8
  %v7333 = vpop.permute.xlu0 %7332
  %7334 = vrot.lane.b32.xlu0 %v7323, 8
  %v7335 = vpop.permute.xlu0 %7334
  %7336 = vrot.lane.b32.xlu0 %v7324, 8
  %v7337 = vpop.permute.xlu0 %7336
  %7338 = vrot.lane.b32.xlu0 %v7325, 8
  %v7339 = vpop.permute.xlu0 %7338
  %7340 = vrot.lane.b32.xlu0 %v7326, 8
  %v7341 = vpop.permute.xlu0 %7340
  %7342 = vrot.lane.b32.xlu0 %v7327, 8
  %v7343 = vpop.permute.xlu0 %7342
  %v7368 = vcombine.low %v4771, %v4819
  %v7369 = vcombine.low %v4867, %v4915
  %v7370 = vcombine.low %v4963, %v5011
  %v7371 = vcombine.low %v5059, %v5107
  %v7372 = vcombine.low %v5155, %v5203
  %v7373 = vcombine.low %v5251, %v5299
  %v7374 = vcombine.low %v5347, %v5395
  %v7375 = vcombine.low %v5443, %v5491
  %7376 = vrot.lane.b32.xlu0 %v7368, 16
  %v7377 = vpop.permute.xlu0 %7376
  %7378 = vrot.lane.b32.xlu0 %v7369, 16
  %v7379 = vpop.permute.xlu0 %7378
  %7380 = vrot.lane.b32.xlu0 %v7370, 16
  %v7381 = vpop.permute.xlu0 %7380
  %7382 = vrot.lane.b32.xlu0 %v7371, 16
  %v7383 = vpop.permute.xlu0 %7382
  %7384 = vrot.lane.b32.xlu0 %v7372, 16
  %v7385 = vpop.permute.xlu0 %7384
  %7386 = vrot.lane.b32.xlu0 %v7373, 16
  %v7387 = vpop.permute.xlu0 %7386
  %7388 = vrot.lane.b32.xlu0 %v7374, 16
  %v7389 = vpop.permute.xlu0 %7388
  %7390 = vrot.lane.b32.xlu0 %v7375, 16
  %v7391 = vpop.permute.xlu0 %7390
  %v7416 = vcombine.low %v6547, %v6595
  %v7417 = vcombine.low %v6643, %v6691
  %v7418 = vcombine.low %v6739, %v6787
  %v7419 = vcombine.low %v6835, %v6883
  %v7420 = vcombine.low %v6931, %v6979
  %v7421 = vcombine.low %v7027, %v7075
  %v7422 = vcombine.low %v7123, %v7171
  %v7423 = vcombine.low %v7219, %v7267
  %7424 = vrot.lane.b32.xlu0 %v7416, 24
  %v7425 = vpop.permute.xlu0 %7424
  %7426 = vrot.lane.b32.xlu0 %v7417, 24
  %v7427 = vpop.permute.xlu0 %7426
  %7428 = vrot.lane.b32.xlu0 %v7418, 24
  %v7429 = vpop.permute.xlu0 %7428
  %7430 = vrot.lane.b32.xlu0 %v7419, 24
  %v7431 = vpop.permute.xlu0 %7430
  %7432 = vrot.lane.b32.xlu0 %v7420, 24
  %v7433 = vpop.permute.xlu0 %7432
  %7434 = vrot.lane.b32.xlu0 %v7421, 24
  %v7435 = vpop.permute.xlu0 %7434
  %7436 = vrot.lane.b32.xlu0 %v7422, 24
  %v7437 = vpop.permute.xlu0 %7436
  %7438 = vrot.lane.b32.xlu0 %v7423, 24
  %v7439 = vpop.permute.xlu0 %7438
  %v7448 = vsel %vm183, %v7288, %v7329
  %v7449 = vsel %vm183, %v7289, %v7331
  %v7450 = vsel %vm183, %v7290, %v7333
  %v7451 = vsel %vm183, %v7291, %v7335
  %v7452 = vsel %vm183, %v7292, %v7337
  %v7453 = vsel %vm183, %v7293, %v7339
  %v7454 = vsel %vm183, %v7294, %v7341
  %v7455 = vsel %vm183, %v7295, %v7343
  %vm7456 = vcmask 130048
  %v7457 = vsel %vm7456, %v7448, %v7377
  %v7458 = vsel %vm7456, %v7449, %v7379
  %v7459 = vsel %vm7456, %v7450, %v7381
  %v7460 = vsel %vm7456, %v7451, %v7383
  %v7461 = vsel %vm7456, %v7452, %v7385
  %v7462 = vsel %vm7456, %v7453, %v7387
  %v7463 = vsel %vm7456, %v7454, %v7389
  %v7464 = vsel %vm7456, %v7455, %v7391
  %vm7465 = vcmask 195584
  %v7466 = vsel %vm7465, %v7457, %v7425
  %v7467 = vsel %vm7465, %v7458, %v7427
  %v7468 = vsel %vm7465, %v7459, %v7429
  %v7469 = vsel %vm7465, %v7460, %v7431
  %v7470 = vsel %vm7465, %v7461, %v7433
  %v7471 = vsel %vm7465, %v7462, %v7435
  %v7472 = vsel %vm7465, %v7463, %v7437
  %v7473 = vsel %vm7465, %v7464, %v7439
  %v7474 = vpack.c.bf16 %v7467, %v7466
  %v7475 = vpack.c.bf16 %v7469, %v7468
  %v7476 = vpack.c.bf16 %v7471, %v7470
  %v7477 = vpack.c.bf16 %v7473, %v7472
  %v7478 = vld [vmem:[%s3] sm:$0xf]
  %v7479 = vld [vmem:[%s3 + $0x4] sm:$0xf]
  %v7480 = vld [vmem:[%s3 + $0x8] sm:$0xf]
  %v7481 = vld [vmem:[%s3 + $0xc] sm:$0xf]
  %v7482 = vld [vmem:[%s4] sm:$0x1]
  %v7484 = vlaneseq
  %v7485 = vshrl.u32 %v7484, 7
  %v7486 = vsub.s32 0, %v7485
  %v7487 = vrot.slane %v7482, %v7486
  %v7493 = vunpack.c.l.b16 %v7478
  %v7494 = vunpack.c.l.b16 %v7479
  %v7495 = vunpack.c.l.b16 %v7480
  %v7496 = vunpack.c.l.b16 %v7481
  %v7497 = vpack.c.b16 %v7494, %v7493
  %v7498 = vpack.c.b16 %v7496, %v7495
  %v7502 = vsel %vm62, %v7474, 0
  %v7505 = vsel %vm62, %v7475, 0
  %v7508 = vsel %vm62, %v7476, 0
  %v7511 = vsel %vm62, %v7477, 0
  %7513 = vmatprep.subr.bf16.mxu0 0
  %7514 = vmatpush1.bf16.msra.mxu0 %v7497
  %7515 = vmatprep.subr.bf16.mxu0 0
  %7516 = vmatpush1.bf16.msra.mxu0 %v7498
  %7517 = vmatprep.subr.bf16.mxu0 0
  %7518 = vmatpush1.bf16.msra.mxu0 0
  %7519 = vmatprep.subr.bf16.mxu0 0
  %7520 = vmatpush1.bf16.msra.mxu0 0
  %7521 = vmatprep.subr.bf16.mxu0 0
  %7522 = vmatpush1.bf16.msra.mxu0 0
  %7523 = vmatprep.subr.bf16.mxu0 0
  %7524 = vmatpush1.bf16.msra.mxu0 0
  %7525 = vmatprep.subr.bf16.mxu0 0
  %7526 = vmatpush1.bf16.msra.mxu0 0
  %7527 = vmatprep.subr.bf16.mxu0 0
  %7528 = vmatpush1.bf16.msra.mxu0 0
  %7529 = vmatprep.subr.bf16.mxu0 0
  %7530 = vmatpush1.bf16.msra.mxu0 0
  %7531 = vmatprep.subr.bf16.mxu0 0
  %7532 = vmatpush1.bf16.msra.mxu0 0
  %7533 = vmatprep.subr.bf16.mxu0 0
  %7534 = vmatpush1.bf16.msra.mxu0 0
  %7535 = vmatprep.subr.bf16.mxu0 0
  %7536 = vmatpush1.bf16.msra.mxu0 0
  %7537 = vmatprep.subr.bf16.mxu0 0
  %7538 = vmatpush1.bf16.msra.mxu0 0
  %7539 = vmatprep.subr.bf16.mxu0 0
  %7540 = vmatpush1.bf16.msra.mxu0 0
  %7541 = vmatprep.subr.bf16.mxu0 0
  %7542 = vmatpush1.bf16.msra.mxu0 0
  %7543 = vmatprep.subr.bf16.mxu0 0
  %7544 = vmatpush1.bf16.msra.mxu0 0
  %7545 = vmatprep.mubr.bf16.mxu0 0
  %7546 = vmatmul.mubr.bf16.gmra.mrb[0].mxu0 %v7502
  %v7547 = vpop.f32.mrb[0].mxu0
  %v7548 = vadd.f32 %v7487, %v7547
  %v7549 = vpop.f32.mrb[0].mxu0
  %v7550 = vpop.f32.mrb[0].mxu0
  %v7551 = vadd.f32 %v7487, %v7550
  %v7552 = vpop.f32.mrb[0].mxu0
  %7553 = vmatprep.mubr.bf16.mxu0 0
  %7554 = vmatmul.mubr.bf16.gmra.mrb[0].mxu0 %v7505
  %v7555 = vpop.f32.mrb[0].mxu0
  %v7556 = vadd.f32 %v7487, %v7555
  %v7557 = vpop.f32.mrb[0].mxu0
  %v7558 = vpop.f32.mrb[0].mxu0
  %v7559 = vadd.f32 %v7487, %v7558
  %v7560 = vpop.f32.mrb[0].mxu0
  %7561 = vmatprep.mubr.bf16.mxu0 0
  %7562 = vmatmul.mubr.bf16.gmra.mrb[0].mxu0 %v7508
  %v7563 = vpop.f32.mrb[0].mxu0
  %v7564 = vadd.f32 %v7487, %v7563
  %v7565 = vpop.f32.mrb[0].mxu0
  %v7566 = vpop.f32.mrb[0].mxu0
  %v7567 = vadd.f32 %v7487, %v7566
  %v7568 = vpop.f32.mrb[0].mxu0
  %7569 = vmatprep.mubr.bf16.mxu0 0
  %7570 = vmatmul.mubr.bf16.gmra.mrb[0].mxu0 %v7511
  %v7571 = vpop.f32.mrb[0].mxu0
  %v7572 = vadd.f32 %v7487, %v7571
  %v7573 = vpop.f32.mrb[0].mxu0
  %v7574 = vpop.f32.mrb[0].mxu0
  %v7575 = vadd.f32 %v7487, %v7574
  %v7576 = vpop.f32.mrb[0].mxu0
  %7577 = vdwg.mxu0
  %v7578 = vadd.f32 %v27, %v7548
  %v7579 = vadd.f32 %v28, %v7551
  %v7580 = vadd.f32 %v29, %v7556
  %v7581 = vadd.f32 %v30, %v7559
  %v7582 = vadd.f32 %v31, %v7564
  %v7583 = vadd.f32 %v32, %v7567
  %v7584 = vadd.f32 %v33, %v7572
  %v7585 = vadd.f32 %v34, %v7575
  %v7586 = vld [vmem:[%s5] sm:$0x1]
  %v7587 = vld [vmem:[%s6] sm:$0x1]
  %v7588 = vsel %vm62, %v7578, 0.0
  %7589 = vadd.xlane.f32.xlu0 %v7588
  %v7590 = vpop.xlane.xlu0 %7589
  %v7591 = vsel %vm62, %v7579, 0.0
  %7592 = vadd.xlane.f32.xlu0 %v7591
  %v7593 = vpop.xlane.xlu0 %7592
  %v7594 = vsel %vm62, %v7580, 0.0
  %7595 = vadd.xlane.f32.xlu0 %v7594
  %v7596 = vpop.xlane.xlu0 %7595
  %v7597 = vsel %vm62, %v7581, 0.0
  %7598 = vadd.xlane.f32.xlu0 %v7597
  %v7599 = vpop.xlane.xlu0 %7598
  %v7600 = vsel %vm62, %v7582, 0.0
  %7601 = vadd.xlane.f32.xlu0 %v7600
  %v7602 = vpop.xlane.xlu0 %7601
  %v7603 = vsel %vm62, %v7583, 0.0
  %7604 = vadd.xlane.f32.xlu0 %v7603
  %v7605 = vpop.xlane.xlu0 %7604
  %v7606 = vsel %vm62, %v7584, 0.0
  %7607 = vadd.xlane.f32.xlu0 %v7606
  %v7608 = vpop.xlane.xlu0 %7607
  %v7609 = vsel %vm62, %v7585, 0.0
  %7610 = vadd.xlane.f32.xlu0 %v7609
  %v7611 = vpop.xlane.xlu0 %7610
  %v7612 = vrcp.pop 32.0
  %v7613 = vmul.f32 %v7590, %v7612
  %v7614 = vmul.f32 %v7593, %v7612
  %v7615 = vmul.f32 %v7596, %v7612
  %v7616 = vmul.f32 %v7599, %v7612
  %v7617 = vmul.f32 %v7602, %v7612
  %v7618 = vmul.f32 %v7605, %v7612
  %v7619 = vmul.f32 %v7608, %v7612
  %v7620 = vmul.f32 %v7611, %v7612
  %v7621 = vsub.f32 %v7578, %v7613
  %v7622 = vsub.f32 %v7579, %v7614
  %v7623 = vsub.f32 %v7580, %v7615
  %v7624 = vsub.f32 %v7581, %v7616
  %v7625 = vsub.f32 %v7582, %v7617
  %v7626 = vsub.f32 %v7583, %v7618
  %v7627 = vsub.f32 %v7584, %v7619
  %v7628 = vsub.f32 %v7585, %v7620
  %v7629 = vmul.f32 %v7621, %v7621
  %v7630 = vmul.f32 %v7622, %v7622
  %v7631 = vmul.f32 %v7623, %v7623
  %v7632 = vmul.f32 %v7624, %v7624
  %v7633 = vmul.f32 %v7625, %v7625
  %v7634 = vmul.f32 %v7626, %v7626
  %v7635 = vmul.f32 %v7627, %v7627
  %v7636 = vmul.f32 %v7628, %v7628
  %v7637 = vsel %vm62, %v7629, 0.0
  %7638 = vadd.xlane.f32.xlu0 %v7637
  %v7639 = vpop.xlane.xlu0 %7638
  %v7640 = vsel %vm62, %v7630, 0.0
  %7641 = vadd.xlane.f32.xlu0 %v7640
  %v7642 = vpop.xlane.xlu0 %7641
  %v7643 = vsel %vm62, %v7631, 0.0
  %7644 = vadd.xlane.f32.xlu0 %v7643
  %v7645 = vpop.xlane.xlu0 %7644
  %v7646 = vsel %vm62, %v7632, 0.0
  %7647 = vadd.xlane.f32.xlu0 %v7646
  %v7648 = vpop.xlane.xlu0 %7647
  %v7649 = vsel %vm62, %v7633, 0.0
  %7650 = vadd.xlane.f32.xlu0 %v7649
  %v7651 = vpop.xlane.xlu0 %7650
  %v7652 = vsel %vm62, %v7634, 0.0
  %7653 = vadd.xlane.f32.xlu0 %v7652
  %v7654 = vpop.xlane.xlu0 %7653
  %v7655 = vsel %vm62, %v7635, 0.0
  %7656 = vadd.xlane.f32.xlu0 %v7655
  %v7657 = vpop.xlane.xlu0 %7656
  %v7658 = vsel %vm62, %v7636, 0.0
  %7659 = vadd.xlane.f32.xlu0 %v7658
  %v7660 = vpop.xlane.xlu0 %7659
  %v7661 = vmul.f32 %v7639, %v7612
  %v7662 = vmul.f32 %v7642, %v7612
  %v7663 = vmul.f32 %v7645, %v7612
  %v7664 = vmul.f32 %v7648, %v7612
  %v7665 = vmul.f32 %v7651, %v7612
  %v7666 = vmul.f32 %v7654, %v7612
  %v7667 = vmul.f32 %v7657, %v7612
  %v7668 = vmul.f32 %v7660, %v7612
  %v7669 = vadd.f32 %v7661, 1e-05
  %v7670 = vadd.f32 %v7662, 1e-05
  %v7671 = vadd.f32 %v7663, 1e-05
  %v7672 = vadd.f32 %v7664, 1e-05
  %v7673 = vadd.f32 %v7665, 1e-05
  %v7674 = vadd.f32 %v7666, 1e-05
  %v7675 = vadd.f32 %v7667, 1e-05
  %v7676 = vadd.f32 %v7668, 1e-05
  %v7677 = vrsqrt.pop %v7669
  %v7678 = vrsqrt.pop %v7670
  %v7679 = vrsqrt.pop %v7671
  %v7680 = vrsqrt.pop %v7672
  %v7681 = vrsqrt.pop %v7673
  %v7682 = vrsqrt.pop %v7674
  %v7683 = vrsqrt.pop %v7675
  %v7684 = vrsqrt.pop %v7676
  %v7685 = vmul.f32 %v7621, %v7677
  %v7686 = vmul.f32 %v7622, %v7678
  %v7687 = vmul.f32 %v7623, %v7679
  %v7688 = vmul.f32 %v7624, %v7680
  %v7689 = vmul.f32 %v7625, %v7681
  %v7690 = vmul.f32 %v7626, %v7682
  %v7691 = vmul.f32 %v7627, %v7683
  %v7692 = vmul.f32 %v7628, %v7684
  %v7694 = vlaneseq
  %v7695 = vshrl.u32 %v7694, 7
  %v7696 = vsub.s32 0, %v7695
  %v7697 = vrot.slane %v7586, %v7696
  %v7699 = vmul.f32 %v7685, %v7697
  %v7700 = vmul.f32 %v7686, %v7697
  %v7701 = vmul.f32 %v7687, %v7697
  %v7702 = vmul.f32 %v7688, %v7697
  %v7703 = vmul.f32 %v7689, %v7697
  %v7704 = vmul.f32 %v7690, %v7697
  %v7705 = vmul.f32 %v7691, %v7697
  %v7706 = vmul.f32 %v7692, %v7697
  %v7708 = vlaneseq
  %v7709 = vshrl.u32 %v7708, 7
  %v7710 = vsub.s32 0, %v7709
  %v7711 = vrot.slane %v7587, %v7710
  %v7713 = vadd.f32 %v7699, %v7711
  %v7714 = vadd.f32 %v7700, %v7711
  %v7715 = vadd.f32 %v7701, %v7711
  %v7716 = vadd.f32 %v7702, %v7711
  %v7717 = vadd.f32 %v7703, %v7711
  %v7718 = vadd.f32 %v7704, %v7711
  %v7719 = vadd.f32 %v7705, %v7711
  %v7720 = vadd.f32 %v7706, %v7711
  %7721 = vst.msk [vmem:[%s7] sm:$0xff] %vm62, %v7713
  %7722 = vst.msk [vmem:[%s7 + $0x8] sm:$0xff] %vm62, %v7714
  %7723 = vst.msk [vmem:[%s7 + $0x10] sm:$0xff] %vm62, %v7715
  %7724 = vst.msk [vmem:[%s7 + $0x18] sm:$0xff] %vm62, %v7716
  %7725 = vst.msk [vmem:[%s7 + $0x20] sm:$0xff] %vm62, %v7717
  %7726 = vst.msk [vmem:[%s7 + $0x28] sm:$0xff] %vm62, %v7718
  %7727 = vst.msk [vmem:[%s7 + $0x30] sm:$0xff] %vm62, %v7719
  %7728 = vst.msk [vmem:[%s7 + $0x38] sm:$0xff] %vm62, %v7720
  // Predicated region
  $region30: #{encoder_layer_forward.4} parent=0 // pred_check
    _
  $region31: #{encoder_layer_forward.4} parent=0 // pred_check_branch
    %7730 = sbr.rel (0) target = $region33
  $region32: #{encoder_layer_forward.4} parent=0 // pred_region
    _
  $region33: #{encoder_layer_forward.4} parent=0 // pred_fallthru
    _
  // Predicated region
  $region34: #{encoder_layer_forward.4} parent=0 // pred_check
    _
  $region35: #{encoder_layer_forward.4} parent=0 // pred_check_branch
    %7732 = sbr.rel (0) target = $region37
  $region36: #{encoder_layer_forward.4} parent=0 // pred_region
    _
  $region37: #{encoder_layer_forward.4} parent=0 // pred_fallthru
    _

</llo_original>
